<compile_context>
chip_gen: v7x
topology: tpu7x:2x2x1
jax: 0.10.0
libtpu: 0.0.40
codegen_flags: <defaults>
</compile_context>

<pallas_src>
import jax
import jax.numpy as jnp
from jax.experimental import pallas as pl
from jax.experimental.pallas import tpu as pltpu


def _readout_kernel(elem_ref, x_ref, w1_ref, wg_ref, out_ref):
    """One tile of atoms: per-element MLP readout.

    elem_ref : [TM, 1]       int32 chemical-element index per atom
    x_ref    : [TM, D]       scalar (way==0) features, compute dtype (bf16 or f32)
    w1_ref   : [D,  W1pad]   layer1 weights concatenated per element (lane-padded)
    wg_ref   : [E,  WGpad]   per-element rows [b1 | w2 | b2] (f32, lane-padded)
    out_ref  : [1,  TM]      lane-dense output row
    """
    x = x_ref[...]                                            # [TM, D]
    tm, d = x.shape
    n_elem = wg_ref.shape[0]

    # ---- in-kernel one-hot selector (no host-side one_hot input stream) ----
    eids = jax.lax.broadcasted_iota(jnp.int32, (tm, n_elem), 1)       # [TM, E]
    oh = (elem_ref[...] == eids).astype(jnp.float32)                  # [TM, E]

    # ---- layer1: ONE wide MXU matmul against concatenated per-element weights ----
    y = jnp.dot(x, w1_ref[...], preferred_element_type=jnp.float32)   # [TM, W1pad] f32

    # ---- per-atom gather of (b1 | w2 | b2) rows: one tiny exact f32 matmul ----
    g = jnp.dot(oh, wg_ref[...], preferred_element_type=jnp.float32)  # [TM, WGpad]
    b1_sel = g[:, :d]                                                  # [TM, D]
    w2_sel = g[:, d:2 * d]                                             # [TM, D]
    b2_sel = g[:, 2 * d:2 * d + 1]                                     # [TM, 1]

    # ---- per-atom block select of layer-1 output (E static slices, VPU blends) ----
    h = jnp.zeros((tm, d), jnp.float32)
    for e in range(n_elem):                    # small, static -> unrolled
        h = h + oh[:, e:e + 1] * y[:, e * d:(e + 1) * d]
    h = h + b1_sel

    # ---- activation: SiLU (scalar / way==0 branch of TensorActivate), narrow [TM, D] ----
    h = h * jax.nn.sigmoid(h)

    # ---- layer2: VPU multiply + lane reduce; store as a lane-dense [1, TM] row ----
    out_col = jnp.sum(h * w2_sel, axis=-1, keepdims=True) + b2_sel     # [TM, 1]
    out_ref[...] = out_col.reshape(1, tm).astype(out_ref.dtype)


def _round_up(x: int, m: int) -> int:
    return ((x + m - 1) // m) * m


def _choose_tile_m(n_atoms: int, requested: int, bytes_per_atom: int,
                   vmem_budget_bytes: int, min_steps: int) -> int:
    """Tile must be a multiple of 128 (lane-dense output row).  Cap by the VMEM
    budget; keep >= min_steps grid blocks only when there is enough work (v7x's
    two TensorCores each need a block under dimension_semantics=('parallel',))."""
    cap = max(128, (vmem_budget_bytes // max(bytes_per_atom, 1)) // 128 * 128)
    t = max(128, min(requested, cap, _round_up(n_atoms, 128)) // 128 * 128)
    if min_steps > 1 and pl.cdiv(n_atoms, t) < min_steps:
        t = max(128, _round_up(pl.cdiv(n_atoms, min_steps), 128))
    return t


def element_readout_mlp(x, elem_idx, params, *, tile_m=4096,
                        compute_dtype=jnp.bfloat16, min_grid_steps=2,
                        vmem_budget_bytes=24 * 1024 * 1024):
    """x: [n_atoms, n_dim] (ideally bf16 from the caller), elem_idx: [n_atoms] int
    -> [n_atoms, 1] in x.dtype."""
    n_atoms, n_dim = x.shape
    w1_t, b1, w2_t, b2 = params
    n_elem = w1_t.shape[0]
    out_dtype = x.dtype

    # ---- pre-pack parameters (done once at trace time) ----
    #   w1_cat[:, e*D:(e+1)*D] = w1_t[e]  so x @ w1_cat computes all elements at once
    #   w_gather[e]            = [b1[e] | w2_t[e,:,0] | b2[e]]   (kept f32 -> exact)
    w1_width = _round_up(n_elem * n_dim, 128)
    w1_cat = jnp.transpose(w1_t, (1, 0, 2)).reshape(n_dim, n_elem * n_dim)
    w1_cat = jnp.pad(w1_cat, ((0, 0), (0, w1_width - n_elem * n_dim)))
    w1_cat = w1_cat.astype(compute_dtype)

    gather_cols = 2 * n_dim + 1
    gather_width = _round_up(gather_cols, 128)
    w_gather = jnp.concatenate(
        [b1.reshape(n_elem, n_dim),
         w2_t.reshape(n_elem, n_dim),
         b2.reshape(n_elem, 1)], axis=1).astype(jnp.float32)
    w_gather = jnp.pad(w_gather, ((0, 0), (0, gather_width - gather_cols)))

    # ---- tile selection + atom-axis padding (no divisibility assumptions) ----
    x_item = jnp.dtype(compute_dtype).itemsize
    out_item = jnp.dtype(out_dtype).itemsize
    bytes_per_atom = (2 * (n_dim * x_item + 4 + out_item)                 # double-buffered streams
                      + 4 * (w1_width + gather_width + 6 * n_dim + n_elem))  # f32 intermediates
    tile_m = _choose_tile_m(n_atoms, tile_m, bytes_per_atom,
                            vmem_budget_bytes, min_grid_steps)
    n_pad = _round_up(n_atoms, tile_m)

    x_p = x.astype(compute_dtype)
    elem_p = elem_idx.astype(jnp.int32)
    if n_pad != n_atoms:
        x_p = jnp.pad(x_p, ((0, n_pad - n_atoms), (0, 0)))
        elem_p = jnp.pad(elem_p, (0, n_pad - n_atoms))     # pad atoms use element 0
    elem_col = elem_p.reshape(n_pad, 1)

    cost = pl.CostEstimate(
        flops=int(2 * n_pad * n_dim * w1_width
                  + 2 * n_pad * n_elem * gather_width
                  + 10 * n_pad * n_dim),
        transcendentals=int(n_pad * n_dim),
        bytes_accessed=int(n_pad * (n_dim * x_item + 4 + out_item)
                           + n_dim * w1_width * x_item
                           + n_elem * gather_width * 4),
    )

    out_row = pl.pallas_call(
        _readout_kernel,
        out_shape=jax.ShapeDtypeStruct((1, n_pad), out_dtype),
        grid_spec=pltpu.PrefetchScalarGridSpec(
            num_scalar_prefetch=0,
            grid=(n_pad // tile_m,),
            in_specs=[
                pl.BlockSpec((tile_m, 1), lambda i: (i, 0)),              # element idx
                pl.BlockSpec((tile_m, n_dim), lambda i: (i, 0)),          # x tile
                pl.BlockSpec((n_dim, w1_width), lambda i: (0, 0)),        # w1_cat (resident)
                pl.BlockSpec((n_elem, gather_width), lambda i: (0, 0)),   # [b1|w2|b2] (resident)
            ],
            out_specs=pl.BlockSpec((1, tile_m), lambda i: (0, i)),        # lane-dense row
        ),
        compiler_params=pltpu.CompilerParams(dimension_semantics=("parallel",)),
        cost_estimate=cost,
    )(elem_col, x_p, w1_cat, w_gather)

    return out_row[0, :n_atoms].reshape(n_atoms, 1)


def reference(x, elem_idx, params):
    """Pure-JAX reference mirroring the PyTorch module (way==0)."""
    w1_t, b1, w2_t, b2 = params
    h = jnp.einsum("nj,nji->ni", x, w1_t[elem_idx]) + b1[elem_idx]
    h = jax.nn.silu(h)
    out = jnp.einsum("nj,njk->nk", h, w2_t[elem_idx]) + b2[elem_idx]
    return out


if __name__ == "__main__":
    n_dim, n_elem = 32, 3   # e.g. ELEMENTS = [H, C, O]

    key = jax.random.PRNGKey(0)
    ks = jax.random.split(key, 6)

    # Deterministic synthetic parameters (shapes from ElementTensorLinear):
    #   layer1: weight [E, n_dim, n_dim], bias [E, n_dim]   (bias because way==0)
    #   layer2: weight [E, n_dim, 1],     bias [E, 1]
    # Stored pre-transposed ([E, in, out]) so the kernel does x @ W.
    w1_t = jax.random.normal(ks[2], (n_elem, n_dim, n_dim), jnp.float32) / jnp.sqrt(n_dim)
    b1 = 0.1 * jax.random.normal(ks[3], (n_elem, n_dim), jnp.float32)
    w2_t = jax.random.normal(ks[4], (n_elem, n_dim, 1), jnp.float32) / jnp.sqrt(n_dim)
    b2 = 0.1 * jax.random.normal(ks[5], (n_elem, 1), jnp.float32)
    params = (w1_t, b1, w2_t, b2)

    # Second case exercises the atom-axis padding path (non-power-of-two count).
    for n_atoms in (1024, 777):
        kx, ke = jax.random.split(jax.random.fold_in(key, n_atoms))
        x = jax.random.normal(kx, (n_atoms, n_dim), jnp.float32)
        elem_idx = jax.random.randint(ke, (n_atoms,), 0, n_elem, dtype=jnp.int32)
        ref = reference(x, elem_idx, params)

        # Exact path (f32 into the MXU) — strict correctness check.
        out_f32 = jax.block_until_ready(
            element_readout_mlp(x, elem_idx, params, compute_dtype=jnp.float32))
        assert out_f32.shape == (n_atoms, 1)
        err_f32 = float(jnp.max(jnp.abs(out_f32 - ref)))
        assert jnp.allclose(out_f32, ref, atol=1e-5, rtol=1e-5), err_f32

        # Default perf path (bf16 x / layer-1 weights into the MXU) — loose check.
        out_bf16 = jax.block_until_ready(element_readout_mlp(x, elem_idx, params))
        assert out_bf16.shape == (n_atoms, 1)
        err_bf16 = float(jnp.max(jnp.abs(out_bf16 - ref)))
        assert jnp.allclose(out_bf16, ref, atol=5e-2, rtol=5e-2), err_bf16

    print("KERNEL_OK")
</pallas_src>

<mosaic_0001>
module attributes {stable_mosaic.version = 11 : i64} {
  func.func @_readout_kernel(%arg0: i32, %arg1: memref<512x1xi32, #tpu.memory_space<vmem>>, %arg2: memref<512x32xf32, #tpu.memory_space<vmem>>, %arg3: memref<32x128xf32, #tpu.memory_space<vmem>>, %arg4: memref<3x128xf32, #tpu.memory_space<vmem>>, %arg5: memref<1x512xf32, #tpu.memory_space<vmem>>) attributes {dimension_semantics = [#tpu.dimension_semantics<parallel>], iteration_bounds = array<i64: 2>, scalar_prefetch = 0 : i64, scratch_operands = 0 : i64, tpu.core_type = #tpu.core_type<tc>, window_params = [{transform_indices = @transform_0, window_bounds = array<i64: 512, 1>}, {transform_indices = @transform_1, window_bounds = array<i64: 512, 32>}, {pipeline_mode = #tpu.pipeline_mode<synchronous>, transform_indices = @transform_2, window_bounds = array<i64: 32, 128>}, {pipeline_mode = #tpu.pipeline_mode<synchronous>, transform_indices = @transform_3, window_bounds = array<i64: 3, 128>}, {transform_indices = @transform_4, window_bounds = array<i64: 1, 512>}]} {
    %c0 = arith.constant 0 : index
    %c0_0 = arith.constant 0 : index
    %0 = vector.load %arg2[%c0, %c0_0] : memref<512x32xf32, #tpu.memory_space<vmem>>, vector<512x32xf32>
    %1 = tpu.iota {dimensions = array<i32: 1>} : vector<512x3xi32>
    %c0_1 = arith.constant 0 : index
    %c0_2 = arith.constant 0 : index
    %2 = vector.load %arg1[%c0_1, %c0_2] : memref<512x1xi32, #tpu.memory_space<vmem>>, vector<512x1xi32>
    %3 = vector.broadcast %2 : vector<512x1xi32> to vector<512x3xi32>
    %4 = arith.cmpi eq, %3, %1 : vector<512x3xi32>
    %5 = arith.extui %4 : vector<512x3xi1> to vector<512x3xi32>
    %6 = arith.sitofp %5 : vector<512x3xi32> to vector<512x3xf32>
    %c0_3 = arith.constant 0 : index
    %c0_4 = arith.constant 0 : index
    %7 = vector.load %arg3[%c0_3, %c0_4] : memref<32x128xf32, #tpu.memory_space<vmem>>, vector<32x128xf32>
    %cst = arith.constant dense<0.000000e+00> : vector<512x128xf32>
    %8 = tpu.matmul %0, %7, %cst {dimension_numbers = #tpu.dot_dimension_numbers<[1], [0], [0], [1], [0, 0, 1, 1], [], []>} : vector<512x32xf32>, vector<32x128xf32>, vector<512x128xf32> -> vector<512x128xf32>
    %c0_5 = arith.constant 0 : index
    %c0_6 = arith.constant 0 : index
    %9 = vector.load %arg4[%c0_5, %c0_6] : memref<3x128xf32, #tpu.memory_space<vmem>>, vector<3x128xf32>
    %cst_7 = arith.constant dense<0.000000e+00> : vector<512x128xf32>
    %10 = tpu.matmul %6, %9, %cst_7 {dimension_numbers = #tpu.dot_dimension_numbers<[1], [0], [0], [1], [0, 0, 1, 1], [], []>} : vector<512x3xf32>, vector<3x128xf32>, vector<512x128xf32> -> vector<512x128xf32>
    %11 = vector.extract_strided_slice %10 {offsets = [0, 0], sizes = [512, 32], strides = [1, 1]} : vector<512x128xf32> to vector<512x32xf32>
    %12 = vector.extract_strided_slice %10 {offsets = [0, 32], sizes = [512, 32], strides = [1, 1]} : vector<512x128xf32> to vector<512x32xf32>
    %13 = vector.extract_strided_slice %10 {offsets = [0, 64], sizes = [512, 1], strides = [1, 1]} : vector<512x128xf32> to vector<512x1xf32>
    %cst_8 = arith.constant 0.000000e+00 : f32
    %14 = vector.broadcast %cst_8 : f32 to vector<512x32xf32>
    %15 = vector.extract_strided_slice %6 {offsets = [0, 0], sizes = [512, 1], strides = [1, 1]} : vector<512x3xf32> to vector<512x1xf32>
    %16 = vector.extract_strided_slice %8 {offsets = [0, 0], sizes = [512, 32], strides = [1, 1]} : vector<512x128xf32> to vector<512x32xf32>
    %17 = vector.broadcast %15 : vector<512x1xf32> to vector<512x32xf32>
    %18 = arith.mulf %17, %16 : vector<512x32xf32>
    %19 = arith.addf %14, %18 : vector<512x32xf32>
    %20 = vector.extract_strided_slice %6 {offsets = [0, 1], sizes = [512, 1], strides = [1, 1]} : vector<512x3xf32> to vector<512x1xf32>
    %21 = vector.extract_strided_slice %8 {offsets = [0, 32], sizes = [512, 32], strides = [1, 1]} : vector<512x128xf32> to vector<512x32xf32>
    %22 = vector.broadcast %20 : vector<512x1xf32> to vector<512x32xf32>
    %23 = arith.mulf %22, %21 : vector<512x32xf32>
    %24 = arith.addf %19, %23 : vector<512x32xf32>
    %25 = vector.extract_strided_slice %6 {offsets = [0, 2], sizes = [512, 1], strides = [1, 1]} : vector<512x3xf32> to vector<512x1xf32>
    %26 = vector.extract_strided_slice %8 {offsets = [0, 64], sizes = [512, 32], strides = [1, 1]} : vector<512x128xf32> to vector<512x32xf32>
    %27 = vector.broadcast %25 : vector<512x1xf32> to vector<512x32xf32>
    %28 = arith.mulf %27, %26 : vector<512x32xf32>
    %29 = arith.addf %24, %28 : vector<512x32xf32>
    %30 = arith.addf %29, %11 : vector<512x32xf32>
    %31 = arith.negf %30 : vector<512x32xf32>
    %32 = math.exp %31 : vector<512x32xf32>
    %cst_9 = arith.constant 1.000000e+00 : f32
    %33 = vector.broadcast %cst_9 : f32 to vector<512x32xf32>
    %34 = arith.addf %33, %32 : vector<512x32xf32>
    %35 = arith.divf %33, %34 : vector<512x32xf32>
    %36 = arith.mulf %30, %35 : vector<512x32xf32>
    %37 = arith.mulf %36, %12 : vector<512x32xf32>
    %cst_10 = arith.constant dense<0.000000e+00> : vector<512xf32>
    %38 = vector.multi_reduction <add>, %37, %cst_10 [1] : vector<512x32xf32> to vector<512xf32>
    %39 = vector.shape_cast %38 : vector<512xf32> to vector<512x1xf32>
    %40 = arith.addf %39, %13 : vector<512x1xf32>
    %41 = vector.shape_cast %40 : vector<512x1xf32> to vector<1x512xf32>
    %c0_11 = arith.constant 0 : index
    %c0_12 = arith.constant 0 : index
    %42 = vector.load %arg5[%c0_11, %c0_12] : memref<1x512xf32, #tpu.memory_space<vmem>>, vector<1x512xf32>
    tpu.vector_store %arg5[%c0_11, %c0_12], %41 {strides = array<i32>} : memref<1x512xf32, #tpu.memory_space<vmem>>, vector<1x512xf32>,
    return
  }
  func.func @transform_0(%arg0: i32) -> (i32, i32) {
    %c0_i32 = arith.constant 0 : i32
    %c0_i32_0 = arith.constant 0 : i32
    return %arg0, %c0_i32 : i32, i32
  }
  func.func @transform_1(%arg0: i32) -> (i32, i32) {
    %c0_i32 = arith.constant 0 : i32
    %c0_i32_0 = arith.constant 0 : i32
    return %arg0, %c0_i32 : i32, i32
  }
  func.func @transform_2(%arg0: i32) -> (i32, i32) {
    %c0_i32 = arith.constant 0 : i32
    %c0_i32_0 = arith.constant 0 : i32
    %c0_i32_1 = arith.constant 0 : i32
    return %c0_i32, %c0_i32_0 : i32, i32
  }
  func.func @transform_3(%arg0: i32) -> (i32, i32) {
    %c0_i32 = arith.constant 0 : i32
    %c0_i32_0 = arith.constant 0 : i32
    %c0_i32_1 = arith.constant 0 : i32
    return %c0_i32, %c0_i32_0 : i32, i32
  }
  func.func @transform_4(%arg0: i32) -> (i32, i32) {
    %c0_i32 = arith.constant 0 : i32
    %c0_i32_0 = arith.constant 0 : i32
    return %c0_i32, %arg0 : i32, i32
  }
}

</mosaic_0001>

<llo_original>
// kernel: tpu_custom_call.1
$region0: #{tpu_custom_call.1}
  #allocation0 [shape = 'u32[]', space=smem, size = 0x4, offset = 0x4, fixed_abs, tag = 'smem constant byte address 0x4 - core index']
  #allocation1 [shape = 'u32[144,128]{1,0:T(1,128)}', space=vmem, size = 0x12000, scoped, tag = 'internal scratch']
  %s0 = inlined_call_operand.vmem [shape: s32[1024,1], index: 0, kind: input, shape index: {}]
  %s1 = inlined_call_operand.vmem [shape: f32[1024,32], index: 1, kind: input, shape index: {}]
  %s2 = inlined_call_operand.vmem [shape: f32[32,128], index: 2, kind: input, shape index: {}]
  %s3 = inlined_call_operand.vmem [shape: f32[3,128], index: 3, kind: input, shape index: {}]
  %s4 = inlined_call_operand.hbm [shape: f32[1,1024], index: 4, kind: output, shape index: {}]
  %s5 = sld [smem:[#allocation0]]
  $region49: #{tpu_custom_call.1} parent=0
    _
  %s7 = ssub.s32 1, %s5
  %s8 = scalar_select 0, %s7, %s5
  $region1: #{tpu_custom_call.1} parent=0
    #allocation2 [shape = 'u8[4096]{0}', space=vmem, size = 0x1000, scoped, tag = 'output window, operand 0']
    #allocation3 [shape = 's32[2]{0}', space=sflag, size = 0x8, scoped, tag = 'scoped memory for tpu_custom_call.1']
    %9 = vsyncpa [#allocation3], 0
    %s10 = scalar_lea.sflag [#allocation3], 1
    %11 = vsyncpa %s10, 0
    loop: start=0, step=1, limit=4
    $region2: #{tpu_custom_call.1} parent=1 // loop_pre_header
      _
    $region3: #{tpu_custom_call.1} parent=1 // loop_header
      %s13 = sphi 0, %s17
      %p14 = scmp.ge.s32.totalorder %s13, 4
      %s23 = sphi 0, %s25
      %s26 = sphi 0, %s23
      %s27 = sphi 0, %s26
      %s43 = sphi 0, %s27
      %s49 = sphi 0, %s51
      %s52 = sphi 0, %s49
      %s53 = sphi 0, %s52
      %s69 = sphi 0, %s53
      %s73 = sphi 0, %s73
      %s75 = sphi 0, %s73
      %s76 = sphi 0, %s75
      %s90 = sphi 0, %s76
      %s94 = sphi 0, %s94
      %s96 = sphi 0, %s94
      %s97 = sphi 0, %s96
      %s111 = sphi 0, %s97
      %s117 = sphi 0, %s119
      %s120 = sphi 0, %s117
      %s121 = sphi 0, %s120
      %s137 = sphi 0, %s121
    $region4: #{tpu_custom_call.1} parent=1 // loop_header_branch
      %16 = sbr.rel (%p14) target = $region8
    $region5: #{tpu_custom_call.1} parent=1 // loop_body
      %s18 = ssub.s32 %s13, 1
      %s19 = ssub.s32 %s13, 2
      %s20 = sadd.s32 %s13, 1
      %s21 = ssub.s32 %s13, %s20
      %p22 = scmp.eq.s32.totalorder %s21, 0
      %s24 = sadd.s32 %s23, 1
      %s25 = scalar_select %p22, %s23, %s24
      %p28 = pneg %p22
      %p29 = scmp.eq.s32.totalorder %s13, 1
      %p30 = por %p28, %p29
      %p31 = scmp.ne.s32.totalorder %s23, %s26
      %p32 = scmp.eq.s32.totalorder %s13, 0
      %p33 = por %p31, %p32
      %p34 = scmp.ne.s32.totalorder %s23, %s26
      %p35 = scmp.eq.s32.totalorder %s18, 1
      %p36 = por %p34, %p35
      %p37 = scmp.ne.s32.totalorder %s26, %s27
      %p38 = scmp.eq.s32.totalorder %s18, 0
      %p39 = por %p37, %p38
      %p40 = scmp.ne.s32.totalorder %s26, %s27
      %p41 = scmp.eq.s32.totalorder %s19, 1
      %p42 = por %p40, %p41
      %p44 = scmp.ne.s32.totalorder %s27, %s43
      %p45 = scmp.eq.s32.totalorder %s19, 0
      %p46 = por %p44, %p45
      %s47 = ssub.s32 %s13, %s20
      %p48 = scmp.eq.s32.totalorder %s47, 0
      %s50 = sadd.s32 %s49, 1
      %s51 = scalar_select %p48, %s49, %s50
      %p54 = pneg %p48
      %p55 = scmp.eq.s32.totalorder %s13, 1
      %p56 = por %p54, %p55
      %p57 = scmp.ne.s32.totalorder %s49, %s52
      %p58 = scmp.eq.s32.totalorder %s13, 0
      %p59 = por %p57, %p58
      %p60 = scmp.ne.s32.totalorder %s49, %s52
      %p61 = scmp.eq.s32.totalorder %s18, 1
      %p62 = por %p60, %p61
      %p63 = scmp.ne.s32.totalorder %s52, %s53
      %p64 = scmp.eq.s32.totalorder %s18, 0
      %p65 = por %p63, %p64
      %p66 = scmp.ne.s32.totalorder %s52, %s53
      %p67 = scmp.eq.s32.totalorder %s19, 1
      %p68 = por %p66, %p67
      %p70 = scmp.ne.s32.totalorder %s53, %s69
      %p71 = scmp.eq.s32.totalorder %s19, 0
      %p72 = por %p70, %p71
      %s74 = sadd.s32 %s73, 1
      %p77 = scmp.eq.s32.totalorder %s13, 1
      %p78 = scmp.ne.s32.totalorder %s73, %s75
      %p79 = scmp.eq.s32.totalorder %s13, 0
      %p80 = por %p78, %p79
      %p81 = scmp.ne.s32.totalorder %s73, %s75
      %p82 = scmp.eq.s32.totalorder %s18, 1
      %p83 = por %p81, %p82
      %p84 = scmp.ne.s32.totalorder %s75, %s76
      %p85 = scmp.eq.s32.totalorder %s18, 0
      %p86 = por %p84, %p85
      %p87 = scmp.ne.s32.totalorder %s75, %s76
      %p88 = scmp.eq.s32.totalorder %s19, 1
      %p89 = por %p87, %p88
      %p91 = scmp.ne.s32.totalorder %s76, %s90
      %p92 = scmp.eq.s32.totalorder %s19, 0
      %p93 = por %p91, %p92
      %s95 = sadd.s32 %s94, 1
      %p98 = scmp.eq.s32.totalorder %s13, 1
      %p99 = scmp.ne.s32.totalorder %s94, %s96
      %p100 = scmp.eq.s32.totalorder %s13, 0
      %p101 = por %p99, %p100
      %p102 = scmp.ne.s32.totalorder %s94, %s96
      %p103 = scmp.eq.s32.totalorder %s18, 1
      %p104 = por %p102, %p103
      %p105 = scmp.ne.s32.totalorder %s96, %s97
      %p106 = scmp.eq.s32.totalorder %s18, 0
      %p107 = por %p105, %p106
      %p108 = scmp.ne.s32.totalorder %s96, %s97
      %p109 = scmp.eq.s32.totalorder %s19, 1
      %p110 = por %p108, %p109
      %p112 = scmp.ne.s32.totalorder %s97, %s111
      %p113 = scmp.eq.s32.totalorder %s19, 0
      %p114 = por %p112, %p113
      %s115 = ssub.s32 %s13, %s20
      %p116 = scmp.eq.s32.totalorder %s115, 0
      %s118 = sadd.s32 %s117, 1
      %s119 = scalar_select %p116, %s117, %s118
      %p122 = pneg %p116
      %p123 = scmp.eq.s32.totalorder %s13, 1
      %p124 = por %p122, %p123
      %p125 = scmp.ne.s32.totalorder %s117, %s120
      %p126 = scmp.eq.s32.totalorder %s13, 0
      %p127 = por %p125, %p126
      %p128 = scmp.ne.s32.totalorder %s117, %s120
      %p129 = scmp.eq.s32.totalorder %s18, 1
      %p130 = por %p128, %p129
      %p131 = scmp.ne.s32.totalorder %s120, %s121
      %p132 = scmp.eq.s32.totalorder %s18, 0
      %p133 = por %p131, %p132
      %p134 = scmp.ne.s32.totalorder %s120, %s121
      %p135 = scmp.eq.s32.totalorder %s19, 1
      %p136 = por %p134, %p135
      %p138 = scmp.ne.s32.totalorder %s121, %s137
      %p139 = scmp.eq.s32.totalorder %s19, 0
      %p140 = por %p138, %p139
      %p141 = scmp.le.s32.totalorder 1, %s13
      %p142 = scmp.lt.s32.totalorder %s13, 3
      %p143 = pnand %p141, %p142
      %p144 = pneg %p143
      // Predicated region
      $region9: #{tpu_custom_call.1} parent=5 // pred_check
        _
      $region10: #{tpu_custom_call.1} parent=5 // pred_check_branch
        %146 = sbr.rel (%p143) target = $region12
      $region11: #{tpu_custom_call.1} parent=5 // pred_region
        %s147 = ssub.s32 %s13, 1
        // Predicated region
        $region13: #{tpu_custom_call.1} parent=11 // pred_check
          %p148 = pneg %p86
        $region14: #{tpu_custom_call.1} parent=11 // pred_check_branch
          %150 = sbr.rel (%p148) target = $region16
        $region15: #{tpu_custom_call.1} parent=11 // pred_region
          _
        $region16: #{tpu_custom_call.1} parent=11 // pred_fallthru
          _
        // Predicated region
        $region17: #{tpu_custom_call.1} parent=11 // pred_check
          %p151 = pneg %p107
        $region18: #{tpu_custom_call.1} parent=11 // pred_check_branch
          %153 = sbr.rel (%p151) target = $region20
        $region19: #{tpu_custom_call.1} parent=11 // pred_region
          _
        $region20: #{tpu_custom_call.1} parent=11 // pred_fallthru
          _
      $region12: #{tpu_custom_call.1} parent=5 // pred_fallthru
        _
      %p154 = scmp.lt.s32.totalorder %s13, 2
      // Predicated region
      $region21: #{tpu_custom_call.1} parent=5 // pred_check
        %p155 = pneg %p154
      $region22: #{tpu_custom_call.1} parent=5 // pred_check_branch
        %157 = sbr.rel (%p155) target = $region24
      $region23: #{tpu_custom_call.1} parent=5 // pred_region
        // Predicated region
        $region25: #{tpu_custom_call.1} parent=23 // pred_check
          %p158 = pneg %p33
        $region26: #{tpu_custom_call.1} parent=23 // pred_check_branch
          %160 = sbr.rel (%p158) target = $region28
        $region27: #{tpu_custom_call.1} parent=23 // pred_region
          %s161 = smul.u32 64, %s13
          %p162 = scmp.lt.s32.totalorder %s161, 127
          %s163 = scalar_select %p162, %s161, 127
          %s164 = smul.addr %s163, 8
          %s165 = scalar_lea.vmem %s0, %s164
          %s166 = smul.u32 64, %s13
        $region28: #{tpu_custom_call.1} parent=23 // pred_fallthru
          _
        // Predicated region
        $region29: #{tpu_custom_call.1} parent=23 // pred_check
          %p167 = pneg %p59
        $region30: #{tpu_custom_call.1} parent=23 // pred_check_branch
          %169 = sbr.rel (%p167) target = $region32
        $region31: #{tpu_custom_call.1} parent=23 // pred_region
          %s170 = smul.u32 64, %s13
          %p171 = scmp.lt.s32.totalorder %s170, 127
          %s172 = scalar_select %p171, %s170, 127
          %s173 = smul.addr %s172, 8
          %s174 = scalar_lea.vmem %s1, %s173
          %s175 = smul.u32 64, %s13
        $region32: #{tpu_custom_call.1} parent=23 // pred_fallthru
          _
      $region24: #{tpu_custom_call.1} parent=5 // pred_fallthru
        _
      %p176 = scmp.le.s32.totalorder 1, %s13
      %p177 = scmp.lt.s32.totalorder %s13, 3
      %p178 = pnand %p176, %p177
      %p179 = pneg %p178
      // Predicated region
      $region33: #{tpu_custom_call.1} parent=5 // pred_check
        _
      $region34: #{tpu_custom_call.1} parent=5 // pred_check_branch
        %181 = sbr.rel (%p178) target = $region36
      $region35: #{tpu_custom_call.1} parent=5 // pred_region
        %s182 = ssub.s32 %s13, 1
        %s183 = smul.u32 64, %s18
        %p184 = scmp.lt.s32.totalorder %s183, 127
        %s185 = scalar_select %p184, %s183, 127
        %s186 = smul.addr %s185, 8
        %s187 = scalar_lea.vmem %s0, %s186
        %p188 = pneg %p39
        %p189 = pneg %p36
        %s190 = smul.u32 64, %s18
        %p191 = scmp.lt.s32.totalorder %s190, 127
        %s192 = scalar_select %p191, %s190, 127
        %s193 = smul.addr %s192, 8
        %s194 = scalar_lea.vmem %s1, %s193
        %p195 = pneg %p65
        %p196 = pneg %p62
        %p197 = pneg %p86
        %p198 = pneg %p83
        %p199 = pneg %p107
        %p200 = pneg %p104
        %p201 = pneg %p133
        %p202 = pneg %p130
        %s203 = sand.u32 %s120, 1
        %s204 = scalar_lea.sflag [#allocation3], %s203
        %s205 = sand.u32 %s120, 1
        %s206 = smul.addr %s205, 4
        %s207 = scalar_lea.vmem [#allocation2], %s206
        %s208 = smul.u32 64, %s18
        %p209 = scmp.lt.s32.totalorder %s208, 127
        %s210 = scalar_select %p209, %s208, 127
        %s211 = smul.addr %s210, 8
        %s212 = scalar_lea.vmem %s0, %s211
        %s213 = smul.u32 64, %s18
        %s214 = smul.u32 64, %s18
        %p215 = scmp.lt.s32.totalorder %s214, 127
        %s216 = scalar_select %p215, %s214, 127
        %s217 = smul.addr %s216, 8
        %s218 = scalar_lea.vmem %s1, %s217
        %s219 = smul.u32 64, %s18
        %s220 = smul.u32 4, %s18
        %v221 = vld [vmem:[%s218] sm:$0xff]
        %v222 = vld [vmem:[%s218 + $0x8] sm:$0xff]
        %v223 = vld [vmem:[%s218 + $0x10] sm:$0xff]
        %v224 = vld [vmem:[%s218 + $0x18] sm:$0xff]
        %v225 = vld [vmem:[%s218 + $0x20] sm:$0xff]
        %v226 = vld [vmem:[%s218 + $0x28] sm:$0xff]
        %v227 = vld [vmem:[%s218 + $0x30] sm:$0xff]
        %v228 = vld [vmem:[%s218 + $0x38] sm:$0xff]
        %v229 = vld [vmem:[%s218 + $0x40] sm:$0xff]
        %v230 = vld [vmem:[%s218 + $0x48] sm:$0xff]
        %v231 = vld [vmem:[%s218 + $0x50] sm:$0xff]
        %v232 = vld [vmem:[%s218 + $0x58] sm:$0xff]
        %v233 = vld [vmem:[%s218 + $0x60] sm:$0xff]
        %v234 = vld [vmem:[%s218 + $0x68] sm:$0xff]
        %v235 = vld [vmem:[%s218 + $0x70] sm:$0xff]
        %v236 = vld [vmem:[%s218 + $0x78] sm:$0xff]
        %v237 = vld [vmem:[%s218 + $0x80] sm:$0xff]
        %v238 = vld [vmem:[%s218 + $0x88] sm:$0xff]
        %v239 = vld [vmem:[%s218 + $0x90] sm:$0xff]
        %v240 = vld [vmem:[%s218 + $0x98] sm:$0xff]
        %v241 = vld [vmem:[%s218 + $0xa0] sm:$0xff]
        %v242 = vld [vmem:[%s218 + $0xa8] sm:$0xff]
        %v243 = vld [vmem:[%s218 + $0xb0] sm:$0xff]
        %v244 = vld [vmem:[%s218 + $0xb8] sm:$0xff]
        %v245 = vld [vmem:[%s218 + $0xc0] sm:$0xff]
        %v246 = vld [vmem:[%s218 + $0xc8] sm:$0xff]
        %v247 = vld [vmem:[%s218 + $0xd0] sm:$0xff]
        %v248 = vld [vmem:[%s218 + $0xd8] sm:$0xff]
        %v249 = vld [vmem:[%s218 + $0xe0] sm:$0xff]
        %v250 = vld [vmem:[%s218 + $0xe8] sm:$0xff]
        %v251 = vld [vmem:[%s218 + $0xf0] sm:$0xff]
        %v252 = vld [vmem:[%s218 + $0xf8] sm:$0xff]
        %v253 = vld [vmem:[%s218 + $0x100] sm:$0xff]
        %v254 = vld [vmem:[%s218 + $0x108] sm:$0xff]
        %v255 = vld [vmem:[%s218 + $0x110] sm:$0xff]
        %v256 = vld [vmem:[%s218 + $0x118] sm:$0xff]
        %v257 = vld [vmem:[%s218 + $0x120] sm:$0xff]
        %v258 = vld [vmem:[%s218 + $0x128] sm:$0xff]
        %v259 = vld [vmem:[%s218 + $0x130] sm:$0xff]
        %v260 = vld [vmem:[%s218 + $0x138] sm:$0xff]
        %v261 = vld [vmem:[%s218 + $0x140] sm:$0xff]
        %v262 = vld [vmem:[%s218 + $0x148] sm:$0xff]
        %v263 = vld [vmem:[%s218 + $0x150] sm:$0xff]
        %v264 = vld [vmem:[%s218 + $0x158] sm:$0xff]
        %v265 = vld [vmem:[%s218 + $0x160] sm:$0xff]
        %v266 = vld [vmem:[%s218 + $0x168] sm:$0xff]
        %v267 = vld [vmem:[%s218 + $0x170] sm:$0xff]
        %v268 = vld [vmem:[%s218 + $0x178] sm:$0xff]
        %v269 = vld [vmem:[%s218 + $0x180] sm:$0xff]
        %v270 = vld [vmem:[%s218 + $0x188] sm:$0xff]
        %v271 = vld [vmem:[%s218 + $0x190] sm:$0xff]
        %v272 = vld [vmem:[%s218 + $0x198] sm:$0xff]
        %v273 = vld [vmem:[%s218 + $0x1a0] sm:$0xff]
        %v274 = vld [vmem:[%s218 + $0x1a8] sm:$0xff]
        %v275 = vld [vmem:[%s218 + $0x1b0] sm:$0xff]
        %v276 = vld [vmem:[%s218 + $0x1b8] sm:$0xff]
        %v277 = vld [vmem:[%s218 + $0x1c0] sm:$0xff]
        %v278 = vld [vmem:[%s218 + $0x1c8] sm:$0xff]
        %v279 = vld [vmem:[%s218 + $0x1d0] sm:$0xff]
        %v280 = vld [vmem:[%s218 + $0x1d8] sm:$0xff]
        %v281 = vld [vmem:[%s218 + $0x1e0] sm:$0xff]
        %v282 = vld [vmem:[%s218 + $0x1e8] sm:$0xff]
        %v283 = vld [vmem:[%s218 + $0x1f0] sm:$0xff]
        %v284 = vld [vmem:[%s218 + $0x1f8] sm:$0xff]
        %v285 = vlaneseq
        %v286 = vand.u32 %v285, 127
        %v287 = vld [vmem:[%s212] sm:$0xff]
        %v288 = vld [vmem:[%s212 + $0x8] sm:$0xff]
        %v289 = vld [vmem:[%s212 + $0x10] sm:$0xff]
        %v290 = vld [vmem:[%s212 + $0x18] sm:$0xff]
        %v291 = vld [vmem:[%s212 + $0x20] sm:$0xff]
        %v292 = vld [vmem:[%s212 + $0x28] sm:$0xff]
        %v293 = vld [vmem:[%s212 + $0x30] sm:$0xff]
        %v294 = vld [vmem:[%s212 + $0x38] sm:$0xff]
        %v295 = vld [vmem:[%s212 + $0x40] sm:$0xff]
        %v296 = vld [vmem:[%s212 + $0x48] sm:$0xff]
        %v297 = vld [vmem:[%s212 + $0x50] sm:$0xff]
        %v298 = vld [vmem:[%s212 + $0x58] sm:$0xff]
        %v299 = vld [vmem:[%s212 + $0x60] sm:$0xff]
        %v300 = vld [vmem:[%s212 + $0x68] sm:$0xff]
        %v301 = vld [vmem:[%s212 + $0x70] sm:$0xff]
        %v302 = vld [vmem:[%s212 + $0x78] sm:$0xff]
        %v303 = vld [vmem:[%s212 + $0x80] sm:$0xff]
        %v304 = vld [vmem:[%s212 + $0x88] sm:$0xff]
        %v305 = vld [vmem:[%s212 + $0x90] sm:$0xff]
        %v306 = vld [vmem:[%s212 + $0x98] sm:$0xff]
        %v307 = vld [vmem:[%s212 + $0xa0] sm:$0xff]
        %v308 = vld [vmem:[%s212 + $0xa8] sm:$0xff]
        %v309 = vld [vmem:[%s212 + $0xb0] sm:$0xff]
        %v310 = vld [vmem:[%s212 + $0xb8] sm:$0xff]
        %v311 = vld [vmem:[%s212 + $0xc0] sm:$0xff]
        %v312 = vld [vmem:[%s212 + $0xc8] sm:$0xff]
        %v313 = vld [vmem:[%s212 + $0xd0] sm:$0xff]
        %v314 = vld [vmem:[%s212 + $0xd8] sm:$0xff]
        %v315 = vld [vmem:[%s212 + $0xe0] sm:$0xff]
        %v316 = vld [vmem:[%s212 + $0xe8] sm:$0xff]
        %v317 = vld [vmem:[%s212 + $0xf0] sm:$0xff]
        %v318 = vld [vmem:[%s212 + $0xf8] sm:$0xff]
        %v319 = vld [vmem:[%s212 + $0x100] sm:$0xff]
        %v320 = vld [vmem:[%s212 + $0x108] sm:$0xff]
        %v321 = vld [vmem:[%s212 + $0x110] sm:$0xff]
        %v322 = vld [vmem:[%s212 + $0x118] sm:$0xff]
        %v323 = vld [vmem:[%s212 + $0x120] sm:$0xff]
        %v324 = vld [vmem:[%s212 + $0x128] sm:$0xff]
        %v325 = vld [vmem:[%s212 + $0x130] sm:$0xff]
        %v326 = vld [vmem:[%s212 + $0x138] sm:$0xff]
        %v327 = vld [vmem:[%s212 + $0x140] sm:$0xff]
        %v328 = vld [vmem:[%s212 + $0x148] sm:$0xff]
        %v329 = vld [vmem:[%s212 + $0x150] sm:$0xff]
        %v330 = vld [vmem:[%s212 + $0x158] sm:$0xff]
        %v331 = vld [vmem:[%s212 + $0x160] sm:$0xff]
        %v332 = vld [vmem:[%s212 + $0x168] sm:$0xff]
        %v333 = vld [vmem:[%s212 + $0x170] sm:$0xff]
        %v334 = vld [vmem:[%s212 + $0x178] sm:$0xff]
        %v335 = vld [vmem:[%s212 + $0x180] sm:$0xff]
        %v336 = vld [vmem:[%s212 + $0x188] sm:$0xff]
        %v337 = vld [vmem:[%s212 + $0x190] sm:$0xff]
        %v338 = vld [vmem:[%s212 + $0x198] sm:$0xff]
        %v339 = vld [vmem:[%s212 + $0x1a0] sm:$0xff]
        %v340 = vld [vmem:[%s212 + $0x1a8] sm:$0xff]
        %v341 = vld [vmem:[%s212 + $0x1b0] sm:$0xff]
        %v342 = vld [vmem:[%s212 + $0x1b8] sm:$0xff]
        %v343 = vld [vmem:[%s212 + $0x1c0] sm:$0xff]
        %v344 = vld [vmem:[%s212 + $0x1c8] sm:$0xff]
        %v345 = vld [vmem:[%s212 + $0x1d0] sm:$0xff]
        %v346 = vld [vmem:[%s212 + $0x1d8] sm:$0xff]
        %v347 = vld [vmem:[%s212 + $0x1e0] sm:$0xff]
        %v348 = vld [vmem:[%s212 + $0x1e8] sm:$0xff]
        %v349 = vld [vmem:[%s212 + $0x1f0] sm:$0xff]
        %v350 = vld [vmem:[%s212 + $0x1f8] sm:$0xff]
        %351 = vset.pattern.permute.xlu0 0
        %352 = vperm.xlu0 %351, %v287
        %v353 = vpop.permute.xlu0 %352
        %354 = vset.pattern.permute.xlu0 0
        %355 = vperm.xlu0 %354, %v288
        %v356 = vpop.permute.xlu0 %355
        %357 = vset.pattern.permute.xlu0 0
        %358 = vperm.xlu0 %357, %v289
        %v359 = vpop.permute.xlu0 %358
        %360 = vset.pattern.permute.xlu0 0
        %361 = vperm.xlu0 %360, %v290
        %v362 = vpop.permute.xlu0 %361
        %363 = vset.pattern.permute.xlu0 0
        %364 = vperm.xlu0 %363, %v291
        %v365 = vpop.permute.xlu0 %364
        %366 = vset.pattern.permute.xlu0 0
        %367 = vperm.xlu0 %366, %v292
        %v368 = vpop.permute.xlu0 %367
        %369 = vset.pattern.permute.xlu0 0
        %370 = vperm.xlu0 %369, %v293
        %v371 = vpop.permute.xlu0 %370
        %372 = vset.pattern.permute.xlu0 0
        %373 = vperm.xlu0 %372, %v294
        %v374 = vpop.permute.xlu0 %373
        %375 = vset.pattern.permute.xlu0 0
        %376 = vperm.xlu0 %375, %v295
        %v377 = vpop.permute.xlu0 %376
        %378 = vset.pattern.permute.xlu0 0
        %379 = vperm.xlu0 %378, %v296
        %v380 = vpop.permute.xlu0 %379
        %381 = vset.pattern.permute.xlu0 0
        %382 = vperm.xlu0 %381, %v297
        %v383 = vpop.permute.xlu0 %382
        %384 = vset.pattern.permute.xlu0 0
        %385 = vperm.xlu0 %384, %v298
        %v386 = vpop.permute.xlu0 %385
        %387 = vset.pattern.permute.xlu0 0
        %388 = vperm.xlu0 %387, %v299
        %v389 = vpop.permute.xlu0 %388
        %390 = vset.pattern.permute.xlu0 0
        %391 = vperm.xlu0 %390, %v300
        %v392 = vpop.permute.xlu0 %391
        %393 = vset.pattern.permute.xlu0 0
        %394 = vperm.xlu0 %393, %v301
        %v395 = vpop.permute.xlu0 %394
        %396 = vset.pattern.permute.xlu0 0
        %397 = vperm.xlu0 %396, %v302
        %v398 = vpop.permute.xlu0 %397
        %399 = vset.pattern.permute.xlu0 0
        %400 = vperm.xlu0 %399, %v303
        %v401 = vpop.permute.xlu0 %400
        %402 = vset.pattern.permute.xlu0 0
        %403 = vperm.xlu0 %402, %v304
        %v404 = vpop.permute.xlu0 %403
        %405 = vset.pattern.permute.xlu0 0
        %406 = vperm.xlu0 %405, %v305
        %v407 = vpop.permute.xlu0 %406
        %408 = vset.pattern.permute.xlu0 0
        %409 = vperm.xlu0 %408, %v306
        %v410 = vpop.permute.xlu0 %409
        %411 = vset.pattern.permute.xlu0 0
        %412 = vperm.xlu0 %411, %v307
        %v413 = vpop.permute.xlu0 %412
        %414 = vset.pattern.permute.xlu0 0
        %415 = vperm.xlu0 %414, %v308
        %v416 = vpop.permute.xlu0 %415
        %417 = vset.pattern.permute.xlu0 0
        %418 = vperm.xlu0 %417, %v309
        %v419 = vpop.permute.xlu0 %418
        %420 = vset.pattern.permute.xlu0 0
        %421 = vperm.xlu0 %420, %v310
        %v422 = vpop.permute.xlu0 %421
        %423 = vset.pattern.permute.xlu0 0
        %424 = vperm.xlu0 %423, %v311
        %v425 = vpop.permute.xlu0 %424
        %426 = vset.pattern.permute.xlu0 0
        %427 = vperm.xlu0 %426, %v312
        %v428 = vpop.permute.xlu0 %427
        %429 = vset.pattern.permute.xlu0 0
        %430 = vperm.xlu0 %429, %v313
        %v431 = vpop.permute.xlu0 %430
        %432 = vset.pattern.permute.xlu0 0
        %433 = vperm.xlu0 %432, %v314
        %v434 = vpop.permute.xlu0 %433
        %435 = vset.pattern.permute.xlu0 0
        %436 = vperm.xlu0 %435, %v315
        %v437 = vpop.permute.xlu0 %436
        %438 = vset.pattern.permute.xlu0 0
        %439 = vperm.xlu0 %438, %v316
        %v440 = vpop.permute.xlu0 %439
        %441 = vset.pattern.permute.xlu0 0
        %442 = vperm.xlu0 %441, %v317
        %v443 = vpop.permute.xlu0 %442
        %444 = vset.pattern.permute.xlu0 0
        %445 = vperm.xlu0 %444, %v318
        %v446 = vpop.permute.xlu0 %445
        %447 = vset.pattern.permute.xlu0 0
        %448 = vperm.xlu0 %447, %v319
        %v449 = vpop.permute.xlu0 %448
        %450 = vset.pattern.permute.xlu0 0
        %451 = vperm.xlu0 %450, %v320
        %v452 = vpop.permute.xlu0 %451
        %453 = vset.pattern.permute.xlu0 0
        %454 = vperm.xlu0 %453, %v321
        %v455 = vpop.permute.xlu0 %454
        %456 = vset.pattern.permute.xlu0 0
        %457 = vperm.xlu0 %456, %v322
        %v458 = vpop.permute.xlu0 %457
        %459 = vset.pattern.permute.xlu0 0
        %460 = vperm.xlu0 %459, %v323
        %v461 = vpop.permute.xlu0 %460
        %462 = vset.pattern.permute.xlu0 0
        %463 = vperm.xlu0 %462, %v324
        %v464 = vpop.permute.xlu0 %463
        %465 = vset.pattern.permute.xlu0 0
        %466 = vperm.xlu0 %465, %v325
        %v467 = vpop.permute.xlu0 %466
        %468 = vset.pattern.permute.xlu0 0
        %469 = vperm.xlu0 %468, %v326
        %v470 = vpop.permute.xlu0 %469
        %471 = vset.pattern.permute.xlu0 0
        %472 = vperm.xlu0 %471, %v327
        %v473 = vpop.permute.xlu0 %472
        %474 = vset.pattern.permute.xlu0 0
        %475 = vperm.xlu0 %474, %v328
        %v476 = vpop.permute.xlu0 %475
        %477 = vset.pattern.permute.xlu0 0
        %478 = vperm.xlu0 %477, %v329
        %v479 = vpop.permute.xlu0 %478
        %480 = vset.pattern.permute.xlu0 0
        %481 = vperm.xlu0 %480, %v330
        %v482 = vpop.permute.xlu0 %481
        %483 = vset.pattern.permute.xlu0 0
        %484 = vperm.xlu0 %483, %v331
        %v485 = vpop.permute.xlu0 %484
        %486 = vset.pattern.permute.xlu0 0
        %487 = vperm.xlu0 %486, %v332
        %v488 = vpop.permute.xlu0 %487
        %489 = vset.pattern.permute.xlu0 0
        %490 = vperm.xlu0 %489, %v333
        %v491 = vpop.permute.xlu0 %490
        %492 = vset.pattern.permute.xlu0 0
        %493 = vperm.xlu0 %492, %v334
        %v494 = vpop.permute.xlu0 %493
        %495 = vset.pattern.permute.xlu0 0
        %496 = vperm.xlu0 %495, %v335
        %v497 = vpop.permute.xlu0 %496
        %498 = vset.pattern.permute.xlu0 0
        %499 = vperm.xlu0 %498, %v336
        %v500 = vpop.permute.xlu0 %499
        %501 = vset.pattern.permute.xlu0 0
        %502 = vperm.xlu0 %501, %v337
        %v503 = vpop.permute.xlu0 %502
        %504 = vset.pattern.permute.xlu0 0
        %505 = vperm.xlu0 %504, %v338
        %v506 = vpop.permute.xlu0 %505
        %507 = vset.pattern.permute.xlu0 0
        %508 = vperm.xlu0 %507, %v339
        %v509 = vpop.permute.xlu0 %508
        %510 = vset.pattern.permute.xlu0 0
        %511 = vperm.xlu0 %510, %v340
        %v512 = vpop.permute.xlu0 %511
        %513 = vset.pattern.permute.xlu0 0
        %514 = vperm.xlu0 %513, %v341
        %v515 = vpop.permute.xlu0 %514
        %516 = vset.pattern.permute.xlu0 0
        %517 = vperm.xlu0 %516, %v342
        %v518 = vpop.permute.xlu0 %517
        %519 = vset.pattern.permute.xlu0 0
        %520 = vperm.xlu0 %519, %v343
        %v521 = vpop.permute.xlu0 %520
        %522 = vset.pattern.permute.xlu0 0
        %523 = vperm.xlu0 %522, %v344
        %v524 = vpop.permute.xlu0 %523
        %525 = vset.pattern.permute.xlu0 0
        %526 = vperm.xlu0 %525, %v345
        %v527 = vpop.permute.xlu0 %526
        %528 = vset.pattern.permute.xlu0 0
        %529 = vperm.xlu0 %528, %v346
        %v530 = vpop.permute.xlu0 %529
        %531 = vset.pattern.permute.xlu0 0
        %532 = vperm.xlu0 %531, %v347
        %v533 = vpop.permute.xlu0 %532
        %534 = vset.pattern.permute.xlu0 0
        %535 = vperm.xlu0 %534, %v348
        %v536 = vpop.permute.xlu0 %535
        %537 = vset.pattern.permute.xlu0 0
        %538 = vperm.xlu0 %537, %v349
        %v539 = vpop.permute.xlu0 %538
        %540 = vset.pattern.permute.xlu0 0
        %541 = vperm.xlu0 %540, %v350
        %v542 = vpop.permute.xlu0 %541
        %vm543 = vcmp.eq.s32.totalorder %v353, %v286
        %vm544 = vcmp.eq.s32.totalorder %v356, %v286
        %vm545 = vcmp.eq.s32.totalorder %v359, %v286
        %vm546 = vcmp.eq.s32.totalorder %v362, %v286
        %vm547 = vcmp.eq.s32.totalorder %v365, %v286
        %vm548 = vcmp.eq.s32.totalorder %v368, %v286
        %vm549 = vcmp.eq.s32.totalorder %v371, %v286
        %vm550 = vcmp.eq.s32.totalorder %v374, %v286
        %vm551 = vcmp.eq.s32.totalorder %v377, %v286
        %vm552 = vcmp.eq.s32.totalorder %v380, %v286
        %vm553 = vcmp.eq.s32.totalorder %v383, %v286
        %vm554 = vcmp.eq.s32.totalorder %v386, %v286
        %vm555 = vcmp.eq.s32.totalorder %v389, %v286
        %vm556 = vcmp.eq.s32.totalorder %v392, %v286
        %vm557 = vcmp.eq.s32.totalorder %v395, %v286
        %vm558 = vcmp.eq.s32.totalorder %v398, %v286
        %vm559 = vcmp.eq.s32.totalorder %v401, %v286
        %vm560 = vcmp.eq.s32.totalorder %v404, %v286
        %vm561 = vcmp.eq.s32.totalorder %v407, %v286
        %vm562 = vcmp.eq.s32.totalorder %v410, %v286
        %vm563 = vcmp.eq.s32.totalorder %v413, %v286
        %vm564 = vcmp.eq.s32.totalorder %v416, %v286
        %vm565 = vcmp.eq.s32.totalorder %v419, %v286
        %vm566 = vcmp.eq.s32.totalorder %v422, %v286
        %vm567 = vcmp.eq.s32.totalorder %v425, %v286
        %vm568 = vcmp.eq.s32.totalorder %v428, %v286
        %vm569 = vcmp.eq.s32.totalorder %v431, %v286
        %vm570 = vcmp.eq.s32.totalorder %v434, %v286
        %vm571 = vcmp.eq.s32.totalorder %v437, %v286
        %vm572 = vcmp.eq.s32.totalorder %v440, %v286
        %vm573 = vcmp.eq.s32.totalorder %v443, %v286
        %vm574 = vcmp.eq.s32.totalorder %v446, %v286
        %vm575 = vcmp.eq.s32.totalorder %v449, %v286
        %vm576 = vcmp.eq.s32.totalorder %v452, %v286
        %vm577 = vcmp.eq.s32.totalorder %v455, %v286
        %vm578 = vcmp.eq.s32.totalorder %v458, %v286
        %vm579 = vcmp.eq.s32.totalorder %v461, %v286
        %vm580 = vcmp.eq.s32.totalorder %v464, %v286
        %vm581 = vcmp.eq.s32.totalorder %v467, %v286
        %vm582 = vcmp.eq.s32.totalorder %v470, %v286
        %vm583 = vcmp.eq.s32.totalorder %v473, %v286
        %vm584 = vcmp.eq.s32.totalorder %v476, %v286
        %vm585 = vcmp.eq.s32.totalorder %v479, %v286
        %vm586 = vcmp.eq.s32.totalorder %v482, %v286
        %vm587 = vcmp.eq.s32.totalorder %v485, %v286
        %vm588 = vcmp.eq.s32.totalorder %v488, %v286
        %vm589 = vcmp.eq.s32.totalorder %v491, %v286
        %vm590 = vcmp.eq.s32.totalorder %v494, %v286
        %vm591 = vcmp.eq.s32.totalorder %v497, %v286
        %vm592 = vcmp.eq.s32.totalorder %v500, %v286
        %vm593 = vcmp.eq.s32.totalorder %v503, %v286
        %vm594 = vcmp.eq.s32.totalorder %v506, %v286
        %vm595 = vcmp.eq.s32.totalorder %v509, %v286
        %vm596 = vcmp.eq.s32.totalorder %v512, %v286
        %vm597 = vcmp.eq.s32.totalorder %v515, %v286
        %vm598 = vcmp.eq.s32.totalorder %v518, %v286
        %vm599 = vcmp.eq.s32.totalorder %v521, %v286
        %vm600 = vcmp.eq.s32.totalorder %v524, %v286
        %vm601 = vcmp.eq.s32.totalorder %v527, %v286
        %vm602 = vcmp.eq.s32.totalorder %v530, %v286
        %vm603 = vcmp.eq.s32.totalorder %v533, %v286
        %vm604 = vcmp.eq.s32.totalorder %v536, %v286
        %vm605 = vcmp.eq.s32.totalorder %v539, %v286
        %vm606 = vcmp.eq.s32.totalorder %v542, %v286
        %v607 = vsel %vm543, 1, 0
        %v608 = vsel %vm544, 1, 0
        %v609 = vsel %vm545, 1, 0
        %v610 = vsel %vm546, 1, 0
        %v611 = vsel %vm547, 1, 0
        %v612 = vsel %vm548, 1, 0
        %v613 = vsel %vm549, 1, 0
        %v614 = vsel %vm550, 1, 0
        %v615 = vsel %vm551, 1, 0
        %v616 = vsel %vm552, 1, 0
        %v617 = vsel %vm553, 1, 0
        %v618 = vsel %vm554, 1, 0
        %v619 = vsel %vm555, 1, 0
        %v620 = vsel %vm556, 1, 0
        %v621 = vsel %vm557, 1, 0
        %v622 = vsel %vm558, 1, 0
        %v623 = vsel %vm559, 1, 0
        %v624 = vsel %vm560, 1, 0
        %v625 = vsel %vm561, 1, 0
        %v626 = vsel %vm562, 1, 0
        %v627 = vsel %vm563, 1, 0
        %v628 = vsel %vm564, 1, 0
        %v629 = vsel %vm565, 1, 0
        %v630 = vsel %vm566, 1, 0
        %v631 = vsel %vm567, 1, 0
        %v632 = vsel %vm568, 1, 0
        %v633 = vsel %vm569, 1, 0
        %v634 = vsel %vm570, 1, 0
        %v635 = vsel %vm571, 1, 0
        %v636 = vsel %vm572, 1, 0
        %v637 = vsel %vm573, 1, 0
        %v638 = vsel %vm574, 1, 0
        %v639 = vsel %vm575, 1, 0
        %v640 = vsel %vm576, 1, 0
        %v641 = vsel %vm577, 1, 0
        %v642 = vsel %vm578, 1, 0
        %v643 = vsel %vm579, 1, 0
        %v644 = vsel %vm580, 1, 0
        %v645 = vsel %vm581, 1, 0
        %v646 = vsel %vm582, 1, 0
        %v647 = vsel %vm583, 1, 0
        %v648 = vsel %vm584, 1, 0
        %v649 = vsel %vm585, 1, 0
        %v650 = vsel %vm586, 1, 0
        %v651 = vsel %vm587, 1, 0
        %v652 = vsel %vm588, 1, 0
        %v653 = vsel %vm589, 1, 0
        %v654 = vsel %vm590, 1, 0
        %v655 = vsel %vm591, 1, 0
        %v656 = vsel %vm592, 1, 0
        %v657 = vsel %vm593, 1, 0
        %v658 = vsel %vm594, 1, 0
        %v659 = vsel %vm595, 1, 0
        %v660 = vsel %vm596, 1, 0
        %v661 = vsel %vm597, 1, 0
        %v662 = vsel %vm598, 1, 0
        %v663 = vsel %vm599, 1, 0
        %v664 = vsel %vm600, 1, 0
        %v665 = vsel %vm601, 1, 0
        %v666 = vsel %vm602, 1, 0
        %v667 = vsel %vm603, 1, 0
        %v668 = vsel %vm604, 1, 0
        %v669 = vsel %vm605, 1, 0
        %v670 = vsel %vm606, 1, 0
        %v671 = vcvt.s32.f32 %v607
        %v672 = vcvt.s32.f32 %v608
        %v673 = vcvt.s32.f32 %v609
        %v674 = vcvt.s32.f32 %v610
        %v675 = vcvt.s32.f32 %v611
        %v676 = vcvt.s32.f32 %v612
        %v677 = vcvt.s32.f32 %v613
        %v678 = vcvt.s32.f32 %v614
        %v679 = vcvt.s32.f32 %v615
        %v680 = vcvt.s32.f32 %v616
        %v681 = vcvt.s32.f32 %v617
        %v682 = vcvt.s32.f32 %v618
        %v683 = vcvt.s32.f32 %v619
        %v684 = vcvt.s32.f32 %v620
        %v685 = vcvt.s32.f32 %v621
        %v686 = vcvt.s32.f32 %v622
        %v687 = vcvt.s32.f32 %v623
        %v688 = vcvt.s32.f32 %v624
        %v689 = vcvt.s32.f32 %v625
        %v690 = vcvt.s32.f32 %v626
        %v691 = vcvt.s32.f32 %v627
        %v692 = vcvt.s32.f32 %v628
        %v693 = vcvt.s32.f32 %v629
        %v694 = vcvt.s32.f32 %v630
        %v695 = vcvt.s32.f32 %v631
        %v696 = vcvt.s32.f32 %v632
        %v697 = vcvt.s32.f32 %v633
        %v698 = vcvt.s32.f32 %v634
        %v699 = vcvt.s32.f32 %v635
        %v700 = vcvt.s32.f32 %v636
        %v701 = vcvt.s32.f32 %v637
        %v702 = vcvt.s32.f32 %v638
        %v703 = vcvt.s32.f32 %v639
        %v704 = vcvt.s32.f32 %v640
        %v705 = vcvt.s32.f32 %v641
        %v706 = vcvt.s32.f32 %v642
        %v707 = vcvt.s32.f32 %v643
        %v708 = vcvt.s32.f32 %v644
        %v709 = vcvt.s32.f32 %v645
        %v710 = vcvt.s32.f32 %v646
        %v711 = vcvt.s32.f32 %v647
        %v712 = vcvt.s32.f32 %v648
        %v713 = vcvt.s32.f32 %v649
        %v714 = vcvt.s32.f32 %v650
        %v715 = vcvt.s32.f32 %v651
        %v716 = vcvt.s32.f32 %v652
        %v717 = vcvt.s32.f32 %v653
        %v718 = vcvt.s32.f32 %v654
        %v719 = vcvt.s32.f32 %v655
        %v720 = vcvt.s32.f32 %v656
        %v721 = vcvt.s32.f32 %v657
        %v722 = vcvt.s32.f32 %v658
        %v723 = vcvt.s32.f32 %v659
        %v724 = vcvt.s32.f32 %v660
        %v725 = vcvt.s32.f32 %v661
        %v726 = vcvt.s32.f32 %v662
        %v727 = vcvt.s32.f32 %v663
        %v728 = vcvt.s32.f32 %v664
        %v729 = vcvt.s32.f32 %v665
        %v730 = vcvt.s32.f32 %v666
        %v731 = vcvt.s32.f32 %v667
        %v732 = vcvt.s32.f32 %v668
        %v733 = vcvt.s32.f32 %v669
        %v734 = vcvt.s32.f32 %v670
        %v735 = vld [vmem:[%s2] sm:$0xff]
        %v736 = vld [vmem:[%s2 + $0x8] sm:$0xff]
        %v737 = vld [vmem:[%s2 + $0x10] sm:$0xff]
        %v738 = vld [vmem:[%s2 + $0x18] sm:$0xff]
        %vm739 = vcmask 261120
        %v741 = vsel %vm739, %v221, 0
        %v744 = vsel %vm739, %v222, 0
        %v747 = vsel %vm739, %v223, 0
        %v750 = vsel %vm739, %v224, 0
        %v753 = vsel %vm739, %v225, 0
        %v756 = vsel %vm739, %v226, 0
        %v759 = vsel %vm739, %v227, 0
        %v762 = vsel %vm739, %v228, 0
        %v765 = vsel %vm739, %v229, 0
        %v768 = vsel %vm739, %v230, 0
        %v771 = vsel %vm739, %v231, 0
        %v774 = vsel %vm739, %v232, 0
        %v777 = vsel %vm739, %v233, 0
        %v780 = vsel %vm739, %v234, 0
        %v783 = vsel %vm739, %v235, 0
        %v786 = vsel %vm739, %v236, 0
        %v789 = vsel %vm739, %v237, 0
        %v792 = vsel %vm739, %v238, 0
        %v795 = vsel %vm739, %v239, 0
        %v798 = vsel %vm739, %v240, 0
        %v801 = vsel %vm739, %v241, 0
        %v804 = vsel %vm739, %v242, 0
        %v807 = vsel %vm739, %v243, 0
        %v810 = vsel %vm739, %v244, 0
        %v813 = vsel %vm739, %v245, 0
        %v816 = vsel %vm739, %v246, 0
        %v819 = vsel %vm739, %v247, 0
        %v822 = vsel %vm739, %v248, 0
        %v825 = vsel %vm739, %v249, 0
        %v828 = vsel %vm739, %v250, 0
        %v831 = vsel %vm739, %v251, 0
        %v834 = vsel %vm739, %v252, 0
        %v837 = vsel %vm739, %v253, 0
        %v840 = vsel %vm739, %v254, 0
        %v843 = vsel %vm739, %v255, 0
        %v846 = vsel %vm739, %v256, 0
        %v849 = vsel %vm739, %v257, 0
        %v852 = vsel %vm739, %v258, 0
        %v855 = vsel %vm739, %v259, 0
        %v858 = vsel %vm739, %v260, 0
        %v861 = vsel %vm739, %v261, 0
        %v864 = vsel %vm739, %v262, 0
        %v867 = vsel %vm739, %v263, 0
        %v870 = vsel %vm739, %v264, 0
        %v873 = vsel %vm739, %v265, 0
        %v876 = vsel %vm739, %v266, 0
        %v879 = vsel %vm739, %v267, 0
        %v882 = vsel %vm739, %v268, 0
        %v885 = vsel %vm739, %v269, 0
        %v888 = vsel %vm739, %v270, 0
        %v891 = vsel %vm739, %v271, 0
        %v894 = vsel %vm739, %v272, 0
        %v897 = vsel %vm739, %v273, 0
        %v900 = vsel %vm739, %v274, 0
        %v903 = vsel %vm739, %v275, 0
        %v906 = vsel %vm739, %v276, 0
        %v909 = vsel %vm739, %v277, 0
        %v912 = vsel %vm739, %v278, 0
        %v915 = vsel %vm739, %v279, 0
        %v918 = vsel %vm739, %v280, 0
        %v921 = vsel %vm739, %v281, 0
        %v924 = vsel %vm739, %v282, 0
        %v927 = vsel %vm739, %v283, 0
        %v930 = vsel %vm739, %v284, 0
        %932 = vmatprep.subr.mxu0 0.0
        %933 = vmatpush1.msra.mxu0 %v735
        %934 = vmatprep.subr.mxu0 0.0
        %935 = vmatpush1.msra.mxu0 %v736
        %936 = vmatprep.subr.mxu0 0.0
        %937 = vmatpush1.msra.mxu0 %v737
        %938 = vmatprep.subr.mxu0 0.0
        %939 = vmatpush1.msra.mxu0 %v738
        %940 = vmatprep.subr.mxu0 0.0
        %941 = vmatpush1.msra.mxu0 0.0
        %942 = vmatprep.subr.mxu0 0.0
        %943 = vmatpush1.msra.mxu0 0.0
        %944 = vmatprep.subr.mxu0 0.0
        %945 = vmatpush1.msra.mxu0 0.0
        %946 = vmatprep.subr.mxu0 0.0
        %947 = vmatpush1.msra.mxu0 0.0
        %948 = vmatprep.subr.mxu0 0.0
        %949 = vmatpush1.msra.mxu0 0.0
        %950 = vmatprep.subr.mxu0 0.0
        %951 = vmatpush1.msra.mxu0 0.0
        %952 = vmatprep.subr.mxu0 0.0
        %953 = vmatpush1.msra.mxu0 0.0
        %954 = vmatprep.subr.mxu0 0.0
        %955 = vmatpush1.msra.mxu0 0.0
        %956 = vmatprep.subr.mxu0 0.0
        %957 = vmatpush1.msra.mxu0 0.0
        %958 = vmatprep.subr.mxu0 0.0
        %959 = vmatpush1.msra.mxu0 0.0
        %960 = vmatprep.subr.mxu0 0.0
        %961 = vmatpush1.msra.mxu0 0.0
        %962 = vmatprep.subr.mxu0 0.0
        %963 = vmatpush1.msra.mxu0 0.0
        %964 = vmatprep.subr.mxu0 0.0
        %965 = vmatpush1.msra.mxu0 0.0
        %966 = vmatprep.subr.mxu0 0.0
        %967 = vmatpush1.msra.mxu0 0.0
        %968 = vmatprep.subr.mxu0 0.0
        %969 = vmatpush1.msra.mxu0 0.0
        %970 = vmatprep.subr.mxu0 0.0
        %971 = vmatpush1.msra.mxu0 0.0
        %972 = vmatprep.subr.mxu0 0.0
        %973 = vmatpush1.msra.mxu0 0.0
        %974 = vmatprep.subr.mxu0 0.0
        %975 = vmatpush1.msra.mxu0 0.0
        %976 = vmatprep.subr.mxu0 0.0
        %977 = vmatpush1.msra.mxu0 0.0
        %978 = vmatprep.subr.mxu0 0.0
        %979 = vmatpush1.msra.mxu0 0.0
        %980 = vmatprep.subr.mxu0 0.0
        %981 = vmatpush1.msra.mxu0 0.0
        %982 = vmatprep.subr.mxu0 0.0
        %983 = vmatpush1.msra.mxu0 0.0
        %984 = vmatprep.subr.mxu0 0.0
        %985 = vmatpush1.msra.mxu0 0.0
        %986 = vmatprep.subr.mxu0 0.0
        %987 = vmatpush1.msra.mxu0 0.0
        %988 = vmatprep.subr.mxu0 0.0
        %989 = vmatpush1.msra.mxu0 0.0
        %990 = vmatprep.subr.mxu0 0.0
        %991 = vmatpush1.msra.mxu0 0.0
        %992 = vmatprep.subr.mxu0 0.0
        %993 = vmatpush1.msra.mxu0 0.0
        %994 = vmatprep.subr.mxu0 0.0
        %995 = vmatpush1.msra.mxu0 0.0
        %996 = vmatprep.mubr.f32.mxu0 0.0
        %997 = vmatmul.mubr.f32.gmra.mrb[0].mxu0 %v741
        %v998 = vpop.f32.mrb[0].mxu0
        %v999 = vadd.f32 0.0, %v998
        %v1000 = vpop.f32.mrb[0].mxu0
        %1001 = vmatprep.mubr.f32.mxu0 0.0
        %1002 = vmatmul.mubr.f32.gmra.mrb[0].mxu0 %v744
        %v1003 = vpop.f32.mrb[0].mxu0
        %v1004 = vadd.f32 0.0, %v1003
        %v1005 = vpop.f32.mrb[0].mxu0
        %1006 = vmatprep.mubr.f32.mxu0 0.0
        %1007 = vmatmul.mubr.f32.gmra.mrb[0].mxu0 %v747
        %v1008 = vpop.f32.mrb[0].mxu0
        %v1009 = vadd.f32 0.0, %v1008
        %v1010 = vpop.f32.mrb[0].mxu0
        %1011 = vmatprep.mubr.f32.mxu0 0.0
        %1012 = vmatmul.mubr.f32.gmra.mrb[0].mxu0 %v750
        %v1013 = vpop.f32.mrb[0].mxu0
        %v1014 = vadd.f32 0.0, %v1013
        %v1015 = vpop.f32.mrb[0].mxu0
        %1016 = vmatprep.mubr.f32.mxu0 0.0
        %1017 = vmatmul.mubr.f32.gmra.mrb[0].mxu0 %v753
        %v1018 = vpop.f32.mrb[0].mxu0
        %v1019 = vadd.f32 0.0, %v1018
        %v1020 = vpop.f32.mrb[0].mxu0
        %1021 = vmatprep.mubr.f32.mxu0 0.0
        %1022 = vmatmul.mubr.f32.gmra.mrb[0].mxu0 %v756
        %v1023 = vpop.f32.mrb[0].mxu0
        %v1024 = vadd.f32 0.0, %v1023
        %v1025 = vpop.f32.mrb[0].mxu0
        %1026 = vmatprep.mubr.f32.mxu0 0.0
        %1027 = vmatmul.mubr.f32.gmra.mrb[0].mxu0 %v759
        %v1028 = vpop.f32.mrb[0].mxu0
        %v1029 = vadd.f32 0.0, %v1028
        %v1030 = vpop.f32.mrb[0].mxu0
        %1031 = vmatprep.mubr.f32.mxu0 0.0
        %1032 = vmatmul.mubr.f32.gmra.mrb[0].mxu0 %v762
        %v1033 = vpop.f32.mrb[0].mxu0
        %v1034 = vadd.f32 0.0, %v1033
        %v1035 = vpop.f32.mrb[0].mxu0
        %1036 = vmatprep.mubr.f32.mxu0 0.0
        %1037 = vmatmul.mubr.f32.gmra.mrb[0].mxu0 %v765
        %v1038 = vpop.f32.mrb[0].mxu0
        %v1039 = vadd.f32 0.0, %v1038
        %v1040 = vpop.f32.mrb[0].mxu0
        %1041 = vmatprep.mubr.f32.mxu0 0.0
        %1042 = vmatmul.mubr.f32.gmra.mrb[0].mxu0 %v768
        %v1043 = vpop.f32.mrb[0].mxu0
        %v1044 = vadd.f32 0.0, %v1043
        %v1045 = vpop.f32.mrb[0].mxu0
        %1046 = vmatprep.mubr.f32.mxu0 0.0
        %1047 = vmatmul.mubr.f32.gmra.mrb[0].mxu0 %v771
        %v1048 = vpop.f32.mrb[0].mxu0
        %v1049 = vadd.f32 0.0, %v1048
        %v1050 = vpop.f32.mrb[0].mxu0
        %1051 = vmatprep.mubr.f32.mxu0 0.0
        %1052 = vmatmul.mubr.f32.gmra.mrb[0].mxu0 %v774
        %v1053 = vpop.f32.mrb[0].mxu0
        %v1054 = vadd.f32 0.0, %v1053
        %v1055 = vpop.f32.mrb[0].mxu0
        %1056 = vmatprep.mubr.f32.mxu0 0.0
        %1057 = vmatmul.mubr.f32.gmra.mrb[0].mxu0 %v777
        %v1058 = vpop.f32.mrb[0].mxu0
        %v1059 = vadd.f32 0.0, %v1058
        %v1060 = vpop.f32.mrb[0].mxu0
        %1061 = vmatprep.mubr.f32.mxu0 0.0
        %1062 = vmatmul.mubr.f32.gmra.mrb[0].mxu0 %v780
        %v1063 = vpop.f32.mrb[0].mxu0
        %v1064 = vadd.f32 0.0, %v1063
        %v1065 = vpop.f32.mrb[0].mxu0
        %1066 = vmatprep.mubr.f32.mxu0 0.0
        %1067 = vmatmul.mubr.f32.gmra.mrb[0].mxu0 %v783
        %v1068 = vpop.f32.mrb[0].mxu0
        %v1069 = vadd.f32 0.0, %v1068
        %v1070 = vpop.f32.mrb[0].mxu0
        %1071 = vmatprep.mubr.f32.mxu0 0.0
        %1072 = vmatmul.mubr.f32.gmra.mrb[0].mxu0 %v786
        %v1073 = vpop.f32.mrb[0].mxu0
        %v1074 = vadd.f32 0.0, %v1073
        %v1075 = vpop.f32.mrb[0].mxu0
        %1076 = vmatprep.mubr.f32.mxu0 0.0
        %1077 = vmatmul.mubr.f32.gmra.mrb[0].mxu0 %v789
        %v1078 = vpop.f32.mrb[0].mxu0
        %v1079 = vadd.f32 0.0, %v1078
        %v1080 = vpop.f32.mrb[0].mxu0
        %1081 = vmatprep.mubr.f32.mxu0 0.0
        %1082 = vmatmul.mubr.f32.gmra.mrb[0].mxu0 %v792
        %v1083 = vpop.f32.mrb[0].mxu0
        %v1084 = vadd.f32 0.0, %v1083
        %v1085 = vpop.f32.mrb[0].mxu0
        %1086 = vmatprep.mubr.f32.mxu0 0.0
        %1087 = vmatmul.mubr.f32.gmra.mrb[0].mxu0 %v795
        %v1088 = vpop.f32.mrb[0].mxu0
        %v1089 = vadd.f32 0.0, %v1088
        %v1090 = vpop.f32.mrb[0].mxu0
        %1091 = vmatprep.mubr.f32.mxu0 0.0
        %1092 = vmatmul.mubr.f32.gmra.mrb[0].mxu0 %v798
        %v1093 = vpop.f32.mrb[0].mxu0
        %v1094 = vadd.f32 0.0, %v1093
        %v1095 = vpop.f32.mrb[0].mxu0
        %1096 = vmatprep.mubr.f32.mxu0 0.0
        %1097 = vmatmul.mubr.f32.gmra.mrb[0].mxu0 %v801
        %v1098 = vpop.f32.mrb[0].mxu0
        %v1099 = vadd.f32 0.0, %v1098
        %v1100 = vpop.f32.mrb[0].mxu0
        %1101 = vmatprep.mubr.f32.mxu0 0.0
        %1102 = vmatmul.mubr.f32.gmra.mrb[0].mxu0 %v804
        %v1103 = vpop.f32.mrb[0].mxu0
        %v1104 = vadd.f32 0.0, %v1103
        %v1105 = vpop.f32.mrb[0].mxu0
        %1106 = vmatprep.mubr.f32.mxu0 0.0
        %1107 = vmatmul.mubr.f32.gmra.mrb[0].mxu0 %v807
        %v1108 = vpop.f32.mrb[0].mxu0
        %v1109 = vadd.f32 0.0, %v1108
        %v1110 = vpop.f32.mrb[0].mxu0
        %1111 = vmatprep.mubr.f32.mxu0 0.0
        %1112 = vmatmul.mubr.f32.gmra.mrb[0].mxu0 %v810
        %v1113 = vpop.f32.mrb[0].mxu0
        %v1114 = vadd.f32 0.0, %v1113
        %v1115 = vpop.f32.mrb[0].mxu0
        %1116 = vmatprep.mubr.f32.mxu0 0.0
        %1117 = vmatmul.mubr.f32.gmra.mrb[0].mxu0 %v813
        %v1118 = vpop.f32.mrb[0].mxu0
        %v1119 = vadd.f32 0.0, %v1118
        %v1120 = vpop.f32.mrb[0].mxu0
        %1121 = vmatprep.mubr.f32.mxu0 0.0
        %1122 = vmatmul.mubr.f32.gmra.mrb[0].mxu0 %v816
        %v1123 = vpop.f32.mrb[0].mxu0
        %v1124 = vadd.f32 0.0, %v1123
        %v1125 = vpop.f32.mrb[0].mxu0
        %1126 = vmatprep.mubr.f32.mxu0 0.0
        %1127 = vmatmul.mubr.f32.gmra.mrb[0].mxu0 %v819
        %v1128 = vpop.f32.mrb[0].mxu0
        %v1129 = vadd.f32 0.0, %v1128
        %v1130 = vpop.f32.mrb[0].mxu0
        %1131 = vmatprep.mubr.f32.mxu0 0.0
        %1132 = vmatmul.mubr.f32.gmra.mrb[0].mxu0 %v822
        %v1133 = vpop.f32.mrb[0].mxu0
        %v1134 = vadd.f32 0.0, %v1133
        %v1135 = vpop.f32.mrb[0].mxu0
        %1136 = vmatprep.mubr.f32.mxu0 0.0
        %1137 = vmatmul.mubr.f32.gmra.mrb[0].mxu0 %v825
        %v1138 = vpop.f32.mrb[0].mxu0
        %v1139 = vadd.f32 0.0, %v1138
        %v1140 = vpop.f32.mrb[0].mxu0
        %1141 = vmatprep.mubr.f32.mxu0 0.0
        %1142 = vmatmul.mubr.f32.gmra.mrb[0].mxu0 %v828
        %v1143 = vpop.f32.mrb[0].mxu0
        %v1144 = vadd.f32 0.0, %v1143
        %v1145 = vpop.f32.mrb[0].mxu0
        %1146 = vmatprep.mubr.f32.mxu0 0.0
        %1147 = vmatmul.mubr.f32.gmra.mrb[0].mxu0 %v831
        %v1148 = vpop.f32.mrb[0].mxu0
        %v1149 = vadd.f32 0.0, %v1148
        %v1150 = vpop.f32.mrb[0].mxu0
        %1151 = vmatprep.mubr.f32.mxu0 0.0
        %1152 = vmatmul.mubr.f32.gmra.mrb[0].mxu0 %v834
        %v1153 = vpop.f32.mrb[0].mxu0
        %v1154 = vadd.f32 0.0, %v1153
        %v1155 = vpop.f32.mrb[0].mxu0
        %1156 = vmatprep.mubr.f32.mxu0 0.0
        %1157 = vmatmul.mubr.f32.gmra.mrb[0].mxu0 %v837
        %v1158 = vpop.f32.mrb[0].mxu0
        %v1159 = vadd.f32 0.0, %v1158
        %v1160 = vpop.f32.mrb[0].mxu0
        %1161 = vmatprep.mubr.f32.mxu0 0.0
        %1162 = vmatmul.mubr.f32.gmra.mrb[0].mxu0 %v840
        %v1163 = vpop.f32.mrb[0].mxu0
        %v1164 = vadd.f32 0.0, %v1163
        %v1165 = vpop.f32.mrb[0].mxu0
        %1166 = vmatprep.mubr.f32.mxu0 0.0
        %1167 = vmatmul.mubr.f32.gmra.mrb[0].mxu0 %v843
        %v1168 = vpop.f32.mrb[0].mxu0
        %v1169 = vadd.f32 0.0, %v1168
        %v1170 = vpop.f32.mrb[0].mxu0
        %1171 = vmatprep.mubr.f32.mxu0 0.0
        %1172 = vmatmul.mubr.f32.gmra.mrb[0].mxu0 %v846
        %v1173 = vpop.f32.mrb[0].mxu0
        %v1174 = vadd.f32 0.0, %v1173
        %v1175 = vpop.f32.mrb[0].mxu0
        %1176 = vmatprep.mubr.f32.mxu0 0.0
        %1177 = vmatmul.mubr.f32.gmra.mrb[0].mxu0 %v849
        %v1178 = vpop.f32.mrb[0].mxu0
        %v1179 = vadd.f32 0.0, %v1178
        %v1180 = vpop.f32.mrb[0].mxu0
        %1181 = vmatprep.mubr.f32.mxu0 0.0
        %1182 = vmatmul.mubr.f32.gmra.mrb[0].mxu0 %v852
        %v1183 = vpop.f32.mrb[0].mxu0
        %v1184 = vadd.f32 0.0, %v1183
        %v1185 = vpop.f32.mrb[0].mxu0
        %1186 = vmatprep.mubr.f32.mxu0 0.0
        %1187 = vmatmul.mubr.f32.gmra.mrb[0].mxu0 %v855
        %v1188 = vpop.f32.mrb[0].mxu0
        %v1189 = vadd.f32 0.0, %v1188
        %v1190 = vpop.f32.mrb[0].mxu0
        %1191 = vmatprep.mubr.f32.mxu0 0.0
        %1192 = vmatmul.mubr.f32.gmra.mrb[0].mxu0 %v858
        %v1193 = vpop.f32.mrb[0].mxu0
        %v1194 = vadd.f32 0.0, %v1193
        %v1195 = vpop.f32.mrb[0].mxu0
        %1196 = vmatprep.mubr.f32.mxu0 0.0
        %1197 = vmatmul.mubr.f32.gmra.mrb[0].mxu0 %v861
        %v1198 = vpop.f32.mrb[0].mxu0
        %v1199 = vadd.f32 0.0, %v1198
        %v1200 = vpop.f32.mrb[0].mxu0
        %1201 = vmatprep.mubr.f32.mxu0 0.0
        %1202 = vmatmul.mubr.f32.gmra.mrb[0].mxu0 %v864
        %v1203 = vpop.f32.mrb[0].mxu0
        %v1204 = vadd.f32 0.0, %v1203
        %v1205 = vpop.f32.mrb[0].mxu0
        %1206 = vmatprep.mubr.f32.mxu0 0.0
        %1207 = vmatmul.mubr.f32.gmra.mrb[0].mxu0 %v867
        %v1208 = vpop.f32.mrb[0].mxu0
        %v1209 = vadd.f32 0.0, %v1208
        %v1210 = vpop.f32.mrb[0].mxu0
        %1211 = vmatprep.mubr.f32.mxu0 0.0
        %1212 = vmatmul.mubr.f32.gmra.mrb[0].mxu0 %v870
        %v1213 = vpop.f32.mrb[0].mxu0
        %v1214 = vadd.f32 0.0, %v1213
        %v1215 = vpop.f32.mrb[0].mxu0
        %1216 = vmatprep.mubr.f32.mxu0 0.0
        %1217 = vmatmul.mubr.f32.gmra.mrb[0].mxu0 %v873
        %v1218 = vpop.f32.mrb[0].mxu0
        %v1219 = vadd.f32 0.0, %v1218
        %v1220 = vpop.f32.mrb[0].mxu0
        %1221 = vmatprep.mubr.f32.mxu0 0.0
        %1222 = vmatmul.mubr.f32.gmra.mrb[0].mxu0 %v876
        %v1223 = vpop.f32.mrb[0].mxu0
        %v1224 = vadd.f32 0.0, %v1223
        %v1225 = vpop.f32.mrb[0].mxu0
        %1226 = vmatprep.mubr.f32.mxu0 0.0
        %1227 = vmatmul.mubr.f32.gmra.mrb[0].mxu0 %v879
        %v1228 = vpop.f32.mrb[0].mxu0
        %v1229 = vadd.f32 0.0, %v1228
        %v1230 = vpop.f32.mrb[0].mxu0
        %1231 = vmatprep.mubr.f32.mxu0 0.0
        %1232 = vmatmul.mubr.f32.gmra.mrb[0].mxu0 %v882
        %v1233 = vpop.f32.mrb[0].mxu0
        %v1234 = vadd.f32 0.0, %v1233
        %v1235 = vpop.f32.mrb[0].mxu0
        %1236 = vmatprep.mubr.f32.mxu0 0.0
        %1237 = vmatmul.mubr.f32.gmra.mrb[0].mxu0 %v885
        %v1238 = vpop.f32.mrb[0].mxu0
        %v1239 = vadd.f32 0.0, %v1238
        %v1240 = vpop.f32.mrb[0].mxu0
        %1241 = vmatprep.mubr.f32.mxu0 0.0
        %1242 = vmatmul.mubr.f32.gmra.mrb[0].mxu0 %v888
        %v1243 = vpop.f32.mrb[0].mxu0
        %v1244 = vadd.f32 0.0, %v1243
        %v1245 = vpop.f32.mrb[0].mxu0
        %1246 = vmatprep.mubr.f32.mxu0 0.0
        %1247 = vmatmul.mubr.f32.gmra.mrb[0].mxu0 %v891
        %v1248 = vpop.f32.mrb[0].mxu0
        %v1249 = vadd.f32 0.0, %v1248
        %v1250 = vpop.f32.mrb[0].mxu0
        %1251 = vmatprep.mubr.f32.mxu0 0.0
        %1252 = vmatmul.mubr.f32.gmra.mrb[0].mxu0 %v894
        %v1253 = vpop.f32.mrb[0].mxu0
        %v1254 = vadd.f32 0.0, %v1253
        %v1255 = vpop.f32.mrb[0].mxu0
        %1256 = vmatprep.mubr.f32.mxu0 0.0
        %1257 = vmatmul.mubr.f32.gmra.mrb[0].mxu0 %v897
        %v1258 = vpop.f32.mrb[0].mxu0
        %v1259 = vadd.f32 0.0, %v1258
        %v1260 = vpop.f32.mrb[0].mxu0
        %1261 = vmatprep.mubr.f32.mxu0 0.0
        %1262 = vmatmul.mubr.f32.gmra.mrb[0].mxu0 %v900
        %v1263 = vpop.f32.mrb[0].mxu0
        %v1264 = vadd.f32 0.0, %v1263
        %v1265 = vpop.f32.mrb[0].mxu0
        %1266 = vmatprep.mubr.f32.mxu0 0.0
        %1267 = vmatmul.mubr.f32.gmra.mrb[0].mxu0 %v903
        %v1268 = vpop.f32.mrb[0].mxu0
        %v1269 = vadd.f32 0.0, %v1268
        %v1270 = vpop.f32.mrb[0].mxu0
        %1271 = vmatprep.mubr.f32.mxu0 0.0
        %1272 = vmatmul.mubr.f32.gmra.mrb[0].mxu0 %v906
        %v1273 = vpop.f32.mrb[0].mxu0
        %v1274 = vadd.f32 0.0, %v1273
        %v1275 = vpop.f32.mrb[0].mxu0
        %1276 = vmatprep.mubr.f32.mxu0 0.0
        %1277 = vmatmul.mubr.f32.gmra.mrb[0].mxu0 %v909
        %v1278 = vpop.f32.mrb[0].mxu0
        %v1279 = vadd.f32 0.0, %v1278
        %v1280 = vpop.f32.mrb[0].mxu0
        %1281 = vmatprep.mubr.f32.mxu0 0.0
        %1282 = vmatmul.mubr.f32.gmra.mrb[0].mxu0 %v912
        %v1283 = vpop.f32.mrb[0].mxu0
        %v1284 = vadd.f32 0.0, %v1283
        %v1285 = vpop.f32.mrb[0].mxu0
        %1286 = vmatprep.mubr.f32.mxu0 0.0
        %1287 = vmatmul.mubr.f32.gmra.mrb[0].mxu0 %v915
        %v1288 = vpop.f32.mrb[0].mxu0
        %v1289 = vadd.f32 0.0, %v1288
        %v1290 = vpop.f32.mrb[0].mxu0
        %1291 = vmatprep.mubr.f32.mxu0 0.0
        %1292 = vmatmul.mubr.f32.gmra.mrb[0].mxu0 %v918
        %v1293 = vpop.f32.mrb[0].mxu0
        %v1294 = vadd.f32 0.0, %v1293
        %v1295 = vpop.f32.mrb[0].mxu0
        %1296 = vmatprep.mubr.f32.mxu0 0.0
        %1297 = vmatmul.mubr.f32.gmra.mrb[0].mxu0 %v921
        %v1298 = vpop.f32.mrb[0].mxu0
        %v1299 = vadd.f32 0.0, %v1298
        %v1300 = vpop.f32.mrb[0].mxu0
        %1301 = vmatprep.mubr.f32.mxu0 0.0
        %1302 = vmatmul.mubr.f32.gmra.mrb[0].mxu0 %v924
        %v1303 = vpop.f32.mrb[0].mxu0
        %v1304 = vadd.f32 0.0, %v1303
        %v1305 = vpop.f32.mrb[0].mxu0
        %1306 = vmatprep.mubr.f32.mxu0 0.0
        %1307 = vmatmul.mubr.f32.gmra.mrb[0].mxu0 %v927
        %v1308 = vpop.f32.mrb[0].mxu0
        %v1309 = vadd.f32 0.0, %v1308
        %v1310 = vpop.f32.mrb[0].mxu0
        %1311 = vmatprep.mubr.f32.mxu0 0.0
        %1312 = vmatmul.mubr.f32.gmra.mrb[0].mxu0 %v930
        %v1313 = vpop.f32.mrb[0].mxu0
        %v1314 = vadd.f32 0.0, %v1313
        %v1315 = vpop.f32.mrb[0].mxu0
        %1316 = vdwg.mxu0
        %v1317 = vld [vmem:[%s3] sm:$0x7]
        %vm1318 = vcmask 23552
        %v1320 = vsel %vm1318, %v671, 0
        %v1323 = vsel %vm1318, %v672, 0
        %v1326 = vsel %vm1318, %v673, 0
        %v1329 = vsel %vm1318, %v674, 0
        %v1332 = vsel %vm1318, %v675, 0
        %v1335 = vsel %vm1318, %v676, 0
        %v1338 = vsel %vm1318, %v677, 0
        %v1341 = vsel %vm1318, %v678, 0
        %v1344 = vsel %vm1318, %v679, 0
        %v1347 = vsel %vm1318, %v680, 0
        %v1350 = vsel %vm1318, %v681, 0
        %v1353 = vsel %vm1318, %v682, 0
        %v1356 = vsel %vm1318, %v683, 0
        %v1359 = vsel %vm1318, %v684, 0
        %v1362 = vsel %vm1318, %v685, 0
        %v1365 = vsel %vm1318, %v686, 0
        %v1368 = vsel %vm1318, %v687, 0
        %v1371 = vsel %vm1318, %v688, 0
        %v1374 = vsel %vm1318, %v689, 0
        %v1377 = vsel %vm1318, %v690, 0
        %v1380 = vsel %vm1318, %v691, 0
        %v1383 = vsel %vm1318, %v692, 0
        %v1386 = vsel %vm1318, %v693, 0
        %v1389 = vsel %vm1318, %v694, 0
        %v1392 = vsel %vm1318, %v695, 0
        %v1395 = vsel %vm1318, %v696, 0
        %v1398 = vsel %vm1318, %v697, 0
        %v1401 = vsel %vm1318, %v698, 0
        %v1404 = vsel %vm1318, %v699, 0
        %v1407 = vsel %vm1318, %v700, 0
        %v1410 = vsel %vm1318, %v701, 0
        %v1413 = vsel %vm1318, %v702, 0
        %v1416 = vsel %vm1318, %v703, 0
        %v1419 = vsel %vm1318, %v704, 0
        %v1422 = vsel %vm1318, %v705, 0
        %v1425 = vsel %vm1318, %v706, 0
        %v1428 = vsel %vm1318, %v707, 0
        %v1431 = vsel %vm1318, %v708, 0
        %v1434 = vsel %vm1318, %v709, 0
        %v1437 = vsel %vm1318, %v710, 0
        %v1440 = vsel %vm1318, %v711, 0
        %v1443 = vsel %vm1318, %v712, 0
        %v1446 = vsel %vm1318, %v713, 0
        %v1449 = vsel %vm1318, %v714, 0
        %v1452 = vsel %vm1318, %v715, 0
        %v1455 = vsel %vm1318, %v716, 0
        %v1458 = vsel %vm1318, %v717, 0
        %v1461 = vsel %vm1318, %v718, 0
        %v1464 = vsel %vm1318, %v719, 0
        %v1467 = vsel %vm1318, %v720, 0
        %v1470 = vsel %vm1318, %v721, 0
        %v1473 = vsel %vm1318, %v722, 0
        %v1476 = vsel %vm1318, %v723, 0
        %v1479 = vsel %vm1318, %v724, 0
        %v1482 = vsel %vm1318, %v725, 0
        %v1485 = vsel %vm1318, %v726, 0
        %v1488 = vsel %vm1318, %v727, 0
        %v1491 = vsel %vm1318, %v728, 0
        %v1494 = vsel %vm1318, %v729, 0
        %v1497 = vsel %vm1318, %v730, 0
        %v1500 = vsel %vm1318, %v731, 0
        %v1503 = vsel %vm1318, %v732, 0
        %v1506 = vsel %vm1318, %v733, 0
        %v1509 = vsel %vm1318, %v734, 0
        %vm1511 = vcmask 1042432
        %v1513 = vsel %vm1511, %v1317, 0
        %1515 = vmatprep.subr.mxu0 0.0
        %1516 = vmatpush1.msra.mxu0 %v1513
        %1517 = vmatprep.subr.mxu0 0.0
        %1518 = vmatpush1.msra.mxu0 0.0
        %1519 = vmatprep.subr.mxu0 0.0
        %1520 = vmatpush1.msra.mxu0 0.0
        %1521 = vmatprep.subr.mxu0 0.0
        %1522 = vmatpush1.msra.mxu0 0.0
        %1523 = vmatprep.subr.mxu0 0.0
        %1524 = vmatpush1.msra.mxu0 0.0
        %1525 = vmatprep.subr.mxu0 0.0
        %1526 = vmatpush1.msra.mxu0 0.0
        %1527 = vmatprep.subr.mxu0 0.0
        %1528 = vmatpush1.msra.mxu0 0.0
        %1529 = vmatprep.subr.mxu0 0.0
        %1530 = vmatpush1.msra.mxu0 0.0
        %1531 = vmatprep.subr.mxu0 0.0
        %1532 = vmatpush1.msra.mxu0 0.0
        %1533 = vmatprep.subr.mxu0 0.0
        %1534 = vmatpush1.msra.mxu0 0.0
        %1535 = vmatprep.subr.mxu0 0.0
        %1536 = vmatpush1.msra.mxu0 0.0
        %1537 = vmatprep.subr.mxu0 0.0
        %1538 = vmatpush1.msra.mxu0 0.0
        %1539 = vmatprep.subr.mxu0 0.0
        %1540 = vmatpush1.msra.mxu0 0.0
        %1541 = vmatprep.subr.mxu0 0.0
        %1542 = vmatpush1.msra.mxu0 0.0
        %1543 = vmatprep.subr.mxu0 0.0
        %1544 = vmatpush1.msra.mxu0 0.0
        %1545 = vmatprep.subr.mxu0 0.0
        %1546 = vmatpush1.msra.mxu0 0.0
        %1547 = vmatprep.subr.mxu0 0.0
        %1548 = vmatpush1.msra.mxu0 0.0
        %1549 = vmatprep.subr.mxu0 0.0
        %1550 = vmatpush1.msra.mxu0 0.0
        %1551 = vmatprep.subr.mxu0 0.0
        %1552 = vmatpush1.msra.mxu0 0.0
        %1553 = vmatprep.subr.mxu0 0.0
        %1554 = vmatpush1.msra.mxu0 0.0
        %1555 = vmatprep.subr.mxu0 0.0
        %1556 = vmatpush1.msra.mxu0 0.0
        %1557 = vmatprep.subr.mxu0 0.0
        %1558 = vmatpush1.msra.mxu0 0.0
        %1559 = vmatprep.subr.mxu0 0.0
        %1560 = vmatpush1.msra.mxu0 0.0
        %1561 = vmatprep.subr.mxu0 0.0
        %1562 = vmatpush1.msra.mxu0 0.0
        %1563 = vmatprep.subr.mxu0 0.0
        %1564 = vmatpush1.msra.mxu0 0.0
        %1565 = vmatprep.subr.mxu0 0.0
        %1566 = vmatpush1.msra.mxu0 0.0
        %1567 = vmatprep.subr.mxu0 0.0
        %1568 = vmatpush1.msra.mxu0 0.0
        %1569 = vmatprep.subr.mxu0 0.0
        %1570 = vmatpush1.msra.mxu0 0.0
        %1571 = vmatprep.subr.mxu0 0.0
        %1572 = vmatpush1.msra.mxu0 0.0
        %1573 = vmatprep.subr.mxu0 0.0
        %1574 = vmatpush1.msra.mxu0 0.0
        %1575 = vmatprep.subr.mxu0 0.0
        %1576 = vmatpush1.msra.mxu0 0.0
        %1577 = vmatprep.subr.mxu0 0.0
        %1578 = vmatpush1.msra.mxu0 0.0
        %1579 = vmatprep.mubr.f32.mxu0 0.0
        %1580 = vmatmul.mubr.f32.gmra.mrb[0].mxu0 %v1320
        %v1581 = vpop.f32.mrb[0].mxu0
        %v1582 = vadd.f32 0.0, %v1581
        %v1583 = vpop.f32.mrb[0].mxu0
        %1584 = vmatprep.mubr.f32.mxu0 0.0
        %1585 = vmatmul.mubr.f32.gmra.mrb[0].mxu0 %v1323
        %v1586 = vpop.f32.mrb[0].mxu0
        %v1587 = vadd.f32 0.0, %v1586
        %v1588 = vpop.f32.mrb[0].mxu0
        %1589 = vmatprep.mubr.f32.mxu0 0.0
        %1590 = vmatmul.mubr.f32.gmra.mrb[0].mxu0 %v1326
        %v1591 = vpop.f32.mrb[0].mxu0
        %v1592 = vadd.f32 0.0, %v1591
        %v1593 = vpop.f32.mrb[0].mxu0
        %1594 = vmatprep.mubr.f32.mxu0 0.0
        %1595 = vmatmul.mubr.f32.gmra.mrb[0].mxu0 %v1329
        %v1596 = vpop.f32.mrb[0].mxu0
        %v1597 = vadd.f32 0.0, %v1596
        %v1598 = vpop.f32.mrb[0].mxu0
        %1599 = vmatprep.mubr.f32.mxu0 0.0
        %1600 = vmatmul.mubr.f32.gmra.mrb[0].mxu0 %v1332
        %v1601 = vpop.f32.mrb[0].mxu0
        %v1602 = vadd.f32 0.0, %v1601
        %v1603 = vpop.f32.mrb[0].mxu0
        %1604 = vmatprep.mubr.f32.mxu0 0.0
        %1605 = vmatmul.mubr.f32.gmra.mrb[0].mxu0 %v1335
        %v1606 = vpop.f32.mrb[0].mxu0
        %v1607 = vadd.f32 0.0, %v1606
        %v1608 = vpop.f32.mrb[0].mxu0
        %1609 = vmatprep.mubr.f32.mxu0 0.0
        %1610 = vmatmul.mubr.f32.gmra.mrb[0].mxu0 %v1338
        %v1611 = vpop.f32.mrb[0].mxu0
        %v1612 = vadd.f32 0.0, %v1611
        %v1613 = vpop.f32.mrb[0].mxu0
        %1614 = vmatprep.mubr.f32.mxu0 0.0
        %1615 = vmatmul.mubr.f32.gmra.mrb[0].mxu0 %v1341
        %v1616 = vpop.f32.mrb[0].mxu0
        %v1617 = vadd.f32 0.0, %v1616
        %v1618 = vpop.f32.mrb[0].mxu0
        %1619 = vmatprep.mubr.f32.mxu0 0.0
        %1620 = vmatmul.mubr.f32.gmra.mrb[0].mxu0 %v1344
        %v1621 = vpop.f32.mrb[0].mxu0
        %v1622 = vadd.f32 0.0, %v1621
        %v1623 = vpop.f32.mrb[0].mxu0
        %1624 = vmatprep.mubr.f32.mxu0 0.0
        %1625 = vmatmul.mubr.f32.gmra.mrb[0].mxu0 %v1347
        %v1626 = vpop.f32.mrb[0].mxu0
        %v1627 = vadd.f32 0.0, %v1626
        %v1628 = vpop.f32.mrb[0].mxu0
        %1629 = vmatprep.mubr.f32.mxu0 0.0
        %1630 = vmatmul.mubr.f32.gmra.mrb[0].mxu0 %v1350
        %v1631 = vpop.f32.mrb[0].mxu0
        %v1632 = vadd.f32 0.0, %v1631
        %v1633 = vpop.f32.mrb[0].mxu0
        %1634 = vmatprep.mubr.f32.mxu0 0.0
        %1635 = vmatmul.mubr.f32.gmra.mrb[0].mxu0 %v1353
        %v1636 = vpop.f32.mrb[0].mxu0
        %v1637 = vadd.f32 0.0, %v1636
        %v1638 = vpop.f32.mrb[0].mxu0
        %1639 = vmatprep.mubr.f32.mxu0 0.0
        %1640 = vmatmul.mubr.f32.gmra.mrb[0].mxu0 %v1356
        %v1641 = vpop.f32.mrb[0].mxu0
        %v1642 = vadd.f32 0.0, %v1641
        %v1643 = vpop.f32.mrb[0].mxu0
        %1644 = vmatprep.mubr.f32.mxu0 0.0
        %1645 = vmatmul.mubr.f32.gmra.mrb[0].mxu0 %v1359
        %v1646 = vpop.f32.mrb[0].mxu0
        %v1647 = vadd.f32 0.0, %v1646
        %v1648 = vpop.f32.mrb[0].mxu0
        %1649 = vmatprep.mubr.f32.mxu0 0.0
        %1650 = vmatmul.mubr.f32.gmra.mrb[0].mxu0 %v1362
        %v1651 = vpop.f32.mrb[0].mxu0
        %v1652 = vadd.f32 0.0, %v1651
        %v1653 = vpop.f32.mrb[0].mxu0
        %1654 = vmatprep.mubr.f32.mxu0 0.0
        %1655 = vmatmul.mubr.f32.gmra.mrb[0].mxu0 %v1365
        %v1656 = vpop.f32.mrb[0].mxu0
        %v1657 = vadd.f32 0.0, %v1656
        %v1658 = vpop.f32.mrb[0].mxu0
        %1659 = vmatprep.mubr.f32.mxu0 0.0
        %1660 = vmatmul.mubr.f32.gmra.mrb[0].mxu0 %v1368
        %v1661 = vpop.f32.mrb[0].mxu0
        %v1662 = vadd.f32 0.0, %v1661
        %v1663 = vpop.f32.mrb[0].mxu0
        %1664 = vmatprep.mubr.f32.mxu0 0.0
        %1665 = vmatmul.mubr.f32.gmra.mrb[0].mxu0 %v1371
        %v1666 = vpop.f32.mrb[0].mxu0
        %v1667 = vadd.f32 0.0, %v1666
        %v1668 = vpop.f32.mrb[0].mxu0
        %1669 = vmatprep.mubr.f32.mxu0 0.0
        %1670 = vmatmul.mubr.f32.gmra.mrb[0].mxu0 %v1374
        %v1671 = vpop.f32.mrb[0].mxu0
        %v1672 = vadd.f32 0.0, %v1671
        %v1673 = vpop.f32.mrb[0].mxu0
        %1674 = vmatprep.mubr.f32.mxu0 0.0
        %1675 = vmatmul.mubr.f32.gmra.mrb[0].mxu0 %v1377
        %v1676 = vpop.f32.mrb[0].mxu0
        %v1677 = vadd.f32 0.0, %v1676
        %v1678 = vpop.f32.mrb[0].mxu0
        %1679 = vmatprep.mubr.f32.mxu0 0.0
        %1680 = vmatmul.mubr.f32.gmra.mrb[0].mxu0 %v1380
        %v1681 = vpop.f32.mrb[0].mxu0
        %v1682 = vadd.f32 0.0, %v1681
        %v1683 = vpop.f32.mrb[0].mxu0
        %1684 = vmatprep.mubr.f32.mxu0 0.0
        %1685 = vmatmul.mubr.f32.gmra.mrb[0].mxu0 %v1383
        %v1686 = vpop.f32.mrb[0].mxu0
        %v1687 = vadd.f32 0.0, %v1686
        %v1688 = vpop.f32.mrb[0].mxu0
        %1689 = vmatprep.mubr.f32.mxu0 0.0
        %1690 = vmatmul.mubr.f32.gmra.mrb[0].mxu0 %v1386
        %v1691 = vpop.f32.mrb[0].mxu0
        %v1692 = vadd.f32 0.0, %v1691
        %v1693 = vpop.f32.mrb[0].mxu0
        %1694 = vmatprep.mubr.f32.mxu0 0.0
        %1695 = vmatmul.mubr.f32.gmra.mrb[0].mxu0 %v1389
        %v1696 = vpop.f32.mrb[0].mxu0
        %v1697 = vadd.f32 0.0, %v1696
        %v1698 = vpop.f32.mrb[0].mxu0
        %1699 = vmatprep.mubr.f32.mxu0 0.0
        %1700 = vmatmul.mubr.f32.gmra.mrb[0].mxu0 %v1392
        %v1701 = vpop.f32.mrb[0].mxu0
        %v1702 = vadd.f32 0.0, %v1701
        %v1703 = vpop.f32.mrb[0].mxu0
        %1704 = vmatprep.mubr.f32.mxu0 0.0
        %1705 = vmatmul.mubr.f32.gmra.mrb[0].mxu0 %v1395
        %v1706 = vpop.f32.mrb[0].mxu0
        %v1707 = vadd.f32 0.0, %v1706
        %v1708 = vpop.f32.mrb[0].mxu0
        %1709 = vmatprep.mubr.f32.mxu0 0.0
        %1710 = vmatmul.mubr.f32.gmra.mrb[0].mxu0 %v1398
        %v1711 = vpop.f32.mrb[0].mxu0
        %v1712 = vadd.f32 0.0, %v1711
        %v1713 = vpop.f32.mrb[0].mxu0
        %1714 = vmatprep.mubr.f32.mxu0 0.0
        %1715 = vmatmul.mubr.f32.gmra.mrb[0].mxu0 %v1401
        %v1716 = vpop.f32.mrb[0].mxu0
        %v1717 = vadd.f32 0.0, %v1716
        %v1718 = vpop.f32.mrb[0].mxu0
        %1719 = vmatprep.mubr.f32.mxu0 0.0
        %1720 = vmatmul.mubr.f32.gmra.mrb[0].mxu0 %v1404
        %v1721 = vpop.f32.mrb[0].mxu0
        %v1722 = vadd.f32 0.0, %v1721
        %v1723 = vpop.f32.mrb[0].mxu0
        %1724 = vmatprep.mubr.f32.mxu0 0.0
        %1725 = vmatmul.mubr.f32.gmra.mrb[0].mxu0 %v1407
        %v1726 = vpop.f32.mrb[0].mxu0
        %v1727 = vadd.f32 0.0, %v1726
        %v1728 = vpop.f32.mrb[0].mxu0
        %1729 = vmatprep.mubr.f32.mxu0 0.0
        %1730 = vmatmul.mubr.f32.gmra.mrb[0].mxu0 %v1410
        %v1731 = vpop.f32.mrb[0].mxu0
        %v1732 = vadd.f32 0.0, %v1731
        %v1733 = vpop.f32.mrb[0].mxu0
        %1734 = vmatprep.mubr.f32.mxu0 0.0
        %1735 = vmatmul.mubr.f32.gmra.mrb[0].mxu0 %v1413
        %v1736 = vpop.f32.mrb[0].mxu0
        %v1737 = vadd.f32 0.0, %v1736
        %v1738 = vpop.f32.mrb[0].mxu0
        %1739 = vmatprep.mubr.f32.mxu0 0.0
        %1740 = vmatmul.mubr.f32.gmra.mrb[0].mxu0 %v1416
        %v1741 = vpop.f32.mrb[0].mxu0
        %v1742 = vadd.f32 0.0, %v1741
        %v1743 = vpop.f32.mrb[0].mxu0
        %1744 = vmatprep.mubr.f32.mxu0 0.0
        %1745 = vmatmul.mubr.f32.gmra.mrb[0].mxu0 %v1419
        %v1746 = vpop.f32.mrb[0].mxu0
        %v1747 = vadd.f32 0.0, %v1746
        %v1748 = vpop.f32.mrb[0].mxu0
        %1749 = vmatprep.mubr.f32.mxu0 0.0
        %1750 = vmatmul.mubr.f32.gmra.mrb[0].mxu0 %v1422
        %v1751 = vpop.f32.mrb[0].mxu0
        %v1752 = vadd.f32 0.0, %v1751
        %v1753 = vpop.f32.mrb[0].mxu0
        %1754 = vmatprep.mubr.f32.mxu0 0.0
        %1755 = vmatmul.mubr.f32.gmra.mrb[0].mxu0 %v1425
        %v1756 = vpop.f32.mrb[0].mxu0
        %v1757 = vadd.f32 0.0, %v1756
        %v1758 = vpop.f32.mrb[0].mxu0
        %1759 = vmatprep.mubr.f32.mxu0 0.0
        %1760 = vmatmul.mubr.f32.gmra.mrb[0].mxu0 %v1428
        %v1761 = vpop.f32.mrb[0].mxu0
        %v1762 = vadd.f32 0.0, %v1761
        %v1763 = vpop.f32.mrb[0].mxu0
        %1764 = vmatprep.mubr.f32.mxu0 0.0
        %1765 = vmatmul.mubr.f32.gmra.mrb[0].mxu0 %v1431
        %v1766 = vpop.f32.mrb[0].mxu0
        %v1767 = vadd.f32 0.0, %v1766
        %v1768 = vpop.f32.mrb[0].mxu0
        %1769 = vmatprep.mubr.f32.mxu0 0.0
        %1770 = vmatmul.mubr.f32.gmra.mrb[0].mxu0 %v1434
        %v1771 = vpop.f32.mrb[0].mxu0
        %v1772 = vadd.f32 0.0, %v1771
        %v1773 = vpop.f32.mrb[0].mxu0
        %1774 = vmatprep.mubr.f32.mxu0 0.0
        %1775 = vmatmul.mubr.f32.gmra.mrb[0].mxu0 %v1437
        %v1776 = vpop.f32.mrb[0].mxu0
        %v1777 = vadd.f32 0.0, %v1776
        %v1778 = vpop.f32.mrb[0].mxu0
        %1779 = vmatprep.mubr.f32.mxu0 0.0
        %1780 = vmatmul.mubr.f32.gmra.mrb[0].mxu0 %v1440
        %v1781 = vpop.f32.mrb[0].mxu0
        %v1782 = vadd.f32 0.0, %v1781
        %v1783 = vpop.f32.mrb[0].mxu0
        %1784 = vmatprep.mubr.f32.mxu0 0.0
        %1785 = vmatmul.mubr.f32.gmra.mrb[0].mxu0 %v1443
        %v1786 = vpop.f32.mrb[0].mxu0
        %v1787 = vadd.f32 0.0, %v1786
        %v1788 = vpop.f32.mrb[0].mxu0
        %1789 = vmatprep.mubr.f32.mxu0 0.0
        %1790 = vmatmul.mubr.f32.gmra.mrb[0].mxu0 %v1446
        %v1791 = vpop.f32.mrb[0].mxu0
        %v1792 = vadd.f32 0.0, %v1791
        %v1793 = vpop.f32.mrb[0].mxu0
        %1794 = vmatprep.mubr.f32.mxu0 0.0
        %1795 = vmatmul.mubr.f32.gmra.mrb[0].mxu0 %v1449
        %v1796 = vpop.f32.mrb[0].mxu0
        %v1797 = vadd.f32 0.0, %v1796
        %v1798 = vpop.f32.mrb[0].mxu0
        %1799 = vmatprep.mubr.f32.mxu0 0.0
        %1800 = vmatmul.mubr.f32.gmra.mrb[0].mxu0 %v1452
        %v1801 = vpop.f32.mrb[0].mxu0
        %v1802 = vadd.f32 0.0, %v1801
        %v1803 = vpop.f32.mrb[0].mxu0
        %1804 = vmatprep.mubr.f32.mxu0 0.0
        %1805 = vmatmul.mubr.f32.gmra.mrb[0].mxu0 %v1455
        %v1806 = vpop.f32.mrb[0].mxu0
        %v1807 = vadd.f32 0.0, %v1806
        %v1808 = vpop.f32.mrb[0].mxu0
        %1809 = vmatprep.mubr.f32.mxu0 0.0
        %1810 = vmatmul.mubr.f32.gmra.mrb[0].mxu0 %v1458
        %v1811 = vpop.f32.mrb[0].mxu0
        %v1812 = vadd.f32 0.0, %v1811
        %v1813 = vpop.f32.mrb[0].mxu0
        %1814 = vmatprep.mubr.f32.mxu0 0.0
        %1815 = vmatmul.mubr.f32.gmra.mrb[0].mxu0 %v1461
        %v1816 = vpop.f32.mrb[0].mxu0
        %v1817 = vadd.f32 0.0, %v1816
        %v1818 = vpop.f32.mrb[0].mxu0
        %1819 = vmatprep.mubr.f32.mxu0 0.0
        %1820 = vmatmul.mubr.f32.gmra.mrb[0].mxu0 %v1464
        %v1821 = vpop.f32.mrb[0].mxu0
        %v1822 = vadd.f32 0.0, %v1821
        %v1823 = vpop.f32.mrb[0].mxu0
        %1824 = vmatprep.mubr.f32.mxu0 0.0
        %1825 = vmatmul.mubr.f32.gmra.mrb[0].mxu0 %v1467
        %v1826 = vpop.f32.mrb[0].mxu0
        %v1827 = vadd.f32 0.0, %v1826
        %v1828 = vpop.f32.mrb[0].mxu0
        %1829 = vmatprep.mubr.f32.mxu0 0.0
        %1830 = vmatmul.mubr.f32.gmra.mrb[0].mxu0 %v1470
        %v1831 = vpop.f32.mrb[0].mxu0
        %v1832 = vadd.f32 0.0, %v1831
        %v1833 = vpop.f32.mrb[0].mxu0
        %1834 = vmatprep.mubr.f32.mxu0 0.0
        %1835 = vmatmul.mubr.f32.gmra.mrb[0].mxu0 %v1473
        %v1836 = vpop.f32.mrb[0].mxu0
        %v1837 = vadd.f32 0.0, %v1836
        %v1838 = vpop.f32.mrb[0].mxu0
        %1839 = vmatprep.mubr.f32.mxu0 0.0
        %1840 = vmatmul.mubr.f32.gmra.mrb[0].mxu0 %v1476
        %v1841 = vpop.f32.mrb[0].mxu0
        %v1842 = vadd.f32 0.0, %v1841
        %v1843 = vpop.f32.mrb[0].mxu0
        %1844 = vmatprep.mubr.f32.mxu0 0.0
        %1845 = vmatmul.mubr.f32.gmra.mrb[0].mxu0 %v1479
        %v1846 = vpop.f32.mrb[0].mxu0
        %v1847 = vadd.f32 0.0, %v1846
        %v1848 = vpop.f32.mrb[0].mxu0
        %1849 = vmatprep.mubr.f32.mxu0 0.0
        %1850 = vmatmul.mubr.f32.gmra.mrb[0].mxu0 %v1482
        %v1851 = vpop.f32.mrb[0].mxu0
        %v1852 = vadd.f32 0.0, %v1851
        %v1853 = vpop.f32.mrb[0].mxu0
        %1854 = vmatprep.mubr.f32.mxu0 0.0
        %1855 = vmatmul.mubr.f32.gmra.mrb[0].mxu0 %v1485
        %v1856 = vpop.f32.mrb[0].mxu0
        %v1857 = vadd.f32 0.0, %v1856
        %v1858 = vpop.f32.mrb[0].mxu0
        %1859 = vmatprep.mubr.f32.mxu0 0.0
        %1860 = vmatmul.mubr.f32.gmra.mrb[0].mxu0 %v1488
        %v1861 = vpop.f32.mrb[0].mxu0
        %v1862 = vadd.f32 0.0, %v1861
        %v1863 = vpop.f32.mrb[0].mxu0
        %1864 = vmatprep.mubr.f32.mxu0 0.0
        %1865 = vmatmul.mubr.f32.gmra.mrb[0].mxu0 %v1491
        %v1866 = vpop.f32.mrb[0].mxu0
        %v1867 = vadd.f32 0.0, %v1866
        %v1868 = vpop.f32.mrb[0].mxu0
        %1869 = vmatprep.mubr.f32.mxu0 0.0
        %1870 = vmatmul.mubr.f32.gmra.mrb[0].mxu0 %v1494
        %v1871 = vpop.f32.mrb[0].mxu0
        %v1872 = vadd.f32 0.0, %v1871
        %v1873 = vpop.f32.mrb[0].mxu0
        %1874 = vmatprep.mubr.f32.mxu0 0.0
        %1875 = vmatmul.mubr.f32.gmra.mrb[0].mxu0 %v1497
        %v1876 = vpop.f32.mrb[0].mxu0
        %v1877 = vadd.f32 0.0, %v1876
        %v1878 = vpop.f32.mrb[0].mxu0
        %1879 = vmatprep.mubr.f32.mxu0 0.0
        %1880 = vmatmul.mubr.f32.gmra.mrb[0].mxu0 %v1500
        %v1881 = vpop.f32.mrb[0].mxu0
        %v1882 = vadd.f32 0.0, %v1881
        %v1883 = vpop.f32.mrb[0].mxu0
        %1884 = vmatprep.mubr.f32.mxu0 0.0
        %1885 = vmatmul.mubr.f32.gmra.mrb[0].mxu0 %v1503
        %v1886 = vpop.f32.mrb[0].mxu0
        %v1887 = vadd.f32 0.0, %v1886
        %v1888 = vpop.f32.mrb[0].mxu0
        %1889 = vmatprep.mubr.f32.mxu0 0.0
        %1890 = vmatmul.mubr.f32.gmra.mrb[0].mxu0 %v1506
        %v1891 = vpop.f32.mrb[0].mxu0
        %v1892 = vadd.f32 0.0, %v1891
        %v1893 = vpop.f32.mrb[0].mxu0
        %1894 = vmatprep.mubr.f32.mxu0 0.0
        %1895 = vmatmul.mubr.f32.gmra.mrb[0].mxu0 %v1509
        %v1896 = vpop.f32.mrb[0].mxu0
        %v1897 = vadd.f32 0.0, %v1896
        %v1898 = vpop.f32.mrb[0].mxu0
        %1899 = vdwg.mxu0
        %1900 = vset.pattern.permute.xlu0 0
        %1901 = vperm.xlu0 %1900, %v671
        %v1902 = vpop.permute.xlu0 %1901
        %1904 = vset.pattern.permute.xlu0 0
        %1905 = vperm.xlu0 %1904, %v672
        %v1906 = vpop.permute.xlu0 %1905
        %1908 = vset.pattern.permute.xlu0 0
        %1909 = vperm.xlu0 %1908, %v673
        %v1910 = vpop.permute.xlu0 %1909
        %1912 = vset.pattern.permute.xlu0 0
        %1913 = vperm.xlu0 %1912, %v674
        %v1914 = vpop.permute.xlu0 %1913
        %1916 = vset.pattern.permute.xlu0 0
        %1917 = vperm.xlu0 %1916, %v675
        %v1918 = vpop.permute.xlu0 %1917
        %1920 = vset.pattern.permute.xlu0 0
        %1921 = vperm.xlu0 %1920, %v676
        %v1922 = vpop.permute.xlu0 %1921
        %1924 = vset.pattern.permute.xlu0 0
        %1925 = vperm.xlu0 %1924, %v677
        %v1926 = vpop.permute.xlu0 %1925
        %1928 = vset.pattern.permute.xlu0 0
        %1929 = vperm.xlu0 %1928, %v678
        %v1930 = vpop.permute.xlu0 %1929
        %1932 = vset.pattern.permute.xlu0 0
        %1933 = vperm.xlu0 %1932, %v679
        %v1934 = vpop.permute.xlu0 %1933
        %1936 = vset.pattern.permute.xlu0 0
        %1937 = vperm.xlu0 %1936, %v680
        %v1938 = vpop.permute.xlu0 %1937
        %1940 = vset.pattern.permute.xlu0 0
        %1941 = vperm.xlu0 %1940, %v681
        %v1942 = vpop.permute.xlu0 %1941
        %1944 = vset.pattern.permute.xlu0 0
        %1945 = vperm.xlu0 %1944, %v682
        %v1946 = vpop.permute.xlu0 %1945
        %1948 = vset.pattern.permute.xlu0 0
        %1949 = vperm.xlu0 %1948, %v683
        %v1950 = vpop.permute.xlu0 %1949
        %1952 = vset.pattern.permute.xlu0 0
        %1953 = vperm.xlu0 %1952, %v684
        %v1954 = vpop.permute.xlu0 %1953
        %1956 = vset.pattern.permute.xlu0 0
        %1957 = vperm.xlu0 %1956, %v685
        %v1958 = vpop.permute.xlu0 %1957
        %1960 = vset.pattern.permute.xlu0 0
        %1961 = vperm.xlu0 %1960, %v686
        %v1962 = vpop.permute.xlu0 %1961
        %1964 = vset.pattern.permute.xlu0 0
        %1965 = vperm.xlu0 %1964, %v687
        %v1966 = vpop.permute.xlu0 %1965
        %1968 = vset.pattern.permute.xlu0 0
        %1969 = vperm.xlu0 %1968, %v688
        %v1970 = vpop.permute.xlu0 %1969
        %1972 = vset.pattern.permute.xlu0 0
        %1973 = vperm.xlu0 %1972, %v689
        %v1974 = vpop.permute.xlu0 %1973
        %1976 = vset.pattern.permute.xlu0 0
        %1977 = vperm.xlu0 %1976, %v690
        %v1978 = vpop.permute.xlu0 %1977
        %1980 = vset.pattern.permute.xlu0 0
        %1981 = vperm.xlu0 %1980, %v691
        %v1982 = vpop.permute.xlu0 %1981
        %1984 = vset.pattern.permute.xlu0 0
        %1985 = vperm.xlu0 %1984, %v692
        %v1986 = vpop.permute.xlu0 %1985
        %1988 = vset.pattern.permute.xlu0 0
        %1989 = vperm.xlu0 %1988, %v693
        %v1990 = vpop.permute.xlu0 %1989
        %1992 = vset.pattern.permute.xlu0 0
        %1993 = vperm.xlu0 %1992, %v694
        %v1994 = vpop.permute.xlu0 %1993
        %1996 = vset.pattern.permute.xlu0 0
        %1997 = vperm.xlu0 %1996, %v695
        %v1998 = vpop.permute.xlu0 %1997
        %2000 = vset.pattern.permute.xlu0 0
        %2001 = vperm.xlu0 %2000, %v696
        %v2002 = vpop.permute.xlu0 %2001
        %2004 = vset.pattern.permute.xlu0 0
        %2005 = vperm.xlu0 %2004, %v697
        %v2006 = vpop.permute.xlu0 %2005
        %2008 = vset.pattern.permute.xlu0 0
        %2009 = vperm.xlu0 %2008, %v698
        %v2010 = vpop.permute.xlu0 %2009
        %2012 = vset.pattern.permute.xlu0 0
        %2013 = vperm.xlu0 %2012, %v699
        %v2014 = vpop.permute.xlu0 %2013
        %2016 = vset.pattern.permute.xlu0 0
        %2017 = vperm.xlu0 %2016, %v700
        %v2018 = vpop.permute.xlu0 %2017
        %2020 = vset.pattern.permute.xlu0 0
        %2021 = vperm.xlu0 %2020, %v701
        %v2022 = vpop.permute.xlu0 %2021
        %2024 = vset.pattern.permute.xlu0 0
        %2025 = vperm.xlu0 %2024, %v702
        %v2026 = vpop.permute.xlu0 %2025
        %2028 = vset.pattern.permute.xlu0 0
        %2029 = vperm.xlu0 %2028, %v703
        %v2030 = vpop.permute.xlu0 %2029
        %2032 = vset.pattern.permute.xlu0 0
        %2033 = vperm.xlu0 %2032, %v704
        %v2034 = vpop.permute.xlu0 %2033
        %2036 = vset.pattern.permute.xlu0 0
        %2037 = vperm.xlu0 %2036, %v705
        %v2038 = vpop.permute.xlu0 %2037
        %2040 = vset.pattern.permute.xlu0 0
        %2041 = vperm.xlu0 %2040, %v706
        %v2042 = vpop.permute.xlu0 %2041
        %2044 = vset.pattern.permute.xlu0 0
        %2045 = vperm.xlu0 %2044, %v707
        %v2046 = vpop.permute.xlu0 %2045
        %2048 = vset.pattern.permute.xlu0 0
        %2049 = vperm.xlu0 %2048, %v708
        %v2050 = vpop.permute.xlu0 %2049
        %2052 = vset.pattern.permute.xlu0 0
        %2053 = vperm.xlu0 %2052, %v709
        %v2054 = vpop.permute.xlu0 %2053
        %2056 = vset.pattern.permute.xlu0 0
        %2057 = vperm.xlu0 %2056, %v710
        %v2058 = vpop.permute.xlu0 %2057
        %2060 = vset.pattern.permute.xlu0 0
        %2061 = vperm.xlu0 %2060, %v711
        %v2062 = vpop.permute.xlu0 %2061
        %2064 = vset.pattern.permute.xlu0 0
        %2065 = vperm.xlu0 %2064, %v712
        %v2066 = vpop.permute.xlu0 %2065
        %2068 = vset.pattern.permute.xlu0 0
        %2069 = vperm.xlu0 %2068, %v713
        %v2070 = vpop.permute.xlu0 %2069
        %2072 = vset.pattern.permute.xlu0 0
        %2073 = vperm.xlu0 %2072, %v714
        %v2074 = vpop.permute.xlu0 %2073
        %2076 = vset.pattern.permute.xlu0 0
        %2077 = vperm.xlu0 %2076, %v715
        %v2078 = vpop.permute.xlu0 %2077
        %2080 = vset.pattern.permute.xlu0 0
        %2081 = vperm.xlu0 %2080, %v716
        %v2082 = vpop.permute.xlu0 %2081
        %2084 = vset.pattern.permute.xlu0 0
        %2085 = vperm.xlu0 %2084, %v717
        %v2086 = vpop.permute.xlu0 %2085
        %2088 = vset.pattern.permute.xlu0 0
        %2089 = vperm.xlu0 %2088, %v718
        %v2090 = vpop.permute.xlu0 %2089
        %2092 = vset.pattern.permute.xlu0 0
        %2093 = vperm.xlu0 %2092, %v719
        %v2094 = vpop.permute.xlu0 %2093
        %2096 = vset.pattern.permute.xlu0 0
        %2097 = vperm.xlu0 %2096, %v720
        %v2098 = vpop.permute.xlu0 %2097
        %2100 = vset.pattern.permute.xlu0 0
        %2101 = vperm.xlu0 %2100, %v721
        %v2102 = vpop.permute.xlu0 %2101
        %2104 = vset.pattern.permute.xlu0 0
        %2105 = vperm.xlu0 %2104, %v722
        %v2106 = vpop.permute.xlu0 %2105
        %2108 = vset.pattern.permute.xlu0 0
        %2109 = vperm.xlu0 %2108, %v723
        %v2110 = vpop.permute.xlu0 %2109
        %2112 = vset.pattern.permute.xlu0 0
        %2113 = vperm.xlu0 %2112, %v724
        %v2114 = vpop.permute.xlu0 %2113
        %2116 = vset.pattern.permute.xlu0 0
        %2117 = vperm.xlu0 %2116, %v725
        %v2118 = vpop.permute.xlu0 %2117
        %2120 = vset.pattern.permute.xlu0 0
        %2121 = vperm.xlu0 %2120, %v726
        %v2122 = vpop.permute.xlu0 %2121
        %2124 = vset.pattern.permute.xlu0 0
        %2125 = vperm.xlu0 %2124, %v727
        %v2126 = vpop.permute.xlu0 %2125
        %2128 = vset.pattern.permute.xlu0 0
        %2129 = vperm.xlu0 %2128, %v728
        %v2130 = vpop.permute.xlu0 %2129
        %2132 = vset.pattern.permute.xlu0 0
        %2133 = vperm.xlu0 %2132, %v729
        %v2134 = vpop.permute.xlu0 %2133
        %2136 = vset.pattern.permute.xlu0 0
        %2137 = vperm.xlu0 %2136, %v730
        %v2138 = vpop.permute.xlu0 %2137
        %2140 = vset.pattern.permute.xlu0 0
        %2141 = vperm.xlu0 %2140, %v731
        %v2142 = vpop.permute.xlu0 %2141
        %2144 = vset.pattern.permute.xlu0 0
        %2145 = vperm.xlu0 %2144, %v732
        %v2146 = vpop.permute.xlu0 %2145
        %2148 = vset.pattern.permute.xlu0 0
        %2149 = vperm.xlu0 %2148, %v733
        %v2150 = vpop.permute.xlu0 %2149
        %2152 = vset.pattern.permute.xlu0 0
        %2153 = vperm.xlu0 %2152, %v734
        %v2154 = vpop.permute.xlu0 %2153
        %v2156 = vmul.f32 %v1902, %v999
        %v2157 = vmul.f32 %v1906, %v1004
        %v2158 = vmul.f32 %v1910, %v1009
        %v2159 = vmul.f32 %v1914, %v1014
        %v2160 = vmul.f32 %v1918, %v1019
        %v2161 = vmul.f32 %v1922, %v1024
        %v2162 = vmul.f32 %v1926, %v1029
        %v2163 = vmul.f32 %v1930, %v1034
        %v2164 = vmul.f32 %v1934, %v1039
        %v2165 = vmul.f32 %v1938, %v1044
        %v2166 = vmul.f32 %v1942, %v1049
        %v2167 = vmul.f32 %v1946, %v1054
        %v2168 = vmul.f32 %v1950, %v1059
        %v2169 = vmul.f32 %v1954, %v1064
        %v2170 = vmul.f32 %v1958, %v1069
        %v2171 = vmul.f32 %v1962, %v1074
        %v2172 = vmul.f32 %v1966, %v1079
        %v2173 = vmul.f32 %v1970, %v1084
        %v2174 = vmul.f32 %v1974, %v1089
        %v2175 = vmul.f32 %v1978, %v1094
        %v2176 = vmul.f32 %v1982, %v1099
        %v2177 = vmul.f32 %v1986, %v1104
        %v2178 = vmul.f32 %v1990, %v1109
        %v2179 = vmul.f32 %v1994, %v1114
        %v2180 = vmul.f32 %v1998, %v1119
        %v2181 = vmul.f32 %v2002, %v1124
        %v2182 = vmul.f32 %v2006, %v1129
        %v2183 = vmul.f32 %v2010, %v1134
        %v2184 = vmul.f32 %v2014, %v1139
        %v2185 = vmul.f32 %v2018, %v1144
        %v2186 = vmul.f32 %v2022, %v1149
        %v2187 = vmul.f32 %v2026, %v1154
        %v2188 = vmul.f32 %v2030, %v1159
        %v2189 = vmul.f32 %v2034, %v1164
        %v2190 = vmul.f32 %v2038, %v1169
        %v2191 = vmul.f32 %v2042, %v1174
        %v2192 = vmul.f32 %v2046, %v1179
        %v2193 = vmul.f32 %v2050, %v1184
        %v2194 = vmul.f32 %v2054, %v1189
        %v2195 = vmul.f32 %v2058, %v1194
        %v2196 = vmul.f32 %v2062, %v1199
        %v2197 = vmul.f32 %v2066, %v1204
        %v2198 = vmul.f32 %v2070, %v1209
        %v2199 = vmul.f32 %v2074, %v1214
        %v2200 = vmul.f32 %v2078, %v1219
        %v2201 = vmul.f32 %v2082, %v1224
        %v2202 = vmul.f32 %v2086, %v1229
        %v2203 = vmul.f32 %v2090, %v1234
        %v2204 = vmul.f32 %v2094, %v1239
        %v2205 = vmul.f32 %v2098, %v1244
        %v2206 = vmul.f32 %v2102, %v1249
        %v2207 = vmul.f32 %v2106, %v1254
        %v2208 = vmul.f32 %v2110, %v1259
        %v2209 = vmul.f32 %v2114, %v1264
        %v2210 = vmul.f32 %v2118, %v1269
        %v2211 = vmul.f32 %v2122, %v1274
        %v2212 = vmul.f32 %v2126, %v1279
        %v2213 = vmul.f32 %v2130, %v1284
        %v2214 = vmul.f32 %v2134, %v1289
        %v2215 = vmul.f32 %v2138, %v1294
        %v2216 = vmul.f32 %v2142, %v1299
        %v2217 = vmul.f32 %v2146, %v1304
        %v2218 = vmul.f32 %v2150, %v1309
        %v2219 = vmul.f32 %v2154, %v1314
        %v2220 = vadd.f32 %v2156, 0.0
        %v2221 = vadd.f32 %v2157, 0.0
        %v2222 = vadd.f32 %v2158, 0.0
        %v2223 = vadd.f32 %v2159, 0.0
        %v2224 = vadd.f32 %v2160, 0.0
        %v2225 = vadd.f32 %v2161, 0.0
        %v2226 = vadd.f32 %v2162, 0.0
        %v2227 = vadd.f32 %v2163, 0.0
        %v2228 = vadd.f32 %v2164, 0.0
        %v2229 = vadd.f32 %v2165, 0.0
        %v2230 = vadd.f32 %v2166, 0.0
        %v2231 = vadd.f32 %v2167, 0.0
        %v2232 = vadd.f32 %v2168, 0.0
        %v2233 = vadd.f32 %v2169, 0.0
        %v2234 = vadd.f32 %v2170, 0.0
        %v2235 = vadd.f32 %v2171, 0.0
        %v2236 = vadd.f32 %v2172, 0.0
        %v2237 = vadd.f32 %v2173, 0.0
        %v2238 = vadd.f32 %v2174, 0.0
        %v2239 = vadd.f32 %v2175, 0.0
        %v2240 = vadd.f32 %v2176, 0.0
        %v2241 = vadd.f32 %v2177, 0.0
        %v2242 = vadd.f32 %v2178, 0.0
        %v2243 = vadd.f32 %v2179, 0.0
        %v2244 = vadd.f32 %v2180, 0.0
        %v2245 = vadd.f32 %v2181, 0.0
        %v2246 = vadd.f32 %v2182, 0.0
        %v2247 = vadd.f32 %v2183, 0.0
        %v2248 = vadd.f32 %v2184, 0.0
        %v2249 = vadd.f32 %v2185, 0.0
        %v2250 = vadd.f32 %v2186, 0.0
        %v2251 = vadd.f32 %v2187, 0.0
        %v2252 = vadd.f32 %v2188, 0.0
        %v2253 = vadd.f32 %v2189, 0.0
        %v2254 = vadd.f32 %v2190, 0.0
        %v2255 = vadd.f32 %v2191, 0.0
        %v2256 = vadd.f32 %v2192, 0.0
        %v2257 = vadd.f32 %v2193, 0.0
        %v2258 = vadd.f32 %v2194, 0.0
        %v2259 = vadd.f32 %v2195, 0.0
        %v2260 = vadd.f32 %v2196, 0.0
        %v2261 = vadd.f32 %v2197, 0.0
        %v2262 = vadd.f32 %v2198, 0.0
        %v2263 = vadd.f32 %v2199, 0.0
        %v2264 = vadd.f32 %v2200, 0.0
        %v2265 = vadd.f32 %v2201, 0.0
        %v2266 = vadd.f32 %v2202, 0.0
        %v2267 = vadd.f32 %v2203, 0.0
        %v2268 = vadd.f32 %v2204, 0.0
        %v2269 = vadd.f32 %v2205, 0.0
        %v2270 = vadd.f32 %v2206, 0.0
        %v2271 = vadd.f32 %v2207, 0.0
        %v2272 = vadd.f32 %v2208, 0.0
        %v2273 = vadd.f32 %v2209, 0.0
        %v2274 = vadd.f32 %v2210, 0.0
        %v2275 = vadd.f32 %v2211, 0.0
        %v2276 = vadd.f32 %v2212, 0.0
        %v2277 = vadd.f32 %v2213, 0.0
        %v2278 = vadd.f32 %v2214, 0.0
        %v2279 = vadd.f32 %v2215, 0.0
        %v2280 = vadd.f32 %v2216, 0.0
        %v2281 = vadd.f32 %v2217, 0.0
        %v2282 = vadd.f32 %v2218, 0.0
        %v2283 = vadd.f32 %v2219, 0.0
        %2284 = vset.pattern.permute.xlu0 1
        %2285 = vperm.xlu0 %2284, %v671
        %v2286 = vpop.permute.xlu0 %2285
        %2288 = vset.pattern.permute.xlu0 1
        %2289 = vperm.xlu0 %2288, %v672
        %v2290 = vpop.permute.xlu0 %2289
        %2292 = vset.pattern.permute.xlu0 1
        %2293 = vperm.xlu0 %2292, %v673
        %v2294 = vpop.permute.xlu0 %2293
        %2296 = vset.pattern.permute.xlu0 1
        %2297 = vperm.xlu0 %2296, %v674
        %v2298 = vpop.permute.xlu0 %2297
        %2300 = vset.pattern.permute.xlu0 1
        %2301 = vperm.xlu0 %2300, %v675
        %v2302 = vpop.permute.xlu0 %2301
        %2304 = vset.pattern.permute.xlu0 1
        %2305 = vperm.xlu0 %2304, %v676
        %v2306 = vpop.permute.xlu0 %2305
        %2308 = vset.pattern.permute.xlu0 1
        %2309 = vperm.xlu0 %2308, %v677
        %v2310 = vpop.permute.xlu0 %2309
        %2312 = vset.pattern.permute.xlu0 1
        %2313 = vperm.xlu0 %2312, %v678
        %v2314 = vpop.permute.xlu0 %2313
        %2316 = vset.pattern.permute.xlu0 1
        %2317 = vperm.xlu0 %2316, %v679
        %v2318 = vpop.permute.xlu0 %2317
        %2320 = vset.pattern.permute.xlu0 1
        %2321 = vperm.xlu0 %2320, %v680
        %v2322 = vpop.permute.xlu0 %2321
        %2324 = vset.pattern.permute.xlu0 1
        %2325 = vperm.xlu0 %2324, %v681
        %v2326 = vpop.permute.xlu0 %2325
        %2328 = vset.pattern.permute.xlu0 1
        %2329 = vperm.xlu0 %2328, %v682
        %v2330 = vpop.permute.xlu0 %2329
        %2332 = vset.pattern.permute.xlu0 1
        %2333 = vperm.xlu0 %2332, %v683
        %v2334 = vpop.permute.xlu0 %2333
        %2336 = vset.pattern.permute.xlu0 1
        %2337 = vperm.xlu0 %2336, %v684
        %v2338 = vpop.permute.xlu0 %2337
        %2340 = vset.pattern.permute.xlu0 1
        %2341 = vperm.xlu0 %2340, %v685
        %v2342 = vpop.permute.xlu0 %2341
        %2344 = vset.pattern.permute.xlu0 1
        %2345 = vperm.xlu0 %2344, %v686
        %v2346 = vpop.permute.xlu0 %2345
        %2348 = vset.pattern.permute.xlu0 1
        %2349 = vperm.xlu0 %2348, %v687
        %v2350 = vpop.permute.xlu0 %2349
        %2352 = vset.pattern.permute.xlu0 1
        %2353 = vperm.xlu0 %2352, %v688
        %v2354 = vpop.permute.xlu0 %2353
        %2356 = vset.pattern.permute.xlu0 1
        %2357 = vperm.xlu0 %2356, %v689
        %v2358 = vpop.permute.xlu0 %2357
        %2360 = vset.pattern.permute.xlu0 1
        %2361 = vperm.xlu0 %2360, %v690
        %v2362 = vpop.permute.xlu0 %2361
        %2364 = vset.pattern.permute.xlu0 1
        %2365 = vperm.xlu0 %2364, %v691
        %v2366 = vpop.permute.xlu0 %2365
        %2368 = vset.pattern.permute.xlu0 1
        %2369 = vperm.xlu0 %2368, %v692
        %v2370 = vpop.permute.xlu0 %2369
        %2372 = vset.pattern.permute.xlu0 1
        %2373 = vperm.xlu0 %2372, %v693
        %v2374 = vpop.permute.xlu0 %2373
        %2376 = vset.pattern.permute.xlu0 1
        %2377 = vperm.xlu0 %2376, %v694
        %v2378 = vpop.permute.xlu0 %2377
        %2380 = vset.pattern.permute.xlu0 1
        %2381 = vperm.xlu0 %2380, %v695
        %v2382 = vpop.permute.xlu0 %2381
        %2384 = vset.pattern.permute.xlu0 1
        %2385 = vperm.xlu0 %2384, %v696
        %v2386 = vpop.permute.xlu0 %2385
        %2388 = vset.pattern.permute.xlu0 1
        %2389 = vperm.xlu0 %2388, %v697
        %v2390 = vpop.permute.xlu0 %2389
        %2392 = vset.pattern.permute.xlu0 1
        %2393 = vperm.xlu0 %2392, %v698
        %v2394 = vpop.permute.xlu0 %2393
        %2396 = vset.pattern.permute.xlu0 1
        %2397 = vperm.xlu0 %2396, %v699
        %v2398 = vpop.permute.xlu0 %2397
        %2400 = vset.pattern.permute.xlu0 1
        %2401 = vperm.xlu0 %2400, %v700
        %v2402 = vpop.permute.xlu0 %2401
        %2404 = vset.pattern.permute.xlu0 1
        %2405 = vperm.xlu0 %2404, %v701
        %v2406 = vpop.permute.xlu0 %2405
        %2408 = vset.pattern.permute.xlu0 1
        %2409 = vperm.xlu0 %2408, %v702
        %v2410 = vpop.permute.xlu0 %2409
        %2412 = vset.pattern.permute.xlu0 1
        %2413 = vperm.xlu0 %2412, %v703
        %v2414 = vpop.permute.xlu0 %2413
        %2416 = vset.pattern.permute.xlu0 1
        %2417 = vperm.xlu0 %2416, %v704
        %v2418 = vpop.permute.xlu0 %2417
        %2420 = vset.pattern.permute.xlu0 1
        %2421 = vperm.xlu0 %2420, %v705
        %v2422 = vpop.permute.xlu0 %2421
        %2424 = vset.pattern.permute.xlu0 1
        %2425 = vperm.xlu0 %2424, %v706
        %v2426 = vpop.permute.xlu0 %2425
        %2428 = vset.pattern.permute.xlu0 1
        %2429 = vperm.xlu0 %2428, %v707
        %v2430 = vpop.permute.xlu0 %2429
        %2432 = vset.pattern.permute.xlu0 1
        %2433 = vperm.xlu0 %2432, %v708
        %v2434 = vpop.permute.xlu0 %2433
        %2436 = vset.pattern.permute.xlu0 1
        %2437 = vperm.xlu0 %2436, %v709
        %v2438 = vpop.permute.xlu0 %2437
        %2440 = vset.pattern.permute.xlu0 1
        %2441 = vperm.xlu0 %2440, %v710
        %v2442 = vpop.permute.xlu0 %2441
        %2444 = vset.pattern.permute.xlu0 1
        %2445 = vperm.xlu0 %2444, %v711
        %v2446 = vpop.permute.xlu0 %2445
        %2448 = vset.pattern.permute.xlu0 1
        %2449 = vperm.xlu0 %2448, %v712
        %v2450 = vpop.permute.xlu0 %2449
        %2452 = vset.pattern.permute.xlu0 1
        %2453 = vperm.xlu0 %2452, %v713
        %v2454 = vpop.permute.xlu0 %2453
        %2456 = vset.pattern.permute.xlu0 1
        %2457 = vperm.xlu0 %2456, %v714
        %v2458 = vpop.permute.xlu0 %2457
        %2460 = vset.pattern.permute.xlu0 1
        %2461 = vperm.xlu0 %2460, %v715
        %v2462 = vpop.permute.xlu0 %2461
        %2464 = vset.pattern.permute.xlu0 1
        %2465 = vperm.xlu0 %2464, %v716
        %v2466 = vpop.permute.xlu0 %2465
        %2468 = vset.pattern.permute.xlu0 1
        %2469 = vperm.xlu0 %2468, %v717
        %v2470 = vpop.permute.xlu0 %2469
        %2472 = vset.pattern.permute.xlu0 1
        %2473 = vperm.xlu0 %2472, %v718
        %v2474 = vpop.permute.xlu0 %2473
        %2476 = vset.pattern.permute.xlu0 1
        %2477 = vperm.xlu0 %2476, %v719
        %v2478 = vpop.permute.xlu0 %2477
        %2480 = vset.pattern.permute.xlu0 1
        %2481 = vperm.xlu0 %2480, %v720
        %v2482 = vpop.permute.xlu0 %2481
        %2484 = vset.pattern.permute.xlu0 1
        %2485 = vperm.xlu0 %2484, %v721
        %v2486 = vpop.permute.xlu0 %2485
        %2488 = vset.pattern.permute.xlu0 1
        %2489 = vperm.xlu0 %2488, %v722
        %v2490 = vpop.permute.xlu0 %2489
        %2492 = vset.pattern.permute.xlu0 1
        %2493 = vperm.xlu0 %2492, %v723
        %v2494 = vpop.permute.xlu0 %2493
        %2496 = vset.pattern.permute.xlu0 1
        %2497 = vperm.xlu0 %2496, %v724
        %v2498 = vpop.permute.xlu0 %2497
        %2500 = vset.pattern.permute.xlu0 1
        %2501 = vperm.xlu0 %2500, %v725
        %v2502 = vpop.permute.xlu0 %2501
        %2504 = vset.pattern.permute.xlu0 1
        %2505 = vperm.xlu0 %2504, %v726
        %v2506 = vpop.permute.xlu0 %2505
        %2508 = vset.pattern.permute.xlu0 1
        %2509 = vperm.xlu0 %2508, %v727
        %v2510 = vpop.permute.xlu0 %2509
        %2512 = vset.pattern.permute.xlu0 1
        %2513 = vperm.xlu0 %2512, %v728
        %v2514 = vpop.permute.xlu0 %2513
        %2516 = vset.pattern.permute.xlu0 1
        %2517 = vperm.xlu0 %2516, %v729
        %v2518 = vpop.permute.xlu0 %2517
        %2520 = vset.pattern.permute.xlu0 1
        %2521 = vperm.xlu0 %2520, %v730
        %v2522 = vpop.permute.xlu0 %2521
        %2524 = vset.pattern.permute.xlu0 1
        %2525 = vperm.xlu0 %2524, %v731
        %v2526 = vpop.permute.xlu0 %2525
        %2528 = vset.pattern.permute.xlu0 1
        %2529 = vperm.xlu0 %2528, %v732
        %v2530 = vpop.permute.xlu0 %2529
        %2532 = vset.pattern.permute.xlu0 1
        %2533 = vperm.xlu0 %2532, %v733
        %v2534 = vpop.permute.xlu0 %2533
        %2536 = vset.pattern.permute.xlu0 1
        %2537 = vperm.xlu0 %2536, %v734
        %v2538 = vpop.permute.xlu0 %2537
        %v2540 = vmul.f32 %v2286, %v999
        %v2541 = vmul.f32 %v2290, %v1004
        %v2542 = vmul.f32 %v2294, %v1009
        %v2543 = vmul.f32 %v2298, %v1014
        %v2544 = vmul.f32 %v2302, %v1019
        %v2545 = vmul.f32 %v2306, %v1024
        %v2546 = vmul.f32 %v2310, %v1029
        %v2547 = vmul.f32 %v2314, %v1034
        %v2548 = vmul.f32 %v2318, %v1039
        %v2549 = vmul.f32 %v2322, %v1044
        %v2550 = vmul.f32 %v2326, %v1049
        %v2551 = vmul.f32 %v2330, %v1054
        %v2552 = vmul.f32 %v2334, %v1059
        %v2553 = vmul.f32 %v2338, %v1064
        %v2554 = vmul.f32 %v2342, %v1069
        %v2555 = vmul.f32 %v2346, %v1074
        %v2556 = vmul.f32 %v2350, %v1079
        %v2557 = vmul.f32 %v2354, %v1084
        %v2558 = vmul.f32 %v2358, %v1089
        %v2559 = vmul.f32 %v2362, %v1094
        %v2560 = vmul.f32 %v2366, %v1099
        %v2561 = vmul.f32 %v2370, %v1104
        %v2562 = vmul.f32 %v2374, %v1109
        %v2563 = vmul.f32 %v2378, %v1114
        %v2564 = vmul.f32 %v2382, %v1119
        %v2565 = vmul.f32 %v2386, %v1124
        %v2566 = vmul.f32 %v2390, %v1129
        %v2567 = vmul.f32 %v2394, %v1134
        %v2568 = vmul.f32 %v2398, %v1139
        %v2569 = vmul.f32 %v2402, %v1144
        %v2570 = vmul.f32 %v2406, %v1149
        %v2571 = vmul.f32 %v2410, %v1154
        %v2572 = vmul.f32 %v2414, %v1159
        %v2573 = vmul.f32 %v2418, %v1164
        %v2574 = vmul.f32 %v2422, %v1169
        %v2575 = vmul.f32 %v2426, %v1174
        %v2576 = vmul.f32 %v2430, %v1179
        %v2577 = vmul.f32 %v2434, %v1184
        %v2578 = vmul.f32 %v2438, %v1189
        %v2579 = vmul.f32 %v2442, %v1194
        %v2580 = vmul.f32 %v2446, %v1199
        %v2581 = vmul.f32 %v2450, %v1204
        %v2582 = vmul.f32 %v2454, %v1209
        %v2583 = vmul.f32 %v2458, %v1214
        %v2584 = vmul.f32 %v2462, %v1219
        %v2585 = vmul.f32 %v2466, %v1224
        %v2586 = vmul.f32 %v2470, %v1229
        %v2587 = vmul.f32 %v2474, %v1234
        %v2588 = vmul.f32 %v2478, %v1239
        %v2589 = vmul.f32 %v2482, %v1244
        %v2590 = vmul.f32 %v2486, %v1249
        %v2591 = vmul.f32 %v2490, %v1254
        %v2592 = vmul.f32 %v2494, %v1259
        %v2593 = vmul.f32 %v2498, %v1264
        %v2594 = vmul.f32 %v2502, %v1269
        %v2595 = vmul.f32 %v2506, %v1274
        %v2596 = vmul.f32 %v2510, %v1279
        %v2597 = vmul.f32 %v2514, %v1284
        %v2598 = vmul.f32 %v2518, %v1289
        %v2599 = vmul.f32 %v2522, %v1294
        %v2600 = vmul.f32 %v2526, %v1299
        %v2601 = vmul.f32 %v2530, %v1304
        %v2602 = vmul.f32 %v2534, %v1309
        %v2603 = vmul.f32 %v2538, %v1314
        %2668 = vrot.lane.b32.xlu0 %v2540, 96
        %v2669 = vpop.permute.xlu0 %2668
        %2670 = vrot.lane.b32.xlu0 %v2541, 96
        %v2671 = vpop.permute.xlu0 %2670
        %2672 = vrot.lane.b32.xlu0 %v2542, 96
        %v2673 = vpop.permute.xlu0 %2672
        %2674 = vrot.lane.b32.xlu0 %v2543, 96
        %v2675 = vpop.permute.xlu0 %2674
        %2676 = vrot.lane.b32.xlu0 %v2544, 96
        %v2677 = vpop.permute.xlu0 %2676
        %2678 = vrot.lane.b32.xlu0 %v2545, 96
        %v2679 = vpop.permute.xlu0 %2678
        %2680 = vrot.lane.b32.xlu0 %v2546, 96
        %v2681 = vpop.permute.xlu0 %2680
        %2682 = vrot.lane.b32.xlu0 %v2547, 96
        %v2683 = vpop.permute.xlu0 %2682
        %2684 = vrot.lane.b32.xlu0 %v2548, 96
        %v2685 = vpop.permute.xlu0 %2684
        %2686 = vrot.lane.b32.xlu0 %v2549, 96
        %v2687 = vpop.permute.xlu0 %2686
        %2688 = vrot.lane.b32.xlu0 %v2550, 96
        %v2689 = vpop.permute.xlu0 %2688
        %2690 = vrot.lane.b32.xlu0 %v2551, 96
        %v2691 = vpop.permute.xlu0 %2690
        %2692 = vrot.lane.b32.xlu0 %v2552, 96
        %v2693 = vpop.permute.xlu0 %2692
        %2694 = vrot.lane.b32.xlu0 %v2553, 96
        %v2695 = vpop.permute.xlu0 %2694
        %2696 = vrot.lane.b32.xlu0 %v2554, 96
        %v2697 = vpop.permute.xlu0 %2696
        %2698 = vrot.lane.b32.xlu0 %v2555, 96
        %v2699 = vpop.permute.xlu0 %2698
        %2700 = vrot.lane.b32.xlu0 %v2556, 96
        %v2701 = vpop.permute.xlu0 %2700
        %2702 = vrot.lane.b32.xlu0 %v2557, 96
        %v2703 = vpop.permute.xlu0 %2702
        %2704 = vrot.lane.b32.xlu0 %v2558, 96
        %v2705 = vpop.permute.xlu0 %2704
        %2706 = vrot.lane.b32.xlu0 %v2559, 96
        %v2707 = vpop.permute.xlu0 %2706
        %2708 = vrot.lane.b32.xlu0 %v2560, 96
        %v2709 = vpop.permute.xlu0 %2708
        %2710 = vrot.lane.b32.xlu0 %v2561, 96
        %v2711 = vpop.permute.xlu0 %2710
        %2712 = vrot.lane.b32.xlu0 %v2562, 96
        %v2713 = vpop.permute.xlu0 %2712
        %2714 = vrot.lane.b32.xlu0 %v2563, 96
        %v2715 = vpop.permute.xlu0 %2714
        %2716 = vrot.lane.b32.xlu0 %v2564, 96
        %v2717 = vpop.permute.xlu0 %2716
        %2718 = vrot.lane.b32.xlu0 %v2565, 96
        %v2719 = vpop.permute.xlu0 %2718
        %2720 = vrot.lane.b32.xlu0 %v2566, 96
        %v2721 = vpop.permute.xlu0 %2720
        %2722 = vrot.lane.b32.xlu0 %v2567, 96
        %v2723 = vpop.permute.xlu0 %2722
        %2724 = vrot.lane.b32.xlu0 %v2568, 96
        %v2725 = vpop.permute.xlu0 %2724
        %2726 = vrot.lane.b32.xlu0 %v2569, 96
        %v2727 = vpop.permute.xlu0 %2726
        %2728 = vrot.lane.b32.xlu0 %v2570, 96
        %v2729 = vpop.permute.xlu0 %2728
        %2730 = vrot.lane.b32.xlu0 %v2571, 96
        %v2731 = vpop.permute.xlu0 %2730
        %2732 = vrot.lane.b32.xlu0 %v2572, 96
        %v2733 = vpop.permute.xlu0 %2732
        %2734 = vrot.lane.b32.xlu0 %v2573, 96
        %v2735 = vpop.permute.xlu0 %2734
        %2736 = vrot.lane.b32.xlu0 %v2574, 96
        %v2737 = vpop.permute.xlu0 %2736
        %2738 = vrot.lane.b32.xlu0 %v2575, 96
        %v2739 = vpop.permute.xlu0 %2738
        %2740 = vrot.lane.b32.xlu0 %v2576, 96
        %v2741 = vpop.permute.xlu0 %2740
        %2742 = vrot.lane.b32.xlu0 %v2577, 96
        %v2743 = vpop.permute.xlu0 %2742
        %2744 = vrot.lane.b32.xlu0 %v2578, 96
        %v2745 = vpop.permute.xlu0 %2744
        %2746 = vrot.lane.b32.xlu0 %v2579, 96
        %v2747 = vpop.permute.xlu0 %2746
        %2748 = vrot.lane.b32.xlu0 %v2580, 96
        %v2749 = vpop.permute.xlu0 %2748
        %2750 = vrot.lane.b32.xlu0 %v2581, 96
        %v2751 = vpop.permute.xlu0 %2750
        %2752 = vrot.lane.b32.xlu0 %v2582, 96
        %v2753 = vpop.permute.xlu0 %2752
        %2754 = vrot.lane.b32.xlu0 %v2583, 96
        %v2755 = vpop.permute.xlu0 %2754
        %2756 = vrot.lane.b32.xlu0 %v2584, 96
        %v2757 = vpop.permute.xlu0 %2756
        %2758 = vrot.lane.b32.xlu0 %v2585, 96
        %v2759 = vpop.permute.xlu0 %2758
        %2760 = vrot.lane.b32.xlu0 %v2586, 96
        %v2761 = vpop.permute.xlu0 %2760
        %2762 = vrot.lane.b32.xlu0 %v2587, 96
        %v2763 = vpop.permute.xlu0 %2762
        %2764 = vrot.lane.b32.xlu0 %v2588, 96
        %v2765 = vpop.permute.xlu0 %2764
        %2766 = vrot.lane.b32.xlu0 %v2589, 96
        %v2767 = vpop.permute.xlu0 %2766
        %2768 = vrot.lane.b32.xlu0 %v2590, 96
        %v2769 = vpop.permute.xlu0 %2768
        %2770 = vrot.lane.b32.xlu0 %v2591, 96
        %v2771 = vpop.permute.xlu0 %2770
        %2772 = vrot.lane.b32.xlu0 %v2592, 96
        %v2773 = vpop.permute.xlu0 %2772
        %2774 = vrot.lane.b32.xlu0 %v2593, 96
        %v2775 = vpop.permute.xlu0 %2774
        %2776 = vrot.lane.b32.xlu0 %v2594, 96
        %v2777 = vpop.permute.xlu0 %2776
        %2778 = vrot.lane.b32.xlu0 %v2595, 96
        %v2779 = vpop.permute.xlu0 %2778
        %2780 = vrot.lane.b32.xlu0 %v2596, 96
        %v2781 = vpop.permute.xlu0 %2780
        %2782 = vrot.lane.b32.xlu0 %v2597, 96
        %v2783 = vpop.permute.xlu0 %2782
        %2784 = vrot.lane.b32.xlu0 %v2598, 96
        %v2785 = vpop.permute.xlu0 %2784
        %2786 = vrot.lane.b32.xlu0 %v2599, 96
        %v2787 = vpop.permute.xlu0 %2786
        %2788 = vrot.lane.b32.xlu0 %v2600, 96
        %v2789 = vpop.permute.xlu0 %2788
        %2790 = vrot.lane.b32.xlu0 %v2601, 96
        %v2791 = vpop.permute.xlu0 %2790
        %2792 = vrot.lane.b32.xlu0 %v2602, 96
        %v2793 = vpop.permute.xlu0 %2792
        %2794 = vrot.lane.b32.xlu0 %v2603, 96
        %v2795 = vpop.permute.xlu0 %2794
        %v2860 = vadd.f32 %v2220, %v2669
        %v2861 = vadd.f32 %v2221, %v2671
        %v2862 = vadd.f32 %v2222, %v2673
        %v2863 = vadd.f32 %v2223, %v2675
        %v2864 = vadd.f32 %v2224, %v2677
        %v2865 = vadd.f32 %v2225, %v2679
        %v2866 = vadd.f32 %v2226, %v2681
        %v2867 = vadd.f32 %v2227, %v2683
        %v2868 = vadd.f32 %v2228, %v2685
        %v2869 = vadd.f32 %v2229, %v2687
        %v2870 = vadd.f32 %v2230, %v2689
        %v2871 = vadd.f32 %v2231, %v2691
        %v2872 = vadd.f32 %v2232, %v2693
        %v2873 = vadd.f32 %v2233, %v2695
        %v2874 = vadd.f32 %v2234, %v2697
        %v2875 = vadd.f32 %v2235, %v2699
        %v2876 = vadd.f32 %v2236, %v2701
        %v2877 = vadd.f32 %v2237, %v2703
        %v2878 = vadd.f32 %v2238, %v2705
        %v2879 = vadd.f32 %v2239, %v2707
        %v2880 = vadd.f32 %v2240, %v2709
        %v2881 = vadd.f32 %v2241, %v2711
        %v2882 = vadd.f32 %v2242, %v2713
        %v2883 = vadd.f32 %v2243, %v2715
        %v2884 = vadd.f32 %v2244, %v2717
        %v2885 = vadd.f32 %v2245, %v2719
        %v2886 = vadd.f32 %v2246, %v2721
        %v2887 = vadd.f32 %v2247, %v2723
        %v2888 = vadd.f32 %v2248, %v2725
        %v2889 = vadd.f32 %v2249, %v2727
        %v2890 = vadd.f32 %v2250, %v2729
        %v2891 = vadd.f32 %v2251, %v2731
        %v2892 = vadd.f32 %v2252, %v2733
        %v2893 = vadd.f32 %v2253, %v2735
        %v2894 = vadd.f32 %v2254, %v2737
        %v2895 = vadd.f32 %v2255, %v2739
        %v2896 = vadd.f32 %v2256, %v2741
        %v2897 = vadd.f32 %v2257, %v2743
        %v2898 = vadd.f32 %v2258, %v2745
        %v2899 = vadd.f32 %v2259, %v2747
        %v2900 = vadd.f32 %v2260, %v2749
        %v2901 = vadd.f32 %v2261, %v2751
        %v2902 = vadd.f32 %v2262, %v2753
        %v2903 = vadd.f32 %v2263, %v2755
        %v2904 = vadd.f32 %v2264, %v2757
        %v2905 = vadd.f32 %v2265, %v2759
        %v2906 = vadd.f32 %v2266, %v2761
        %v2907 = vadd.f32 %v2267, %v2763
        %v2908 = vadd.f32 %v2268, %v2765
        %v2909 = vadd.f32 %v2269, %v2767
        %v2910 = vadd.f32 %v2270, %v2769
        %v2911 = vadd.f32 %v2271, %v2771
        %v2912 = vadd.f32 %v2272, %v2773
        %v2913 = vadd.f32 %v2273, %v2775
        %v2914 = vadd.f32 %v2274, %v2777
        %v2915 = vadd.f32 %v2275, %v2779
        %v2916 = vadd.f32 %v2276, %v2781
        %v2917 = vadd.f32 %v2277, %v2783
        %v2918 = vadd.f32 %v2278, %v2785
        %v2919 = vadd.f32 %v2279, %v2787
        %v2920 = vadd.f32 %v2280, %v2789
        %v2921 = vadd.f32 %v2281, %v2791
        %v2922 = vadd.f32 %v2282, %v2793
        %v2923 = vadd.f32 %v2283, %v2795
        %2924 = vset.pattern.permute.xlu0 2
        %2925 = vperm.xlu0 %2924, %v671
        %v2926 = vpop.permute.xlu0 %2925
        %2928 = vset.pattern.permute.xlu0 2
        %2929 = vperm.xlu0 %2928, %v672
        %v2930 = vpop.permute.xlu0 %2929
        %2932 = vset.pattern.permute.xlu0 2
        %2933 = vperm.xlu0 %2932, %v673
        %v2934 = vpop.permute.xlu0 %2933
        %2936 = vset.pattern.permute.xlu0 2
        %2937 = vperm.xlu0 %2936, %v674
        %v2938 = vpop.permute.xlu0 %2937
        %2940 = vset.pattern.permute.xlu0 2
        %2941 = vperm.xlu0 %2940, %v675
        %v2942 = vpop.permute.xlu0 %2941
        %2944 = vset.pattern.permute.xlu0 2
        %2945 = vperm.xlu0 %2944, %v676
        %v2946 = vpop.permute.xlu0 %2945
        %2948 = vset.pattern.permute.xlu0 2
        %2949 = vperm.xlu0 %2948, %v677
        %v2950 = vpop.permute.xlu0 %2949
        %2952 = vset.pattern.permute.xlu0 2
        %2953 = vperm.xlu0 %2952, %v678
        %v2954 = vpop.permute.xlu0 %2953
        %2956 = vset.pattern.permute.xlu0 2
        %2957 = vperm.xlu0 %2956, %v679
        %v2958 = vpop.permute.xlu0 %2957
        %2960 = vset.pattern.permute.xlu0 2
        %2961 = vperm.xlu0 %2960, %v680
        %v2962 = vpop.permute.xlu0 %2961
        %2964 = vset.pattern.permute.xlu0 2
        %2965 = vperm.xlu0 %2964, %v681
        %v2966 = vpop.permute.xlu0 %2965
        %2968 = vset.pattern.permute.xlu0 2
        %2969 = vperm.xlu0 %2968, %v682
        %v2970 = vpop.permute.xlu0 %2969
        %2972 = vset.pattern.permute.xlu0 2
        %2973 = vperm.xlu0 %2972, %v683
        %v2974 = vpop.permute.xlu0 %2973
        %2976 = vset.pattern.permute.xlu0 2
        %2977 = vperm.xlu0 %2976, %v684
        %v2978 = vpop.permute.xlu0 %2977
        %2980 = vset.pattern.permute.xlu0 2
        %2981 = vperm.xlu0 %2980, %v685
        %v2982 = vpop.permute.xlu0 %2981
        %2984 = vset.pattern.permute.xlu0 2
        %2985 = vperm.xlu0 %2984, %v686
        %v2986 = vpop.permute.xlu0 %2985
        %2988 = vset.pattern.permute.xlu0 2
        %2989 = vperm.xlu0 %2988, %v687
        %v2990 = vpop.permute.xlu0 %2989
        %2992 = vset.pattern.permute.xlu0 2
        %2993 = vperm.xlu0 %2992, %v688
        %v2994 = vpop.permute.xlu0 %2993
        %2996 = vset.pattern.permute.xlu0 2
        %2997 = vperm.xlu0 %2996, %v689
        %v2998 = vpop.permute.xlu0 %2997
        %3000 = vset.pattern.permute.xlu0 2
        %3001 = vperm.xlu0 %3000, %v690
        %v3002 = vpop.permute.xlu0 %3001
        %3004 = vset.pattern.permute.xlu0 2
        %3005 = vperm.xlu0 %3004, %v691
        %v3006 = vpop.permute.xlu0 %3005
        %3008 = vset.pattern.permute.xlu0 2
        %3009 = vperm.xlu0 %3008, %v692
        %v3010 = vpop.permute.xlu0 %3009
        %3012 = vset.pattern.permute.xlu0 2
        %3013 = vperm.xlu0 %3012, %v693
        %v3014 = vpop.permute.xlu0 %3013
        %3016 = vset.pattern.permute.xlu0 2
        %3017 = vperm.xlu0 %3016, %v694
        %v3018 = vpop.permute.xlu0 %3017
        %3020 = vset.pattern.permute.xlu0 2
        %3021 = vperm.xlu0 %3020, %v695
        %v3022 = vpop.permute.xlu0 %3021
        %3024 = vset.pattern.permute.xlu0 2
        %3025 = vperm.xlu0 %3024, %v696
        %v3026 = vpop.permute.xlu0 %3025
        %3028 = vset.pattern.permute.xlu0 2
        %3029 = vperm.xlu0 %3028, %v697
        %v3030 = vpop.permute.xlu0 %3029
        %3032 = vset.pattern.permute.xlu0 2
        %3033 = vperm.xlu0 %3032, %v698
        %v3034 = vpop.permute.xlu0 %3033
        %3036 = vset.pattern.permute.xlu0 2
        %3037 = vperm.xlu0 %3036, %v699
        %v3038 = vpop.permute.xlu0 %3037
        %3040 = vset.pattern.permute.xlu0 2
        %3041 = vperm.xlu0 %3040, %v700
        %v3042 = vpop.permute.xlu0 %3041
        %3044 = vset.pattern.permute.xlu0 2
        %3045 = vperm.xlu0 %3044, %v701
        %v3046 = vpop.permute.xlu0 %3045
        %3048 = vset.pattern.permute.xlu0 2
        %3049 = vperm.xlu0 %3048, %v702
        %v3050 = vpop.permute.xlu0 %3049
        %3052 = vset.pattern.permute.xlu0 2
        %3053 = vperm.xlu0 %3052, %v703
        %v3054 = vpop.permute.xlu0 %3053
        %3056 = vset.pattern.permute.xlu0 2
        %3057 = vperm.xlu0 %3056, %v704
        %v3058 = vpop.permute.xlu0 %3057
        %3060 = vset.pattern.permute.xlu0 2
        %3061 = vperm.xlu0 %3060, %v705
        %v3062 = vpop.permute.xlu0 %3061
        %3064 = vset.pattern.permute.xlu0 2
        %3065 = vperm.xlu0 %3064, %v706
        %v3066 = vpop.permute.xlu0 %3065
        %3068 = vset.pattern.permute.xlu0 2
        %3069 = vperm.xlu0 %3068, %v707
        %v3070 = vpop.permute.xlu0 %3069
        %3072 = vset.pattern.permute.xlu0 2
        %3073 = vperm.xlu0 %3072, %v708
        %v3074 = vpop.permute.xlu0 %3073
        %3076 = vset.pattern.permute.xlu0 2
        %3077 = vperm.xlu0 %3076, %v709
        %v3078 = vpop.permute.xlu0 %3077
        %3080 = vset.pattern.permute.xlu0 2
        %3081 = vperm.xlu0 %3080, %v710
        %v3082 = vpop.permute.xlu0 %3081
        %3084 = vset.pattern.permute.xlu0 2
        %3085 = vperm.xlu0 %3084, %v711
        %v3086 = vpop.permute.xlu0 %3085
        %3088 = vset.pattern.permute.xlu0 2
        %3089 = vperm.xlu0 %3088, %v712
        %v3090 = vpop.permute.xlu0 %3089
        %3092 = vset.pattern.permute.xlu0 2
        %3093 = vperm.xlu0 %3092, %v713
        %v3094 = vpop.permute.xlu0 %3093
        %3096 = vset.pattern.permute.xlu0 2
        %3097 = vperm.xlu0 %3096, %v714
        %v3098 = vpop.permute.xlu0 %3097
        %3100 = vset.pattern.permute.xlu0 2
        %3101 = vperm.xlu0 %3100, %v715
        %v3102 = vpop.permute.xlu0 %3101
        %3104 = vset.pattern.permute.xlu0 2
        %3105 = vperm.xlu0 %3104, %v716
        %v3106 = vpop.permute.xlu0 %3105
        %3108 = vset.pattern.permute.xlu0 2
        %3109 = vperm.xlu0 %3108, %v717
        %v3110 = vpop.permute.xlu0 %3109
        %3112 = vset.pattern.permute.xlu0 2
        %3113 = vperm.xlu0 %3112, %v718
        %v3114 = vpop.permute.xlu0 %3113
        %3116 = vset.pattern.permute.xlu0 2
        %3117 = vperm.xlu0 %3116, %v719
        %v3118 = vpop.permute.xlu0 %3117
        %3120 = vset.pattern.permute.xlu0 2
        %3121 = vperm.xlu0 %3120, %v720
        %v3122 = vpop.permute.xlu0 %3121
        %3124 = vset.pattern.permute.xlu0 2
        %3125 = vperm.xlu0 %3124, %v721
        %v3126 = vpop.permute.xlu0 %3125
        %3128 = vset.pattern.permute.xlu0 2
        %3129 = vperm.xlu0 %3128, %v722
        %v3130 = vpop.permute.xlu0 %3129
        %3132 = vset.pattern.permute.xlu0 2
        %3133 = vperm.xlu0 %3132, %v723
        %v3134 = vpop.permute.xlu0 %3133
        %3136 = vset.pattern.permute.xlu0 2
        %3137 = vperm.xlu0 %3136, %v724
        %v3138 = vpop.permute.xlu0 %3137
        %3140 = vset.pattern.permute.xlu0 2
        %3141 = vperm.xlu0 %3140, %v725
        %v3142 = vpop.permute.xlu0 %3141
        %3144 = vset.pattern.permute.xlu0 2
        %3145 = vperm.xlu0 %3144, %v726
        %v3146 = vpop.permute.xlu0 %3145
        %3148 = vset.pattern.permute.xlu0 2
        %3149 = vperm.xlu0 %3148, %v727
        %v3150 = vpop.permute.xlu0 %3149
        %3152 = vset.pattern.permute.xlu0 2
        %3153 = vperm.xlu0 %3152, %v728
        %v3154 = vpop.permute.xlu0 %3153
        %3156 = vset.pattern.permute.xlu0 2
        %3157 = vperm.xlu0 %3156, %v729
        %v3158 = vpop.permute.xlu0 %3157
        %3160 = vset.pattern.permute.xlu0 2
        %3161 = vperm.xlu0 %3160, %v730
        %v3162 = vpop.permute.xlu0 %3161
        %3164 = vset.pattern.permute.xlu0 2
        %3165 = vperm.xlu0 %3164, %v731
        %v3166 = vpop.permute.xlu0 %3165
        %3168 = vset.pattern.permute.xlu0 2
        %3169 = vperm.xlu0 %3168, %v732
        %v3170 = vpop.permute.xlu0 %3169
        %3172 = vset.pattern.permute.xlu0 2
        %3173 = vperm.xlu0 %3172, %v733
        %v3174 = vpop.permute.xlu0 %3173
        %3176 = vset.pattern.permute.xlu0 2
        %3177 = vperm.xlu0 %3176, %v734
        %v3178 = vpop.permute.xlu0 %3177
        %v3180 = vmul.f32 %v2926, %v999
        %v3181 = vmul.f32 %v2930, %v1004
        %v3182 = vmul.f32 %v2934, %v1009
        %v3183 = vmul.f32 %v2938, %v1014
        %v3184 = vmul.f32 %v2942, %v1019
        %v3185 = vmul.f32 %v2946, %v1024
        %v3186 = vmul.f32 %v2950, %v1029
        %v3187 = vmul.f32 %v2954, %v1034
        %v3188 = vmul.f32 %v2958, %v1039
        %v3189 = vmul.f32 %v2962, %v1044
        %v3190 = vmul.f32 %v2966, %v1049
        %v3191 = vmul.f32 %v2970, %v1054
        %v3192 = vmul.f32 %v2974, %v1059
        %v3193 = vmul.f32 %v2978, %v1064
        %v3194 = vmul.f32 %v2982, %v1069
        %v3195 = vmul.f32 %v2986, %v1074
        %v3196 = vmul.f32 %v2990, %v1079
        %v3197 = vmul.f32 %v2994, %v1084
        %v3198 = vmul.f32 %v2998, %v1089
        %v3199 = vmul.f32 %v3002, %v1094
        %v3200 = vmul.f32 %v3006, %v1099
        %v3201 = vmul.f32 %v3010, %v1104
        %v3202 = vmul.f32 %v3014, %v1109
        %v3203 = vmul.f32 %v3018, %v1114
        %v3204 = vmul.f32 %v3022, %v1119
        %v3205 = vmul.f32 %v3026, %v1124
        %v3206 = vmul.f32 %v3030, %v1129
        %v3207 = vmul.f32 %v3034, %v1134
        %v3208 = vmul.f32 %v3038, %v1139
        %v3209 = vmul.f32 %v3042, %v1144
        %v3210 = vmul.f32 %v3046, %v1149
        %v3211 = vmul.f32 %v3050, %v1154
        %v3212 = vmul.f32 %v3054, %v1159
        %v3213 = vmul.f32 %v3058, %v1164
        %v3214 = vmul.f32 %v3062, %v1169
        %v3215 = vmul.f32 %v3066, %v1174
        %v3216 = vmul.f32 %v3070, %v1179
        %v3217 = vmul.f32 %v3074, %v1184
        %v3218 = vmul.f32 %v3078, %v1189
        %v3219 = vmul.f32 %v3082, %v1194
        %v3220 = vmul.f32 %v3086, %v1199
        %v3221 = vmul.f32 %v3090, %v1204
        %v3222 = vmul.f32 %v3094, %v1209
        %v3223 = vmul.f32 %v3098, %v1214
        %v3224 = vmul.f32 %v3102, %v1219
        %v3225 = vmul.f32 %v3106, %v1224
        %v3226 = vmul.f32 %v3110, %v1229
        %v3227 = vmul.f32 %v3114, %v1234
        %v3228 = vmul.f32 %v3118, %v1239
        %v3229 = vmul.f32 %v3122, %v1244
        %v3230 = vmul.f32 %v3126, %v1249
        %v3231 = vmul.f32 %v3130, %v1254
        %v3232 = vmul.f32 %v3134, %v1259
        %v3233 = vmul.f32 %v3138, %v1264
        %v3234 = vmul.f32 %v3142, %v1269
        %v3235 = vmul.f32 %v3146, %v1274
        %v3236 = vmul.f32 %v3150, %v1279
        %v3237 = vmul.f32 %v3154, %v1284
        %v3238 = vmul.f32 %v3158, %v1289
        %v3239 = vmul.f32 %v3162, %v1294
        %v3240 = vmul.f32 %v3166, %v1299
        %v3241 = vmul.f32 %v3170, %v1304
        %v3242 = vmul.f32 %v3174, %v1309
        %v3243 = vmul.f32 %v3178, %v1314
        %3308 = vrot.lane.b32.xlu0 %v3180, 64
        %v3309 = vpop.permute.xlu0 %3308
        %3310 = vrot.lane.b32.xlu0 %v3181, 64
        %v3311 = vpop.permute.xlu0 %3310
        %3312 = vrot.lane.b32.xlu0 %v3182, 64
        %v3313 = vpop.permute.xlu0 %3312
        %3314 = vrot.lane.b32.xlu0 %v3183, 64
        %v3315 = vpop.permute.xlu0 %3314
        %3316 = vrot.lane.b32.xlu0 %v3184, 64
        %v3317 = vpop.permute.xlu0 %3316
        %3318 = vrot.lane.b32.xlu0 %v3185, 64
        %v3319 = vpop.permute.xlu0 %3318
        %3320 = vrot.lane.b32.xlu0 %v3186, 64
        %v3321 = vpop.permute.xlu0 %3320
        %3322 = vrot.lane.b32.xlu0 %v3187, 64
        %v3323 = vpop.permute.xlu0 %3322
        %3324 = vrot.lane.b32.xlu0 %v3188, 64
        %v3325 = vpop.permute.xlu0 %3324
        %3326 = vrot.lane.b32.xlu0 %v3189, 64
        %v3327 = vpop.permute.xlu0 %3326
        %3328 = vrot.lane.b32.xlu0 %v3190, 64
        %v3329 = vpop.permute.xlu0 %3328
        %3330 = vrot.lane.b32.xlu0 %v3191, 64
        %v3331 = vpop.permute.xlu0 %3330
        %3332 = vrot.lane.b32.xlu0 %v3192, 64
        %v3333 = vpop.permute.xlu0 %3332
        %3334 = vrot.lane.b32.xlu0 %v3193, 64
        %v3335 = vpop.permute.xlu0 %3334
        %3336 = vrot.lane.b32.xlu0 %v3194, 64
        %v3337 = vpop.permute.xlu0 %3336
        %3338 = vrot.lane.b32.xlu0 %v3195, 64
        %v3339 = vpop.permute.xlu0 %3338
        %3340 = vrot.lane.b32.xlu0 %v3196, 64
        %v3341 = vpop.permute.xlu0 %3340
        %3342 = vrot.lane.b32.xlu0 %v3197, 64
        %v3343 = vpop.permute.xlu0 %3342
        %3344 = vrot.lane.b32.xlu0 %v3198, 64
        %v3345 = vpop.permute.xlu0 %3344
        %3346 = vrot.lane.b32.xlu0 %v3199, 64
        %v3347 = vpop.permute.xlu0 %3346
        %3348 = vrot.lane.b32.xlu0 %v3200, 64
        %v3349 = vpop.permute.xlu0 %3348
        %3350 = vrot.lane.b32.xlu0 %v3201, 64
        %v3351 = vpop.permute.xlu0 %3350
        %3352 = vrot.lane.b32.xlu0 %v3202, 64
        %v3353 = vpop.permute.xlu0 %3352
        %3354 = vrot.lane.b32.xlu0 %v3203, 64
        %v3355 = vpop.permute.xlu0 %3354
        %3356 = vrot.lane.b32.xlu0 %v3204, 64
        %v3357 = vpop.permute.xlu0 %3356
        %3358 = vrot.lane.b32.xlu0 %v3205, 64
        %v3359 = vpop.permute.xlu0 %3358
        %3360 = vrot.lane.b32.xlu0 %v3206, 64
        %v3361 = vpop.permute.xlu0 %3360
        %3362 = vrot.lane.b32.xlu0 %v3207, 64
        %v3363 = vpop.permute.xlu0 %3362
        %3364 = vrot.lane.b32.xlu0 %v3208, 64
        %v3365 = vpop.permute.xlu0 %3364
        %3366 = vrot.lane.b32.xlu0 %v3209, 64
        %v3367 = vpop.permute.xlu0 %3366
        %3368 = vrot.lane.b32.xlu0 %v3210, 64
        %v3369 = vpop.permute.xlu0 %3368
        %3370 = vrot.lane.b32.xlu0 %v3211, 64
        %v3371 = vpop.permute.xlu0 %3370
        %3372 = vrot.lane.b32.xlu0 %v3212, 64
        %v3373 = vpop.permute.xlu0 %3372
        %3374 = vrot.lane.b32.xlu0 %v3213, 64
        %v3375 = vpop.permute.xlu0 %3374
        %3376 = vrot.lane.b32.xlu0 %v3214, 64
        %v3377 = vpop.permute.xlu0 %3376
        %3378 = vrot.lane.b32.xlu0 %v3215, 64
        %v3379 = vpop.permute.xlu0 %3378
        %3380 = vrot.lane.b32.xlu0 %v3216, 64
        %v3381 = vpop.permute.xlu0 %3380
        %3382 = vrot.lane.b32.xlu0 %v3217, 64
        %v3383 = vpop.permute.xlu0 %3382
        %3384 = vrot.lane.b32.xlu0 %v3218, 64
        %v3385 = vpop.permute.xlu0 %3384
        %3386 = vrot.lane.b32.xlu0 %v3219, 64
        %v3387 = vpop.permute.xlu0 %3386
        %3388 = vrot.lane.b32.xlu0 %v3220, 64
        %v3389 = vpop.permute.xlu0 %3388
        %3390 = vrot.lane.b32.xlu0 %v3221, 64
        %v3391 = vpop.permute.xlu0 %3390
        %3392 = vrot.lane.b32.xlu0 %v3222, 64
        %v3393 = vpop.permute.xlu0 %3392
        %3394 = vrot.lane.b32.xlu0 %v3223, 64
        %v3395 = vpop.permute.xlu0 %3394
        %3396 = vrot.lane.b32.xlu0 %v3224, 64
        %v3397 = vpop.permute.xlu0 %3396
        %3398 = vrot.lane.b32.xlu0 %v3225, 64
        %v3399 = vpop.permute.xlu0 %3398
        %3400 = vrot.lane.b32.xlu0 %v3226, 64
        %v3401 = vpop.permute.xlu0 %3400
        %3402 = vrot.lane.b32.xlu0 %v3227, 64
        %v3403 = vpop.permute.xlu0 %3402
        %3404 = vrot.lane.b32.xlu0 %v3228, 64
        %v3405 = vpop.permute.xlu0 %3404
        %3406 = vrot.lane.b32.xlu0 %v3229, 64
        %v3407 = vpop.permute.xlu0 %3406
        %3408 = vrot.lane.b32.xlu0 %v3230, 64
        %v3409 = vpop.permute.xlu0 %3408
        %3410 = vrot.lane.b32.xlu0 %v3231, 64
        %v3411 = vpop.permute.xlu0 %3410
        %3412 = vrot.lane.b32.xlu0 %v3232, 64
        %v3413 = vpop.permute.xlu0 %3412
        %3414 = vrot.lane.b32.xlu0 %v3233, 64
        %v3415 = vpop.permute.xlu0 %3414
        %3416 = vrot.lane.b32.xlu0 %v3234, 64
        %v3417 = vpop.permute.xlu0 %3416
        %3418 = vrot.lane.b32.xlu0 %v3235, 64
        %v3419 = vpop.permute.xlu0 %3418
        %3420 = vrot.lane.b32.xlu0 %v3236, 64
        %v3421 = vpop.permute.xlu0 %3420
        %3422 = vrot.lane.b32.xlu0 %v3237, 64
        %v3423 = vpop.permute.xlu0 %3422
        %3424 = vrot.lane.b32.xlu0 %v3238, 64
        %v3425 = vpop.permute.xlu0 %3424
        %3426 = vrot.lane.b32.xlu0 %v3239, 64
        %v3427 = vpop.permute.xlu0 %3426
        %3428 = vrot.lane.b32.xlu0 %v3240, 64
        %v3429 = vpop.permute.xlu0 %3428
        %3430 = vrot.lane.b32.xlu0 %v3241, 64
        %v3431 = vpop.permute.xlu0 %3430
        %3432 = vrot.lane.b32.xlu0 %v3242, 64
        %v3433 = vpop.permute.xlu0 %3432
        %3434 = vrot.lane.b32.xlu0 %v3243, 64
        %v3435 = vpop.permute.xlu0 %3434
        %v3500 = vadd.f32 %v2860, %v3309
        %v3501 = vadd.f32 %v2861, %v3311
        %v3502 = vadd.f32 %v2862, %v3313
        %v3503 = vadd.f32 %v2863, %v3315
        %v3504 = vadd.f32 %v2864, %v3317
        %v3505 = vadd.f32 %v2865, %v3319
        %v3506 = vadd.f32 %v2866, %v3321
        %v3507 = vadd.f32 %v2867, %v3323
        %v3508 = vadd.f32 %v2868, %v3325
        %v3509 = vadd.f32 %v2869, %v3327
        %v3510 = vadd.f32 %v2870, %v3329
        %v3511 = vadd.f32 %v2871, %v3331
        %v3512 = vadd.f32 %v2872, %v3333
        %v3513 = vadd.f32 %v2873, %v3335
        %v3514 = vadd.f32 %v2874, %v3337
        %v3515 = vadd.f32 %v2875, %v3339
        %v3516 = vadd.f32 %v2876, %v3341
        %v3517 = vadd.f32 %v2877, %v3343
        %v3518 = vadd.f32 %v2878, %v3345
        %v3519 = vadd.f32 %v2879, %v3347
        %v3520 = vadd.f32 %v2880, %v3349
        %v3521 = vadd.f32 %v2881, %v3351
        %v3522 = vadd.f32 %v2882, %v3353
        %v3523 = vadd.f32 %v2883, %v3355
        %v3524 = vadd.f32 %v2884, %v3357
        %v3525 = vadd.f32 %v2885, %v3359
        %v3526 = vadd.f32 %v2886, %v3361
        %v3527 = vadd.f32 %v2887, %v3363
        %v3528 = vadd.f32 %v2888, %v3365
        %v3529 = vadd.f32 %v2889, %v3367
        %v3530 = vadd.f32 %v2890, %v3369
        %v3531 = vadd.f32 %v2891, %v3371
        %v3532 = vadd.f32 %v2892, %v3373
        %v3533 = vadd.f32 %v2893, %v3375
        %v3534 = vadd.f32 %v2894, %v3377
        %v3535 = vadd.f32 %v2895, %v3379
        %v3536 = vadd.f32 %v2896, %v3381
        %v3537 = vadd.f32 %v2897, %v3383
        %v3538 = vadd.f32 %v2898, %v3385
        %v3539 = vadd.f32 %v2899, %v3387
        %v3540 = vadd.f32 %v2900, %v3389
        %v3541 = vadd.f32 %v2901, %v3391
        %v3542 = vadd.f32 %v2902, %v3393
        %v3543 = vadd.f32 %v2903, %v3395
        %v3544 = vadd.f32 %v2904, %v3397
        %v3545 = vadd.f32 %v2905, %v3399
        %v3546 = vadd.f32 %v2906, %v3401
        %v3547 = vadd.f32 %v2907, %v3403
        %v3548 = vadd.f32 %v2908, %v3405
        %v3549 = vadd.f32 %v2909, %v3407
        %v3550 = vadd.f32 %v2910, %v3409
        %v3551 = vadd.f32 %v2911, %v3411
        %v3552 = vadd.f32 %v2912, %v3413
        %v3553 = vadd.f32 %v2913, %v3415
        %v3554 = vadd.f32 %v2914, %v3417
        %v3555 = vadd.f32 %v2915, %v3419
        %v3556 = vadd.f32 %v2916, %v3421
        %v3557 = vadd.f32 %v2917, %v3423
        %v3558 = vadd.f32 %v2918, %v3425
        %v3559 = vadd.f32 %v2919, %v3427
        %v3560 = vadd.f32 %v2920, %v3429
        %v3561 = vadd.f32 %v2921, %v3431
        %v3562 = vadd.f32 %v2922, %v3433
        %v3563 = vadd.f32 %v2923, %v3435
        %v3564 = vadd.f32 %v3500, %v1582
        %v3565 = vadd.f32 %v3501, %v1587
        %v3566 = vadd.f32 %v3502, %v1592
        %v3567 = vadd.f32 %v3503, %v1597
        %v3568 = vadd.f32 %v3504, %v1602
        %v3569 = vadd.f32 %v3505, %v1607
        %v3570 = vadd.f32 %v3506, %v1612
        %v3571 = vadd.f32 %v3507, %v1617
        %v3572 = vadd.f32 %v3508, %v1622
        %v3573 = vadd.f32 %v3509, %v1627
        %v3574 = vadd.f32 %v3510, %v1632
        %v3575 = vadd.f32 %v3511, %v1637
        %v3576 = vadd.f32 %v3512, %v1642
        %v3577 = vadd.f32 %v3513, %v1647
        %v3578 = vadd.f32 %v3514, %v1652
        %v3579 = vadd.f32 %v3515, %v1657
        %v3580 = vadd.f32 %v3516, %v1662
        %v3581 = vadd.f32 %v3517, %v1667
        %v3582 = vadd.f32 %v3518, %v1672
        %v3583 = vadd.f32 %v3519, %v1677
        %v3584 = vadd.f32 %v3520, %v1682
        %v3585 = vadd.f32 %v3521, %v1687
        %v3586 = vadd.f32 %v3522, %v1692
        %v3587 = vadd.f32 %v3523, %v1697
        %v3588 = vadd.f32 %v3524, %v1702
        %v3589 = vadd.f32 %v3525, %v1707
        %v3590 = vadd.f32 %v3526, %v1712
        %v3591 = vadd.f32 %v3527, %v1717
        %v3592 = vadd.f32 %v3528, %v1722
        %v3593 = vadd.f32 %v3529, %v1727
        %v3594 = vadd.f32 %v3530, %v1732
        %v3595 = vadd.f32 %v3531, %v1737
        %v3596 = vadd.f32 %v3532, %v1742
        %v3597 = vadd.f32 %v3533, %v1747
        %v3598 = vadd.f32 %v3534, %v1752
        %v3599 = vadd.f32 %v3535, %v1757
        %v3600 = vadd.f32 %v3536, %v1762
        %v3601 = vadd.f32 %v3537, %v1767
        %v3602 = vadd.f32 %v3538, %v1772
        %v3603 = vadd.f32 %v3539, %v1777
        %v3604 = vadd.f32 %v3540, %v1782
        %v3605 = vadd.f32 %v3541, %v1787
        %v3606 = vadd.f32 %v3542, %v1792
        %v3607 = vadd.f32 %v3543, %v1797
        %v3608 = vadd.f32 %v3544, %v1802
        %v3609 = vadd.f32 %v3545, %v1807
        %v3610 = vadd.f32 %v3546, %v1812
        %v3611 = vadd.f32 %v3547, %v1817
        %v3612 = vadd.f32 %v3548, %v1822
        %v3613 = vadd.f32 %v3549, %v1827
        %v3614 = vadd.f32 %v3550, %v1832
        %v3615 = vadd.f32 %v3551, %v1837
        %v3616 = vadd.f32 %v3552, %v1842
        %v3617 = vadd.f32 %v3553, %v1847
        %v3618 = vadd.f32 %v3554, %v1852
        %v3619 = vadd.f32 %v3555, %v1857
        %v3620 = vadd.f32 %v3556, %v1862
        %v3621 = vadd.f32 %v3557, %v1867
        %v3622 = vadd.f32 %v3558, %v1872
        %v3623 = vadd.f32 %v3559, %v1877
        %v3624 = vadd.f32 %v3560, %v1882
        %v3625 = vadd.f32 %v3561, %v1887
        %v3626 = vadd.f32 %v3562, %v1892
        %v3627 = vadd.f32 %v3563, %v1897
        %v3628 = vxor.u32 %v3564, 2147483648
        %v3629 = vxor.u32 %v3565, 2147483648
        %v3630 = vxor.u32 %v3566, 2147483648
        %v3631 = vxor.u32 %v3567, 2147483648
        %v3632 = vxor.u32 %v3568, 2147483648
        %v3633 = vxor.u32 %v3569, 2147483648
        %v3634 = vxor.u32 %v3570, 2147483648
        %v3635 = vxor.u32 %v3571, 2147483648
        %v3636 = vxor.u32 %v3572, 2147483648
        %v3637 = vxor.u32 %v3573, 2147483648
        %v3638 = vxor.u32 %v3574, 2147483648
        %v3639 = vxor.u32 %v3575, 2147483648
        %v3640 = vxor.u32 %v3576, 2147483648
        %v3641 = vxor.u32 %v3577, 2147483648
        %v3642 = vxor.u32 %v3578, 2147483648
        %v3643 = vxor.u32 %v3579, 2147483648
        %v3644 = vxor.u32 %v3580, 2147483648
        %v3645 = vxor.u32 %v3581, 2147483648
        %v3646 = vxor.u32 %v3582, 2147483648
        %v3647 = vxor.u32 %v3583, 2147483648
        %v3648 = vxor.u32 %v3584, 2147483648
        %v3649 = vxor.u32 %v3585, 2147483648
        %v3650 = vxor.u32 %v3586, 2147483648
        %v3651 = vxor.u32 %v3587, 2147483648
        %v3652 = vxor.u32 %v3588, 2147483648
        %v3653 = vxor.u32 %v3589, 2147483648
        %v3654 = vxor.u32 %v3590, 2147483648
        %v3655 = vxor.u32 %v3591, 2147483648
        %v3656 = vxor.u32 %v3592, 2147483648
        %v3657 = vxor.u32 %v3593, 2147483648
        %v3658 = vxor.u32 %v3594, 2147483648
        %v3659 = vxor.u32 %v3595, 2147483648
        %v3660 = vxor.u32 %v3596, 2147483648
        %v3661 = vxor.u32 %v3597, 2147483648
        %v3662 = vxor.u32 %v3598, 2147483648
        %v3663 = vxor.u32 %v3599, 2147483648
        %v3664 = vxor.u32 %v3600, 2147483648
        %v3665 = vxor.u32 %v3601, 2147483648
        %v3666 = vxor.u32 %v3602, 2147483648
        %v3667 = vxor.u32 %v3603, 2147483648
        %v3668 = vxor.u32 %v3604, 2147483648
        %v3669 = vxor.u32 %v3605, 2147483648
        %v3670 = vxor.u32 %v3606, 2147483648
        %v3671 = vxor.u32 %v3607, 2147483648
        %v3672 = vxor.u32 %v3608, 2147483648
        %v3673 = vxor.u32 %v3609, 2147483648
        %v3674 = vxor.u32 %v3610, 2147483648
        %v3675 = vxor.u32 %v3611, 2147483648
        %v3676 = vxor.u32 %v3612, 2147483648
        %v3677 = vxor.u32 %v3613, 2147483648
        %v3678 = vxor.u32 %v3614, 2147483648
        %v3679 = vxor.u32 %v3615, 2147483648
        %v3680 = vxor.u32 %v3616, 2147483648
        %v3681 = vxor.u32 %v3617, 2147483648
        %v3682 = vxor.u32 %v3618, 2147483648
        %v3683 = vxor.u32 %v3619, 2147483648
        %v3684 = vxor.u32 %v3620, 2147483648
        %v3685 = vxor.u32 %v3621, 2147483648
        %v3686 = vxor.u32 %v3622, 2147483648
        %v3687 = vxor.u32 %v3623, 2147483648
        %v3688 = vxor.u32 %v3624, 2147483648
        %v3689 = vxor.u32 %v3625, 2147483648
        %v3690 = vxor.u32 %v3626, 2147483648
        %v3691 = vxor.u32 %v3627, 2147483648
        %v3692 = vmul.f32 %v3628, 1.442695
        %v3693 = vpow.pop %v3692
        %v3694 = vmul.f32 %v3629, 1.442695
        %v3695 = vpow.pop %v3694
        %v3696 = vmul.f32 %v3630, 1.442695
        %v3697 = vpow.pop %v3696
        %v3698 = vmul.f32 %v3631, 1.442695
        %v3699 = vpow.pop %v3698
        %v3700 = vmul.f32 %v3632, 1.442695
        %v3701 = vpow.pop %v3700
        %v3702 = vmul.f32 %v3633, 1.442695
        %v3703 = vpow.pop %v3702
        %v3704 = vmul.f32 %v3634, 1.442695
        %v3705 = vpow.pop %v3704
        %v3706 = vmul.f32 %v3635, 1.442695
        %v3707 = vpow.pop %v3706
        %v3708 = vmul.f32 %v3636, 1.442695
        %v3709 = vpow.pop %v3708
        %v3710 = vmul.f32 %v3637, 1.442695
        %v3711 = vpow.pop %v3710
        %v3712 = vmul.f32 %v3638, 1.442695
        %v3713 = vpow.pop %v3712
        %v3714 = vmul.f32 %v3639, 1.442695
        %v3715 = vpow.pop %v3714
        %v3716 = vmul.f32 %v3640, 1.442695
        %v3717 = vpow.pop %v3716
        %v3718 = vmul.f32 %v3641, 1.442695
        %v3719 = vpow.pop %v3718
        %v3720 = vmul.f32 %v3642, 1.442695
        %v3721 = vpow.pop %v3720
        %v3722 = vmul.f32 %v3643, 1.442695
        %v3723 = vpow.pop %v3722
        %v3724 = vmul.f32 %v3644, 1.442695
        %v3725 = vpow.pop %v3724
        %v3726 = vmul.f32 %v3645, 1.442695
        %v3727 = vpow.pop %v3726
        %v3728 = vmul.f32 %v3646, 1.442695
        %v3729 = vpow.pop %v3728
        %v3730 = vmul.f32 %v3647, 1.442695
        %v3731 = vpow.pop %v3730
        %v3732 = vmul.f32 %v3648, 1.442695
        %v3733 = vpow.pop %v3732
        %v3734 = vmul.f32 %v3649, 1.442695
        %v3735 = vpow.pop %v3734
        %v3736 = vmul.f32 %v3650, 1.442695
        %v3737 = vpow.pop %v3736
        %v3738 = vmul.f32 %v3651, 1.442695
        %v3739 = vpow.pop %v3738
        %v3740 = vmul.f32 %v3652, 1.442695
        %v3741 = vpow.pop %v3740
        %v3742 = vmul.f32 %v3653, 1.442695
        %v3743 = vpow.pop %v3742
        %v3744 = vmul.f32 %v3654, 1.442695
        %v3745 = vpow.pop %v3744
        %v3746 = vmul.f32 %v3655, 1.442695
        %v3747 = vpow.pop %v3746
        %v3748 = vmul.f32 %v3656, 1.442695
        %v3749 = vpow.pop %v3748
        %v3750 = vmul.f32 %v3657, 1.442695
        %v3751 = vpow.pop %v3750
        %v3752 = vmul.f32 %v3658, 1.442695
        %v3753 = vpow.pop %v3752
        %v3754 = vmul.f32 %v3659, 1.442695
        %v3755 = vpow.pop %v3754
        %v3756 = vmul.f32 %v3660, 1.442695
        %v3757 = vpow.pop %v3756
        %v3758 = vmul.f32 %v3661, 1.442695
        %v3759 = vpow.pop %v3758
        %v3760 = vmul.f32 %v3662, 1.442695
        %v3761 = vpow.pop %v3760
        %v3762 = vmul.f32 %v3663, 1.442695
        %v3763 = vpow.pop %v3762
        %v3764 = vmul.f32 %v3664, 1.442695
        %v3765 = vpow.pop %v3764
        %v3766 = vmul.f32 %v3665, 1.442695
        %v3767 = vpow.pop %v3766
        %v3768 = vmul.f32 %v3666, 1.442695
        %v3769 = vpow.pop %v3768
        %v3770 = vmul.f32 %v3667, 1.442695
        %v3771 = vpow.pop %v3770
        %v3772 = vmul.f32 %v3668, 1.442695
        %v3773 = vpow.pop %v3772
        %v3774 = vmul.f32 %v3669, 1.442695
        %v3775 = vpow.pop %v3774
        %v3776 = vmul.f32 %v3670, 1.442695
        %v3777 = vpow.pop %v3776
        %v3778 = vmul.f32 %v3671, 1.442695
        %v3779 = vpow.pop %v3778
        %v3780 = vmul.f32 %v3672, 1.442695
        %v3781 = vpow.pop %v3780
        %v3782 = vmul.f32 %v3673, 1.442695
        %v3783 = vpow.pop %v3782
        %v3784 = vmul.f32 %v3674, 1.442695
        %v3785 = vpow.pop %v3784
        %v3786 = vmul.f32 %v3675, 1.442695
        %v3787 = vpow.pop %v3786
        %v3788 = vmul.f32 %v3676, 1.442695
        %v3789 = vpow.pop %v3788
        %v3790 = vmul.f32 %v3677, 1.442695
        %v3791 = vpow.pop %v3790
        %v3792 = vmul.f32 %v3678, 1.442695
        %v3793 = vpow.pop %v3792
        %v3794 = vmul.f32 %v3679, 1.442695
        %v3795 = vpow.pop %v3794
        %v3796 = vmul.f32 %v3680, 1.442695
        %v3797 = vpow.pop %v3796
        %v3798 = vmul.f32 %v3681, 1.442695
        %v3799 = vpow.pop %v3798
        %v3800 = vmul.f32 %v3682, 1.442695
        %v3801 = vpow.pop %v3800
        %v3802 = vmul.f32 %v3683, 1.442695
        %v3803 = vpow.pop %v3802
        %v3804 = vmul.f32 %v3684, 1.442695
        %v3805 = vpow.pop %v3804
        %v3806 = vmul.f32 %v3685, 1.442695
        %v3807 = vpow.pop %v3806
        %v3808 = vmul.f32 %v3686, 1.442695
        %v3809 = vpow.pop %v3808
        %v3810 = vmul.f32 %v3687, 1.442695
        %v3811 = vpow.pop %v3810
        %v3812 = vmul.f32 %v3688, 1.442695
        %v3813 = vpow.pop %v3812
        %v3814 = vmul.f32 %v3689, 1.442695
        %v3815 = vpow.pop %v3814
        %v3816 = vmul.f32 %v3690, 1.442695
        %v3817 = vpow.pop %v3816
        %v3818 = vmul.f32 %v3691, 1.442695
        %v3819 = vpow.pop %v3818
        %v3820 = vadd.f32 %v3693, 1.0
        %v3821 = vadd.f32 %v3695, 1.0
        %v3822 = vadd.f32 %v3697, 1.0
        %v3823 = vadd.f32 %v3699, 1.0
        %v3824 = vadd.f32 %v3701, 1.0
        %v3825 = vadd.f32 %v3703, 1.0
        %v3826 = vadd.f32 %v3705, 1.0
        %v3827 = vadd.f32 %v3707, 1.0
        %v3828 = vadd.f32 %v3709, 1.0
        %v3829 = vadd.f32 %v3711, 1.0
        %v3830 = vadd.f32 %v3713, 1.0
        %v3831 = vadd.f32 %v3715, 1.0
        %v3832 = vadd.f32 %v3717, 1.0
        %v3833 = vadd.f32 %v3719, 1.0
        %v3834 = vadd.f32 %v3721, 1.0
        %v3835 = vadd.f32 %v3723, 1.0
        %v3836 = vadd.f32 %v3725, 1.0
        %v3837 = vadd.f32 %v3727, 1.0
        %v3838 = vadd.f32 %v3729, 1.0
        %v3839 = vadd.f32 %v3731, 1.0
        %v3840 = vadd.f32 %v3733, 1.0
        %v3841 = vadd.f32 %v3735, 1.0
        %v3842 = vadd.f32 %v3737, 1.0
        %v3843 = vadd.f32 %v3739, 1.0
        %v3844 = vadd.f32 %v3741, 1.0
        %v3845 = vadd.f32 %v3743, 1.0
        %v3846 = vadd.f32 %v3745, 1.0
        %v3847 = vadd.f32 %v3747, 1.0
        %v3848 = vadd.f32 %v3749, 1.0
        %v3849 = vadd.f32 %v3751, 1.0
        %v3850 = vadd.f32 %v3753, 1.0
        %v3851 = vadd.f32 %v3755, 1.0
        %v3852 = vadd.f32 %v3757, 1.0
        %v3853 = vadd.f32 %v3759, 1.0
        %v3854 = vadd.f32 %v3761, 1.0
        %v3855 = vadd.f32 %v3763, 1.0
        %v3856 = vadd.f32 %v3765, 1.0
        %v3857 = vadd.f32 %v3767, 1.0
        %v3858 = vadd.f32 %v3769, 1.0
        %v3859 = vadd.f32 %v3771, 1.0
        %v3860 = vadd.f32 %v3773, 1.0
        %v3861 = vadd.f32 %v3775, 1.0
        %v3862 = vadd.f32 %v3777, 1.0
        %v3863 = vadd.f32 %v3779, 1.0
        %v3864 = vadd.f32 %v3781, 1.0
        %v3865 = vadd.f32 %v3783, 1.0
        %v3866 = vadd.f32 %v3785, 1.0
        %v3867 = vadd.f32 %v3787, 1.0
        %v3868 = vadd.f32 %v3789, 1.0
        %v3869 = vadd.f32 %v3791, 1.0
        %v3870 = vadd.f32 %v3793, 1.0
        %v3871 = vadd.f32 %v3795, 1.0
        %v3872 = vadd.f32 %v3797, 1.0
        %v3873 = vadd.f32 %v3799, 1.0
        %v3874 = vadd.f32 %v3801, 1.0
        %v3875 = vadd.f32 %v3803, 1.0
        %v3876 = vadd.f32 %v3805, 1.0
        %v3877 = vadd.f32 %v3807, 1.0
        %v3878 = vadd.f32 %v3809, 1.0
        %v3879 = vadd.f32 %v3811, 1.0
        %v3880 = vadd.f32 %v3813, 1.0
        %v3881 = vadd.f32 %v3815, 1.0
        %v3882 = vadd.f32 %v3817, 1.0
        %v3883 = vadd.f32 %v3819, 1.0
        %v3884 = vrcp.pop %v3820
        %v3885 = vmul.f32 1.0, %v3884
        %v3886 = vrcp.pop %v3821
        %v3887 = vmul.f32 1.0, %v3886
        %v3888 = vrcp.pop %v3822
        %v3889 = vmul.f32 1.0, %v3888
        %v3890 = vrcp.pop %v3823
        %v3891 = vmul.f32 1.0, %v3890
        %v3892 = vrcp.pop %v3824
        %v3893 = vmul.f32 1.0, %v3892
        %v3894 = vrcp.pop %v3825
        %v3895 = vmul.f32 1.0, %v3894
        %v3896 = vrcp.pop %v3826
        %v3897 = vmul.f32 1.0, %v3896
        %v3898 = vrcp.pop %v3827
        %v3899 = vmul.f32 1.0, %v3898
        %v3900 = vrcp.pop %v3828
        %v3901 = vmul.f32 1.0, %v3900
        %v3902 = vrcp.pop %v3829
        %v3903 = vmul.f32 1.0, %v3902
        %v3904 = vrcp.pop %v3830
        %v3905 = vmul.f32 1.0, %v3904
        %v3906 = vrcp.pop %v3831
        %v3907 = vmul.f32 1.0, %v3906
        %v3908 = vrcp.pop %v3832
        %v3909 = vmul.f32 1.0, %v3908
        %v3910 = vrcp.pop %v3833
        %v3911 = vmul.f32 1.0, %v3910
        %v3912 = vrcp.pop %v3834
        %v3913 = vmul.f32 1.0, %v3912
        %v3914 = vrcp.pop %v3835
        %v3915 = vmul.f32 1.0, %v3914
        %v3916 = vrcp.pop %v3836
        %v3917 = vmul.f32 1.0, %v3916
        %v3918 = vrcp.pop %v3837
        %v3919 = vmul.f32 1.0, %v3918
        %v3920 = vrcp.pop %v3838
        %v3921 = vmul.f32 1.0, %v3920
        %v3922 = vrcp.pop %v3839
        %v3923 = vmul.f32 1.0, %v3922
        %v3924 = vrcp.pop %v3840
        %v3925 = vmul.f32 1.0, %v3924
        %v3926 = vrcp.pop %v3841
        %v3927 = vmul.f32 1.0, %v3926
        %v3928 = vrcp.pop %v3842
        %v3929 = vmul.f32 1.0, %v3928
        %v3930 = vrcp.pop %v3843
        %v3931 = vmul.f32 1.0, %v3930
        %v3932 = vrcp.pop %v3844
        %v3933 = vmul.f32 1.0, %v3932
        %v3934 = vrcp.pop %v3845
        %v3935 = vmul.f32 1.0, %v3934
        %v3936 = vrcp.pop %v3846
        %v3937 = vmul.f32 1.0, %v3936
        %v3938 = vrcp.pop %v3847
        %v3939 = vmul.f32 1.0, %v3938
        %v3940 = vrcp.pop %v3848
        %v3941 = vmul.f32 1.0, %v3940
        %v3942 = vrcp.pop %v3849
        %v3943 = vmul.f32 1.0, %v3942
        %v3944 = vrcp.pop %v3850
        %v3945 = vmul.f32 1.0, %v3944
        %v3946 = vrcp.pop %v3851
        %v3947 = vmul.f32 1.0, %v3946
        %v3948 = vrcp.pop %v3852
        %v3949 = vmul.f32 1.0, %v3948
        %v3950 = vrcp.pop %v3853
        %v3951 = vmul.f32 1.0, %v3950
        %v3952 = vrcp.pop %v3854
        %v3953 = vmul.f32 1.0, %v3952
        %v3954 = vrcp.pop %v3855
        %v3955 = vmul.f32 1.0, %v3954
        %v3956 = vrcp.pop %v3856
        %v3957 = vmul.f32 1.0, %v3956
        %v3958 = vrcp.pop %v3857
        %v3959 = vmul.f32 1.0, %v3958
        %v3960 = vrcp.pop %v3858
        %v3961 = vmul.f32 1.0, %v3960
        %v3962 = vrcp.pop %v3859
        %v3963 = vmul.f32 1.0, %v3962
        %v3964 = vrcp.pop %v3860
        %v3965 = vmul.f32 1.0, %v3964
        %v3966 = vrcp.pop %v3861
        %v3967 = vmul.f32 1.0, %v3966
        %v3968 = vrcp.pop %v3862
        %v3969 = vmul.f32 1.0, %v3968
        %v3970 = vrcp.pop %v3863
        %v3971 = vmul.f32 1.0, %v3970
        %v3972 = vrcp.pop %v3864
        %v3973 = vmul.f32 1.0, %v3972
        %v3974 = vrcp.pop %v3865
        %v3975 = vmul.f32 1.0, %v3974
        %v3976 = vrcp.pop %v3866
        %v3977 = vmul.f32 1.0, %v3976
        %v3978 = vrcp.pop %v3867
        %v3979 = vmul.f32 1.0, %v3978
        %v3980 = vrcp.pop %v3868
        %v3981 = vmul.f32 1.0, %v3980
        %v3982 = vrcp.pop %v3869
        %v3983 = vmul.f32 1.0, %v3982
        %v3984 = vrcp.pop %v3870
        %v3985 = vmul.f32 1.0, %v3984
        %v3986 = vrcp.pop %v3871
        %v3987 = vmul.f32 1.0, %v3986
        %v3988 = vrcp.pop %v3872
        %v3989 = vmul.f32 1.0, %v3988
        %v3990 = vrcp.pop %v3873
        %v3991 = vmul.f32 1.0, %v3990
        %v3992 = vrcp.pop %v3874
        %v3993 = vmul.f32 1.0, %v3992
        %v3994 = vrcp.pop %v3875
        %v3995 = vmul.f32 1.0, %v3994
        %v3996 = vrcp.pop %v3876
        %v3997 = vmul.f32 1.0, %v3996
        %v3998 = vrcp.pop %v3877
        %v3999 = vmul.f32 1.0, %v3998
        %v4000 = vrcp.pop %v3878
        %v4001 = vmul.f32 1.0, %v4000
        %v4002 = vrcp.pop %v3879
        %v4003 = vmul.f32 1.0, %v4002
        %v4004 = vrcp.pop %v3880
        %v4005 = vmul.f32 1.0, %v4004
        %v4006 = vrcp.pop %v3881
        %v4007 = vmul.f32 1.0, %v4006
        %v4008 = vrcp.pop %v3882
        %v4009 = vmul.f32 1.0, %v4008
        %v4010 = vrcp.pop %v3883
        %v4011 = vmul.f32 1.0, %v4010
        %v4012 = vmul.f32 %v3564, %v3885
        %v4013 = vmul.f32 %v3565, %v3887
        %v4014 = vmul.f32 %v3566, %v3889
        %v4015 = vmul.f32 %v3567, %v3891
        %v4016 = vmul.f32 %v3568, %v3893
        %v4017 = vmul.f32 %v3569, %v3895
        %v4018 = vmul.f32 %v3570, %v3897
        %v4019 = vmul.f32 %v3571, %v3899
        %v4020 = vmul.f32 %v3572, %v3901
        %v4021 = vmul.f32 %v3573, %v3903
        %v4022 = vmul.f32 %v3574, %v3905
        %v4023 = vmul.f32 %v3575, %v3907
        %v4024 = vmul.f32 %v3576, %v3909
        %v4025 = vmul.f32 %v3577, %v3911
        %v4026 = vmul.f32 %v3578, %v3913
        %v4027 = vmul.f32 %v3579, %v3915
        %v4028 = vmul.f32 %v3580, %v3917
        %v4029 = vmul.f32 %v3581, %v3919
        %v4030 = vmul.f32 %v3582, %v3921
        %v4031 = vmul.f32 %v3583, %v3923
        %v4032 = vmul.f32 %v3584, %v3925
        %v4033 = vmul.f32 %v3585, %v3927
        %v4034 = vmul.f32 %v3586, %v3929
        %v4035 = vmul.f32 %v3587, %v3931
        %v4036 = vmul.f32 %v3588, %v3933
        %v4037 = vmul.f32 %v3589, %v3935
        %v4038 = vmul.f32 %v3590, %v3937
        %v4039 = vmul.f32 %v3591, %v3939
        %v4040 = vmul.f32 %v3592, %v3941
        %v4041 = vmul.f32 %v3593, %v3943
        %v4042 = vmul.f32 %v3594, %v3945
        %v4043 = vmul.f32 %v3595, %v3947
        %v4044 = vmul.f32 %v3596, %v3949
        %v4045 = vmul.f32 %v3597, %v3951
        %v4046 = vmul.f32 %v3598, %v3953
        %v4047 = vmul.f32 %v3599, %v3955
        %v4048 = vmul.f32 %v3600, %v3957
        %v4049 = vmul.f32 %v3601, %v3959
        %v4050 = vmul.f32 %v3602, %v3961
        %v4051 = vmul.f32 %v3603, %v3963
        %v4052 = vmul.f32 %v3604, %v3965
        %v4053 = vmul.f32 %v3605, %v3967
        %v4054 = vmul.f32 %v3606, %v3969
        %v4055 = vmul.f32 %v3607, %v3971
        %v4056 = vmul.f32 %v3608, %v3973
        %v4057 = vmul.f32 %v3609, %v3975
        %v4058 = vmul.f32 %v3610, %v3977
        %v4059 = vmul.f32 %v3611, %v3979
        %v4060 = vmul.f32 %v3612, %v3981
        %v4061 = vmul.f32 %v3613, %v3983
        %v4062 = vmul.f32 %v3614, %v3985
        %v4063 = vmul.f32 %v3615, %v3987
        %v4064 = vmul.f32 %v3616, %v3989
        %v4065 = vmul.f32 %v3617, %v3991
        %v4066 = vmul.f32 %v3618, %v3993
        %v4067 = vmul.f32 %v3619, %v3995
        %v4068 = vmul.f32 %v3620, %v3997
        %v4069 = vmul.f32 %v3621, %v3999
        %v4070 = vmul.f32 %v3622, %v4001
        %v4071 = vmul.f32 %v3623, %v4003
        %v4072 = vmul.f32 %v3624, %v4005
        %v4073 = vmul.f32 %v3625, %v4007
        %v4074 = vmul.f32 %v3626, %v4009
        %v4075 = vmul.f32 %v3627, %v4011
        %4140 = vrot.lane.b32.xlu0 %v1582, 96
        %v4141 = vpop.permute.xlu0 %4140
        %4142 = vrot.lane.b32.xlu0 %v1587, 96
        %v4143 = vpop.permute.xlu0 %4142
        %4144 = vrot.lane.b32.xlu0 %v1592, 96
        %v4145 = vpop.permute.xlu0 %4144
        %4146 = vrot.lane.b32.xlu0 %v1597, 96
        %v4147 = vpop.permute.xlu0 %4146
        %4148 = vrot.lane.b32.xlu0 %v1602, 96
        %v4149 = vpop.permute.xlu0 %4148
        %4150 = vrot.lane.b32.xlu0 %v1607, 96
        %v4151 = vpop.permute.xlu0 %4150
        %4152 = vrot.lane.b32.xlu0 %v1612, 96
        %v4153 = vpop.permute.xlu0 %4152
        %4154 = vrot.lane.b32.xlu0 %v1617, 96
        %v4155 = vpop.permute.xlu0 %4154
        %4156 = vrot.lane.b32.xlu0 %v1622, 96
        %v4157 = vpop.permute.xlu0 %4156
        %4158 = vrot.lane.b32.xlu0 %v1627, 96
        %v4159 = vpop.permute.xlu0 %4158
        %4160 = vrot.lane.b32.xlu0 %v1632, 96
        %v4161 = vpop.permute.xlu0 %4160
        %4162 = vrot.lane.b32.xlu0 %v1637, 96
        %v4163 = vpop.permute.xlu0 %4162
        %4164 = vrot.lane.b32.xlu0 %v1642, 96
        %v4165 = vpop.permute.xlu0 %4164
        %4166 = vrot.lane.b32.xlu0 %v1647, 96
        %v4167 = vpop.permute.xlu0 %4166
        %4168 = vrot.lane.b32.xlu0 %v1652, 96
        %v4169 = vpop.permute.xlu0 %4168
        %4170 = vrot.lane.b32.xlu0 %v1657, 96
        %v4171 = vpop.permute.xlu0 %4170
        %4172 = vrot.lane.b32.xlu0 %v1662, 96
        %v4173 = vpop.permute.xlu0 %4172
        %4174 = vrot.lane.b32.xlu0 %v1667, 96
        %v4175 = vpop.permute.xlu0 %4174
        %4176 = vrot.lane.b32.xlu0 %v1672, 96
        %v4177 = vpop.permute.xlu0 %4176
        %4178 = vrot.lane.b32.xlu0 %v1677, 96
        %v4179 = vpop.permute.xlu0 %4178
        %4180 = vrot.lane.b32.xlu0 %v1682, 96
        %v4181 = vpop.permute.xlu0 %4180
        %4182 = vrot.lane.b32.xlu0 %v1687, 96
        %v4183 = vpop.permute.xlu0 %4182
        %4184 = vrot.lane.b32.xlu0 %v1692, 96
        %v4185 = vpop.permute.xlu0 %4184
        %4186 = vrot.lane.b32.xlu0 %v1697, 96
        %v4187 = vpop.permute.xlu0 %4186
        %4188 = vrot.lane.b32.xlu0 %v1702, 96
        %v4189 = vpop.permute.xlu0 %4188
        %4190 = vrot.lane.b32.xlu0 %v1707, 96
        %v4191 = vpop.permute.xlu0 %4190
        %4192 = vrot.lane.b32.xlu0 %v1712, 96
        %v4193 = vpop.permute.xlu0 %4192
        %4194 = vrot.lane.b32.xlu0 %v1717, 96
        %v4195 = vpop.permute.xlu0 %4194
        %4196 = vrot.lane.b32.xlu0 %v1722, 96
        %v4197 = vpop.permute.xlu0 %4196
        %4198 = vrot.lane.b32.xlu0 %v1727, 96
        %v4199 = vpop.permute.xlu0 %4198
        %4200 = vrot.lane.b32.xlu0 %v1732, 96
        %v4201 = vpop.permute.xlu0 %4200
        %4202 = vrot.lane.b32.xlu0 %v1737, 96
        %v4203 = vpop.permute.xlu0 %4202
        %4204 = vrot.lane.b32.xlu0 %v1742, 96
        %v4205 = vpop.permute.xlu0 %4204
        %4206 = vrot.lane.b32.xlu0 %v1747, 96
        %v4207 = vpop.permute.xlu0 %4206
        %4208 = vrot.lane.b32.xlu0 %v1752, 96
        %v4209 = vpop.permute.xlu0 %4208
        %4210 = vrot.lane.b32.xlu0 %v1757, 96
        %v4211 = vpop.permute.xlu0 %4210
        %4212 = vrot.lane.b32.xlu0 %v1762, 96
        %v4213 = vpop.permute.xlu0 %4212
        %4214 = vrot.lane.b32.xlu0 %v1767, 96
        %v4215 = vpop.permute.xlu0 %4214
        %4216 = vrot.lane.b32.xlu0 %v1772, 96
        %v4217 = vpop.permute.xlu0 %4216
        %4218 = vrot.lane.b32.xlu0 %v1777, 96
        %v4219 = vpop.permute.xlu0 %4218
        %4220 = vrot.lane.b32.xlu0 %v1782, 96
        %v4221 = vpop.permute.xlu0 %4220
        %4222 = vrot.lane.b32.xlu0 %v1787, 96
        %v4223 = vpop.permute.xlu0 %4222
        %4224 = vrot.lane.b32.xlu0 %v1792, 96
        %v4225 = vpop.permute.xlu0 %4224
        %4226 = vrot.lane.b32.xlu0 %v1797, 96
        %v4227 = vpop.permute.xlu0 %4226
        %4228 = vrot.lane.b32.xlu0 %v1802, 96
        %v4229 = vpop.permute.xlu0 %4228
        %4230 = vrot.lane.b32.xlu0 %v1807, 96
        %v4231 = vpop.permute.xlu0 %4230
        %4232 = vrot.lane.b32.xlu0 %v1812, 96
        %v4233 = vpop.permute.xlu0 %4232
        %4234 = vrot.lane.b32.xlu0 %v1817, 96
        %v4235 = vpop.permute.xlu0 %4234
        %4236 = vrot.lane.b32.xlu0 %v1822, 96
        %v4237 = vpop.permute.xlu0 %4236
        %4238 = vrot.lane.b32.xlu0 %v1827, 96
        %v4239 = vpop.permute.xlu0 %4238
        %4240 = vrot.lane.b32.xlu0 %v1832, 96
        %v4241 = vpop.permute.xlu0 %4240
        %4242 = vrot.lane.b32.xlu0 %v1837, 96
        %v4243 = vpop.permute.xlu0 %4242
        %4244 = vrot.lane.b32.xlu0 %v1842, 96
        %v4245 = vpop.permute.xlu0 %4244
        %4246 = vrot.lane.b32.xlu0 %v1847, 96
        %v4247 = vpop.permute.xlu0 %4246
        %4248 = vrot.lane.b32.xlu0 %v1852, 96
        %v4249 = vpop.permute.xlu0 %4248
        %4250 = vrot.lane.b32.xlu0 %v1857, 96
        %v4251 = vpop.permute.xlu0 %4250
        %4252 = vrot.lane.b32.xlu0 %v1862, 96
        %v4253 = vpop.permute.xlu0 %4252
        %4254 = vrot.lane.b32.xlu0 %v1867, 96
        %v4255 = vpop.permute.xlu0 %4254
        %4256 = vrot.lane.b32.xlu0 %v1872, 96
        %v4257 = vpop.permute.xlu0 %4256
        %4258 = vrot.lane.b32.xlu0 %v1877, 96
        %v4259 = vpop.permute.xlu0 %4258
        %4260 = vrot.lane.b32.xlu0 %v1882, 96
        %v4261 = vpop.permute.xlu0 %4260
        %4262 = vrot.lane.b32.xlu0 %v1887, 96
        %v4263 = vpop.permute.xlu0 %4262
        %4264 = vrot.lane.b32.xlu0 %v1892, 96
        %v4265 = vpop.permute.xlu0 %4264
        %4266 = vrot.lane.b32.xlu0 %v1897, 96
        %v4267 = vpop.permute.xlu0 %4266
        %v4332 = vmul.f32 %v4012, %v4141
        %v4333 = vmul.f32 %v4013, %v4143
        %v4334 = vmul.f32 %v4014, %v4145
        %v4335 = vmul.f32 %v4015, %v4147
        %v4336 = vmul.f32 %v4016, %v4149
        %v4337 = vmul.f32 %v4017, %v4151
        %v4338 = vmul.f32 %v4018, %v4153
        %v4339 = vmul.f32 %v4019, %v4155
        %v4340 = vmul.f32 %v4020, %v4157
        %v4341 = vmul.f32 %v4021, %v4159
        %v4342 = vmul.f32 %v4022, %v4161
        %v4343 = vmul.f32 %v4023, %v4163
        %v4344 = vmul.f32 %v4024, %v4165
        %v4345 = vmul.f32 %v4025, %v4167
        %v4346 = vmul.f32 %v4026, %v4169
        %v4347 = vmul.f32 %v4027, %v4171
        %v4348 = vmul.f32 %v4028, %v4173
        %v4349 = vmul.f32 %v4029, %v4175
        %v4350 = vmul.f32 %v4030, %v4177
        %v4351 = vmul.f32 %v4031, %v4179
        %v4352 = vmul.f32 %v4032, %v4181
        %v4353 = vmul.f32 %v4033, %v4183
        %v4354 = vmul.f32 %v4034, %v4185
        %v4355 = vmul.f32 %v4035, %v4187
        %v4356 = vmul.f32 %v4036, %v4189
        %v4357 = vmul.f32 %v4037, %v4191
        %v4358 = vmul.f32 %v4038, %v4193
        %v4359 = vmul.f32 %v4039, %v4195
        %v4360 = vmul.f32 %v4040, %v4197
        %v4361 = vmul.f32 %v4041, %v4199
        %v4362 = vmul.f32 %v4042, %v4201
        %v4363 = vmul.f32 %v4043, %v4203
        %v4364 = vmul.f32 %v4044, %v4205
        %v4365 = vmul.f32 %v4045, %v4207
        %v4366 = vmul.f32 %v4046, %v4209
        %v4367 = vmul.f32 %v4047, %v4211
        %v4368 = vmul.f32 %v4048, %v4213
        %v4369 = vmul.f32 %v4049, %v4215
        %v4370 = vmul.f32 %v4050, %v4217
        %v4371 = vmul.f32 %v4051, %v4219
        %v4372 = vmul.f32 %v4052, %v4221
        %v4373 = vmul.f32 %v4053, %v4223
        %v4374 = vmul.f32 %v4054, %v4225
        %v4375 = vmul.f32 %v4055, %v4227
        %v4376 = vmul.f32 %v4056, %v4229
        %v4377 = vmul.f32 %v4057, %v4231
        %v4378 = vmul.f32 %v4058, %v4233
        %v4379 = vmul.f32 %v4059, %v4235
        %v4380 = vmul.f32 %v4060, %v4237
        %v4381 = vmul.f32 %v4061, %v4239
        %v4382 = vmul.f32 %v4062, %v4241
        %v4383 = vmul.f32 %v4063, %v4243
        %v4384 = vmul.f32 %v4064, %v4245
        %v4385 = vmul.f32 %v4065, %v4247
        %v4386 = vmul.f32 %v4066, %v4249
        %v4387 = vmul.f32 %v4067, %v4251
        %v4388 = vmul.f32 %v4068, %v4253
        %v4389 = vmul.f32 %v4069, %v4255
        %v4390 = vmul.f32 %v4070, %v4257
        %v4391 = vmul.f32 %v4071, %v4259
        %v4392 = vmul.f32 %v4072, %v4261
        %v4393 = vmul.f32 %v4073, %v4263
        %v4394 = vmul.f32 %v4074, %v4265
        %v4395 = vmul.f32 %v4075, %v4267
        %v4396 = vsel %vm739, %v4332, 0.0
        %4397 = vadd.xlane.f32.xlu0 %v4396
        %v4398 = vpop.xlane.xlu0 %4397
        %v4399 = vsel %vm739, %v4333, 0.0
        %4400 = vadd.xlane.f32.xlu0 %v4399
        %v4401 = vpop.xlane.xlu0 %4400
        %v4402 = vsel %vm739, %v4334, 0.0
        %4403 = vadd.xlane.f32.xlu0 %v4402
        %v4404 = vpop.xlane.xlu0 %4403
        %v4405 = vsel %vm739, %v4335, 0.0
        %4406 = vadd.xlane.f32.xlu0 %v4405
        %v4407 = vpop.xlane.xlu0 %4406
        %v4408 = vsel %vm739, %v4336, 0.0
        %4409 = vadd.xlane.f32.xlu0 %v4408
        %v4410 = vpop.xlane.xlu0 %4409
        %v4411 = vsel %vm739, %v4337, 0.0
        %4412 = vadd.xlane.f32.xlu0 %v4411
        %v4413 = vpop.xlane.xlu0 %4412
        %v4414 = vsel %vm739, %v4338, 0.0
        %4415 = vadd.xlane.f32.xlu0 %v4414
        %v4416 = vpop.xlane.xlu0 %4415
        %v4417 = vsel %vm739, %v4339, 0.0
        %4418 = vadd.xlane.f32.xlu0 %v4417
        %v4419 = vpop.xlane.xlu0 %4418
        %v4420 = vsel %vm739, %v4340, 0.0
        %4421 = vadd.xlane.f32.xlu0 %v4420
        %v4422 = vpop.xlane.xlu0 %4421
        %v4423 = vsel %vm739, %v4341, 0.0
        %4424 = vadd.xlane.f32.xlu0 %v4423
        %v4425 = vpop.xlane.xlu0 %4424
        %v4426 = vsel %vm739, %v4342, 0.0
        %4427 = vadd.xlane.f32.xlu0 %v4426
        %v4428 = vpop.xlane.xlu0 %4427
        %v4429 = vsel %vm739, %v4343, 0.0
        %4430 = vadd.xlane.f32.xlu0 %v4429
        %v4431 = vpop.xlane.xlu0 %4430
        %v4432 = vsel %vm739, %v4344, 0.0
        %4433 = vadd.xlane.f32.xlu0 %v4432
        %v4434 = vpop.xlane.xlu0 %4433
        %v4435 = vsel %vm739, %v4345, 0.0
        %4436 = vadd.xlane.f32.xlu0 %v4435
        %v4437 = vpop.xlane.xlu0 %4436
        %v4438 = vsel %vm739, %v4346, 0.0
        %4439 = vadd.xlane.f32.xlu0 %v4438
        %v4440 = vpop.xlane.xlu0 %4439
        %v4441 = vsel %vm739, %v4347, 0.0
        %4442 = vadd.xlane.f32.xlu0 %v4441
        %v4443 = vpop.xlane.xlu0 %4442
        %v4444 = vsel %vm739, %v4348, 0.0
        %4445 = vadd.xlane.f32.xlu0 %v4444
        %v4446 = vpop.xlane.xlu0 %4445
        %v4447 = vsel %vm739, %v4349, 0.0
        %4448 = vadd.xlane.f32.xlu0 %v4447
        %v4449 = vpop.xlane.xlu0 %4448
        %v4450 = vsel %vm739, %v4350, 0.0
        %4451 = vadd.xlane.f32.xlu0 %v4450
        %v4452 = vpop.xlane.xlu0 %4451
        %v4453 = vsel %vm739, %v4351, 0.0
        %4454 = vadd.xlane.f32.xlu0 %v4453
        %v4455 = vpop.xlane.xlu0 %4454
        %v4456 = vsel %vm739, %v4352, 0.0
        %4457 = vadd.xlane.f32.xlu0 %v4456
        %v4458 = vpop.xlane.xlu0 %4457
        %v4459 = vsel %vm739, %v4353, 0.0
        %4460 = vadd.xlane.f32.xlu0 %v4459
        %v4461 = vpop.xlane.xlu0 %4460
        %v4462 = vsel %vm739, %v4354, 0.0
        %4463 = vadd.xlane.f32.xlu0 %v4462
        %v4464 = vpop.xlane.xlu0 %4463
        %v4465 = vsel %vm739, %v4355, 0.0
        %4466 = vadd.xlane.f32.xlu0 %v4465
        %v4467 = vpop.xlane.xlu0 %4466
        %v4468 = vsel %vm739, %v4356, 0.0
        %4469 = vadd.xlane.f32.xlu0 %v4468
        %v4470 = vpop.xlane.xlu0 %4469
        %v4471 = vsel %vm739, %v4357, 0.0
        %4472 = vadd.xlane.f32.xlu0 %v4471
        %v4473 = vpop.xlane.xlu0 %4472
        %v4474 = vsel %vm739, %v4358, 0.0
        %4475 = vadd.xlane.f32.xlu0 %v4474
        %v4476 = vpop.xlane.xlu0 %4475
        %v4477 = vsel %vm739, %v4359, 0.0
        %4478 = vadd.xlane.f32.xlu0 %v4477
        %v4479 = vpop.xlane.xlu0 %4478
        %v4480 = vsel %vm739, %v4360, 0.0
        %4481 = vadd.xlane.f32.xlu0 %v4480
        %v4482 = vpop.xlane.xlu0 %4481
        %v4483 = vsel %vm739, %v4361, 0.0
        %4484 = vadd.xlane.f32.xlu0 %v4483
        %v4485 = vpop.xlane.xlu0 %4484
        %v4486 = vsel %vm739, %v4362, 0.0
        %4487 = vadd.xlane.f32.xlu0 %v4486
        %v4488 = vpop.xlane.xlu0 %4487
        %v4489 = vsel %vm739, %v4363, 0.0
        %4490 = vadd.xlane.f32.xlu0 %v4489
        %v4491 = vpop.xlane.xlu0 %4490
        %v4492 = vsel %vm739, %v4364, 0.0
        %4493 = vadd.xlane.f32.xlu0 %v4492
        %v4494 = vpop.xlane.xlu0 %4493
        %v4495 = vsel %vm739, %v4365, 0.0
        %4496 = vadd.xlane.f32.xlu0 %v4495
        %v4497 = vpop.xlane.xlu0 %4496
        %v4498 = vsel %vm739, %v4366, 0.0
        %4499 = vadd.xlane.f32.xlu0 %v4498
        %v4500 = vpop.xlane.xlu0 %4499
        %v4501 = vsel %vm739, %v4367, 0.0
        %4502 = vadd.xlane.f32.xlu0 %v4501
        %v4503 = vpop.xlane.xlu0 %4502
        %v4504 = vsel %vm739, %v4368, 0.0
        %4505 = vadd.xlane.f32.xlu0 %v4504
        %v4506 = vpop.xlane.xlu0 %4505
        %v4507 = vsel %vm739, %v4369, 0.0
        %4508 = vadd.xlane.f32.xlu0 %v4507
        %v4509 = vpop.xlane.xlu0 %4508
        %v4510 = vsel %vm739, %v4370, 0.0
        %4511 = vadd.xlane.f32.xlu0 %v4510
        %v4512 = vpop.xlane.xlu0 %4511
        %v4513 = vsel %vm739, %v4371, 0.0
        %4514 = vadd.xlane.f32.xlu0 %v4513
        %v4515 = vpop.xlane.xlu0 %4514
        %v4516 = vsel %vm739, %v4372, 0.0
        %4517 = vadd.xlane.f32.xlu0 %v4516
        %v4518 = vpop.xlane.xlu0 %4517
        %v4519 = vsel %vm739, %v4373, 0.0
        %4520 = vadd.xlane.f32.xlu0 %v4519
        %v4521 = vpop.xlane.xlu0 %4520
        %v4522 = vsel %vm739, %v4374, 0.0
        %4523 = vadd.xlane.f32.xlu0 %v4522
        %v4524 = vpop.xlane.xlu0 %4523
        %v4525 = vsel %vm739, %v4375, 0.0
        %4526 = vadd.xlane.f32.xlu0 %v4525
        %v4527 = vpop.xlane.xlu0 %4526
        %v4528 = vsel %vm739, %v4376, 0.0
        %4529 = vadd.xlane.f32.xlu0 %v4528
        %v4530 = vpop.xlane.xlu0 %4529
        %v4531 = vsel %vm739, %v4377, 0.0
        %4532 = vadd.xlane.f32.xlu0 %v4531
        %v4533 = vpop.xlane.xlu0 %4532
        %v4534 = vsel %vm739, %v4378, 0.0
        %4535 = vadd.xlane.f32.xlu0 %v4534
        %v4536 = vpop.xlane.xlu0 %4535
        %v4537 = vsel %vm739, %v4379, 0.0
        %4538 = vadd.xlane.f32.xlu0 %v4537
        %v4539 = vpop.xlane.xlu0 %4538
        %v4540 = vsel %vm739, %v4380, 0.0
        %4541 = vadd.xlane.f32.xlu0 %v4540
        %v4542 = vpop.xlane.xlu0 %4541
        %v4543 = vsel %vm739, %v4381, 0.0
        %4544 = vadd.xlane.f32.xlu0 %v4543
        %v4545 = vpop.xlane.xlu0 %4544
        %v4546 = vsel %vm739, %v4382, 0.0
        %4547 = vadd.xlane.f32.xlu0 %v4546
        %v4548 = vpop.xlane.xlu0 %4547
        %v4549 = vsel %vm739, %v4383, 0.0
        %4550 = vadd.xlane.f32.xlu0 %v4549
        %v4551 = vpop.xlane.xlu0 %4550
        %v4552 = vsel %vm739, %v4384, 0.0
        %4553 = vadd.xlane.f32.xlu0 %v4552
        %v4554 = vpop.xlane.xlu0 %4553
        %v4555 = vsel %vm739, %v4385, 0.0
        %4556 = vadd.xlane.f32.xlu0 %v4555
        %v4557 = vpop.xlane.xlu0 %4556
        %v4558 = vsel %vm739, %v4386, 0.0
        %4559 = vadd.xlane.f32.xlu0 %v4558
        %v4560 = vpop.xlane.xlu0 %4559
        %v4561 = vsel %vm739, %v4387, 0.0
        %4562 = vadd.xlane.f32.xlu0 %v4561
        %v4563 = vpop.xlane.xlu0 %4562
        %v4564 = vsel %vm739, %v4388, 0.0
        %4565 = vadd.xlane.f32.xlu0 %v4564
        %v4566 = vpop.xlane.xlu0 %4565
        %v4567 = vsel %vm739, %v4389, 0.0
        %4568 = vadd.xlane.f32.xlu0 %v4567
        %v4569 = vpop.xlane.xlu0 %4568
        %v4570 = vsel %vm739, %v4390, 0.0
        %4571 = vadd.xlane.f32.xlu0 %v4570
        %v4572 = vpop.xlane.xlu0 %4571
        %v4573 = vsel %vm739, %v4391, 0.0
        %4574 = vadd.xlane.f32.xlu0 %v4573
        %v4575 = vpop.xlane.xlu0 %4574
        %v4576 = vsel %vm739, %v4392, 0.0
        %4577 = vadd.xlane.f32.xlu0 %v4576
        %v4578 = vpop.xlane.xlu0 %4577
        %v4579 = vsel %vm739, %v4393, 0.0
        %4580 = vadd.xlane.f32.xlu0 %v4579
        %v4581 = vpop.xlane.xlu0 %4580
        %v4582 = vsel %vm739, %v4394, 0.0
        %4583 = vadd.xlane.f32.xlu0 %v4582
        %v4584 = vpop.xlane.xlu0 %4583
        %v4585 = vsel %vm739, %v4395, 0.0
        %4586 = vadd.xlane.f32.xlu0 %v4585
        %v4587 = vpop.xlane.xlu0 %4586
        %v4588 = vadd.f32 %v4398, %v1582
        %v4589 = vadd.f32 %v4401, %v1587
        %v4590 = vadd.f32 %v4404, %v1592
        %v4591 = vadd.f32 %v4407, %v1597
        %v4592 = vadd.f32 %v4410, %v1602
        %v4593 = vadd.f32 %v4413, %v1607
        %v4594 = vadd.f32 %v4416, %v1612
        %v4595 = vadd.f32 %v4419, %v1617
        %v4596 = vadd.f32 %v4422, %v1622
        %v4597 = vadd.f32 %v4425, %v1627
        %v4598 = vadd.f32 %v4428, %v1632
        %v4599 = vadd.f32 %v4431, %v1637
        %v4600 = vadd.f32 %v4434, %v1642
        %v4601 = vadd.f32 %v4437, %v1647
        %v4602 = vadd.f32 %v4440, %v1652
        %v4603 = vadd.f32 %v4443, %v1657
        %v4604 = vadd.f32 %v4446, %v1662
        %v4605 = vadd.f32 %v4449, %v1667
        %v4606 = vadd.f32 %v4452, %v1672
        %v4607 = vadd.f32 %v4455, %v1677
        %v4608 = vadd.f32 %v4458, %v1682
        %v4609 = vadd.f32 %v4461, %v1687
        %v4610 = vadd.f32 %v4464, %v1692
        %v4611 = vadd.f32 %v4467, %v1697
        %v4612 = vadd.f32 %v4470, %v1702
        %v4613 = vadd.f32 %v4473, %v1707
        %v4614 = vadd.f32 %v4476, %v1712
        %v4615 = vadd.f32 %v4479, %v1717
        %v4616 = vadd.f32 %v4482, %v1722
        %v4617 = vadd.f32 %v4485, %v1727
        %v4618 = vadd.f32 %v4488, %v1732
        %v4619 = vadd.f32 %v4491, %v1737
        %v4620 = vadd.f32 %v4494, %v1742
        %v4621 = vadd.f32 %v4497, %v1747
        %v4622 = vadd.f32 %v4500, %v1752
        %v4623 = vadd.f32 %v4503, %v1757
        %v4624 = vadd.f32 %v4506, %v1762
        %v4625 = vadd.f32 %v4509, %v1767
        %v4626 = vadd.f32 %v4512, %v1772
        %v4627 = vadd.f32 %v4515, %v1777
        %v4628 = vadd.f32 %v4518, %v1782
        %v4629 = vadd.f32 %v4521, %v1787
        %v4630 = vadd.f32 %v4524, %v1792
        %v4631 = vadd.f32 %v4527, %v1797
        %v4632 = vadd.f32 %v4530, %v1802
        %v4633 = vadd.f32 %v4533, %v1807
        %v4634 = vadd.f32 %v4536, %v1812
        %v4635 = vadd.f32 %v4539, %v1817
        %v4636 = vadd.f32 %v4542, %v1822
        %v4637 = vadd.f32 %v4545, %v1827
        %v4638 = vadd.f32 %v4548, %v1832
        %v4639 = vadd.f32 %v4551, %v1837
        %v4640 = vadd.f32 %v4554, %v1842
        %v4641 = vadd.f32 %v4557, %v1847
        %v4642 = vadd.f32 %v4560, %v1852
        %v4643 = vadd.f32 %v4563, %v1857
        %v4644 = vadd.f32 %v4566, %v1862
        %v4645 = vadd.f32 %v4569, %v1867
        %v4646 = vadd.f32 %v4572, %v1872
        %v4647 = vadd.f32 %v4575, %v1877
        %v4648 = vadd.f32 %v4578, %v1882
        %v4649 = vadd.f32 %v4581, %v1887
        %v4650 = vadd.f32 %v4584, %v1892
        %v4651 = vadd.f32 %v4587, %v1897
        %v4716 = vcombine.high %v4588, %v4588
        %v4718 = vunpack.c.l.s4 1966171168
        %v4719 = vunpack.c.0.s8 %v4718
        %v4720 = vlaneseq
        %v4721 = vshrl.u32 %v4720, 7
        %v4722 = vsub.s32 %v4719, %v4721
        %v4723 = vrot.slane %v4588, %v4722
        %v4725 = vunpack.c.l.s4 1966171168
        %v4726 = vunpack.c.0.s8 %v4725
        %v4727 = vlaneseq
        %v4728 = vshrl.u32 %v4727, 7
        %v4729 = vsub.s32 %v4726, %v4728
        %v4730 = vrot.slane %v4716, %v4729
        %v4731 = vcombine.high %v4723, %v4723
        %v4732 = vcombine.high %v4730, %v4730
        %v4734 = vunpack.c.l.s4 1966171168
        %v4735 = vunpack.c.0.s8 %v4734
        %v4736 = vlaneseq
        %v4737 = vshrl.u32 %v4736, 7
        %v4738 = vsub.s32 %v4735, %v4737
        %v4739 = vrot.slane %v4723, %v4738
        %v4741 = vunpack.c.l.s4 1966171168
        %v4742 = vunpack.c.0.s8 %v4741
        %v4743 = vlaneseq
        %v4744 = vshrl.u32 %v4743, 7
        %v4745 = vsub.s32 %v4742, %v4744
        %v4746 = vrot.slane %v4730, %v4745
        %v4748 = vunpack.c.l.s4 1966171168
        %v4749 = vunpack.c.0.s8 %v4748
        %v4750 = vlaneseq
        %v4751 = vshrl.u32 %v4750, 7
        %v4752 = vsub.s32 %v4749, %v4751
        %v4753 = vrot.slane %v4731, %v4752
        %v4755 = vunpack.c.l.s4 1966171168
        %v4756 = vunpack.c.0.s8 %v4755
        %v4757 = vlaneseq
        %v4758 = vshrl.u32 %v4757, 7
        %v4759 = vsub.s32 %v4756, %v4758
        %v4760 = vrot.slane %v4732, %v4759
        %v4761 = vcombine.high %v4739, %v4739
        %v4762 = vcombine.high %v4746, %v4746
        %v4763 = vcombine.high %v4753, %v4753
        %v4764 = vcombine.high %v4760, %v4760
        %v4765 = vcombine.high %v4589, %v4589
        %v4767 = vunpack.c.l.s4 1966171168
        %v4768 = vunpack.c.0.s8 %v4767
        %v4769 = vlaneseq
        %v4770 = vshrl.u32 %v4769, 7
        %v4771 = vsub.s32 %v4768, %v4770
        %v4772 = vrot.slane %v4589, %v4771
        %v4774 = vunpack.c.l.s4 1966171168
        %v4775 = vunpack.c.0.s8 %v4774
        %v4776 = vlaneseq
        %v4777 = vshrl.u32 %v4776, 7
        %v4778 = vsub.s32 %v4775, %v4777
        %v4779 = vrot.slane %v4765, %v4778
        %v4780 = vcombine.high %v4772, %v4772
        %v4781 = vcombine.high %v4779, %v4779
        %v4783 = vunpack.c.l.s4 1966171168
        %v4784 = vunpack.c.0.s8 %v4783
        %v4785 = vlaneseq
        %v4786 = vshrl.u32 %v4785, 7
        %v4787 = vsub.s32 %v4784, %v4786
        %v4788 = vrot.slane %v4772, %v4787
        %v4790 = vunpack.c.l.s4 1966171168
        %v4791 = vunpack.c.0.s8 %v4790
        %v4792 = vlaneseq
        %v4793 = vshrl.u32 %v4792, 7
        %v4794 = vsub.s32 %v4791, %v4793
        %v4795 = vrot.slane %v4779, %v4794
        %v4797 = vunpack.c.l.s4 1966171168
        %v4798 = vunpack.c.0.s8 %v4797
        %v4799 = vlaneseq
        %v4800 = vshrl.u32 %v4799, 7
        %v4801 = vsub.s32 %v4798, %v4800
        %v4802 = vrot.slane %v4780, %v4801
        %v4804 = vunpack.c.l.s4 1966171168
        %v4805 = vunpack.c.0.s8 %v4804
        %v4806 = vlaneseq
        %v4807 = vshrl.u32 %v4806, 7
        %v4808 = vsub.s32 %v4805, %v4807
        %v4809 = vrot.slane %v4781, %v4808
        %v4810 = vcombine.high %v4788, %v4788
        %v4811 = vcombine.high %v4795, %v4795
        %v4812 = vcombine.high %v4802, %v4802
        %v4813 = vcombine.high %v4809, %v4809
        %v4814 = vcombine.high %v4590, %v4590
        %v4816 = vunpack.c.l.s4 1966171168
        %v4817 = vunpack.c.0.s8 %v4816
        %v4818 = vlaneseq
        %v4819 = vshrl.u32 %v4818, 7
        %v4820 = vsub.s32 %v4817, %v4819
        %v4821 = vrot.slane %v4590, %v4820
        %v4823 = vunpack.c.l.s4 1966171168
        %v4824 = vunpack.c.0.s8 %v4823
        %v4825 = vlaneseq
        %v4826 = vshrl.u32 %v4825, 7
        %v4827 = vsub.s32 %v4824, %v4826
        %v4828 = vrot.slane %v4814, %v4827
        %v4829 = vcombine.high %v4821, %v4821
        %v4830 = vcombine.high %v4828, %v4828
        %v4832 = vunpack.c.l.s4 1966171168
        %v4833 = vunpack.c.0.s8 %v4832
        %v4834 = vlaneseq
        %v4835 = vshrl.u32 %v4834, 7
        %v4836 = vsub.s32 %v4833, %v4835
        %v4837 = vrot.slane %v4821, %v4836
        %v4839 = vunpack.c.l.s4 1966171168
        %v4840 = vunpack.c.0.s8 %v4839
        %v4841 = vlaneseq
        %v4842 = vshrl.u32 %v4841, 7
        %v4843 = vsub.s32 %v4840, %v4842
        %v4844 = vrot.slane %v4828, %v4843
        %v4846 = vunpack.c.l.s4 1966171168
        %v4847 = vunpack.c.0.s8 %v4846
        %v4848 = vlaneseq
        %v4849 = vshrl.u32 %v4848, 7
        %v4850 = vsub.s32 %v4847, %v4849
        %v4851 = vrot.slane %v4829, %v4850
        %v4853 = vunpack.c.l.s4 1966171168
        %v4854 = vunpack.c.0.s8 %v4853
        %v4855 = vlaneseq
        %v4856 = vshrl.u32 %v4855, 7
        %v4857 = vsub.s32 %v4854, %v4856
        %v4858 = vrot.slane %v4830, %v4857
        %v4859 = vcombine.high %v4837, %v4837
        %v4860 = vcombine.high %v4844, %v4844
        %v4861 = vcombine.high %v4851, %v4851
        %v4862 = vcombine.high %v4858, %v4858
        %v4863 = vcombine.high %v4591, %v4591
        %v4865 = vunpack.c.l.s4 1966171168
        %v4866 = vunpack.c.0.s8 %v4865
        %v4867 = vlaneseq
        %v4868 = vshrl.u32 %v4867, 7
        %v4869 = vsub.s32 %v4866, %v4868
        %v4870 = vrot.slane %v4591, %v4869
        %v4872 = vunpack.c.l.s4 1966171168
        %v4873 = vunpack.c.0.s8 %v4872
        %v4874 = vlaneseq
        %v4875 = vshrl.u32 %v4874, 7
        %v4876 = vsub.s32 %v4873, %v4875
        %v4877 = vrot.slane %v4863, %v4876
        %v4878 = vcombine.high %v4870, %v4870
        %v4879 = vcombine.high %v4877, %v4877
        %v4881 = vunpack.c.l.s4 1966171168
        %v4882 = vunpack.c.0.s8 %v4881
        %v4883 = vlaneseq
        %v4884 = vshrl.u32 %v4883, 7
        %v4885 = vsub.s32 %v4882, %v4884
        %v4886 = vrot.slane %v4870, %v4885
        %v4888 = vunpack.c.l.s4 1966171168
        %v4889 = vunpack.c.0.s8 %v4888
        %v4890 = vlaneseq
        %v4891 = vshrl.u32 %v4890, 7
        %v4892 = vsub.s32 %v4889, %v4891
        %v4893 = vrot.slane %v4877, %v4892
        %v4895 = vunpack.c.l.s4 1966171168
        %v4896 = vunpack.c.0.s8 %v4895
        %v4897 = vlaneseq
        %v4898 = vshrl.u32 %v4897, 7
        %v4899 = vsub.s32 %v4896, %v4898
        %v4900 = vrot.slane %v4878, %v4899
        %v4902 = vunpack.c.l.s4 1966171168
        %v4903 = vunpack.c.0.s8 %v4902
        %v4904 = vlaneseq
        %v4905 = vshrl.u32 %v4904, 7
        %v4906 = vsub.s32 %v4903, %v4905
        %v4907 = vrot.slane %v4879, %v4906
        %v4908 = vcombine.high %v4886, %v4886
        %v4909 = vcombine.high %v4893, %v4893
        %v4910 = vcombine.high %v4900, %v4900
        %v4911 = vcombine.high %v4907, %v4907
        %v4912 = vcombine.high %v4592, %v4592
        %v4914 = vunpack.c.l.s4 1966171168
        %v4915 = vunpack.c.0.s8 %v4914
        %v4916 = vlaneseq
        %v4917 = vshrl.u32 %v4916, 7
        %v4918 = vsub.s32 %v4915, %v4917
        %v4919 = vrot.slane %v4592, %v4918
        %v4921 = vunpack.c.l.s4 1966171168
        %v4922 = vunpack.c.0.s8 %v4921
        %v4923 = vlaneseq
        %v4924 = vshrl.u32 %v4923, 7
        %v4925 = vsub.s32 %v4922, %v4924
        %v4926 = vrot.slane %v4912, %v4925
        %v4927 = vcombine.high %v4919, %v4919
        %v4928 = vcombine.high %v4926, %v4926
        %v4930 = vunpack.c.l.s4 1966171168
        %v4931 = vunpack.c.0.s8 %v4930
        %v4932 = vlaneseq
        %v4933 = vshrl.u32 %v4932, 7
        %v4934 = vsub.s32 %v4931, %v4933
        %v4935 = vrot.slane %v4919, %v4934
        %v4937 = vunpack.c.l.s4 1966171168
        %v4938 = vunpack.c.0.s8 %v4937
        %v4939 = vlaneseq
        %v4940 = vshrl.u32 %v4939, 7
        %v4941 = vsub.s32 %v4938, %v4940
        %v4942 = vrot.slane %v4926, %v4941
        %v4944 = vunpack.c.l.s4 1966171168
        %v4945 = vunpack.c.0.s8 %v4944
        %v4946 = vlaneseq
        %v4947 = vshrl.u32 %v4946, 7
        %v4948 = vsub.s32 %v4945, %v4947
        %v4949 = vrot.slane %v4927, %v4948
        %v4951 = vunpack.c.l.s4 1966171168
        %v4952 = vunpack.c.0.s8 %v4951
        %v4953 = vlaneseq
        %v4954 = vshrl.u32 %v4953, 7
        %v4955 = vsub.s32 %v4952, %v4954
        %v4956 = vrot.slane %v4928, %v4955
        %v4957 = vcombine.high %v4935, %v4935
        %v4958 = vcombine.high %v4942, %v4942
        %v4959 = vcombine.high %v4949, %v4949
        %v4960 = vcombine.high %v4956, %v4956
        %v4961 = vcombine.high %v4593, %v4593
        %v4963 = vunpack.c.l.s4 1966171168
        %v4964 = vunpack.c.0.s8 %v4963
        %v4965 = vlaneseq
        %v4966 = vshrl.u32 %v4965, 7
        %v4967 = vsub.s32 %v4964, %v4966
        %v4968 = vrot.slane %v4593, %v4967
        %v4970 = vunpack.c.l.s4 1966171168
        %v4971 = vunpack.c.0.s8 %v4970
        %v4972 = vlaneseq
        %v4973 = vshrl.u32 %v4972, 7
        %v4974 = vsub.s32 %v4971, %v4973
        %v4975 = vrot.slane %v4961, %v4974
        %v4976 = vcombine.high %v4968, %v4968
        %v4977 = vcombine.high %v4975, %v4975
        %v4979 = vunpack.c.l.s4 1966171168
        %v4980 = vunpack.c.0.s8 %v4979
        %v4981 = vlaneseq
        %v4982 = vshrl.u32 %v4981, 7
        %v4983 = vsub.s32 %v4980, %v4982
        %v4984 = vrot.slane %v4968, %v4983
        %v4986 = vunpack.c.l.s4 1966171168
        %v4987 = vunpack.c.0.s8 %v4986
        %v4988 = vlaneseq
        %v4989 = vshrl.u32 %v4988, 7
        %v4990 = vsub.s32 %v4987, %v4989
        %v4991 = vrot.slane %v4975, %v4990
        %v4993 = vunpack.c.l.s4 1966171168
        %v4994 = vunpack.c.0.s8 %v4993
        %v4995 = vlaneseq
        %v4996 = vshrl.u32 %v4995, 7
        %v4997 = vsub.s32 %v4994, %v4996
        %v4998 = vrot.slane %v4976, %v4997
        %v5000 = vunpack.c.l.s4 1966171168
        %v5001 = vunpack.c.0.s8 %v5000
        %v5002 = vlaneseq
        %v5003 = vshrl.u32 %v5002, 7
        %v5004 = vsub.s32 %v5001, %v5003
        %v5005 = vrot.slane %v4977, %v5004
        %v5006 = vcombine.high %v4984, %v4984
        %v5007 = vcombine.high %v4991, %v4991
        %v5008 = vcombine.high %v4998, %v4998
        %v5009 = vcombine.high %v5005, %v5005
        %v5010 = vcombine.high %v4594, %v4594
        %v5012 = vunpack.c.l.s4 1966171168
        %v5013 = vunpack.c.0.s8 %v5012
        %v5014 = vlaneseq
        %v5015 = vshrl.u32 %v5014, 7
        %v5016 = vsub.s32 %v5013, %v5015
        %v5017 = vrot.slane %v4594, %v5016
        %v5019 = vunpack.c.l.s4 1966171168
        %v5020 = vunpack.c.0.s8 %v5019
        %v5021 = vlaneseq
        %v5022 = vshrl.u32 %v5021, 7
        %v5023 = vsub.s32 %v5020, %v5022
        %v5024 = vrot.slane %v5010, %v5023
        %v5025 = vcombine.high %v5017, %v5017
        %v5026 = vcombine.high %v5024, %v5024
        %v5028 = vunpack.c.l.s4 1966171168
        %v5029 = vunpack.c.0.s8 %v5028
        %v5030 = vlaneseq
        %v5031 = vshrl.u32 %v5030, 7
        %v5032 = vsub.s32 %v5029, %v5031
        %v5033 = vrot.slane %v5017, %v5032
        %v5035 = vunpack.c.l.s4 1966171168
        %v5036 = vunpack.c.0.s8 %v5035
        %v5037 = vlaneseq
        %v5038 = vshrl.u32 %v5037, 7
        %v5039 = vsub.s32 %v5036, %v5038
        %v5040 = vrot.slane %v5024, %v5039
        %v5042 = vunpack.c.l.s4 1966171168
        %v5043 = vunpack.c.0.s8 %v5042
        %v5044 = vlaneseq
        %v5045 = vshrl.u32 %v5044, 7
        %v5046 = vsub.s32 %v5043, %v5045
        %v5047 = vrot.slane %v5025, %v5046
        %v5049 = vunpack.c.l.s4 1966171168
        %v5050 = vunpack.c.0.s8 %v5049
        %v5051 = vlaneseq
        %v5052 = vshrl.u32 %v5051, 7
        %v5053 = vsub.s32 %v5050, %v5052
        %v5054 = vrot.slane %v5026, %v5053
        %v5055 = vcombine.high %v5033, %v5033
        %v5056 = vcombine.high %v5040, %v5040
        %v5057 = vcombine.high %v5047, %v5047
        %v5058 = vcombine.high %v5054, %v5054
        %v5059 = vcombine.high %v4595, %v4595
        %v5061 = vunpack.c.l.s4 1966171168
        %v5062 = vunpack.c.0.s8 %v5061
        %v5063 = vlaneseq
        %v5064 = vshrl.u32 %v5063, 7
        %v5065 = vsub.s32 %v5062, %v5064
        %v5066 = vrot.slane %v4595, %v5065
        %v5068 = vunpack.c.l.s4 1966171168
        %v5069 = vunpack.c.0.s8 %v5068
        %v5070 = vlaneseq
        %v5071 = vshrl.u32 %v5070, 7
        %v5072 = vsub.s32 %v5069, %v5071
        %v5073 = vrot.slane %v5059, %v5072
        %v5074 = vcombine.high %v5066, %v5066
        %v5075 = vcombine.high %v5073, %v5073
        %v5077 = vunpack.c.l.s4 1966171168
        %v5078 = vunpack.c.0.s8 %v5077
        %v5079 = vlaneseq
        %v5080 = vshrl.u32 %v5079, 7
        %v5081 = vsub.s32 %v5078, %v5080
        %v5082 = vrot.slane %v5066, %v5081
        %v5084 = vunpack.c.l.s4 1966171168
        %v5085 = vunpack.c.0.s8 %v5084
        %v5086 = vlaneseq
        %v5087 = vshrl.u32 %v5086, 7
        %v5088 = vsub.s32 %v5085, %v5087
        %v5089 = vrot.slane %v5073, %v5088
        %v5091 = vunpack.c.l.s4 1966171168
        %v5092 = vunpack.c.0.s8 %v5091
        %v5093 = vlaneseq
        %v5094 = vshrl.u32 %v5093, 7
        %v5095 = vsub.s32 %v5092, %v5094
        %v5096 = vrot.slane %v5074, %v5095
        %v5098 = vunpack.c.l.s4 1966171168
        %v5099 = vunpack.c.0.s8 %v5098
        %v5100 = vlaneseq
        %v5101 = vshrl.u32 %v5100, 7
        %v5102 = vsub.s32 %v5099, %v5101
        %v5103 = vrot.slane %v5075, %v5102
        %v5104 = vcombine.high %v5082, %v5082
        %v5105 = vcombine.high %v5089, %v5089
        %v5106 = vcombine.high %v5096, %v5096
        %v5107 = vcombine.high %v5103, %v5103
        %v5108 = vcombine.high %v4596, %v4596
        %v5110 = vunpack.c.l.s4 1966171168
        %v5111 = vunpack.c.0.s8 %v5110
        %v5112 = vlaneseq
        %v5113 = vshrl.u32 %v5112, 7
        %v5114 = vsub.s32 %v5111, %v5113
        %v5115 = vrot.slane %v4596, %v5114
        %v5117 = vunpack.c.l.s4 1966171168
        %v5118 = vunpack.c.0.s8 %v5117
        %v5119 = vlaneseq
        %v5120 = vshrl.u32 %v5119, 7
        %v5121 = vsub.s32 %v5118, %v5120
        %v5122 = vrot.slane %v5108, %v5121
        %v5123 = vcombine.high %v5115, %v5115
        %v5124 = vcombine.high %v5122, %v5122
        %v5126 = vunpack.c.l.s4 1966171168
        %v5127 = vunpack.c.0.s8 %v5126
        %v5128 = vlaneseq
        %v5129 = vshrl.u32 %v5128, 7
        %v5130 = vsub.s32 %v5127, %v5129
        %v5131 = vrot.slane %v5115, %v5130
        %v5133 = vunpack.c.l.s4 1966171168
        %v5134 = vunpack.c.0.s8 %v5133
        %v5135 = vlaneseq
        %v5136 = vshrl.u32 %v5135, 7
        %v5137 = vsub.s32 %v5134, %v5136
        %v5138 = vrot.slane %v5122, %v5137
        %v5140 = vunpack.c.l.s4 1966171168
        %v5141 = vunpack.c.0.s8 %v5140
        %v5142 = vlaneseq
        %v5143 = vshrl.u32 %v5142, 7
        %v5144 = vsub.s32 %v5141, %v5143
        %v5145 = vrot.slane %v5123, %v5144
        %v5147 = vunpack.c.l.s4 1966171168
        %v5148 = vunpack.c.0.s8 %v5147
        %v5149 = vlaneseq
        %v5150 = vshrl.u32 %v5149, 7
        %v5151 = vsub.s32 %v5148, %v5150
        %v5152 = vrot.slane %v5124, %v5151
        %v5153 = vcombine.high %v5131, %v5131
        %v5154 = vcombine.high %v5138, %v5138
        %v5155 = vcombine.high %v5145, %v5145
        %v5156 = vcombine.high %v5152, %v5152
        %v5157 = vcombine.high %v4597, %v4597
        %v5159 = vunpack.c.l.s4 1966171168
        %v5160 = vunpack.c.0.s8 %v5159
        %v5161 = vlaneseq
        %v5162 = vshrl.u32 %v5161, 7
        %v5163 = vsub.s32 %v5160, %v5162
        %v5164 = vrot.slane %v4597, %v5163
        %v5166 = vunpack.c.l.s4 1966171168
        %v5167 = vunpack.c.0.s8 %v5166
        %v5168 = vlaneseq
        %v5169 = vshrl.u32 %v5168, 7
        %v5170 = vsub.s32 %v5167, %v5169
        %v5171 = vrot.slane %v5157, %v5170
        %v5172 = vcombine.high %v5164, %v5164
        %v5173 = vcombine.high %v5171, %v5171
        %v5175 = vunpack.c.l.s4 1966171168
        %v5176 = vunpack.c.0.s8 %v5175
        %v5177 = vlaneseq
        %v5178 = vshrl.u32 %v5177, 7
        %v5179 = vsub.s32 %v5176, %v5178
        %v5180 = vrot.slane %v5164, %v5179
        %v5182 = vunpack.c.l.s4 1966171168
        %v5183 = vunpack.c.0.s8 %v5182
        %v5184 = vlaneseq
        %v5185 = vshrl.u32 %v5184, 7
        %v5186 = vsub.s32 %v5183, %v5185
        %v5187 = vrot.slane %v5171, %v5186
        %v5189 = vunpack.c.l.s4 1966171168
        %v5190 = vunpack.c.0.s8 %v5189
        %v5191 = vlaneseq
        %v5192 = vshrl.u32 %v5191, 7
        %v5193 = vsub.s32 %v5190, %v5192
        %v5194 = vrot.slane %v5172, %v5193
        %v5196 = vunpack.c.l.s4 1966171168
        %v5197 = vunpack.c.0.s8 %v5196
        %v5198 = vlaneseq
        %v5199 = vshrl.u32 %v5198, 7
        %v5200 = vsub.s32 %v5197, %v5199
        %v5201 = vrot.slane %v5173, %v5200
        %v5202 = vcombine.high %v5180, %v5180
        %v5203 = vcombine.high %v5187, %v5187
        %v5204 = vcombine.high %v5194, %v5194
        %v5205 = vcombine.high %v5201, %v5201
        %v5206 = vcombine.high %v4598, %v4598
        %v5208 = vunpack.c.l.s4 1966171168
        %v5209 = vunpack.c.0.s8 %v5208
        %v5210 = vlaneseq
        %v5211 = vshrl.u32 %v5210, 7
        %v5212 = vsub.s32 %v5209, %v5211
        %v5213 = vrot.slane %v4598, %v5212
        %v5215 = vunpack.c.l.s4 1966171168
        %v5216 = vunpack.c.0.s8 %v5215
        %v5217 = vlaneseq
        %v5218 = vshrl.u32 %v5217, 7
        %v5219 = vsub.s32 %v5216, %v5218
        %v5220 = vrot.slane %v5206, %v5219
        %v5221 = vcombine.high %v5213, %v5213
        %v5222 = vcombine.high %v5220, %v5220
        %v5224 = vunpack.c.l.s4 1966171168
        %v5225 = vunpack.c.0.s8 %v5224
        %v5226 = vlaneseq
        %v5227 = vshrl.u32 %v5226, 7
        %v5228 = vsub.s32 %v5225, %v5227
        %v5229 = vrot.slane %v5213, %v5228
        %v5231 = vunpack.c.l.s4 1966171168
        %v5232 = vunpack.c.0.s8 %v5231
        %v5233 = vlaneseq
        %v5234 = vshrl.u32 %v5233, 7
        %v5235 = vsub.s32 %v5232, %v5234
        %v5236 = vrot.slane %v5220, %v5235
        %v5238 = vunpack.c.l.s4 1966171168
        %v5239 = vunpack.c.0.s8 %v5238
        %v5240 = vlaneseq
        %v5241 = vshrl.u32 %v5240, 7
        %v5242 = vsub.s32 %v5239, %v5241
        %v5243 = vrot.slane %v5221, %v5242
        %v5245 = vunpack.c.l.s4 1966171168
        %v5246 = vunpack.c.0.s8 %v5245
        %v5247 = vlaneseq
        %v5248 = vshrl.u32 %v5247, 7
        %v5249 = vsub.s32 %v5246, %v5248
        %v5250 = vrot.slane %v5222, %v5249
        %v5251 = vcombine.high %v5229, %v5229
        %v5252 = vcombine.high %v5236, %v5236
        %v5253 = vcombine.high %v5243, %v5243
        %v5254 = vcombine.high %v5250, %v5250
        %v5255 = vcombine.high %v4599, %v4599
        %v5257 = vunpack.c.l.s4 1966171168
        %v5258 = vunpack.c.0.s8 %v5257
        %v5259 = vlaneseq
        %v5260 = vshrl.u32 %v5259, 7
        %v5261 = vsub.s32 %v5258, %v5260
        %v5262 = vrot.slane %v4599, %v5261
        %v5264 = vunpack.c.l.s4 1966171168
        %v5265 = vunpack.c.0.s8 %v5264
        %v5266 = vlaneseq
        %v5267 = vshrl.u32 %v5266, 7
        %v5268 = vsub.s32 %v5265, %v5267
        %v5269 = vrot.slane %v5255, %v5268
        %v5270 = vcombine.high %v5262, %v5262
        %v5271 = vcombine.high %v5269, %v5269
        %v5273 = vunpack.c.l.s4 1966171168
        %v5274 = vunpack.c.0.s8 %v5273
        %v5275 = vlaneseq
        %v5276 = vshrl.u32 %v5275, 7
        %v5277 = vsub.s32 %v5274, %v5276
        %v5278 = vrot.slane %v5262, %v5277
        %v5280 = vunpack.c.l.s4 1966171168
        %v5281 = vunpack.c.0.s8 %v5280
        %v5282 = vlaneseq
        %v5283 = vshrl.u32 %v5282, 7
        %v5284 = vsub.s32 %v5281, %v5283
        %v5285 = vrot.slane %v5269, %v5284
        %v5287 = vunpack.c.l.s4 1966171168
        %v5288 = vunpack.c.0.s8 %v5287
        %v5289 = vlaneseq
        %v5290 = vshrl.u32 %v5289, 7
        %v5291 = vsub.s32 %v5288, %v5290
        %v5292 = vrot.slane %v5270, %v5291
        %v5294 = vunpack.c.l.s4 1966171168
        %v5295 = vunpack.c.0.s8 %v5294
        %v5296 = vlaneseq
        %v5297 = vshrl.u32 %v5296, 7
        %v5298 = vsub.s32 %v5295, %v5297
        %v5299 = vrot.slane %v5271, %v5298
        %v5300 = vcombine.high %v5278, %v5278
        %v5301 = vcombine.high %v5285, %v5285
        %v5302 = vcombine.high %v5292, %v5292
        %v5303 = vcombine.high %v5299, %v5299
        %v5304 = vcombine.high %v4600, %v4600
        %v5306 = vunpack.c.l.s4 1966171168
        %v5307 = vunpack.c.0.s8 %v5306
        %v5308 = vlaneseq
        %v5309 = vshrl.u32 %v5308, 7
        %v5310 = vsub.s32 %v5307, %v5309
        %v5311 = vrot.slane %v4600, %v5310
        %v5313 = vunpack.c.l.s4 1966171168
        %v5314 = vunpack.c.0.s8 %v5313
        %v5315 = vlaneseq
        %v5316 = vshrl.u32 %v5315, 7
        %v5317 = vsub.s32 %v5314, %v5316
        %v5318 = vrot.slane %v5304, %v5317
        %v5319 = vcombine.high %v5311, %v5311
        %v5320 = vcombine.high %v5318, %v5318
        %v5322 = vunpack.c.l.s4 1966171168
        %v5323 = vunpack.c.0.s8 %v5322
        %v5324 = vlaneseq
        %v5325 = vshrl.u32 %v5324, 7
        %v5326 = vsub.s32 %v5323, %v5325
        %v5327 = vrot.slane %v5311, %v5326
        %v5329 = vunpack.c.l.s4 1966171168
        %v5330 = vunpack.c.0.s8 %v5329
        %v5331 = vlaneseq
        %v5332 = vshrl.u32 %v5331, 7
        %v5333 = vsub.s32 %v5330, %v5332
        %v5334 = vrot.slane %v5318, %v5333
        %v5336 = vunpack.c.l.s4 1966171168
        %v5337 = vunpack.c.0.s8 %v5336
        %v5338 = vlaneseq
        %v5339 = vshrl.u32 %v5338, 7
        %v5340 = vsub.s32 %v5337, %v5339
        %v5341 = vrot.slane %v5319, %v5340
        %v5343 = vunpack.c.l.s4 1966171168
        %v5344 = vunpack.c.0.s8 %v5343
        %v5345 = vlaneseq
        %v5346 = vshrl.u32 %v5345, 7
        %v5347 = vsub.s32 %v5344, %v5346
        %v5348 = vrot.slane %v5320, %v5347
        %v5349 = vcombine.high %v5327, %v5327
        %v5350 = vcombine.high %v5334, %v5334
        %v5351 = vcombine.high %v5341, %v5341
        %v5352 = vcombine.high %v5348, %v5348
        %v5353 = vcombine.high %v4601, %v4601
        %v5355 = vunpack.c.l.s4 1966171168
        %v5356 = vunpack.c.0.s8 %v5355
        %v5357 = vlaneseq
        %v5358 = vshrl.u32 %v5357, 7
        %v5359 = vsub.s32 %v5356, %v5358
        %v5360 = vrot.slane %v4601, %v5359
        %v5362 = vunpack.c.l.s4 1966171168
        %v5363 = vunpack.c.0.s8 %v5362
        %v5364 = vlaneseq
        %v5365 = vshrl.u32 %v5364, 7
        %v5366 = vsub.s32 %v5363, %v5365
        %v5367 = vrot.slane %v5353, %v5366
        %v5368 = vcombine.high %v5360, %v5360
        %v5369 = vcombine.high %v5367, %v5367
        %v5371 = vunpack.c.l.s4 1966171168
        %v5372 = vunpack.c.0.s8 %v5371
        %v5373 = vlaneseq
        %v5374 = vshrl.u32 %v5373, 7
        %v5375 = vsub.s32 %v5372, %v5374
        %v5376 = vrot.slane %v5360, %v5375
        %v5378 = vunpack.c.l.s4 1966171168
        %v5379 = vunpack.c.0.s8 %v5378
        %v5380 = vlaneseq
        %v5381 = vshrl.u32 %v5380, 7
        %v5382 = vsub.s32 %v5379, %v5381
        %v5383 = vrot.slane %v5367, %v5382
        %v5385 = vunpack.c.l.s4 1966171168
        %v5386 = vunpack.c.0.s8 %v5385
        %v5387 = vlaneseq
        %v5388 = vshrl.u32 %v5387, 7
        %v5389 = vsub.s32 %v5386, %v5388
        %v5390 = vrot.slane %v5368, %v5389
        %v5392 = vunpack.c.l.s4 1966171168
        %v5393 = vunpack.c.0.s8 %v5392
        %v5394 = vlaneseq
        %v5395 = vshrl.u32 %v5394, 7
        %v5396 = vsub.s32 %v5393, %v5395
        %v5397 = vrot.slane %v5369, %v5396
        %v5398 = vcombine.high %v5376, %v5376
        %v5399 = vcombine.high %v5383, %v5383
        %v5400 = vcombine.high %v5390, %v5390
        %v5401 = vcombine.high %v5397, %v5397
        %v5402 = vcombine.high %v4602, %v4602
        %v5404 = vunpack.c.l.s4 1966171168
        %v5405 = vunpack.c.0.s8 %v5404
        %v5406 = vlaneseq
        %v5407 = vshrl.u32 %v5406, 7
        %v5408 = vsub.s32 %v5405, %v5407
        %v5409 = vrot.slane %v4602, %v5408
        %v5411 = vunpack.c.l.s4 1966171168
        %v5412 = vunpack.c.0.s8 %v5411
        %v5413 = vlaneseq
        %v5414 = vshrl.u32 %v5413, 7
        %v5415 = vsub.s32 %v5412, %v5414
        %v5416 = vrot.slane %v5402, %v5415
        %v5417 = vcombine.high %v5409, %v5409
        %v5418 = vcombine.high %v5416, %v5416
        %v5420 = vunpack.c.l.s4 1966171168
        %v5421 = vunpack.c.0.s8 %v5420
        %v5422 = vlaneseq
        %v5423 = vshrl.u32 %v5422, 7
        %v5424 = vsub.s32 %v5421, %v5423
        %v5425 = vrot.slane %v5409, %v5424
        %v5427 = vunpack.c.l.s4 1966171168
        %v5428 = vunpack.c.0.s8 %v5427
        %v5429 = vlaneseq
        %v5430 = vshrl.u32 %v5429, 7
        %v5431 = vsub.s32 %v5428, %v5430
        %v5432 = vrot.slane %v5416, %v5431
        %v5434 = vunpack.c.l.s4 1966171168
        %v5435 = vunpack.c.0.s8 %v5434
        %v5436 = vlaneseq
        %v5437 = vshrl.u32 %v5436, 7
        %v5438 = vsub.s32 %v5435, %v5437
        %v5439 = vrot.slane %v5417, %v5438
        %v5441 = vunpack.c.l.s4 1966171168
        %v5442 = vunpack.c.0.s8 %v5441
        %v5443 = vlaneseq
        %v5444 = vshrl.u32 %v5443, 7
        %v5445 = vsub.s32 %v5442, %v5444
        %v5446 = vrot.slane %v5418, %v5445
        %v5447 = vcombine.high %v5425, %v5425
        %v5448 = vcombine.high %v5432, %v5432
        %v5449 = vcombine.high %v5439, %v5439
        %v5450 = vcombine.high %v5446, %v5446
        %v5451 = vcombine.high %v4603, %v4603
        %v5453 = vunpack.c.l.s4 1966171168
        %v5454 = vunpack.c.0.s8 %v5453
        %v5455 = vlaneseq
        %v5456 = vshrl.u32 %v5455, 7
        %v5457 = vsub.s32 %v5454, %v5456
        %v5458 = vrot.slane %v4603, %v5457
        %v5460 = vunpack.c.l.s4 1966171168
        %v5461 = vunpack.c.0.s8 %v5460
        %v5462 = vlaneseq
        %v5463 = vshrl.u32 %v5462, 7
        %v5464 = vsub.s32 %v5461, %v5463
        %v5465 = vrot.slane %v5451, %v5464
        %v5466 = vcombine.high %v5458, %v5458
        %v5467 = vcombine.high %v5465, %v5465
        %v5469 = vunpack.c.l.s4 1966171168
        %v5470 = vunpack.c.0.s8 %v5469
        %v5471 = vlaneseq
        %v5472 = vshrl.u32 %v5471, 7
        %v5473 = vsub.s32 %v5470, %v5472
        %v5474 = vrot.slane %v5458, %v5473
        %v5476 = vunpack.c.l.s4 1966171168
        %v5477 = vunpack.c.0.s8 %v5476
        %v5478 = vlaneseq
        %v5479 = vshrl.u32 %v5478, 7
        %v5480 = vsub.s32 %v5477, %v5479
        %v5481 = vrot.slane %v5465, %v5480
        %v5483 = vunpack.c.l.s4 1966171168
        %v5484 = vunpack.c.0.s8 %v5483
        %v5485 = vlaneseq
        %v5486 = vshrl.u32 %v5485, 7
        %v5487 = vsub.s32 %v5484, %v5486
        %v5488 = vrot.slane %v5466, %v5487
        %v5490 = vunpack.c.l.s4 1966171168
        %v5491 = vunpack.c.0.s8 %v5490
        %v5492 = vlaneseq
        %v5493 = vshrl.u32 %v5492, 7
        %v5494 = vsub.s32 %v5491, %v5493
        %v5495 = vrot.slane %v5467, %v5494
        %v5496 = vcombine.high %v5474, %v5474
        %v5497 = vcombine.high %v5481, %v5481
        %v5498 = vcombine.high %v5488, %v5488
        %v5499 = vcombine.high %v5495, %v5495
        %v5500 = vcombine.high %v4604, %v4604
        %v5502 = vunpack.c.l.s4 1966171168
        %v5503 = vunpack.c.0.s8 %v5502
        %v5504 = vlaneseq
        %v5505 = vshrl.u32 %v5504, 7
        %v5506 = vsub.s32 %v5503, %v5505
        %v5507 = vrot.slane %v4604, %v5506
        %v5509 = vunpack.c.l.s4 1966171168
        %v5510 = vunpack.c.0.s8 %v5509
        %v5511 = vlaneseq
        %v5512 = vshrl.u32 %v5511, 7
        %v5513 = vsub.s32 %v5510, %v5512
        %v5514 = vrot.slane %v5500, %v5513
        %v5515 = vcombine.high %v5507, %v5507
        %v5516 = vcombine.high %v5514, %v5514
        %v5518 = vunpack.c.l.s4 1966171168
        %v5519 = vunpack.c.0.s8 %v5518
        %v5520 = vlaneseq
        %v5521 = vshrl.u32 %v5520, 7
        %v5522 = vsub.s32 %v5519, %v5521
        %v5523 = vrot.slane %v5507, %v5522
        %v5525 = vunpack.c.l.s4 1966171168
        %v5526 = vunpack.c.0.s8 %v5525
        %v5527 = vlaneseq
        %v5528 = vshrl.u32 %v5527, 7
        %v5529 = vsub.s32 %v5526, %v5528
        %v5530 = vrot.slane %v5514, %v5529
        %v5532 = vunpack.c.l.s4 1966171168
        %v5533 = vunpack.c.0.s8 %v5532
        %v5534 = vlaneseq
        %v5535 = vshrl.u32 %v5534, 7
        %v5536 = vsub.s32 %v5533, %v5535
        %v5537 = vrot.slane %v5515, %v5536
        %v5539 = vunpack.c.l.s4 1966171168
        %v5540 = vunpack.c.0.s8 %v5539
        %v5541 = vlaneseq
        %v5542 = vshrl.u32 %v5541, 7
        %v5543 = vsub.s32 %v5540, %v5542
        %v5544 = vrot.slane %v5516, %v5543
        %v5545 = vcombine.high %v5523, %v5523
        %v5546 = vcombine.high %v5530, %v5530
        %v5547 = vcombine.high %v5537, %v5537
        %v5548 = vcombine.high %v5544, %v5544
        %v5549 = vcombine.high %v4605, %v4605
        %v5551 = vunpack.c.l.s4 1966171168
        %v5552 = vunpack.c.0.s8 %v5551
        %v5553 = vlaneseq
        %v5554 = vshrl.u32 %v5553, 7
        %v5555 = vsub.s32 %v5552, %v5554
        %v5556 = vrot.slane %v4605, %v5555
        %v5558 = vunpack.c.l.s4 1966171168
        %v5559 = vunpack.c.0.s8 %v5558
        %v5560 = vlaneseq
        %v5561 = vshrl.u32 %v5560, 7
        %v5562 = vsub.s32 %v5559, %v5561
        %v5563 = vrot.slane %v5549, %v5562
        %v5564 = vcombine.high %v5556, %v5556
        %v5565 = vcombine.high %v5563, %v5563
        %v5567 = vunpack.c.l.s4 1966171168
        %v5568 = vunpack.c.0.s8 %v5567
        %v5569 = vlaneseq
        %v5570 = vshrl.u32 %v5569, 7
        %v5571 = vsub.s32 %v5568, %v5570
        %v5572 = vrot.slane %v5556, %v5571
        %v5574 = vunpack.c.l.s4 1966171168
        %v5575 = vunpack.c.0.s8 %v5574
        %v5576 = vlaneseq
        %v5577 = vshrl.u32 %v5576, 7
        %v5578 = vsub.s32 %v5575, %v5577
        %v5579 = vrot.slane %v5563, %v5578
        %v5581 = vunpack.c.l.s4 1966171168
        %v5582 = vunpack.c.0.s8 %v5581
        %v5583 = vlaneseq
        %v5584 = vshrl.u32 %v5583, 7
        %v5585 = vsub.s32 %v5582, %v5584
        %v5586 = vrot.slane %v5564, %v5585
        %v5588 = vunpack.c.l.s4 1966171168
        %v5589 = vunpack.c.0.s8 %v5588
        %v5590 = vlaneseq
        %v5591 = vshrl.u32 %v5590, 7
        %v5592 = vsub.s32 %v5589, %v5591
        %v5593 = vrot.slane %v5565, %v5592
        %v5594 = vcombine.high %v5572, %v5572
        %v5595 = vcombine.high %v5579, %v5579
        %v5596 = vcombine.high %v5586, %v5586
        %v5597 = vcombine.high %v5593, %v5593
        %v5598 = vcombine.high %v4606, %v4606
        %v5600 = vunpack.c.l.s4 1966171168
        %v5601 = vunpack.c.0.s8 %v5600
        %v5602 = vlaneseq
        %v5603 = vshrl.u32 %v5602, 7
        %v5604 = vsub.s32 %v5601, %v5603
        %v5605 = vrot.slane %v4606, %v5604
        %v5607 = vunpack.c.l.s4 1966171168
        %v5608 = vunpack.c.0.s8 %v5607
        %v5609 = vlaneseq
        %v5610 = vshrl.u32 %v5609, 7
        %v5611 = vsub.s32 %v5608, %v5610
        %v5612 = vrot.slane %v5598, %v5611
        %v5613 = vcombine.high %v5605, %v5605
        %v5614 = vcombine.high %v5612, %v5612
        %v5616 = vunpack.c.l.s4 1966171168
        %v5617 = vunpack.c.0.s8 %v5616
        %v5618 = vlaneseq
        %v5619 = vshrl.u32 %v5618, 7
        %v5620 = vsub.s32 %v5617, %v5619
        %v5621 = vrot.slane %v5605, %v5620
        %v5623 = vunpack.c.l.s4 1966171168
        %v5624 = vunpack.c.0.s8 %v5623
        %v5625 = vlaneseq
        %v5626 = vshrl.u32 %v5625, 7
        %v5627 = vsub.s32 %v5624, %v5626
        %v5628 = vrot.slane %v5612, %v5627
        %v5630 = vunpack.c.l.s4 1966171168
        %v5631 = vunpack.c.0.s8 %v5630
        %v5632 = vlaneseq
        %v5633 = vshrl.u32 %v5632, 7
        %v5634 = vsub.s32 %v5631, %v5633
        %v5635 = vrot.slane %v5613, %v5634
        %v5637 = vunpack.c.l.s4 1966171168
        %v5638 = vunpack.c.0.s8 %v5637
        %v5639 = vlaneseq
        %v5640 = vshrl.u32 %v5639, 7
        %v5641 = vsub.s32 %v5638, %v5640
        %v5642 = vrot.slane %v5614, %v5641
        %v5643 = vcombine.high %v5621, %v5621
        %v5644 = vcombine.high %v5628, %v5628
        %v5645 = vcombine.high %v5635, %v5635
        %v5646 = vcombine.high %v5642, %v5642
        %v5647 = vcombine.high %v4607, %v4607
        %v5649 = vunpack.c.l.s4 1966171168
        %v5650 = vunpack.c.0.s8 %v5649
        %v5651 = vlaneseq
        %v5652 = vshrl.u32 %v5651, 7
        %v5653 = vsub.s32 %v5650, %v5652
        %v5654 = vrot.slane %v4607, %v5653
        %v5656 = vunpack.c.l.s4 1966171168
        %v5657 = vunpack.c.0.s8 %v5656
        %v5658 = vlaneseq
        %v5659 = vshrl.u32 %v5658, 7
        %v5660 = vsub.s32 %v5657, %v5659
        %v5661 = vrot.slane %v5647, %v5660
        %v5662 = vcombine.high %v5654, %v5654
        %v5663 = vcombine.high %v5661, %v5661
        %v5665 = vunpack.c.l.s4 1966171168
        %v5666 = vunpack.c.0.s8 %v5665
        %v5667 = vlaneseq
        %v5668 = vshrl.u32 %v5667, 7
        %v5669 = vsub.s32 %v5666, %v5668
        %v5670 = vrot.slane %v5654, %v5669
        %v5672 = vunpack.c.l.s4 1966171168
        %v5673 = vunpack.c.0.s8 %v5672
        %v5674 = vlaneseq
        %v5675 = vshrl.u32 %v5674, 7
        %v5676 = vsub.s32 %v5673, %v5675
        %v5677 = vrot.slane %v5661, %v5676
        %v5679 = vunpack.c.l.s4 1966171168
        %v5680 = vunpack.c.0.s8 %v5679
        %v5681 = vlaneseq
        %v5682 = vshrl.u32 %v5681, 7
        %v5683 = vsub.s32 %v5680, %v5682
        %v5684 = vrot.slane %v5662, %v5683
        %v5686 = vunpack.c.l.s4 1966171168
        %v5687 = vunpack.c.0.s8 %v5686
        %v5688 = vlaneseq
        %v5689 = vshrl.u32 %v5688, 7
        %v5690 = vsub.s32 %v5687, %v5689
        %v5691 = vrot.slane %v5663, %v5690
        %v5692 = vcombine.high %v5670, %v5670
        %v5693 = vcombine.high %v5677, %v5677
        %v5694 = vcombine.high %v5684, %v5684
        %v5695 = vcombine.high %v5691, %v5691
        %v5696 = vcombine.high %v4608, %v4608
        %v5698 = vunpack.c.l.s4 1966171168
        %v5699 = vunpack.c.0.s8 %v5698
        %v5700 = vlaneseq
        %v5701 = vshrl.u32 %v5700, 7
        %v5702 = vsub.s32 %v5699, %v5701
        %v5703 = vrot.slane %v4608, %v5702
        %v5705 = vunpack.c.l.s4 1966171168
        %v5706 = vunpack.c.0.s8 %v5705
        %v5707 = vlaneseq
        %v5708 = vshrl.u32 %v5707, 7
        %v5709 = vsub.s32 %v5706, %v5708
        %v5710 = vrot.slane %v5696, %v5709
        %v5711 = vcombine.high %v5703, %v5703
        %v5712 = vcombine.high %v5710, %v5710
        %v5714 = vunpack.c.l.s4 1966171168
        %v5715 = vunpack.c.0.s8 %v5714
        %v5716 = vlaneseq
        %v5717 = vshrl.u32 %v5716, 7
        %v5718 = vsub.s32 %v5715, %v5717
        %v5719 = vrot.slane %v5703, %v5718
        %v5721 = vunpack.c.l.s4 1966171168
        %v5722 = vunpack.c.0.s8 %v5721
        %v5723 = vlaneseq
        %v5724 = vshrl.u32 %v5723, 7
        %v5725 = vsub.s32 %v5722, %v5724
        %v5726 = vrot.slane %v5710, %v5725
        %v5728 = vunpack.c.l.s4 1966171168
        %v5729 = vunpack.c.0.s8 %v5728
        %v5730 = vlaneseq
        %v5731 = vshrl.u32 %v5730, 7
        %v5732 = vsub.s32 %v5729, %v5731
        %v5733 = vrot.slane %v5711, %v5732
        %v5735 = vunpack.c.l.s4 1966171168
        %v5736 = vunpack.c.0.s8 %v5735
        %v5737 = vlaneseq
        %v5738 = vshrl.u32 %v5737, 7
        %v5739 = vsub.s32 %v5736, %v5738
        %v5740 = vrot.slane %v5712, %v5739
        %v5741 = vcombine.high %v5719, %v5719
        %v5742 = vcombine.high %v5726, %v5726
        %v5743 = vcombine.high %v5733, %v5733
        %v5744 = vcombine.high %v5740, %v5740
        %v5745 = vcombine.high %v4609, %v4609
        %v5747 = vunpack.c.l.s4 1966171168
        %v5748 = vunpack.c.0.s8 %v5747
        %v5749 = vlaneseq
        %v5750 = vshrl.u32 %v5749, 7
        %v5751 = vsub.s32 %v5748, %v5750
        %v5752 = vrot.slane %v4609, %v5751
        %v5754 = vunpack.c.l.s4 1966171168
        %v5755 = vunpack.c.0.s8 %v5754
        %v5756 = vlaneseq
        %v5757 = vshrl.u32 %v5756, 7
        %v5758 = vsub.s32 %v5755, %v5757
        %v5759 = vrot.slane %v5745, %v5758
        %v5760 = vcombine.high %v5752, %v5752
        %v5761 = vcombine.high %v5759, %v5759
        %v5763 = vunpack.c.l.s4 1966171168
        %v5764 = vunpack.c.0.s8 %v5763
        %v5765 = vlaneseq
        %v5766 = vshrl.u32 %v5765, 7
        %v5767 = vsub.s32 %v5764, %v5766
        %v5768 = vrot.slane %v5752, %v5767
        %v5770 = vunpack.c.l.s4 1966171168
        %v5771 = vunpack.c.0.s8 %v5770
        %v5772 = vlaneseq
        %v5773 = vshrl.u32 %v5772, 7
        %v5774 = vsub.s32 %v5771, %v5773
        %v5775 = vrot.slane %v5759, %v5774
        %v5777 = vunpack.c.l.s4 1966171168
        %v5778 = vunpack.c.0.s8 %v5777
        %v5779 = vlaneseq
        %v5780 = vshrl.u32 %v5779, 7
        %v5781 = vsub.s32 %v5778, %v5780
        %v5782 = vrot.slane %v5760, %v5781
        %v5784 = vunpack.c.l.s4 1966171168
        %v5785 = vunpack.c.0.s8 %v5784
        %v5786 = vlaneseq
        %v5787 = vshrl.u32 %v5786, 7
        %v5788 = vsub.s32 %v5785, %v5787
        %v5789 = vrot.slane %v5761, %v5788
        %v5790 = vcombine.high %v5768, %v5768
        %v5791 = vcombine.high %v5775, %v5775
        %v5792 = vcombine.high %v5782, %v5782
        %v5793 = vcombine.high %v5789, %v5789
        %v5794 = vcombine.high %v4610, %v4610
        %v5796 = vunpack.c.l.s4 1966171168
        %v5797 = vunpack.c.0.s8 %v5796
        %v5798 = vlaneseq
        %v5799 = vshrl.u32 %v5798, 7
        %v5800 = vsub.s32 %v5797, %v5799
        %v5801 = vrot.slane %v4610, %v5800
        %v5803 = vunpack.c.l.s4 1966171168
        %v5804 = vunpack.c.0.s8 %v5803
        %v5805 = vlaneseq
        %v5806 = vshrl.u32 %v5805, 7
        %v5807 = vsub.s32 %v5804, %v5806
        %v5808 = vrot.slane %v5794, %v5807
        %v5809 = vcombine.high %v5801, %v5801
        %v5810 = vcombine.high %v5808, %v5808
        %v5812 = vunpack.c.l.s4 1966171168
        %v5813 = vunpack.c.0.s8 %v5812
        %v5814 = vlaneseq
        %v5815 = vshrl.u32 %v5814, 7
        %v5816 = vsub.s32 %v5813, %v5815
        %v5817 = vrot.slane %v5801, %v5816
        %v5819 = vunpack.c.l.s4 1966171168
        %v5820 = vunpack.c.0.s8 %v5819
        %v5821 = vlaneseq
        %v5822 = vshrl.u32 %v5821, 7
        %v5823 = vsub.s32 %v5820, %v5822
        %v5824 = vrot.slane %v5808, %v5823
        %v5826 = vunpack.c.l.s4 1966171168
        %v5827 = vunpack.c.0.s8 %v5826
        %v5828 = vlaneseq
        %v5829 = vshrl.u32 %v5828, 7
        %v5830 = vsub.s32 %v5827, %v5829
        %v5831 = vrot.slane %v5809, %v5830
        %v5833 = vunpack.c.l.s4 1966171168
        %v5834 = vunpack.c.0.s8 %v5833
        %v5835 = vlaneseq
        %v5836 = vshrl.u32 %v5835, 7
        %v5837 = vsub.s32 %v5834, %v5836
        %v5838 = vrot.slane %v5810, %v5837
        %v5839 = vcombine.high %v5817, %v5817
        %v5840 = vcombine.high %v5824, %v5824
        %v5841 = vcombine.high %v5831, %v5831
        %v5842 = vcombine.high %v5838, %v5838
        %v5843 = vcombine.high %v4611, %v4611
        %v5845 = vunpack.c.l.s4 1966171168
        %v5846 = vunpack.c.0.s8 %v5845
        %v5847 = vlaneseq
        %v5848 = vshrl.u32 %v5847, 7
        %v5849 = vsub.s32 %v5846, %v5848
        %v5850 = vrot.slane %v4611, %v5849
        %v5852 = vunpack.c.l.s4 1966171168
        %v5853 = vunpack.c.0.s8 %v5852
        %v5854 = vlaneseq
        %v5855 = vshrl.u32 %v5854, 7
        %v5856 = vsub.s32 %v5853, %v5855
        %v5857 = vrot.slane %v5843, %v5856
        %v5858 = vcombine.high %v5850, %v5850
        %v5859 = vcombine.high %v5857, %v5857
        %v5861 = vunpack.c.l.s4 1966171168
        %v5862 = vunpack.c.0.s8 %v5861
        %v5863 = vlaneseq
        %v5864 = vshrl.u32 %v5863, 7
        %v5865 = vsub.s32 %v5862, %v5864
        %v5866 = vrot.slane %v5850, %v5865
        %v5868 = vunpack.c.l.s4 1966171168
        %v5869 = vunpack.c.0.s8 %v5868
        %v5870 = vlaneseq
        %v5871 = vshrl.u32 %v5870, 7
        %v5872 = vsub.s32 %v5869, %v5871
        %v5873 = vrot.slane %v5857, %v5872
        %v5875 = vunpack.c.l.s4 1966171168
        %v5876 = vunpack.c.0.s8 %v5875
        %v5877 = vlaneseq
        %v5878 = vshrl.u32 %v5877, 7
        %v5879 = vsub.s32 %v5876, %v5878
        %v5880 = vrot.slane %v5858, %v5879
        %v5882 = vunpack.c.l.s4 1966171168
        %v5883 = vunpack.c.0.s8 %v5882
        %v5884 = vlaneseq
        %v5885 = vshrl.u32 %v5884, 7
        %v5886 = vsub.s32 %v5883, %v5885
        %v5887 = vrot.slane %v5859, %v5886
        %v5888 = vcombine.high %v5866, %v5866
        %v5889 = vcombine.high %v5873, %v5873
        %v5890 = vcombine.high %v5880, %v5880
        %v5891 = vcombine.high %v5887, %v5887
        %v5892 = vcombine.high %v4612, %v4612
        %v5894 = vunpack.c.l.s4 1966171168
        %v5895 = vunpack.c.0.s8 %v5894
        %v5896 = vlaneseq
        %v5897 = vshrl.u32 %v5896, 7
        %v5898 = vsub.s32 %v5895, %v5897
        %v5899 = vrot.slane %v4612, %v5898
        %v5901 = vunpack.c.l.s4 1966171168
        %v5902 = vunpack.c.0.s8 %v5901
        %v5903 = vlaneseq
        %v5904 = vshrl.u32 %v5903, 7
        %v5905 = vsub.s32 %v5902, %v5904
        %v5906 = vrot.slane %v5892, %v5905
        %v5907 = vcombine.high %v5899, %v5899
        %v5908 = vcombine.high %v5906, %v5906
        %v5910 = vunpack.c.l.s4 1966171168
        %v5911 = vunpack.c.0.s8 %v5910
        %v5912 = vlaneseq
        %v5913 = vshrl.u32 %v5912, 7
        %v5914 = vsub.s32 %v5911, %v5913
        %v5915 = vrot.slane %v5899, %v5914
        %v5917 = vunpack.c.l.s4 1966171168
        %v5918 = vunpack.c.0.s8 %v5917
        %v5919 = vlaneseq
        %v5920 = vshrl.u32 %v5919, 7
        %v5921 = vsub.s32 %v5918, %v5920
        %v5922 = vrot.slane %v5906, %v5921
        %v5924 = vunpack.c.l.s4 1966171168
        %v5925 = vunpack.c.0.s8 %v5924
        %v5926 = vlaneseq
        %v5927 = vshrl.u32 %v5926, 7
        %v5928 = vsub.s32 %v5925, %v5927
        %v5929 = vrot.slane %v5907, %v5928
        %v5931 = vunpack.c.l.s4 1966171168
        %v5932 = vunpack.c.0.s8 %v5931
        %v5933 = vlaneseq
        %v5934 = vshrl.u32 %v5933, 7
        %v5935 = vsub.s32 %v5932, %v5934
        %v5936 = vrot.slane %v5908, %v5935
        %v5937 = vcombine.high %v5915, %v5915
        %v5938 = vcombine.high %v5922, %v5922
        %v5939 = vcombine.high %v5929, %v5929
        %v5940 = vcombine.high %v5936, %v5936
        %v5941 = vcombine.high %v4613, %v4613
        %v5943 = vunpack.c.l.s4 1966171168
        %v5944 = vunpack.c.0.s8 %v5943
        %v5945 = vlaneseq
        %v5946 = vshrl.u32 %v5945, 7
        %v5947 = vsub.s32 %v5944, %v5946
        %v5948 = vrot.slane %v4613, %v5947
        %v5950 = vunpack.c.l.s4 1966171168
        %v5951 = vunpack.c.0.s8 %v5950
        %v5952 = vlaneseq
        %v5953 = vshrl.u32 %v5952, 7
        %v5954 = vsub.s32 %v5951, %v5953
        %v5955 = vrot.slane %v5941, %v5954
        %v5956 = vcombine.high %v5948, %v5948
        %v5957 = vcombine.high %v5955, %v5955
        %v5959 = vunpack.c.l.s4 1966171168
        %v5960 = vunpack.c.0.s8 %v5959
        %v5961 = vlaneseq
        %v5962 = vshrl.u32 %v5961, 7
        %v5963 = vsub.s32 %v5960, %v5962
        %v5964 = vrot.slane %v5948, %v5963
        %v5966 = vunpack.c.l.s4 1966171168
        %v5967 = vunpack.c.0.s8 %v5966
        %v5968 = vlaneseq
        %v5969 = vshrl.u32 %v5968, 7
        %v5970 = vsub.s32 %v5967, %v5969
        %v5971 = vrot.slane %v5955, %v5970
        %v5973 = vunpack.c.l.s4 1966171168
        %v5974 = vunpack.c.0.s8 %v5973
        %v5975 = vlaneseq
        %v5976 = vshrl.u32 %v5975, 7
        %v5977 = vsub.s32 %v5974, %v5976
        %v5978 = vrot.slane %v5956, %v5977
        %v5980 = vunpack.c.l.s4 1966171168
        %v5981 = vunpack.c.0.s8 %v5980
        %v5982 = vlaneseq
        %v5983 = vshrl.u32 %v5982, 7
        %v5984 = vsub.s32 %v5981, %v5983
        %v5985 = vrot.slane %v5957, %v5984
        %v5986 = vcombine.high %v5964, %v5964
        %v5987 = vcombine.high %v5971, %v5971
        %v5988 = vcombine.high %v5978, %v5978
        %v5989 = vcombine.high %v5985, %v5985
        %v5990 = vcombine.high %v4614, %v4614
        %v5992 = vunpack.c.l.s4 1966171168
        %v5993 = vunpack.c.0.s8 %v5992
        %v5994 = vlaneseq
        %v5995 = vshrl.u32 %v5994, 7
        %v5996 = vsub.s32 %v5993, %v5995
        %v5997 = vrot.slane %v4614, %v5996
        %v5999 = vunpack.c.l.s4 1966171168
        %v6000 = vunpack.c.0.s8 %v5999
        %v6001 = vlaneseq
        %v6002 = vshrl.u32 %v6001, 7
        %v6003 = vsub.s32 %v6000, %v6002
        %v6004 = vrot.slane %v5990, %v6003
        %v6005 = vcombine.high %v5997, %v5997
        %v6006 = vcombine.high %v6004, %v6004
        %v6008 = vunpack.c.l.s4 1966171168
        %v6009 = vunpack.c.0.s8 %v6008
        %v6010 = vlaneseq
        %v6011 = vshrl.u32 %v6010, 7
        %v6012 = vsub.s32 %v6009, %v6011
        %v6013 = vrot.slane %v5997, %v6012
        %v6015 = vunpack.c.l.s4 1966171168
        %v6016 = vunpack.c.0.s8 %v6015
        %v6017 = vlaneseq
        %v6018 = vshrl.u32 %v6017, 7
        %v6019 = vsub.s32 %v6016, %v6018
        %v6020 = vrot.slane %v6004, %v6019
        %v6022 = vunpack.c.l.s4 1966171168
        %v6023 = vunpack.c.0.s8 %v6022
        %v6024 = vlaneseq
        %v6025 = vshrl.u32 %v6024, 7
        %v6026 = vsub.s32 %v6023, %v6025
        %v6027 = vrot.slane %v6005, %v6026
        %v6029 = vunpack.c.l.s4 1966171168
        %v6030 = vunpack.c.0.s8 %v6029
        %v6031 = vlaneseq
        %v6032 = vshrl.u32 %v6031, 7
        %v6033 = vsub.s32 %v6030, %v6032
        %v6034 = vrot.slane %v6006, %v6033
        %v6035 = vcombine.high %v6013, %v6013
        %v6036 = vcombine.high %v6020, %v6020
        %v6037 = vcombine.high %v6027, %v6027
        %v6038 = vcombine.high %v6034, %v6034
        %v6039 = vcombine.high %v4615, %v4615
        %v6041 = vunpack.c.l.s4 1966171168
        %v6042 = vunpack.c.0.s8 %v6041
        %v6043 = vlaneseq
        %v6044 = vshrl.u32 %v6043, 7
        %v6045 = vsub.s32 %v6042, %v6044
        %v6046 = vrot.slane %v4615, %v6045
        %v6048 = vunpack.c.l.s4 1966171168
        %v6049 = vunpack.c.0.s8 %v6048
        %v6050 = vlaneseq
        %v6051 = vshrl.u32 %v6050, 7
        %v6052 = vsub.s32 %v6049, %v6051
        %v6053 = vrot.slane %v6039, %v6052
        %v6054 = vcombine.high %v6046, %v6046
        %v6055 = vcombine.high %v6053, %v6053
        %v6057 = vunpack.c.l.s4 1966171168
        %v6058 = vunpack.c.0.s8 %v6057
        %v6059 = vlaneseq
        %v6060 = vshrl.u32 %v6059, 7
        %v6061 = vsub.s32 %v6058, %v6060
        %v6062 = vrot.slane %v6046, %v6061
        %v6064 = vunpack.c.l.s4 1966171168
        %v6065 = vunpack.c.0.s8 %v6064
        %v6066 = vlaneseq
        %v6067 = vshrl.u32 %v6066, 7
        %v6068 = vsub.s32 %v6065, %v6067
        %v6069 = vrot.slane %v6053, %v6068
        %v6071 = vunpack.c.l.s4 1966171168
        %v6072 = vunpack.c.0.s8 %v6071
        %v6073 = vlaneseq
        %v6074 = vshrl.u32 %v6073, 7
        %v6075 = vsub.s32 %v6072, %v6074
        %v6076 = vrot.slane %v6054, %v6075
        %v6078 = vunpack.c.l.s4 1966171168
        %v6079 = vunpack.c.0.s8 %v6078
        %v6080 = vlaneseq
        %v6081 = vshrl.u32 %v6080, 7
        %v6082 = vsub.s32 %v6079, %v6081
        %v6083 = vrot.slane %v6055, %v6082
        %v6084 = vcombine.high %v6062, %v6062
        %v6085 = vcombine.high %v6069, %v6069
        %v6086 = vcombine.high %v6076, %v6076
        %v6087 = vcombine.high %v6083, %v6083
        %v6088 = vcombine.high %v4616, %v4616
        %v6090 = vunpack.c.l.s4 1966171168
        %v6091 = vunpack.c.0.s8 %v6090
        %v6092 = vlaneseq
        %v6093 = vshrl.u32 %v6092, 7
        %v6094 = vsub.s32 %v6091, %v6093
        %v6095 = vrot.slane %v4616, %v6094
        %v6097 = vunpack.c.l.s4 1966171168
        %v6098 = vunpack.c.0.s8 %v6097
        %v6099 = vlaneseq
        %v6100 = vshrl.u32 %v6099, 7
        %v6101 = vsub.s32 %v6098, %v6100
        %v6102 = vrot.slane %v6088, %v6101
        %v6103 = vcombine.high %v6095, %v6095
        %v6104 = vcombine.high %v6102, %v6102
        %v6106 = vunpack.c.l.s4 1966171168
        %v6107 = vunpack.c.0.s8 %v6106
        %v6108 = vlaneseq
        %v6109 = vshrl.u32 %v6108, 7
        %v6110 = vsub.s32 %v6107, %v6109
        %v6111 = vrot.slane %v6095, %v6110
        %v6113 = vunpack.c.l.s4 1966171168
        %v6114 = vunpack.c.0.s8 %v6113
        %v6115 = vlaneseq
        %v6116 = vshrl.u32 %v6115, 7
        %v6117 = vsub.s32 %v6114, %v6116
        %v6118 = vrot.slane %v6102, %v6117
        %v6120 = vunpack.c.l.s4 1966171168
        %v6121 = vunpack.c.0.s8 %v6120
        %v6122 = vlaneseq
        %v6123 = vshrl.u32 %v6122, 7
        %v6124 = vsub.s32 %v6121, %v6123
        %v6125 = vrot.slane %v6103, %v6124
        %v6127 = vunpack.c.l.s4 1966171168
        %v6128 = vunpack.c.0.s8 %v6127
        %v6129 = vlaneseq
        %v6130 = vshrl.u32 %v6129, 7
        %v6131 = vsub.s32 %v6128, %v6130
        %v6132 = vrot.slane %v6104, %v6131
        %v6133 = vcombine.high %v6111, %v6111
        %v6134 = vcombine.high %v6118, %v6118
        %v6135 = vcombine.high %v6125, %v6125
        %v6136 = vcombine.high %v6132, %v6132
        %v6137 = vcombine.high %v4617, %v4617
        %v6139 = vunpack.c.l.s4 1966171168
        %v6140 = vunpack.c.0.s8 %v6139
        %v6141 = vlaneseq
        %v6142 = vshrl.u32 %v6141, 7
        %v6143 = vsub.s32 %v6140, %v6142
        %v6144 = vrot.slane %v4617, %v6143
        %v6146 = vunpack.c.l.s4 1966171168
        %v6147 = vunpack.c.0.s8 %v6146
        %v6148 = vlaneseq
        %v6149 = vshrl.u32 %v6148, 7
        %v6150 = vsub.s32 %v6147, %v6149
        %v6151 = vrot.slane %v6137, %v6150
        %v6152 = vcombine.high %v6144, %v6144
        %v6153 = vcombine.high %v6151, %v6151
        %v6155 = vunpack.c.l.s4 1966171168
        %v6156 = vunpack.c.0.s8 %v6155
        %v6157 = vlaneseq
        %v6158 = vshrl.u32 %v6157, 7
        %v6159 = vsub.s32 %v6156, %v6158
        %v6160 = vrot.slane %v6144, %v6159
        %v6162 = vunpack.c.l.s4 1966171168
        %v6163 = vunpack.c.0.s8 %v6162
        %v6164 = vlaneseq
        %v6165 = vshrl.u32 %v6164, 7
        %v6166 = vsub.s32 %v6163, %v6165
        %v6167 = vrot.slane %v6151, %v6166
        %v6169 = vunpack.c.l.s4 1966171168
        %v6170 = vunpack.c.0.s8 %v6169
        %v6171 = vlaneseq
        %v6172 = vshrl.u32 %v6171, 7
        %v6173 = vsub.s32 %v6170, %v6172
        %v6174 = vrot.slane %v6152, %v6173
        %v6176 = vunpack.c.l.s4 1966171168
        %v6177 = vunpack.c.0.s8 %v6176
        %v6178 = vlaneseq
        %v6179 = vshrl.u32 %v6178, 7
        %v6180 = vsub.s32 %v6177, %v6179
        %v6181 = vrot.slane %v6153, %v6180
        %v6182 = vcombine.high %v6160, %v6160
        %v6183 = vcombine.high %v6167, %v6167
        %v6184 = vcombine.high %v6174, %v6174
        %v6185 = vcombine.high %v6181, %v6181
        %v6186 = vcombine.high %v4618, %v4618
        %v6188 = vunpack.c.l.s4 1966171168
        %v6189 = vunpack.c.0.s8 %v6188
        %v6190 = vlaneseq
        %v6191 = vshrl.u32 %v6190, 7
        %v6192 = vsub.s32 %v6189, %v6191
        %v6193 = vrot.slane %v4618, %v6192
        %v6195 = vunpack.c.l.s4 1966171168
        %v6196 = vunpack.c.0.s8 %v6195
        %v6197 = vlaneseq
        %v6198 = vshrl.u32 %v6197, 7
        %v6199 = vsub.s32 %v6196, %v6198
        %v6200 = vrot.slane %v6186, %v6199
        %v6201 = vcombine.high %v6193, %v6193
        %v6202 = vcombine.high %v6200, %v6200
        %v6204 = vunpack.c.l.s4 1966171168
        %v6205 = vunpack.c.0.s8 %v6204
        %v6206 = vlaneseq
        %v6207 = vshrl.u32 %v6206, 7
        %v6208 = vsub.s32 %v6205, %v6207
        %v6209 = vrot.slane %v6193, %v6208
        %v6211 = vunpack.c.l.s4 1966171168
        %v6212 = vunpack.c.0.s8 %v6211
        %v6213 = vlaneseq
        %v6214 = vshrl.u32 %v6213, 7
        %v6215 = vsub.s32 %v6212, %v6214
        %v6216 = vrot.slane %v6200, %v6215
        %v6218 = vunpack.c.l.s4 1966171168
        %v6219 = vunpack.c.0.s8 %v6218
        %v6220 = vlaneseq
        %v6221 = vshrl.u32 %v6220, 7
        %v6222 = vsub.s32 %v6219, %v6221
        %v6223 = vrot.slane %v6201, %v6222
        %v6225 = vunpack.c.l.s4 1966171168
        %v6226 = vunpack.c.0.s8 %v6225
        %v6227 = vlaneseq
        %v6228 = vshrl.u32 %v6227, 7
        %v6229 = vsub.s32 %v6226, %v6228
        %v6230 = vrot.slane %v6202, %v6229
        %v6231 = vcombine.high %v6209, %v6209
        %v6232 = vcombine.high %v6216, %v6216
        %v6233 = vcombine.high %v6223, %v6223
        %v6234 = vcombine.high %v6230, %v6230
        %v6235 = vcombine.high %v4619, %v4619
        %v6237 = vunpack.c.l.s4 1966171168
        %v6238 = vunpack.c.0.s8 %v6237
        %v6239 = vlaneseq
        %v6240 = vshrl.u32 %v6239, 7
        %v6241 = vsub.s32 %v6238, %v6240
        %v6242 = vrot.slane %v4619, %v6241
        %v6244 = vunpack.c.l.s4 1966171168
        %v6245 = vunpack.c.0.s8 %v6244
        %v6246 = vlaneseq
        %v6247 = vshrl.u32 %v6246, 7
        %v6248 = vsub.s32 %v6245, %v6247
        %v6249 = vrot.slane %v6235, %v6248
        %v6250 = vcombine.high %v6242, %v6242
        %v6251 = vcombine.high %v6249, %v6249
        %v6253 = vunpack.c.l.s4 1966171168
        %v6254 = vunpack.c.0.s8 %v6253
        %v6255 = vlaneseq
        %v6256 = vshrl.u32 %v6255, 7
        %v6257 = vsub.s32 %v6254, %v6256
        %v6258 = vrot.slane %v6242, %v6257
        %v6260 = vunpack.c.l.s4 1966171168
        %v6261 = vunpack.c.0.s8 %v6260
        %v6262 = vlaneseq
        %v6263 = vshrl.u32 %v6262, 7
        %v6264 = vsub.s32 %v6261, %v6263
        %v6265 = vrot.slane %v6249, %v6264
        %v6267 = vunpack.c.l.s4 1966171168
        %v6268 = vunpack.c.0.s8 %v6267
        %v6269 = vlaneseq
        %v6270 = vshrl.u32 %v6269, 7
        %v6271 = vsub.s32 %v6268, %v6270
        %v6272 = vrot.slane %v6250, %v6271
        %v6274 = vunpack.c.l.s4 1966171168
        %v6275 = vunpack.c.0.s8 %v6274
        %v6276 = vlaneseq
        %v6277 = vshrl.u32 %v6276, 7
        %v6278 = vsub.s32 %v6275, %v6277
        %v6279 = vrot.slane %v6251, %v6278
        %v6280 = vcombine.high %v6258, %v6258
        %v6281 = vcombine.high %v6265, %v6265
        %v6282 = vcombine.high %v6272, %v6272
        %v6283 = vcombine.high %v6279, %v6279
        %v6284 = vcombine.high %v4620, %v4620
        %v6286 = vunpack.c.l.s4 1966171168
        %v6287 = vunpack.c.0.s8 %v6286
        %v6288 = vlaneseq
        %v6289 = vshrl.u32 %v6288, 7
        %v6290 = vsub.s32 %v6287, %v6289
        %v6291 = vrot.slane %v4620, %v6290
        %v6293 = vunpack.c.l.s4 1966171168
        %v6294 = vunpack.c.0.s8 %v6293
        %v6295 = vlaneseq
        %v6296 = vshrl.u32 %v6295, 7
        %v6297 = vsub.s32 %v6294, %v6296
        %v6298 = vrot.slane %v6284, %v6297
        %v6299 = vcombine.high %v6291, %v6291
        %v6300 = vcombine.high %v6298, %v6298
        %v6302 = vunpack.c.l.s4 1966171168
        %v6303 = vunpack.c.0.s8 %v6302
        %v6304 = vlaneseq
        %v6305 = vshrl.u32 %v6304, 7
        %v6306 = vsub.s32 %v6303, %v6305
        %v6307 = vrot.slane %v6291, %v6306
        %v6309 = vunpack.c.l.s4 1966171168
        %v6310 = vunpack.c.0.s8 %v6309
        %v6311 = vlaneseq
        %v6312 = vshrl.u32 %v6311, 7
        %v6313 = vsub.s32 %v6310, %v6312
        %v6314 = vrot.slane %v6298, %v6313
        %v6316 = vunpack.c.l.s4 1966171168
        %v6317 = vunpack.c.0.s8 %v6316
        %v6318 = vlaneseq
        %v6319 = vshrl.u32 %v6318, 7
        %v6320 = vsub.s32 %v6317, %v6319
        %v6321 = vrot.slane %v6299, %v6320
        %v6323 = vunpack.c.l.s4 1966171168
        %v6324 = vunpack.c.0.s8 %v6323
        %v6325 = vlaneseq
        %v6326 = vshrl.u32 %v6325, 7
        %v6327 = vsub.s32 %v6324, %v6326
        %v6328 = vrot.slane %v6300, %v6327
        %v6329 = vcombine.high %v6307, %v6307
        %v6330 = vcombine.high %v6314, %v6314
        %v6331 = vcombine.high %v6321, %v6321
        %v6332 = vcombine.high %v6328, %v6328
        %v6333 = vcombine.high %v4621, %v4621
        %v6335 = vunpack.c.l.s4 1966171168
        %v6336 = vunpack.c.0.s8 %v6335
        %v6337 = vlaneseq
        %v6338 = vshrl.u32 %v6337, 7
        %v6339 = vsub.s32 %v6336, %v6338
        %v6340 = vrot.slane %v4621, %v6339
        %v6342 = vunpack.c.l.s4 1966171168
        %v6343 = vunpack.c.0.s8 %v6342
        %v6344 = vlaneseq
        %v6345 = vshrl.u32 %v6344, 7
        %v6346 = vsub.s32 %v6343, %v6345
        %v6347 = vrot.slane %v6333, %v6346
        %v6348 = vcombine.high %v6340, %v6340
        %v6349 = vcombine.high %v6347, %v6347
        %v6351 = vunpack.c.l.s4 1966171168
        %v6352 = vunpack.c.0.s8 %v6351
        %v6353 = vlaneseq
        %v6354 = vshrl.u32 %v6353, 7
        %v6355 = vsub.s32 %v6352, %v6354
        %v6356 = vrot.slane %v6340, %v6355
        %v6358 = vunpack.c.l.s4 1966171168
        %v6359 = vunpack.c.0.s8 %v6358
        %v6360 = vlaneseq
        %v6361 = vshrl.u32 %v6360, 7
        %v6362 = vsub.s32 %v6359, %v6361
        %v6363 = vrot.slane %v6347, %v6362
        %v6365 = vunpack.c.l.s4 1966171168
        %v6366 = vunpack.c.0.s8 %v6365
        %v6367 = vlaneseq
        %v6368 = vshrl.u32 %v6367, 7
        %v6369 = vsub.s32 %v6366, %v6368
        %v6370 = vrot.slane %v6348, %v6369
        %v6372 = vunpack.c.l.s4 1966171168
        %v6373 = vunpack.c.0.s8 %v6372
        %v6374 = vlaneseq
        %v6375 = vshrl.u32 %v6374, 7
        %v6376 = vsub.s32 %v6373, %v6375
        %v6377 = vrot.slane %v6349, %v6376
        %v6378 = vcombine.high %v6356, %v6356
        %v6379 = vcombine.high %v6363, %v6363
        %v6380 = vcombine.high %v6370, %v6370
        %v6381 = vcombine.high %v6377, %v6377
        %v6382 = vcombine.high %v4622, %v4622
        %v6384 = vunpack.c.l.s4 1966171168
        %v6385 = vunpack.c.0.s8 %v6384
        %v6386 = vlaneseq
        %v6387 = vshrl.u32 %v6386, 7
        %v6388 = vsub.s32 %v6385, %v6387
        %v6389 = vrot.slane %v4622, %v6388
        %v6391 = vunpack.c.l.s4 1966171168
        %v6392 = vunpack.c.0.s8 %v6391
        %v6393 = vlaneseq
        %v6394 = vshrl.u32 %v6393, 7
        %v6395 = vsub.s32 %v6392, %v6394
        %v6396 = vrot.slane %v6382, %v6395
        %v6397 = vcombine.high %v6389, %v6389
        %v6398 = vcombine.high %v6396, %v6396
        %v6400 = vunpack.c.l.s4 1966171168
        %v6401 = vunpack.c.0.s8 %v6400
        %v6402 = vlaneseq
        %v6403 = vshrl.u32 %v6402, 7
        %v6404 = vsub.s32 %v6401, %v6403
        %v6405 = vrot.slane %v6389, %v6404
        %v6407 = vunpack.c.l.s4 1966171168
        %v6408 = vunpack.c.0.s8 %v6407
        %v6409 = vlaneseq
        %v6410 = vshrl.u32 %v6409, 7
        %v6411 = vsub.s32 %v6408, %v6410
        %v6412 = vrot.slane %v6396, %v6411
        %v6414 = vunpack.c.l.s4 1966171168
        %v6415 = vunpack.c.0.s8 %v6414
        %v6416 = vlaneseq
        %v6417 = vshrl.u32 %v6416, 7
        %v6418 = vsub.s32 %v6415, %v6417
        %v6419 = vrot.slane %v6397, %v6418
        %v6421 = vunpack.c.l.s4 1966171168
        %v6422 = vunpack.c.0.s8 %v6421
        %v6423 = vlaneseq
        %v6424 = vshrl.u32 %v6423, 7
        %v6425 = vsub.s32 %v6422, %v6424
        %v6426 = vrot.slane %v6398, %v6425
        %v6427 = vcombine.high %v6405, %v6405
        %v6428 = vcombine.high %v6412, %v6412
        %v6429 = vcombine.high %v6419, %v6419
        %v6430 = vcombine.high %v6426, %v6426
        %v6431 = vcombine.high %v4623, %v4623
        %v6433 = vunpack.c.l.s4 1966171168
        %v6434 = vunpack.c.0.s8 %v6433
        %v6435 = vlaneseq
        %v6436 = vshrl.u32 %v6435, 7
        %v6437 = vsub.s32 %v6434, %v6436
        %v6438 = vrot.slane %v4623, %v6437
        %v6440 = vunpack.c.l.s4 1966171168
        %v6441 = vunpack.c.0.s8 %v6440
        %v6442 = vlaneseq
        %v6443 = vshrl.u32 %v6442, 7
        %v6444 = vsub.s32 %v6441, %v6443
        %v6445 = vrot.slane %v6431, %v6444
        %v6446 = vcombine.high %v6438, %v6438
        %v6447 = vcombine.high %v6445, %v6445
        %v6449 = vunpack.c.l.s4 1966171168
        %v6450 = vunpack.c.0.s8 %v6449
        %v6451 = vlaneseq
        %v6452 = vshrl.u32 %v6451, 7
        %v6453 = vsub.s32 %v6450, %v6452
        %v6454 = vrot.slane %v6438, %v6453
        %v6456 = vunpack.c.l.s4 1966171168
        %v6457 = vunpack.c.0.s8 %v6456
        %v6458 = vlaneseq
        %v6459 = vshrl.u32 %v6458, 7
        %v6460 = vsub.s32 %v6457, %v6459
        %v6461 = vrot.slane %v6445, %v6460
        %v6463 = vunpack.c.l.s4 1966171168
        %v6464 = vunpack.c.0.s8 %v6463
        %v6465 = vlaneseq
        %v6466 = vshrl.u32 %v6465, 7
        %v6467 = vsub.s32 %v6464, %v6466
        %v6468 = vrot.slane %v6446, %v6467
        %v6470 = vunpack.c.l.s4 1966171168
        %v6471 = vunpack.c.0.s8 %v6470
        %v6472 = vlaneseq
        %v6473 = vshrl.u32 %v6472, 7
        %v6474 = vsub.s32 %v6471, %v6473
        %v6475 = vrot.slane %v6447, %v6474
        %v6476 = vcombine.high %v6454, %v6454
        %v6477 = vcombine.high %v6461, %v6461
        %v6478 = vcombine.high %v6468, %v6468
        %v6479 = vcombine.high %v6475, %v6475
        %v6480 = vcombine.high %v4624, %v4624
        %v6482 = vunpack.c.l.s4 1966171168
        %v6483 = vunpack.c.0.s8 %v6482
        %v6484 = vlaneseq
        %v6485 = vshrl.u32 %v6484, 7
        %v6486 = vsub.s32 %v6483, %v6485
        %v6487 = vrot.slane %v4624, %v6486
        %v6489 = vunpack.c.l.s4 1966171168
        %v6490 = vunpack.c.0.s8 %v6489
        %v6491 = vlaneseq
        %v6492 = vshrl.u32 %v6491, 7
        %v6493 = vsub.s32 %v6490, %v6492
        %v6494 = vrot.slane %v6480, %v6493
        %v6495 = vcombine.high %v6487, %v6487
        %v6496 = vcombine.high %v6494, %v6494
        %v6498 = vunpack.c.l.s4 1966171168
        %v6499 = vunpack.c.0.s8 %v6498
        %v6500 = vlaneseq
        %v6501 = vshrl.u32 %v6500, 7
        %v6502 = vsub.s32 %v6499, %v6501
        %v6503 = vrot.slane %v6487, %v6502
        %v6505 = vunpack.c.l.s4 1966171168
        %v6506 = vunpack.c.0.s8 %v6505
        %v6507 = vlaneseq
        %v6508 = vshrl.u32 %v6507, 7
        %v6509 = vsub.s32 %v6506, %v6508
        %v6510 = vrot.slane %v6494, %v6509
        %v6512 = vunpack.c.l.s4 1966171168
        %v6513 = vunpack.c.0.s8 %v6512
        %v6514 = vlaneseq
        %v6515 = vshrl.u32 %v6514, 7
        %v6516 = vsub.s32 %v6513, %v6515
        %v6517 = vrot.slane %v6495, %v6516
        %v6519 = vunpack.c.l.s4 1966171168
        %v6520 = vunpack.c.0.s8 %v6519
        %v6521 = vlaneseq
        %v6522 = vshrl.u32 %v6521, 7
        %v6523 = vsub.s32 %v6520, %v6522
        %v6524 = vrot.slane %v6496, %v6523
        %v6525 = vcombine.high %v6503, %v6503
        %v6526 = vcombine.high %v6510, %v6510
        %v6527 = vcombine.high %v6517, %v6517
        %v6528 = vcombine.high %v6524, %v6524
        %v6529 = vcombine.high %v4625, %v4625
        %v6531 = vunpack.c.l.s4 1966171168
        %v6532 = vunpack.c.0.s8 %v6531
        %v6533 = vlaneseq
        %v6534 = vshrl.u32 %v6533, 7
        %v6535 = vsub.s32 %v6532, %v6534
        %v6536 = vrot.slane %v4625, %v6535
        %v6538 = vunpack.c.l.s4 1966171168
        %v6539 = vunpack.c.0.s8 %v6538
        %v6540 = vlaneseq
        %v6541 = vshrl.u32 %v6540, 7
        %v6542 = vsub.s32 %v6539, %v6541
        %v6543 = vrot.slane %v6529, %v6542
        %v6544 = vcombine.high %v6536, %v6536
        %v6545 = vcombine.high %v6543, %v6543
        %v6547 = vunpack.c.l.s4 1966171168
        %v6548 = vunpack.c.0.s8 %v6547
        %v6549 = vlaneseq
        %v6550 = vshrl.u32 %v6549, 7
        %v6551 = vsub.s32 %v6548, %v6550
        %v6552 = vrot.slane %v6536, %v6551
        %v6554 = vunpack.c.l.s4 1966171168
        %v6555 = vunpack.c.0.s8 %v6554
        %v6556 = vlaneseq
        %v6557 = vshrl.u32 %v6556, 7
        %v6558 = vsub.s32 %v6555, %v6557
        %v6559 = vrot.slane %v6543, %v6558
        %v6561 = vunpack.c.l.s4 1966171168
        %v6562 = vunpack.c.0.s8 %v6561
        %v6563 = vlaneseq
        %v6564 = vshrl.u32 %v6563, 7
        %v6565 = vsub.s32 %v6562, %v6564
        %v6566 = vrot.slane %v6544, %v6565
        %v6568 = vunpack.c.l.s4 1966171168
        %v6569 = vunpack.c.0.s8 %v6568
        %v6570 = vlaneseq
        %v6571 = vshrl.u32 %v6570, 7
        %v6572 = vsub.s32 %v6569, %v6571
        %v6573 = vrot.slane %v6545, %v6572
        %v6574 = vcombine.high %v6552, %v6552
        %v6575 = vcombine.high %v6559, %v6559
        %v6576 = vcombine.high %v6566, %v6566
        %v6577 = vcombine.high %v6573, %v6573
        %v6578 = vcombine.high %v4626, %v4626
        %v6580 = vunpack.c.l.s4 1966171168
        %v6581 = vunpack.c.0.s8 %v6580
        %v6582 = vlaneseq
        %v6583 = vshrl.u32 %v6582, 7
        %v6584 = vsub.s32 %v6581, %v6583
        %v6585 = vrot.slane %v4626, %v6584
        %v6587 = vunpack.c.l.s4 1966171168
        %v6588 = vunpack.c.0.s8 %v6587
        %v6589 = vlaneseq
        %v6590 = vshrl.u32 %v6589, 7
        %v6591 = vsub.s32 %v6588, %v6590
        %v6592 = vrot.slane %v6578, %v6591
        %v6593 = vcombine.high %v6585, %v6585
        %v6594 = vcombine.high %v6592, %v6592
        %v6596 = vunpack.c.l.s4 1966171168
        %v6597 = vunpack.c.0.s8 %v6596
        %v6598 = vlaneseq
        %v6599 = vshrl.u32 %v6598, 7
        %v6600 = vsub.s32 %v6597, %v6599
        %v6601 = vrot.slane %v6585, %v6600
        %v6603 = vunpack.c.l.s4 1966171168
        %v6604 = vunpack.c.0.s8 %v6603
        %v6605 = vlaneseq
        %v6606 = vshrl.u32 %v6605, 7
        %v6607 = vsub.s32 %v6604, %v6606
        %v6608 = vrot.slane %v6592, %v6607
        %v6610 = vunpack.c.l.s4 1966171168
        %v6611 = vunpack.c.0.s8 %v6610
        %v6612 = vlaneseq
        %v6613 = vshrl.u32 %v6612, 7
        %v6614 = vsub.s32 %v6611, %v6613
        %v6615 = vrot.slane %v6593, %v6614
        %v6617 = vunpack.c.l.s4 1966171168
        %v6618 = vunpack.c.0.s8 %v6617
        %v6619 = vlaneseq
        %v6620 = vshrl.u32 %v6619, 7
        %v6621 = vsub.s32 %v6618, %v6620
        %v6622 = vrot.slane %v6594, %v6621
        %v6623 = vcombine.high %v6601, %v6601
        %v6624 = vcombine.high %v6608, %v6608
        %v6625 = vcombine.high %v6615, %v6615
        %v6626 = vcombine.high %v6622, %v6622
        %v6627 = vcombine.high %v4627, %v4627
        %v6629 = vunpack.c.l.s4 1966171168
        %v6630 = vunpack.c.0.s8 %v6629
        %v6631 = vlaneseq
        %v6632 = vshrl.u32 %v6631, 7
        %v6633 = vsub.s32 %v6630, %v6632
        %v6634 = vrot.slane %v4627, %v6633
        %v6636 = vunpack.c.l.s4 1966171168
        %v6637 = vunpack.c.0.s8 %v6636
        %v6638 = vlaneseq
        %v6639 = vshrl.u32 %v6638, 7
        %v6640 = vsub.s32 %v6637, %v6639
        %v6641 = vrot.slane %v6627, %v6640
        %v6642 = vcombine.high %v6634, %v6634
        %v6643 = vcombine.high %v6641, %v6641
        %v6645 = vunpack.c.l.s4 1966171168
        %v6646 = vunpack.c.0.s8 %v6645
        %v6647 = vlaneseq
        %v6648 = vshrl.u32 %v6647, 7
        %v6649 = vsub.s32 %v6646, %v6648
        %v6650 = vrot.slane %v6634, %v6649
        %v6652 = vunpack.c.l.s4 1966171168
        %v6653 = vunpack.c.0.s8 %v6652
        %v6654 = vlaneseq
        %v6655 = vshrl.u32 %v6654, 7
        %v6656 = vsub.s32 %v6653, %v6655
        %v6657 = vrot.slane %v6641, %v6656
        %v6659 = vunpack.c.l.s4 1966171168
        %v6660 = vunpack.c.0.s8 %v6659
        %v6661 = vlaneseq
        %v6662 = vshrl.u32 %v6661, 7
        %v6663 = vsub.s32 %v6660, %v6662
        %v6664 = vrot.slane %v6642, %v6663
        %v6666 = vunpack.c.l.s4 1966171168
        %v6667 = vunpack.c.0.s8 %v6666
        %v6668 = vlaneseq
        %v6669 = vshrl.u32 %v6668, 7
        %v6670 = vsub.s32 %v6667, %v6669
        %v6671 = vrot.slane %v6643, %v6670
        %v6672 = vcombine.high %v6650, %v6650
        %v6673 = vcombine.high %v6657, %v6657
        %v6674 = vcombine.high %v6664, %v6664
        %v6675 = vcombine.high %v6671, %v6671
        %v6676 = vcombine.high %v4628, %v4628
        %v6678 = vunpack.c.l.s4 1966171168
        %v6679 = vunpack.c.0.s8 %v6678
        %v6680 = vlaneseq
        %v6681 = vshrl.u32 %v6680, 7
        %v6682 = vsub.s32 %v6679, %v6681
        %v6683 = vrot.slane %v4628, %v6682
        %v6685 = vunpack.c.l.s4 1966171168
        %v6686 = vunpack.c.0.s8 %v6685
        %v6687 = vlaneseq
        %v6688 = vshrl.u32 %v6687, 7
        %v6689 = vsub.s32 %v6686, %v6688
        %v6690 = vrot.slane %v6676, %v6689
        %v6691 = vcombine.high %v6683, %v6683
        %v6692 = vcombine.high %v6690, %v6690
        %v6694 = vunpack.c.l.s4 1966171168
        %v6695 = vunpack.c.0.s8 %v6694
        %v6696 = vlaneseq
        %v6697 = vshrl.u32 %v6696, 7
        %v6698 = vsub.s32 %v6695, %v6697
        %v6699 = vrot.slane %v6683, %v6698
        %v6701 = vunpack.c.l.s4 1966171168
        %v6702 = vunpack.c.0.s8 %v6701
        %v6703 = vlaneseq
        %v6704 = vshrl.u32 %v6703, 7
        %v6705 = vsub.s32 %v6702, %v6704
        %v6706 = vrot.slane %v6690, %v6705
        %v6708 = vunpack.c.l.s4 1966171168
        %v6709 = vunpack.c.0.s8 %v6708
        %v6710 = vlaneseq
        %v6711 = vshrl.u32 %v6710, 7
        %v6712 = vsub.s32 %v6709, %v6711
        %v6713 = vrot.slane %v6691, %v6712
        %v6715 = vunpack.c.l.s4 1966171168
        %v6716 = vunpack.c.0.s8 %v6715
        %v6717 = vlaneseq
        %v6718 = vshrl.u32 %v6717, 7
        %v6719 = vsub.s32 %v6716, %v6718
        %v6720 = vrot.slane %v6692, %v6719
        %v6721 = vcombine.high %v6699, %v6699
        %v6722 = vcombine.high %v6706, %v6706
        %v6723 = vcombine.high %v6713, %v6713
        %v6724 = vcombine.high %v6720, %v6720
        %v6725 = vcombine.high %v4629, %v4629
        %v6727 = vunpack.c.l.s4 1966171168
        %v6728 = vunpack.c.0.s8 %v6727
        %v6729 = vlaneseq
        %v6730 = vshrl.u32 %v6729, 7
        %v6731 = vsub.s32 %v6728, %v6730
        %v6732 = vrot.slane %v4629, %v6731
        %v6734 = vunpack.c.l.s4 1966171168
        %v6735 = vunpack.c.0.s8 %v6734
        %v6736 = vlaneseq
        %v6737 = vshrl.u32 %v6736, 7
        %v6738 = vsub.s32 %v6735, %v6737
        %v6739 = vrot.slane %v6725, %v6738
        %v6740 = vcombine.high %v6732, %v6732
        %v6741 = vcombine.high %v6739, %v6739
        %v6743 = vunpack.c.l.s4 1966171168
        %v6744 = vunpack.c.0.s8 %v6743
        %v6745 = vlaneseq
        %v6746 = vshrl.u32 %v6745, 7
        %v6747 = vsub.s32 %v6744, %v6746
        %v6748 = vrot.slane %v6732, %v6747
        %v6750 = vunpack.c.l.s4 1966171168
        %v6751 = vunpack.c.0.s8 %v6750
        %v6752 = vlaneseq
        %v6753 = vshrl.u32 %v6752, 7
        %v6754 = vsub.s32 %v6751, %v6753
        %v6755 = vrot.slane %v6739, %v6754
        %v6757 = vunpack.c.l.s4 1966171168
        %v6758 = vunpack.c.0.s8 %v6757
        %v6759 = vlaneseq
        %v6760 = vshrl.u32 %v6759, 7
        %v6761 = vsub.s32 %v6758, %v6760
        %v6762 = vrot.slane %v6740, %v6761
        %v6764 = vunpack.c.l.s4 1966171168
        %v6765 = vunpack.c.0.s8 %v6764
        %v6766 = vlaneseq
        %v6767 = vshrl.u32 %v6766, 7
        %v6768 = vsub.s32 %v6765, %v6767
        %v6769 = vrot.slane %v6741, %v6768
        %v6770 = vcombine.high %v6748, %v6748
        %v6771 = vcombine.high %v6755, %v6755
        %v6772 = vcombine.high %v6762, %v6762
        %v6773 = vcombine.high %v6769, %v6769
        %v6774 = vcombine.high %v4630, %v4630
        %v6776 = vunpack.c.l.s4 1966171168
        %v6777 = vunpack.c.0.s8 %v6776
        %v6778 = vlaneseq
        %v6779 = vshrl.u32 %v6778, 7
        %v6780 = vsub.s32 %v6777, %v6779
        %v6781 = vrot.slane %v4630, %v6780
        %v6783 = vunpack.c.l.s4 1966171168
        %v6784 = vunpack.c.0.s8 %v6783
        %v6785 = vlaneseq
        %v6786 = vshrl.u32 %v6785, 7
        %v6787 = vsub.s32 %v6784, %v6786
        %v6788 = vrot.slane %v6774, %v6787
        %v6789 = vcombine.high %v6781, %v6781
        %v6790 = vcombine.high %v6788, %v6788
        %v6792 = vunpack.c.l.s4 1966171168
        %v6793 = vunpack.c.0.s8 %v6792
        %v6794 = vlaneseq
        %v6795 = vshrl.u32 %v6794, 7
        %v6796 = vsub.s32 %v6793, %v6795
        %v6797 = vrot.slane %v6781, %v6796
        %v6799 = vunpack.c.l.s4 1966171168
        %v6800 = vunpack.c.0.s8 %v6799
        %v6801 = vlaneseq
        %v6802 = vshrl.u32 %v6801, 7
        %v6803 = vsub.s32 %v6800, %v6802
        %v6804 = vrot.slane %v6788, %v6803
        %v6806 = vunpack.c.l.s4 1966171168
        %v6807 = vunpack.c.0.s8 %v6806
        %v6808 = vlaneseq
        %v6809 = vshrl.u32 %v6808, 7
        %v6810 = vsub.s32 %v6807, %v6809
        %v6811 = vrot.slane %v6789, %v6810
        %v6813 = vunpack.c.l.s4 1966171168
        %v6814 = vunpack.c.0.s8 %v6813
        %v6815 = vlaneseq
        %v6816 = vshrl.u32 %v6815, 7
        %v6817 = vsub.s32 %v6814, %v6816
        %v6818 = vrot.slane %v6790, %v6817
        %v6819 = vcombine.high %v6797, %v6797
        %v6820 = vcombine.high %v6804, %v6804
        %v6821 = vcombine.high %v6811, %v6811
        %v6822 = vcombine.high %v6818, %v6818
        %v6823 = vcombine.high %v4631, %v4631
        %v6825 = vunpack.c.l.s4 1966171168
        %v6826 = vunpack.c.0.s8 %v6825
        %v6827 = vlaneseq
        %v6828 = vshrl.u32 %v6827, 7
        %v6829 = vsub.s32 %v6826, %v6828
        %v6830 = vrot.slane %v4631, %v6829
        %v6832 = vunpack.c.l.s4 1966171168
        %v6833 = vunpack.c.0.s8 %v6832
        %v6834 = vlaneseq
        %v6835 = vshrl.u32 %v6834, 7
        %v6836 = vsub.s32 %v6833, %v6835
        %v6837 = vrot.slane %v6823, %v6836
        %v6838 = vcombine.high %v6830, %v6830
        %v6839 = vcombine.high %v6837, %v6837
        %v6841 = vunpack.c.l.s4 1966171168
        %v6842 = vunpack.c.0.s8 %v6841
        %v6843 = vlaneseq
        %v6844 = vshrl.u32 %v6843, 7
        %v6845 = vsub.s32 %v6842, %v6844
        %v6846 = vrot.slane %v6830, %v6845
        %v6848 = vunpack.c.l.s4 1966171168
        %v6849 = vunpack.c.0.s8 %v6848
        %v6850 = vlaneseq
        %v6851 = vshrl.u32 %v6850, 7
        %v6852 = vsub.s32 %v6849, %v6851
        %v6853 = vrot.slane %v6837, %v6852
        %v6855 = vunpack.c.l.s4 1966171168
        %v6856 = vunpack.c.0.s8 %v6855
        %v6857 = vlaneseq
        %v6858 = vshrl.u32 %v6857, 7
        %v6859 = vsub.s32 %v6856, %v6858
        %v6860 = vrot.slane %v6838, %v6859
        %v6862 = vunpack.c.l.s4 1966171168
        %v6863 = vunpack.c.0.s8 %v6862
        %v6864 = vlaneseq
        %v6865 = vshrl.u32 %v6864, 7
        %v6866 = vsub.s32 %v6863, %v6865
        %v6867 = vrot.slane %v6839, %v6866
        %v6868 = vcombine.high %v6846, %v6846
        %v6869 = vcombine.high %v6853, %v6853
        %v6870 = vcombine.high %v6860, %v6860
        %v6871 = vcombine.high %v6867, %v6867
        %v6872 = vcombine.high %v4632, %v4632
        %v6874 = vunpack.c.l.s4 1966171168
        %v6875 = vunpack.c.0.s8 %v6874
        %v6876 = vlaneseq
        %v6877 = vshrl.u32 %v6876, 7
        %v6878 = vsub.s32 %v6875, %v6877
        %v6879 = vrot.slane %v4632, %v6878
        %v6881 = vunpack.c.l.s4 1966171168
        %v6882 = vunpack.c.0.s8 %v6881
        %v6883 = vlaneseq
        %v6884 = vshrl.u32 %v6883, 7
        %v6885 = vsub.s32 %v6882, %v6884
        %v6886 = vrot.slane %v6872, %v6885
        %v6887 = vcombine.high %v6879, %v6879
        %v6888 = vcombine.high %v6886, %v6886
        %v6890 = vunpack.c.l.s4 1966171168
        %v6891 = vunpack.c.0.s8 %v6890
        %v6892 = vlaneseq
        %v6893 = vshrl.u32 %v6892, 7
        %v6894 = vsub.s32 %v6891, %v6893
        %v6895 = vrot.slane %v6879, %v6894
        %v6897 = vunpack.c.l.s4 1966171168
        %v6898 = vunpack.c.0.s8 %v6897
        %v6899 = vlaneseq
        %v6900 = vshrl.u32 %v6899, 7
        %v6901 = vsub.s32 %v6898, %v6900
        %v6902 = vrot.slane %v6886, %v6901
        %v6904 = vunpack.c.l.s4 1966171168
        %v6905 = vunpack.c.0.s8 %v6904
        %v6906 = vlaneseq
        %v6907 = vshrl.u32 %v6906, 7
        %v6908 = vsub.s32 %v6905, %v6907
        %v6909 = vrot.slane %v6887, %v6908
        %v6911 = vunpack.c.l.s4 1966171168
        %v6912 = vunpack.c.0.s8 %v6911
        %v6913 = vlaneseq
        %v6914 = vshrl.u32 %v6913, 7
        %v6915 = vsub.s32 %v6912, %v6914
        %v6916 = vrot.slane %v6888, %v6915
        %v6917 = vcombine.high %v6895, %v6895
        %v6918 = vcombine.high %v6902, %v6902
        %v6919 = vcombine.high %v6909, %v6909
        %v6920 = vcombine.high %v6916, %v6916
        %v6921 = vcombine.high %v4633, %v4633
        %v6923 = vunpack.c.l.s4 1966171168
        %v6924 = vunpack.c.0.s8 %v6923
        %v6925 = vlaneseq
        %v6926 = vshrl.u32 %v6925, 7
        %v6927 = vsub.s32 %v6924, %v6926
        %v6928 = vrot.slane %v4633, %v6927
        %v6930 = vunpack.c.l.s4 1966171168
        %v6931 = vunpack.c.0.s8 %v6930
        %v6932 = vlaneseq
        %v6933 = vshrl.u32 %v6932, 7
        %v6934 = vsub.s32 %v6931, %v6933
        %v6935 = vrot.slane %v6921, %v6934
        %v6936 = vcombine.high %v6928, %v6928
        %v6937 = vcombine.high %v6935, %v6935
        %v6939 = vunpack.c.l.s4 1966171168
        %v6940 = vunpack.c.0.s8 %v6939
        %v6941 = vlaneseq
        %v6942 = vshrl.u32 %v6941, 7
        %v6943 = vsub.s32 %v6940, %v6942
        %v6944 = vrot.slane %v6928, %v6943
        %v6946 = vunpack.c.l.s4 1966171168
        %v6947 = vunpack.c.0.s8 %v6946
        %v6948 = vlaneseq
        %v6949 = vshrl.u32 %v6948, 7
        %v6950 = vsub.s32 %v6947, %v6949
        %v6951 = vrot.slane %v6935, %v6950
        %v6953 = vunpack.c.l.s4 1966171168
        %v6954 = vunpack.c.0.s8 %v6953
        %v6955 = vlaneseq
        %v6956 = vshrl.u32 %v6955, 7
        %v6957 = vsub.s32 %v6954, %v6956
        %v6958 = vrot.slane %v6936, %v6957
        %v6960 = vunpack.c.l.s4 1966171168
        %v6961 = vunpack.c.0.s8 %v6960
        %v6962 = vlaneseq
        %v6963 = vshrl.u32 %v6962, 7
        %v6964 = vsub.s32 %v6961, %v6963
        %v6965 = vrot.slane %v6937, %v6964
        %v6966 = vcombine.high %v6944, %v6944
        %v6967 = vcombine.high %v6951, %v6951
        %v6968 = vcombine.high %v6958, %v6958
        %v6969 = vcombine.high %v6965, %v6965
        %v6970 = vcombine.high %v4634, %v4634
        %v6972 = vunpack.c.l.s4 1966171168
        %v6973 = vunpack.c.0.s8 %v6972
        %v6974 = vlaneseq
        %v6975 = vshrl.u32 %v6974, 7
        %v6976 = vsub.s32 %v6973, %v6975
        %v6977 = vrot.slane %v4634, %v6976
        %v6979 = vunpack.c.l.s4 1966171168
        %v6980 = vunpack.c.0.s8 %v6979
        %v6981 = vlaneseq
        %v6982 = vshrl.u32 %v6981, 7
        %v6983 = vsub.s32 %v6980, %v6982
        %v6984 = vrot.slane %v6970, %v6983
        %v6985 = vcombine.high %v6977, %v6977
        %v6986 = vcombine.high %v6984, %v6984
        %v6988 = vunpack.c.l.s4 1966171168
        %v6989 = vunpack.c.0.s8 %v6988
        %v6990 = vlaneseq
        %v6991 = vshrl.u32 %v6990, 7
        %v6992 = vsub.s32 %v6989, %v6991
        %v6993 = vrot.slane %v6977, %v6992
        %v6995 = vunpack.c.l.s4 1966171168
        %v6996 = vunpack.c.0.s8 %v6995
        %v6997 = vlaneseq
        %v6998 = vshrl.u32 %v6997, 7
        %v6999 = vsub.s32 %v6996, %v6998
        %v7000 = vrot.slane %v6984, %v6999
        %v7002 = vunpack.c.l.s4 1966171168
        %v7003 = vunpack.c.0.s8 %v7002
        %v7004 = vlaneseq
        %v7005 = vshrl.u32 %v7004, 7
        %v7006 = vsub.s32 %v7003, %v7005
        %v7007 = vrot.slane %v6985, %v7006
        %v7009 = vunpack.c.l.s4 1966171168
        %v7010 = vunpack.c.0.s8 %v7009
        %v7011 = vlaneseq
        %v7012 = vshrl.u32 %v7011, 7
        %v7013 = vsub.s32 %v7010, %v7012
        %v7014 = vrot.slane %v6986, %v7013
        %v7015 = vcombine.high %v6993, %v6993
        %v7016 = vcombine.high %v7000, %v7000
        %v7017 = vcombine.high %v7007, %v7007
        %v7018 = vcombine.high %v7014, %v7014
        %v7019 = vcombine.high %v4635, %v4635
        %v7021 = vunpack.c.l.s4 1966171168
        %v7022 = vunpack.c.0.s8 %v7021
        %v7023 = vlaneseq
        %v7024 = vshrl.u32 %v7023, 7
        %v7025 = vsub.s32 %v7022, %v7024
        %v7026 = vrot.slane %v4635, %v7025
        %v7028 = vunpack.c.l.s4 1966171168
        %v7029 = vunpack.c.0.s8 %v7028
        %v7030 = vlaneseq
        %v7031 = vshrl.u32 %v7030, 7
        %v7032 = vsub.s32 %v7029, %v7031
        %v7033 = vrot.slane %v7019, %v7032
        %v7034 = vcombine.high %v7026, %v7026
        %v7035 = vcombine.high %v7033, %v7033
        %v7037 = vunpack.c.l.s4 1966171168
        %v7038 = vunpack.c.0.s8 %v7037
        %v7039 = vlaneseq
        %v7040 = vshrl.u32 %v7039, 7
        %v7041 = vsub.s32 %v7038, %v7040
        %v7042 = vrot.slane %v7026, %v7041
        %v7044 = vunpack.c.l.s4 1966171168
        %v7045 = vunpack.c.0.s8 %v7044
        %v7046 = vlaneseq
        %v7047 = vshrl.u32 %v7046, 7
        %v7048 = vsub.s32 %v7045, %v7047
        %v7049 = vrot.slane %v7033, %v7048
        %v7051 = vunpack.c.l.s4 1966171168
        %v7052 = vunpack.c.0.s8 %v7051
        %v7053 = vlaneseq
        %v7054 = vshrl.u32 %v7053, 7
        %v7055 = vsub.s32 %v7052, %v7054
        %v7056 = vrot.slane %v7034, %v7055
        %v7058 = vunpack.c.l.s4 1966171168
        %v7059 = vunpack.c.0.s8 %v7058
        %v7060 = vlaneseq
        %v7061 = vshrl.u32 %v7060, 7
        %v7062 = vsub.s32 %v7059, %v7061
        %v7063 = vrot.slane %v7035, %v7062
        %v7064 = vcombine.high %v7042, %v7042
        %v7065 = vcombine.high %v7049, %v7049
        %v7066 = vcombine.high %v7056, %v7056
        %v7067 = vcombine.high %v7063, %v7063
        %v7068 = vcombine.high %v4636, %v4636
        %v7070 = vunpack.c.l.s4 1966171168
        %v7071 = vunpack.c.0.s8 %v7070
        %v7072 = vlaneseq
        %v7073 = vshrl.u32 %v7072, 7
        %v7074 = vsub.s32 %v7071, %v7073
        %v7075 = vrot.slane %v4636, %v7074
        %v7077 = vunpack.c.l.s4 1966171168
        %v7078 = vunpack.c.0.s8 %v7077
        %v7079 = vlaneseq
        %v7080 = vshrl.u32 %v7079, 7
        %v7081 = vsub.s32 %v7078, %v7080
        %v7082 = vrot.slane %v7068, %v7081
        %v7083 = vcombine.high %v7075, %v7075
        %v7084 = vcombine.high %v7082, %v7082
        %v7086 = vunpack.c.l.s4 1966171168
        %v7087 = vunpack.c.0.s8 %v7086
        %v7088 = vlaneseq
        %v7089 = vshrl.u32 %v7088, 7
        %v7090 = vsub.s32 %v7087, %v7089
        %v7091 = vrot.slane %v7075, %v7090
        %v7093 = vunpack.c.l.s4 1966171168
        %v7094 = vunpack.c.0.s8 %v7093
        %v7095 = vlaneseq
        %v7096 = vshrl.u32 %v7095, 7
        %v7097 = vsub.s32 %v7094, %v7096
        %v7098 = vrot.slane %v7082, %v7097
        %v7100 = vunpack.c.l.s4 1966171168
        %v7101 = vunpack.c.0.s8 %v7100
        %v7102 = vlaneseq
        %v7103 = vshrl.u32 %v7102, 7
        %v7104 = vsub.s32 %v7101, %v7103
        %v7105 = vrot.slane %v7083, %v7104
        %v7107 = vunpack.c.l.s4 1966171168
        %v7108 = vunpack.c.0.s8 %v7107
        %v7109 = vlaneseq
        %v7110 = vshrl.u32 %v7109, 7
        %v7111 = vsub.s32 %v7108, %v7110
        %v7112 = vrot.slane %v7084, %v7111
        %v7113 = vcombine.high %v7091, %v7091
        %v7114 = vcombine.high %v7098, %v7098
        %v7115 = vcombine.high %v7105, %v7105
        %v7116 = vcombine.high %v7112, %v7112
        %v7117 = vcombine.high %v4637, %v4637
        %v7119 = vunpack.c.l.s4 1966171168
        %v7120 = vunpack.c.0.s8 %v7119
        %v7121 = vlaneseq
        %v7122 = vshrl.u32 %v7121, 7
        %v7123 = vsub.s32 %v7120, %v7122
        %v7124 = vrot.slane %v4637, %v7123
        %v7126 = vunpack.c.l.s4 1966171168
        %v7127 = vunpack.c.0.s8 %v7126
        %v7128 = vlaneseq
        %v7129 = vshrl.u32 %v7128, 7
        %v7130 = vsub.s32 %v7127, %v7129
        %v7131 = vrot.slane %v7117, %v7130
        %v7132 = vcombine.high %v7124, %v7124
        %v7133 = vcombine.high %v7131, %v7131
        %v7135 = vunpack.c.l.s4 1966171168
        %v7136 = vunpack.c.0.s8 %v7135
        %v7137 = vlaneseq
        %v7138 = vshrl.u32 %v7137, 7
        %v7139 = vsub.s32 %v7136, %v7138
        %v7140 = vrot.slane %v7124, %v7139
        %v7142 = vunpack.c.l.s4 1966171168
        %v7143 = vunpack.c.0.s8 %v7142
        %v7144 = vlaneseq
        %v7145 = vshrl.u32 %v7144, 7
        %v7146 = vsub.s32 %v7143, %v7145
        %v7147 = vrot.slane %v7131, %v7146
        %v7149 = vunpack.c.l.s4 1966171168
        %v7150 = vunpack.c.0.s8 %v7149
        %v7151 = vlaneseq
        %v7152 = vshrl.u32 %v7151, 7
        %v7153 = vsub.s32 %v7150, %v7152
        %v7154 = vrot.slane %v7132, %v7153
        %v7156 = vunpack.c.l.s4 1966171168
        %v7157 = vunpack.c.0.s8 %v7156
        %v7158 = vlaneseq
        %v7159 = vshrl.u32 %v7158, 7
        %v7160 = vsub.s32 %v7157, %v7159
        %v7161 = vrot.slane %v7133, %v7160
        %v7162 = vcombine.high %v7140, %v7140
        %v7163 = vcombine.high %v7147, %v7147
        %v7164 = vcombine.high %v7154, %v7154
        %v7165 = vcombine.high %v7161, %v7161
        %v7166 = vcombine.high %v4638, %v4638
        %v7168 = vunpack.c.l.s4 1966171168
        %v7169 = vunpack.c.0.s8 %v7168
        %v7170 = vlaneseq
        %v7171 = vshrl.u32 %v7170, 7
        %v7172 = vsub.s32 %v7169, %v7171
        %v7173 = vrot.slane %v4638, %v7172
        %v7175 = vunpack.c.l.s4 1966171168
        %v7176 = vunpack.c.0.s8 %v7175
        %v7177 = vlaneseq
        %v7178 = vshrl.u32 %v7177, 7
        %v7179 = vsub.s32 %v7176, %v7178
        %v7180 = vrot.slane %v7166, %v7179
        %v7181 = vcombine.high %v7173, %v7173
        %v7182 = vcombine.high %v7180, %v7180
        %v7184 = vunpack.c.l.s4 1966171168
        %v7185 = vunpack.c.0.s8 %v7184
        %v7186 = vlaneseq
        %v7187 = vshrl.u32 %v7186, 7
        %v7188 = vsub.s32 %v7185, %v7187
        %v7189 = vrot.slane %v7173, %v7188
        %v7191 = vunpack.c.l.s4 1966171168
        %v7192 = vunpack.c.0.s8 %v7191
        %v7193 = vlaneseq
        %v7194 = vshrl.u32 %v7193, 7
        %v7195 = vsub.s32 %v7192, %v7194
        %v7196 = vrot.slane %v7180, %v7195
        %v7198 = vunpack.c.l.s4 1966171168
        %v7199 = vunpack.c.0.s8 %v7198
        %v7200 = vlaneseq
        %v7201 = vshrl.u32 %v7200, 7
        %v7202 = vsub.s32 %v7199, %v7201
        %v7203 = vrot.slane %v7181, %v7202
        %v7205 = vunpack.c.l.s4 1966171168
        %v7206 = vunpack.c.0.s8 %v7205
        %v7207 = vlaneseq
        %v7208 = vshrl.u32 %v7207, 7
        %v7209 = vsub.s32 %v7206, %v7208
        %v7210 = vrot.slane %v7182, %v7209
        %v7211 = vcombine.high %v7189, %v7189
        %v7212 = vcombine.high %v7196, %v7196
        %v7213 = vcombine.high %v7203, %v7203
        %v7214 = vcombine.high %v7210, %v7210
        %v7215 = vcombine.high %v4639, %v4639
        %v7217 = vunpack.c.l.s4 1966171168
        %v7218 = vunpack.c.0.s8 %v7217
        %v7219 = vlaneseq
        %v7220 = vshrl.u32 %v7219, 7
        %v7221 = vsub.s32 %v7218, %v7220
        %v7222 = vrot.slane %v4639, %v7221
        %v7224 = vunpack.c.l.s4 1966171168
        %v7225 = vunpack.c.0.s8 %v7224
        %v7226 = vlaneseq
        %v7227 = vshrl.u32 %v7226, 7
        %v7228 = vsub.s32 %v7225, %v7227
        %v7229 = vrot.slane %v7215, %v7228
        %v7230 = vcombine.high %v7222, %v7222
        %v7231 = vcombine.high %v7229, %v7229
        %v7233 = vunpack.c.l.s4 1966171168
        %v7234 = vunpack.c.0.s8 %v7233
        %v7235 = vlaneseq
        %v7236 = vshrl.u32 %v7235, 7
        %v7237 = vsub.s32 %v7234, %v7236
        %v7238 = vrot.slane %v7222, %v7237
        %v7240 = vunpack.c.l.s4 1966171168
        %v7241 = vunpack.c.0.s8 %v7240
        %v7242 = vlaneseq
        %v7243 = vshrl.u32 %v7242, 7
        %v7244 = vsub.s32 %v7241, %v7243
        %v7245 = vrot.slane %v7229, %v7244
        %v7247 = vunpack.c.l.s4 1966171168
        %v7248 = vunpack.c.0.s8 %v7247
        %v7249 = vlaneseq
        %v7250 = vshrl.u32 %v7249, 7
        %v7251 = vsub.s32 %v7248, %v7250
        %v7252 = vrot.slane %v7230, %v7251
        %v7254 = vunpack.c.l.s4 1966171168
        %v7255 = vunpack.c.0.s8 %v7254
        %v7256 = vlaneseq
        %v7257 = vshrl.u32 %v7256, 7
        %v7258 = vsub.s32 %v7255, %v7257
        %v7259 = vrot.slane %v7231, %v7258
        %v7260 = vcombine.high %v7238, %v7238
        %v7261 = vcombine.high %v7245, %v7245
        %v7262 = vcombine.high %v7252, %v7252
        %v7263 = vcombine.high %v7259, %v7259
        %v7264 = vcombine.high %v4640, %v4640
        %v7266 = vunpack.c.l.s4 1966171168
        %v7267 = vunpack.c.0.s8 %v7266
        %v7268 = vlaneseq
        %v7269 = vshrl.u32 %v7268, 7
        %v7270 = vsub.s32 %v7267, %v7269
        %v7271 = vrot.slane %v4640, %v7270
        %v7273 = vunpack.c.l.s4 1966171168
        %v7274 = vunpack.c.0.s8 %v7273
        %v7275 = vlaneseq
        %v7276 = vshrl.u32 %v7275, 7
        %v7277 = vsub.s32 %v7274, %v7276
        %v7278 = vrot.slane %v7264, %v7277
        %v7279 = vcombine.high %v7271, %v7271
        %v7280 = vcombine.high %v7278, %v7278
        %v7282 = vunpack.c.l.s4 1966171168
        %v7283 = vunpack.c.0.s8 %v7282
        %v7284 = vlaneseq
        %v7285 = vshrl.u32 %v7284, 7
        %v7286 = vsub.s32 %v7283, %v7285
        %v7287 = vrot.slane %v7271, %v7286
        %v7289 = vunpack.c.l.s4 1966171168
        %v7290 = vunpack.c.0.s8 %v7289
        %v7291 = vlaneseq
        %v7292 = vshrl.u32 %v7291, 7
        %v7293 = vsub.s32 %v7290, %v7292
        %v7294 = vrot.slane %v7278, %v7293
        %v7296 = vunpack.c.l.s4 1966171168
        %v7297 = vunpack.c.0.s8 %v7296
        %v7298 = vlaneseq
        %v7299 = vshrl.u32 %v7298, 7
        %v7300 = vsub.s32 %v7297, %v7299
        %v7301 = vrot.slane %v7279, %v7300
        %v7303 = vunpack.c.l.s4 1966171168
        %v7304 = vunpack.c.0.s8 %v7303
        %v7305 = vlaneseq
        %v7306 = vshrl.u32 %v7305, 7
        %v7307 = vsub.s32 %v7304, %v7306
        %v7308 = vrot.slane %v7280, %v7307
        %v7309 = vcombine.high %v7287, %v7287
        %v7310 = vcombine.high %v7294, %v7294
        %v7311 = vcombine.high %v7301, %v7301
        %v7312 = vcombine.high %v7308, %v7308
        %v7313 = vcombine.high %v4641, %v4641
        %v7315 = vunpack.c.l.s4 1966171168
        %v7316 = vunpack.c.0.s8 %v7315
        %v7317 = vlaneseq
        %v7318 = vshrl.u32 %v7317, 7
        %v7319 = vsub.s32 %v7316, %v7318
        %v7320 = vrot.slane %v4641, %v7319
        %v7322 = vunpack.c.l.s4 1966171168
        %v7323 = vunpack.c.0.s8 %v7322
        %v7324 = vlaneseq
        %v7325 = vshrl.u32 %v7324, 7
        %v7326 = vsub.s32 %v7323, %v7325
        %v7327 = vrot.slane %v7313, %v7326
        %v7328 = vcombine.high %v7320, %v7320
        %v7329 = vcombine.high %v7327, %v7327
        %v7331 = vunpack.c.l.s4 1966171168
        %v7332 = vunpack.c.0.s8 %v7331
        %v7333 = vlaneseq
        %v7334 = vshrl.u32 %v7333, 7
        %v7335 = vsub.s32 %v7332, %v7334
        %v7336 = vrot.slane %v7320, %v7335
        %v7338 = vunpack.c.l.s4 1966171168
        %v7339 = vunpack.c.0.s8 %v7338
        %v7340 = vlaneseq
        %v7341 = vshrl.u32 %v7340, 7
        %v7342 = vsub.s32 %v7339, %v7341
        %v7343 = vrot.slane %v7327, %v7342
        %v7345 = vunpack.c.l.s4 1966171168
        %v7346 = vunpack.c.0.s8 %v7345
        %v7347 = vlaneseq
        %v7348 = vshrl.u32 %v7347, 7
        %v7349 = vsub.s32 %v7346, %v7348
        %v7350 = vrot.slane %v7328, %v7349
        %v7352 = vunpack.c.l.s4 1966171168
        %v7353 = vunpack.c.0.s8 %v7352
        %v7354 = vlaneseq
        %v7355 = vshrl.u32 %v7354, 7
        %v7356 = vsub.s32 %v7353, %v7355
        %v7357 = vrot.slane %v7329, %v7356
        %v7358 = vcombine.high %v7336, %v7336
        %v7359 = vcombine.high %v7343, %v7343
        %v7360 = vcombine.high %v7350, %v7350
        %v7361 = vcombine.high %v7357, %v7357
        %v7362 = vcombine.high %v4642, %v4642
        %v7364 = vunpack.c.l.s4 1966171168
        %v7365 = vunpack.c.0.s8 %v7364
        %v7366 = vlaneseq
        %v7367 = vshrl.u32 %v7366, 7
        %v7368 = vsub.s32 %v7365, %v7367
        %v7369 = vrot.slane %v4642, %v7368
        %v7371 = vunpack.c.l.s4 1966171168
        %v7372 = vunpack.c.0.s8 %v7371
        %v7373 = vlaneseq
        %v7374 = vshrl.u32 %v7373, 7
        %v7375 = vsub.s32 %v7372, %v7374
        %v7376 = vrot.slane %v7362, %v7375
        %v7377 = vcombine.high %v7369, %v7369
        %v7378 = vcombine.high %v7376, %v7376
        %v7380 = vunpack.c.l.s4 1966171168
        %v7381 = vunpack.c.0.s8 %v7380
        %v7382 = vlaneseq
        %v7383 = vshrl.u32 %v7382, 7
        %v7384 = vsub.s32 %v7381, %v7383
        %v7385 = vrot.slane %v7369, %v7384
        %v7387 = vunpack.c.l.s4 1966171168
        %v7388 = vunpack.c.0.s8 %v7387
        %v7389 = vlaneseq
        %v7390 = vshrl.u32 %v7389, 7
        %v7391 = vsub.s32 %v7388, %v7390
        %v7392 = vrot.slane %v7376, %v7391
        %v7394 = vunpack.c.l.s4 1966171168
        %v7395 = vunpack.c.0.s8 %v7394
        %v7396 = vlaneseq
        %v7397 = vshrl.u32 %v7396, 7
        %v7398 = vsub.s32 %v7395, %v7397
        %v7399 = vrot.slane %v7377, %v7398
        %v7401 = vunpack.c.l.s4 1966171168
        %v7402 = vunpack.c.0.s8 %v7401
        %v7403 = vlaneseq
        %v7404 = vshrl.u32 %v7403, 7
        %v7405 = vsub.s32 %v7402, %v7404
        %v7406 = vrot.slane %v7378, %v7405
        %v7407 = vcombine.high %v7385, %v7385
        %v7408 = vcombine.high %v7392, %v7392
        %v7409 = vcombine.high %v7399, %v7399
        %v7410 = vcombine.high %v7406, %v7406
        %v7411 = vcombine.high %v4643, %v4643
        %v7413 = vunpack.c.l.s4 1966171168
        %v7414 = vunpack.c.0.s8 %v7413
        %v7415 = vlaneseq
        %v7416 = vshrl.u32 %v7415, 7
        %v7417 = vsub.s32 %v7414, %v7416
        %v7418 = vrot.slane %v4643, %v7417
        %v7420 = vunpack.c.l.s4 1966171168
        %v7421 = vunpack.c.0.s8 %v7420
        %v7422 = vlaneseq
        %v7423 = vshrl.u32 %v7422, 7
        %v7424 = vsub.s32 %v7421, %v7423
        %v7425 = vrot.slane %v7411, %v7424
        %v7426 = vcombine.high %v7418, %v7418
        %v7427 = vcombine.high %v7425, %v7425
        %v7429 = vunpack.c.l.s4 1966171168
        %v7430 = vunpack.c.0.s8 %v7429
        %v7431 = vlaneseq
        %v7432 = vshrl.u32 %v7431, 7
        %v7433 = vsub.s32 %v7430, %v7432
        %v7434 = vrot.slane %v7418, %v7433
        %v7436 = vunpack.c.l.s4 1966171168
        %v7437 = vunpack.c.0.s8 %v7436
        %v7438 = vlaneseq
        %v7439 = vshrl.u32 %v7438, 7
        %v7440 = vsub.s32 %v7437, %v7439
        %v7441 = vrot.slane %v7425, %v7440
        %v7443 = vunpack.c.l.s4 1966171168
        %v7444 = vunpack.c.0.s8 %v7443
        %v7445 = vlaneseq
        %v7446 = vshrl.u32 %v7445, 7
        %v7447 = vsub.s32 %v7444, %v7446
        %v7448 = vrot.slane %v7426, %v7447
        %v7450 = vunpack.c.l.s4 1966171168
        %v7451 = vunpack.c.0.s8 %v7450
        %v7452 = vlaneseq
        %v7453 = vshrl.u32 %v7452, 7
        %v7454 = vsub.s32 %v7451, %v7453
        %v7455 = vrot.slane %v7427, %v7454
        %v7456 = vcombine.high %v7434, %v7434
        %v7457 = vcombine.high %v7441, %v7441
        %v7458 = vcombine.high %v7448, %v7448
        %v7459 = vcombine.high %v7455, %v7455
        %v7460 = vcombine.high %v4644, %v4644
        %v7462 = vunpack.c.l.s4 1966171168
        %v7463 = vunpack.c.0.s8 %v7462
        %v7464 = vlaneseq
        %v7465 = vshrl.u32 %v7464, 7
        %v7466 = vsub.s32 %v7463, %v7465
        %v7467 = vrot.slane %v4644, %v7466
        %v7469 = vunpack.c.l.s4 1966171168
        %v7470 = vunpack.c.0.s8 %v7469
        %v7471 = vlaneseq
        %v7472 = vshrl.u32 %v7471, 7
        %v7473 = vsub.s32 %v7470, %v7472
        %v7474 = vrot.slane %v7460, %v7473
        %v7475 = vcombine.high %v7467, %v7467
        %v7476 = vcombine.high %v7474, %v7474
        %v7478 = vunpack.c.l.s4 1966171168
        %v7479 = vunpack.c.0.s8 %v7478
        %v7480 = vlaneseq
        %v7481 = vshrl.u32 %v7480, 7
        %v7482 = vsub.s32 %v7479, %v7481
        %v7483 = vrot.slane %v7467, %v7482
        %v7485 = vunpack.c.l.s4 1966171168
        %v7486 = vunpack.c.0.s8 %v7485
        %v7487 = vlaneseq
        %v7488 = vshrl.u32 %v7487, 7
        %v7489 = vsub.s32 %v7486, %v7488
        %v7490 = vrot.slane %v7474, %v7489
        %v7492 = vunpack.c.l.s4 1966171168
        %v7493 = vunpack.c.0.s8 %v7492
        %v7494 = vlaneseq
        %v7495 = vshrl.u32 %v7494, 7
        %v7496 = vsub.s32 %v7493, %v7495
        %v7497 = vrot.slane %v7475, %v7496
        %v7499 = vunpack.c.l.s4 1966171168
        %v7500 = vunpack.c.0.s8 %v7499
        %v7501 = vlaneseq
        %v7502 = vshrl.u32 %v7501, 7
        %v7503 = vsub.s32 %v7500, %v7502
        %v7504 = vrot.slane %v7476, %v7503
        %v7505 = vcombine.high %v7483, %v7483
        %v7506 = vcombine.high %v7490, %v7490
        %v7507 = vcombine.high %v7497, %v7497
        %v7508 = vcombine.high %v7504, %v7504
        %v7509 = vcombine.high %v4645, %v4645
        %v7511 = vunpack.c.l.s4 1966171168
        %v7512 = vunpack.c.0.s8 %v7511
        %v7513 = vlaneseq
        %v7514 = vshrl.u32 %v7513, 7
        %v7515 = vsub.s32 %v7512, %v7514
        %v7516 = vrot.slane %v4645, %v7515
        %v7518 = vunpack.c.l.s4 1966171168
        %v7519 = vunpack.c.0.s8 %v7518
        %v7520 = vlaneseq
        %v7521 = vshrl.u32 %v7520, 7
        %v7522 = vsub.s32 %v7519, %v7521
        %v7523 = vrot.slane %v7509, %v7522
        %v7524 = vcombine.high %v7516, %v7516
        %v7525 = vcombine.high %v7523, %v7523
        %v7527 = vunpack.c.l.s4 1966171168
        %v7528 = vunpack.c.0.s8 %v7527
        %v7529 = vlaneseq
        %v7530 = vshrl.u32 %v7529, 7
        %v7531 = vsub.s32 %v7528, %v7530
        %v7532 = vrot.slane %v7516, %v7531
        %v7534 = vunpack.c.l.s4 1966171168
        %v7535 = vunpack.c.0.s8 %v7534
        %v7536 = vlaneseq
        %v7537 = vshrl.u32 %v7536, 7
        %v7538 = vsub.s32 %v7535, %v7537
        %v7539 = vrot.slane %v7523, %v7538
        %v7541 = vunpack.c.l.s4 1966171168
        %v7542 = vunpack.c.0.s8 %v7541
        %v7543 = vlaneseq
        %v7544 = vshrl.u32 %v7543, 7
        %v7545 = vsub.s32 %v7542, %v7544
        %v7546 = vrot.slane %v7524, %v7545
        %v7548 = vunpack.c.l.s4 1966171168
        %v7549 = vunpack.c.0.s8 %v7548
        %v7550 = vlaneseq
        %v7551 = vshrl.u32 %v7550, 7
        %v7552 = vsub.s32 %v7549, %v7551
        %v7553 = vrot.slane %v7525, %v7552
        %v7554 = vcombine.high %v7532, %v7532
        %v7555 = vcombine.high %v7539, %v7539
        %v7556 = vcombine.high %v7546, %v7546
        %v7557 = vcombine.high %v7553, %v7553
        %v7558 = vcombine.high %v4646, %v4646
        %v7560 = vunpack.c.l.s4 1966171168
        %v7561 = vunpack.c.0.s8 %v7560
        %v7562 = vlaneseq
        %v7563 = vshrl.u32 %v7562, 7
        %v7564 = vsub.s32 %v7561, %v7563
        %v7565 = vrot.slane %v4646, %v7564
        %v7567 = vunpack.c.l.s4 1966171168
        %v7568 = vunpack.c.0.s8 %v7567
        %v7569 = vlaneseq
        %v7570 = vshrl.u32 %v7569, 7
        %v7571 = vsub.s32 %v7568, %v7570
        %v7572 = vrot.slane %v7558, %v7571
        %v7573 = vcombine.high %v7565, %v7565
        %v7574 = vcombine.high %v7572, %v7572
        %v7576 = vunpack.c.l.s4 1966171168
        %v7577 = vunpack.c.0.s8 %v7576
        %v7578 = vlaneseq
        %v7579 = vshrl.u32 %v7578, 7
        %v7580 = vsub.s32 %v7577, %v7579
        %v7581 = vrot.slane %v7565, %v7580
        %v7583 = vunpack.c.l.s4 1966171168
        %v7584 = vunpack.c.0.s8 %v7583
        %v7585 = vlaneseq
        %v7586 = vshrl.u32 %v7585, 7
        %v7587 = vsub.s32 %v7584, %v7586
        %v7588 = vrot.slane %v7572, %v7587
        %v7590 = vunpack.c.l.s4 1966171168
        %v7591 = vunpack.c.0.s8 %v7590
        %v7592 = vlaneseq
        %v7593 = vshrl.u32 %v7592, 7
        %v7594 = vsub.s32 %v7591, %v7593
        %v7595 = vrot.slane %v7573, %v7594
        %v7597 = vunpack.c.l.s4 1966171168
        %v7598 = vunpack.c.0.s8 %v7597
        %v7599 = vlaneseq
        %v7600 = vshrl.u32 %v7599, 7
        %v7601 = vsub.s32 %v7598, %v7600
        %v7602 = vrot.slane %v7574, %v7601
        %v7603 = vcombine.high %v7581, %v7581
        %v7604 = vcombine.high %v7588, %v7588
        %v7605 = vcombine.high %v7595, %v7595
        %v7606 = vcombine.high %v7602, %v7602
        %v7607 = vcombine.high %v4647, %v4647
        %v7609 = vunpack.c.l.s4 1966171168
        %v7610 = vunpack.c.0.s8 %v7609
        %v7611 = vlaneseq
        %v7612 = vshrl.u32 %v7611, 7
        %v7613 = vsub.s32 %v7610, %v7612
        %v7614 = vrot.slane %v4647, %v7613
        %v7616 = vunpack.c.l.s4 1966171168
        %v7617 = vunpack.c.0.s8 %v7616
        %v7618 = vlaneseq
        %v7619 = vshrl.u32 %v7618, 7
        %v7620 = vsub.s32 %v7617, %v7619
        %v7621 = vrot.slane %v7607, %v7620
        %v7622 = vcombine.high %v7614, %v7614
        %v7623 = vcombine.high %v7621, %v7621
        %v7625 = vunpack.c.l.s4 1966171168
        %v7626 = vunpack.c.0.s8 %v7625
        %v7627 = vlaneseq
        %v7628 = vshrl.u32 %v7627, 7
        %v7629 = vsub.s32 %v7626, %v7628
        %v7630 = vrot.slane %v7614, %v7629
        %v7632 = vunpack.c.l.s4 1966171168
        %v7633 = vunpack.c.0.s8 %v7632
        %v7634 = vlaneseq
        %v7635 = vshrl.u32 %v7634, 7
        %v7636 = vsub.s32 %v7633, %v7635
        %v7637 = vrot.slane %v7621, %v7636
        %v7639 = vunpack.c.l.s4 1966171168
        %v7640 = vunpack.c.0.s8 %v7639
        %v7641 = vlaneseq
        %v7642 = vshrl.u32 %v7641, 7
        %v7643 = vsub.s32 %v7640, %v7642
        %v7644 = vrot.slane %v7622, %v7643
        %v7646 = vunpack.c.l.s4 1966171168
        %v7647 = vunpack.c.0.s8 %v7646
        %v7648 = vlaneseq
        %v7649 = vshrl.u32 %v7648, 7
        %v7650 = vsub.s32 %v7647, %v7649
        %v7651 = vrot.slane %v7623, %v7650
        %v7652 = vcombine.high %v7630, %v7630
        %v7653 = vcombine.high %v7637, %v7637
        %v7654 = vcombine.high %v7644, %v7644
        %v7655 = vcombine.high %v7651, %v7651
        %v7656 = vcombine.high %v4648, %v4648
        %v7658 = vunpack.c.l.s4 1966171168
        %v7659 = vunpack.c.0.s8 %v7658
        %v7660 = vlaneseq
        %v7661 = vshrl.u32 %v7660, 7
        %v7662 = vsub.s32 %v7659, %v7661
        %v7663 = vrot.slane %v4648, %v7662
        %v7665 = vunpack.c.l.s4 1966171168
        %v7666 = vunpack.c.0.s8 %v7665
        %v7667 = vlaneseq
        %v7668 = vshrl.u32 %v7667, 7
        %v7669 = vsub.s32 %v7666, %v7668
        %v7670 = vrot.slane %v7656, %v7669
        %v7671 = vcombine.high %v7663, %v7663
        %v7672 = vcombine.high %v7670, %v7670
        %v7674 = vunpack.c.l.s4 1966171168
        %v7675 = vunpack.c.0.s8 %v7674
        %v7676 = vlaneseq
        %v7677 = vshrl.u32 %v7676, 7
        %v7678 = vsub.s32 %v7675, %v7677
        %v7679 = vrot.slane %v7663, %v7678
        %v7681 = vunpack.c.l.s4 1966171168
        %v7682 = vunpack.c.0.s8 %v7681
        %v7683 = vlaneseq
        %v7684 = vshrl.u32 %v7683, 7
        %v7685 = vsub.s32 %v7682, %v7684
        %v7686 = vrot.slane %v7670, %v7685
        %v7688 = vunpack.c.l.s4 1966171168
        %v7689 = vunpack.c.0.s8 %v7688
        %v7690 = vlaneseq
        %v7691 = vshrl.u32 %v7690, 7
        %v7692 = vsub.s32 %v7689, %v7691
        %v7693 = vrot.slane %v7671, %v7692
        %v7695 = vunpack.c.l.s4 1966171168
        %v7696 = vunpack.c.0.s8 %v7695
        %v7697 = vlaneseq
        %v7698 = vshrl.u32 %v7697, 7
        %v7699 = vsub.s32 %v7696, %v7698
        %v7700 = vrot.slane %v7672, %v7699
        %v7701 = vcombine.high %v7679, %v7679
        %v7702 = vcombine.high %v7686, %v7686
        %v7703 = vcombine.high %v7693, %v7693
        %v7704 = vcombine.high %v7700, %v7700
        %v7705 = vcombine.high %v4649, %v4649
        %v7707 = vunpack.c.l.s4 1966171168
        %v7708 = vunpack.c.0.s8 %v7707
        %v7709 = vlaneseq
        %v7710 = vshrl.u32 %v7709, 7
        %v7711 = vsub.s32 %v7708, %v7710
        %v7712 = vrot.slane %v4649, %v7711
        %v7714 = vunpack.c.l.s4 1966171168
        %v7715 = vunpack.c.0.s8 %v7714
        %v7716 = vlaneseq
        %v7717 = vshrl.u32 %v7716, 7
        %v7718 = vsub.s32 %v7715, %v7717
        %v7719 = vrot.slane %v7705, %v7718
        %v7720 = vcombine.high %v7712, %v7712
        %v7721 = vcombine.high %v7719, %v7719
        %v7723 = vunpack.c.l.s4 1966171168
        %v7724 = vunpack.c.0.s8 %v7723
        %v7725 = vlaneseq
        %v7726 = vshrl.u32 %v7725, 7
        %v7727 = vsub.s32 %v7724, %v7726
        %v7728 = vrot.slane %v7712, %v7727
        %v7730 = vunpack.c.l.s4 1966171168
        %v7731 = vunpack.c.0.s8 %v7730
        %v7732 = vlaneseq
        %v7733 = vshrl.u32 %v7732, 7
        %v7734 = vsub.s32 %v7731, %v7733
        %v7735 = vrot.slane %v7719, %v7734
        %v7737 = vunpack.c.l.s4 1966171168
        %v7738 = vunpack.c.0.s8 %v7737
        %v7739 = vlaneseq
        %v7740 = vshrl.u32 %v7739, 7
        %v7741 = vsub.s32 %v7738, %v7740
        %v7742 = vrot.slane %v7720, %v7741
        %v7744 = vunpack.c.l.s4 1966171168
        %v7745 = vunpack.c.0.s8 %v7744
        %v7746 = vlaneseq
        %v7747 = vshrl.u32 %v7746, 7
        %v7748 = vsub.s32 %v7745, %v7747
        %v7749 = vrot.slane %v7721, %v7748
        %v7750 = vcombine.high %v7728, %v7728
        %v7751 = vcombine.high %v7735, %v7735
        %v7752 = vcombine.high %v7742, %v7742
        %v7753 = vcombine.high %v7749, %v7749
        %v7754 = vcombine.high %v4650, %v4650
        %v7756 = vunpack.c.l.s4 1966171168
        %v7757 = vunpack.c.0.s8 %v7756
        %v7758 = vlaneseq
        %v7759 = vshrl.u32 %v7758, 7
        %v7760 = vsub.s32 %v7757, %v7759
        %v7761 = vrot.slane %v4650, %v7760
        %v7763 = vunpack.c.l.s4 1966171168
        %v7764 = vunpack.c.0.s8 %v7763
        %v7765 = vlaneseq
        %v7766 = vshrl.u32 %v7765, 7
        %v7767 = vsub.s32 %v7764, %v7766
        %v7768 = vrot.slane %v7754, %v7767
        %v7769 = vcombine.high %v7761, %v7761
        %v7770 = vcombine.high %v7768, %v7768
        %v7772 = vunpack.c.l.s4 1966171168
        %v7773 = vunpack.c.0.s8 %v7772
        %v7774 = vlaneseq
        %v7775 = vshrl.u32 %v7774, 7
        %v7776 = vsub.s32 %v7773, %v7775
        %v7777 = vrot.slane %v7761, %v7776
        %v7779 = vunpack.c.l.s4 1966171168
        %v7780 = vunpack.c.0.s8 %v7779
        %v7781 = vlaneseq
        %v7782 = vshrl.u32 %v7781, 7
        %v7783 = vsub.s32 %v7780, %v7782
        %v7784 = vrot.slane %v7768, %v7783
        %v7786 = vunpack.c.l.s4 1966171168
        %v7787 = vunpack.c.0.s8 %v7786
        %v7788 = vlaneseq
        %v7789 = vshrl.u32 %v7788, 7
        %v7790 = vsub.s32 %v7787, %v7789
        %v7791 = vrot.slane %v7769, %v7790
        %v7793 = vunpack.c.l.s4 1966171168
        %v7794 = vunpack.c.0.s8 %v7793
        %v7795 = vlaneseq
        %v7796 = vshrl.u32 %v7795, 7
        %v7797 = vsub.s32 %v7794, %v7796
        %v7798 = vrot.slane %v7770, %v7797
        %v7799 = vcombine.high %v7777, %v7777
        %v7800 = vcombine.high %v7784, %v7784
        %v7801 = vcombine.high %v7791, %v7791
        %v7802 = vcombine.high %v7798, %v7798
        %v7803 = vcombine.high %v4651, %v4651
        %v7805 = vunpack.c.l.s4 1966171168
        %v7806 = vunpack.c.0.s8 %v7805
        %v7807 = vlaneseq
        %v7808 = vshrl.u32 %v7807, 7
        %v7809 = vsub.s32 %v7806, %v7808
        %v7810 = vrot.slane %v4651, %v7809
        %v7812 = vunpack.c.l.s4 1966171168
        %v7813 = vunpack.c.0.s8 %v7812
        %v7814 = vlaneseq
        %v7815 = vshrl.u32 %v7814, 7
        %v7816 = vsub.s32 %v7813, %v7815
        %v7817 = vrot.slane %v7803, %v7816
        %v7818 = vcombine.high %v7810, %v7810
        %v7819 = vcombine.high %v7817, %v7817
        %v7821 = vunpack.c.l.s4 1966171168
        %v7822 = vunpack.c.0.s8 %v7821
        %v7823 = vlaneseq
        %v7824 = vshrl.u32 %v7823, 7
        %v7825 = vsub.s32 %v7822, %v7824
        %v7826 = vrot.slane %v7810, %v7825
        %v7828 = vunpack.c.l.s4 1966171168
        %v7829 = vunpack.c.0.s8 %v7828
        %v7830 = vlaneseq
        %v7831 = vshrl.u32 %v7830, 7
        %v7832 = vsub.s32 %v7829, %v7831
        %v7833 = vrot.slane %v7817, %v7832
        %v7835 = vunpack.c.l.s4 1966171168
        %v7836 = vunpack.c.0.s8 %v7835
        %v7837 = vlaneseq
        %v7838 = vshrl.u32 %v7837, 7
        %v7839 = vsub.s32 %v7836, %v7838
        %v7840 = vrot.slane %v7818, %v7839
        %v7842 = vunpack.c.l.s4 1966171168
        %v7843 = vunpack.c.0.s8 %v7842
        %v7844 = vlaneseq
        %v7845 = vshrl.u32 %v7844, 7
        %v7846 = vsub.s32 %v7843, %v7845
        %v7847 = vrot.slane %v7819, %v7846
        %v7848 = vcombine.high %v7826, %v7826
        %v7849 = vcombine.high %v7833, %v7833
        %v7850 = vcombine.high %v7840, %v7840
        %v7851 = vcombine.high %v7847, %v7847
        %v7852 = vcombine.low %v4739, %v4753
        %v7853 = vcombine.low %v4761, %v4763
        %v7854 = vcombine.low %v4746, %v4760
        %v7855 = vcombine.low %v4762, %v4764
        %v7857 = vunpack.c.l.s4 1966171168
        %v7858 = vunpack.c.0.s8 %v7857
        %v7859 = vlaneseq
        %v7860 = vshrl.u32 %v7859, 7
        %v7861 = vsub.s32 %v7858, %v7860
        %v7862 = vrot.slane %v7852, %v7861
        %v7864 = vunpack.c.l.s4 1966171168
        %v7865 = vunpack.c.0.s8 %v7864
        %v7866 = vlaneseq
        %v7867 = vshrl.u32 %v7866, 7
        %v7868 = vsub.s32 %v7865, %v7867
        %v7869 = vrot.slane %v7853, %v7868
        %v7871 = vunpack.c.l.s4 1966171168
        %v7872 = vunpack.c.0.s8 %v7871
        %v7873 = vlaneseq
        %v7874 = vshrl.u32 %v7873, 7
        %v7875 = vsub.s32 %v7872, %v7874
        %v7876 = vrot.slane %v7854, %v7875
        %v7878 = vunpack.c.l.s4 1966171168
        %v7879 = vunpack.c.0.s8 %v7878
        %v7880 = vlaneseq
        %v7881 = vshrl.u32 %v7880, 7
        %v7882 = vsub.s32 %v7879, %v7881
        %v7883 = vrot.slane %v7855, %v7882
        %v7884 = vcombine.low %v7862, %v7869
        %v7885 = vcombine.low %v7876, %v7883
        %v7887 = vunpack.c.l.s4 1966171168
        %v7888 = vunpack.c.0.s8 %v7887
        %v7889 = vlaneseq
        %v7890 = vshrl.u32 %v7889, 7
        %v7891 = vsub.s32 %v7888, %v7890
        %v7892 = vrot.slane %v7884, %v7891
        %v7894 = vunpack.c.l.s4 1966171168
        %v7895 = vunpack.c.0.s8 %v7894
        %v7896 = vlaneseq
        %v7897 = vshrl.u32 %v7896, 7
        %v7898 = vsub.s32 %v7895, %v7897
        %v7899 = vrot.slane %v7885, %v7898
        %v7900 = vcombine.low %v7892, %v7899
        %v7901 = vcombine.low %v4788, %v4802
        %v7902 = vcombine.low %v4810, %v4812
        %v7903 = vcombine.low %v4795, %v4809
        %v7904 = vcombine.low %v4811, %v4813
        %v7906 = vunpack.c.l.s4 1966171168
        %v7907 = vunpack.c.0.s8 %v7906
        %v7908 = vlaneseq
        %v7909 = vshrl.u32 %v7908, 7
        %v7910 = vsub.s32 %v7907, %v7909
        %v7911 = vrot.slane %v7901, %v7910
        %v7913 = vunpack.c.l.s4 1966171168
        %v7914 = vunpack.c.0.s8 %v7913
        %v7915 = vlaneseq
        %v7916 = vshrl.u32 %v7915, 7
        %v7917 = vsub.s32 %v7914, %v7916
        %v7918 = vrot.slane %v7902, %v7917
        %v7920 = vunpack.c.l.s4 1966171168
        %v7921 = vunpack.c.0.s8 %v7920
        %v7922 = vlaneseq
        %v7923 = vshrl.u32 %v7922, 7
        %v7924 = vsub.s32 %v7921, %v7923
        %v7925 = vrot.slane %v7903, %v7924
        %v7927 = vunpack.c.l.s4 1966171168
        %v7928 = vunpack.c.0.s8 %v7927
        %v7929 = vlaneseq
        %v7930 = vshrl.u32 %v7929, 7
        %v7931 = vsub.s32 %v7928, %v7930
        %v7932 = vrot.slane %v7904, %v7931
        %v7933 = vcombine.low %v7911, %v7918
        %v7934 = vcombine.low %v7925, %v7932
        %v7936 = vunpack.c.l.s4 1966171168
        %v7937 = vunpack.c.0.s8 %v7936
        %v7938 = vlaneseq
        %v7939 = vshrl.u32 %v7938, 7
        %v7940 = vsub.s32 %v7937, %v7939
        %v7941 = vrot.slane %v7933, %v7940
        %v7943 = vunpack.c.l.s4 1966171168
        %v7944 = vunpack.c.0.s8 %v7943
        %v7945 = vlaneseq
        %v7946 = vshrl.u32 %v7945, 7
        %v7947 = vsub.s32 %v7944, %v7946
        %v7948 = vrot.slane %v7934, %v7947
        %v7949 = vcombine.low %v7941, %v7948
        %v7950 = vcombine.low %v4837, %v4851
        %v7951 = vcombine.low %v4859, %v4861
        %v7952 = vcombine.low %v4844, %v4858
        %v7953 = vcombine.low %v4860, %v4862
        %v7955 = vunpack.c.l.s4 1966171168
        %v7956 = vunpack.c.0.s8 %v7955
        %v7957 = vlaneseq
        %v7958 = vshrl.u32 %v7957, 7
        %v7959 = vsub.s32 %v7956, %v7958
        %v7960 = vrot.slane %v7950, %v7959
        %v7962 = vunpack.c.l.s4 1966171168
        %v7963 = vunpack.c.0.s8 %v7962
        %v7964 = vlaneseq
        %v7965 = vshrl.u32 %v7964, 7
        %v7966 = vsub.s32 %v7963, %v7965
        %v7967 = vrot.slane %v7951, %v7966
        %v7969 = vunpack.c.l.s4 1966171168
        %v7970 = vunpack.c.0.s8 %v7969
        %v7971 = vlaneseq
        %v7972 = vshrl.u32 %v7971, 7
        %v7973 = vsub.s32 %v7970, %v7972
        %v7974 = vrot.slane %v7952, %v7973
        %v7976 = vunpack.c.l.s4 1966171168
        %v7977 = vunpack.c.0.s8 %v7976
        %v7978 = vlaneseq
        %v7979 = vshrl.u32 %v7978, 7
        %v7980 = vsub.s32 %v7977, %v7979
        %v7981 = vrot.slane %v7953, %v7980
        %v7982 = vcombine.low %v7960, %v7967
        %v7983 = vcombine.low %v7974, %v7981
        %v7985 = vunpack.c.l.s4 1966171168
        %v7986 = vunpack.c.0.s8 %v7985
        %v7987 = vlaneseq
        %v7988 = vshrl.u32 %v7987, 7
        %v7989 = vsub.s32 %v7986, %v7988
        %v7990 = vrot.slane %v7982, %v7989
        %v7992 = vunpack.c.l.s4 1966171168
        %v7993 = vunpack.c.0.s8 %v7992
        %v7994 = vlaneseq
        %v7995 = vshrl.u32 %v7994, 7
        %v7996 = vsub.s32 %v7993, %v7995
        %v7997 = vrot.slane %v7983, %v7996
        %v7998 = vcombine.low %v7990, %v7997
        %v7999 = vcombine.low %v4886, %v4900
        %v8000 = vcombine.low %v4908, %v4910
        %v8001 = vcombine.low %v4893, %v4907
        %v8002 = vcombine.low %v4909, %v4911
        %v8004 = vunpack.c.l.s4 1966171168
        %v8005 = vunpack.c.0.s8 %v8004
        %v8006 = vlaneseq
        %v8007 = vshrl.u32 %v8006, 7
        %v8008 = vsub.s32 %v8005, %v8007
        %v8009 = vrot.slane %v7999, %v8008
        %v8011 = vunpack.c.l.s4 1966171168
        %v8012 = vunpack.c.0.s8 %v8011
        %v8013 = vlaneseq
        %v8014 = vshrl.u32 %v8013, 7
        %v8015 = vsub.s32 %v8012, %v8014
        %v8016 = vrot.slane %v8000, %v8015
        %v8018 = vunpack.c.l.s4 1966171168
        %v8019 = vunpack.c.0.s8 %v8018
        %v8020 = vlaneseq
        %v8021 = vshrl.u32 %v8020, 7
        %v8022 = vsub.s32 %v8019, %v8021
        %v8023 = vrot.slane %v8001, %v8022
        %v8025 = vunpack.c.l.s4 1966171168
        %v8026 = vunpack.c.0.s8 %v8025
        %v8027 = vlaneseq
        %v8028 = vshrl.u32 %v8027, 7
        %v8029 = vsub.s32 %v8026, %v8028
        %v8030 = vrot.slane %v8002, %v8029
        %v8031 = vcombine.low %v8009, %v8016
        %v8032 = vcombine.low %v8023, %v8030
        %v8034 = vunpack.c.l.s4 1966171168
        %v8035 = vunpack.c.0.s8 %v8034
        %v8036 = vlaneseq
        %v8037 = vshrl.u32 %v8036, 7
        %v8038 = vsub.s32 %v8035, %v8037
        %v8039 = vrot.slane %v8031, %v8038
        %v8041 = vunpack.c.l.s4 1966171168
        %v8042 = vunpack.c.0.s8 %v8041
        %v8043 = vlaneseq
        %v8044 = vshrl.u32 %v8043, 7
        %v8045 = vsub.s32 %v8042, %v8044
        %v8046 = vrot.slane %v8032, %v8045
        %v8047 = vcombine.low %v8039, %v8046
        %v8048 = vcombine.low %v4935, %v4949
        %v8049 = vcombine.low %v4957, %v4959
        %v8050 = vcombine.low %v4942, %v4956
        %v8051 = vcombine.low %v4958, %v4960
        %v8053 = vunpack.c.l.s4 1966171168
        %v8054 = vunpack.c.0.s8 %v8053
        %v8055 = vlaneseq
        %v8056 = vshrl.u32 %v8055, 7
        %v8057 = vsub.s32 %v8054, %v8056
        %v8058 = vrot.slane %v8048, %v8057
        %v8060 = vunpack.c.l.s4 1966171168
        %v8061 = vunpack.c.0.s8 %v8060
        %v8062 = vlaneseq
        %v8063 = vshrl.u32 %v8062, 7
        %v8064 = vsub.s32 %v8061, %v8063
        %v8065 = vrot.slane %v8049, %v8064
        %v8067 = vunpack.c.l.s4 1966171168
        %v8068 = vunpack.c.0.s8 %v8067
        %v8069 = vlaneseq
        %v8070 = vshrl.u32 %v8069, 7
        %v8071 = vsub.s32 %v8068, %v8070
        %v8072 = vrot.slane %v8050, %v8071
        %v8074 = vunpack.c.l.s4 1966171168
        %v8075 = vunpack.c.0.s8 %v8074
        %v8076 = vlaneseq
        %v8077 = vshrl.u32 %v8076, 7
        %v8078 = vsub.s32 %v8075, %v8077
        %v8079 = vrot.slane %v8051, %v8078
        %v8080 = vcombine.low %v8058, %v8065
        %v8081 = vcombine.low %v8072, %v8079
        %v8083 = vunpack.c.l.s4 1966171168
        %v8084 = vunpack.c.0.s8 %v8083
        %v8085 = vlaneseq
        %v8086 = vshrl.u32 %v8085, 7
        %v8087 = vsub.s32 %v8084, %v8086
        %v8088 = vrot.slane %v8080, %v8087
        %v8090 = vunpack.c.l.s4 1966171168
        %v8091 = vunpack.c.0.s8 %v8090
        %v8092 = vlaneseq
        %v8093 = vshrl.u32 %v8092, 7
        %v8094 = vsub.s32 %v8091, %v8093
        %v8095 = vrot.slane %v8081, %v8094
        %v8096 = vcombine.low %v8088, %v8095
        %v8097 = vcombine.low %v4984, %v4998
        %v8098 = vcombine.low %v5006, %v5008
        %v8099 = vcombine.low %v4991, %v5005
        %v8100 = vcombine.low %v5007, %v5009
        %v8102 = vunpack.c.l.s4 1966171168
        %v8103 = vunpack.c.0.s8 %v8102
        %v8104 = vlaneseq
        %v8105 = vshrl.u32 %v8104, 7
        %v8106 = vsub.s32 %v8103, %v8105
        %v8107 = vrot.slane %v8097, %v8106
        %v8109 = vunpack.c.l.s4 1966171168
        %v8110 = vunpack.c.0.s8 %v8109
        %v8111 = vlaneseq
        %v8112 = vshrl.u32 %v8111, 7
        %v8113 = vsub.s32 %v8110, %v8112
        %v8114 = vrot.slane %v8098, %v8113
        %v8116 = vunpack.c.l.s4 1966171168
        %v8117 = vunpack.c.0.s8 %v8116
        %v8118 = vlaneseq
        %v8119 = vshrl.u32 %v8118, 7
        %v8120 = vsub.s32 %v8117, %v8119
        %v8121 = vrot.slane %v8099, %v8120
        %v8123 = vunpack.c.l.s4 1966171168
        %v8124 = vunpack.c.0.s8 %v8123
        %v8125 = vlaneseq
        %v8126 = vshrl.u32 %v8125, 7
        %v8127 = vsub.s32 %v8124, %v8126
        %v8128 = vrot.slane %v8100, %v8127
        %v8129 = vcombine.low %v8107, %v8114
        %v8130 = vcombine.low %v8121, %v8128
        %v8132 = vunpack.c.l.s4 1966171168
        %v8133 = vunpack.c.0.s8 %v8132
        %v8134 = vlaneseq
        %v8135 = vshrl.u32 %v8134, 7
        %v8136 = vsub.s32 %v8133, %v8135
        %v8137 = vrot.slane %v8129, %v8136
        %v8139 = vunpack.c.l.s4 1966171168
        %v8140 = vunpack.c.0.s8 %v8139
        %v8141 = vlaneseq
        %v8142 = vshrl.u32 %v8141, 7
        %v8143 = vsub.s32 %v8140, %v8142
        %v8144 = vrot.slane %v8130, %v8143
        %v8145 = vcombine.low %v8137, %v8144
        %v8146 = vcombine.low %v5033, %v5047
        %v8147 = vcombine.low %v5055, %v5057
        %v8148 = vcombine.low %v5040, %v5054
        %v8149 = vcombine.low %v5056, %v5058
        %v8151 = vunpack.c.l.s4 1966171168
        %v8152 = vunpack.c.0.s8 %v8151
        %v8153 = vlaneseq
        %v8154 = vshrl.u32 %v8153, 7
        %v8155 = vsub.s32 %v8152, %v8154
        %v8156 = vrot.slane %v8146, %v8155
        %v8158 = vunpack.c.l.s4 1966171168
        %v8159 = vunpack.c.0.s8 %v8158
        %v8160 = vlaneseq
        %v8161 = vshrl.u32 %v8160, 7
        %v8162 = vsub.s32 %v8159, %v8161
        %v8163 = vrot.slane %v8147, %v8162
        %v8165 = vunpack.c.l.s4 1966171168
        %v8166 = vunpack.c.0.s8 %v8165
        %v8167 = vlaneseq
        %v8168 = vshrl.u32 %v8167, 7
        %v8169 = vsub.s32 %v8166, %v8168
        %v8170 = vrot.slane %v8148, %v8169
        %v8172 = vunpack.c.l.s4 1966171168
        %v8173 = vunpack.c.0.s8 %v8172
        %v8174 = vlaneseq
        %v8175 = vshrl.u32 %v8174, 7
        %v8176 = vsub.s32 %v8173, %v8175
        %v8177 = vrot.slane %v8149, %v8176
        %v8178 = vcombine.low %v8156, %v8163
        %v8179 = vcombine.low %v8170, %v8177
        %v8181 = vunpack.c.l.s4 1966171168
        %v8182 = vunpack.c.0.s8 %v8181
        %v8183 = vlaneseq
        %v8184 = vshrl.u32 %v8183, 7
        %v8185 = vsub.s32 %v8182, %v8184
        %v8186 = vrot.slane %v8178, %v8185
        %v8188 = vunpack.c.l.s4 1966171168
        %v8189 = vunpack.c.0.s8 %v8188
        %v8190 = vlaneseq
        %v8191 = vshrl.u32 %v8190, 7
        %v8192 = vsub.s32 %v8189, %v8191
        %v8193 = vrot.slane %v8179, %v8192
        %v8194 = vcombine.low %v8186, %v8193
        %v8195 = vcombine.low %v5082, %v5096
        %v8196 = vcombine.low %v5104, %v5106
        %v8197 = vcombine.low %v5089, %v5103
        %v8198 = vcombine.low %v5105, %v5107
        %v8200 = vunpack.c.l.s4 1966171168
        %v8201 = vunpack.c.0.s8 %v8200
        %v8202 = vlaneseq
        %v8203 = vshrl.u32 %v8202, 7
        %v8204 = vsub.s32 %v8201, %v8203
        %v8205 = vrot.slane %v8195, %v8204
        %v8207 = vunpack.c.l.s4 1966171168
        %v8208 = vunpack.c.0.s8 %v8207
        %v8209 = vlaneseq
        %v8210 = vshrl.u32 %v8209, 7
        %v8211 = vsub.s32 %v8208, %v8210
        %v8212 = vrot.slane %v8196, %v8211
        %v8214 = vunpack.c.l.s4 1966171168
        %v8215 = vunpack.c.0.s8 %v8214
        %v8216 = vlaneseq
        %v8217 = vshrl.u32 %v8216, 7
        %v8218 = vsub.s32 %v8215, %v8217
        %v8219 = vrot.slane %v8197, %v8218
        %v8221 = vunpack.c.l.s4 1966171168
        %v8222 = vunpack.c.0.s8 %v8221
        %v8223 = vlaneseq
        %v8224 = vshrl.u32 %v8223, 7
        %v8225 = vsub.s32 %v8222, %v8224
        %v8226 = vrot.slane %v8198, %v8225
        %v8227 = vcombine.low %v8205, %v8212
        %v8228 = vcombine.low %v8219, %v8226
        %v8230 = vunpack.c.l.s4 1966171168
        %v8231 = vunpack.c.0.s8 %v8230
        %v8232 = vlaneseq
        %v8233 = vshrl.u32 %v8232, 7
        %v8234 = vsub.s32 %v8231, %v8233
        %v8235 = vrot.slane %v8227, %v8234
        %v8237 = vunpack.c.l.s4 1966171168
        %v8238 = vunpack.c.0.s8 %v8237
        %v8239 = vlaneseq
        %v8240 = vshrl.u32 %v8239, 7
        %v8241 = vsub.s32 %v8238, %v8240
        %v8242 = vrot.slane %v8228, %v8241
        %v8243 = vcombine.low %v8235, %v8242
        %v8244 = vcombine.low %v5131, %v5145
        %v8245 = vcombine.low %v5153, %v5155
        %v8246 = vcombine.low %v5138, %v5152
        %v8247 = vcombine.low %v5154, %v5156
        %v8249 = vunpack.c.l.s4 1966171168
        %v8250 = vunpack.c.0.s8 %v8249
        %v8251 = vlaneseq
        %v8252 = vshrl.u32 %v8251, 7
        %v8253 = vsub.s32 %v8250, %v8252
        %v8254 = vrot.slane %v8244, %v8253
        %v8256 = vunpack.c.l.s4 1966171168
        %v8257 = vunpack.c.0.s8 %v8256
        %v8258 = vlaneseq
        %v8259 = vshrl.u32 %v8258, 7
        %v8260 = vsub.s32 %v8257, %v8259
        %v8261 = vrot.slane %v8245, %v8260
        %v8263 = vunpack.c.l.s4 1966171168
        %v8264 = vunpack.c.0.s8 %v8263
        %v8265 = vlaneseq
        %v8266 = vshrl.u32 %v8265, 7
        %v8267 = vsub.s32 %v8264, %v8266
        %v8268 = vrot.slane %v8246, %v8267
        %v8270 = vunpack.c.l.s4 1966171168
        %v8271 = vunpack.c.0.s8 %v8270
        %v8272 = vlaneseq
        %v8273 = vshrl.u32 %v8272, 7
        %v8274 = vsub.s32 %v8271, %v8273
        %v8275 = vrot.slane %v8247, %v8274
        %v8276 = vcombine.low %v8254, %v8261
        %v8277 = vcombine.low %v8268, %v8275
        %v8279 = vunpack.c.l.s4 1966171168
        %v8280 = vunpack.c.0.s8 %v8279
        %v8281 = vlaneseq
        %v8282 = vshrl.u32 %v8281, 7
        %v8283 = vsub.s32 %v8280, %v8282
        %v8284 = vrot.slane %v8276, %v8283
        %v8286 = vunpack.c.l.s4 1966171168
        %v8287 = vunpack.c.0.s8 %v8286
        %v8288 = vlaneseq
        %v8289 = vshrl.u32 %v8288, 7
        %v8290 = vsub.s32 %v8287, %v8289
        %v8291 = vrot.slane %v8277, %v8290
        %v8292 = vcombine.low %v8284, %v8291
        %v8293 = vcombine.low %v5180, %v5194
        %v8294 = vcombine.low %v5202, %v5204
        %v8295 = vcombine.low %v5187, %v5201
        %v8296 = vcombine.low %v5203, %v5205
        %v8298 = vunpack.c.l.s4 1966171168
        %v8299 = vunpack.c.0.s8 %v8298
        %v8300 = vlaneseq
        %v8301 = vshrl.u32 %v8300, 7
        %v8302 = vsub.s32 %v8299, %v8301
        %v8303 = vrot.slane %v8293, %v8302
        %v8305 = vunpack.c.l.s4 1966171168
        %v8306 = vunpack.c.0.s8 %v8305
        %v8307 = vlaneseq
        %v8308 = vshrl.u32 %v8307, 7
        %v8309 = vsub.s32 %v8306, %v8308
        %v8310 = vrot.slane %v8294, %v8309
        %v8312 = vunpack.c.l.s4 1966171168
        %v8313 = vunpack.c.0.s8 %v8312
        %v8314 = vlaneseq
        %v8315 = vshrl.u32 %v8314, 7
        %v8316 = vsub.s32 %v8313, %v8315
        %v8317 = vrot.slane %v8295, %v8316
        %v8319 = vunpack.c.l.s4 1966171168
        %v8320 = vunpack.c.0.s8 %v8319
        %v8321 = vlaneseq
        %v8322 = vshrl.u32 %v8321, 7
        %v8323 = vsub.s32 %v8320, %v8322
        %v8324 = vrot.slane %v8296, %v8323
        %v8325 = vcombine.low %v8303, %v8310
        %v8326 = vcombine.low %v8317, %v8324
        %v8328 = vunpack.c.l.s4 1966171168
        %v8329 = vunpack.c.0.s8 %v8328
        %v8330 = vlaneseq
        %v8331 = vshrl.u32 %v8330, 7
        %v8332 = vsub.s32 %v8329, %v8331
        %v8333 = vrot.slane %v8325, %v8332
        %v8335 = vunpack.c.l.s4 1966171168
        %v8336 = vunpack.c.0.s8 %v8335
        %v8337 = vlaneseq
        %v8338 = vshrl.u32 %v8337, 7
        %v8339 = vsub.s32 %v8336, %v8338
        %v8340 = vrot.slane %v8326, %v8339
        %v8341 = vcombine.low %v8333, %v8340
        %v8342 = vcombine.low %v5229, %v5243
        %v8343 = vcombine.low %v5251, %v5253
        %v8344 = vcombine.low %v5236, %v5250
        %v8345 = vcombine.low %v5252, %v5254
        %v8347 = vunpack.c.l.s4 1966171168
        %v8348 = vunpack.c.0.s8 %v8347
        %v8349 = vlaneseq
        %v8350 = vshrl.u32 %v8349, 7
        %v8351 = vsub.s32 %v8348, %v8350
        %v8352 = vrot.slane %v8342, %v8351
        %v8354 = vunpack.c.l.s4 1966171168
        %v8355 = vunpack.c.0.s8 %v8354
        %v8356 = vlaneseq
        %v8357 = vshrl.u32 %v8356, 7
        %v8358 = vsub.s32 %v8355, %v8357
        %v8359 = vrot.slane %v8343, %v8358
        %v8361 = vunpack.c.l.s4 1966171168
        %v8362 = vunpack.c.0.s8 %v8361
        %v8363 = vlaneseq
        %v8364 = vshrl.u32 %v8363, 7
        %v8365 = vsub.s32 %v8362, %v8364
        %v8366 = vrot.slane %v8344, %v8365
        %v8368 = vunpack.c.l.s4 1966171168
        %v8369 = vunpack.c.0.s8 %v8368
        %v8370 = vlaneseq
        %v8371 = vshrl.u32 %v8370, 7
        %v8372 = vsub.s32 %v8369, %v8371
        %v8373 = vrot.slane %v8345, %v8372
        %v8374 = vcombine.low %v8352, %v8359
        %v8375 = vcombine.low %v8366, %v8373
        %v8377 = vunpack.c.l.s4 1966171168
        %v8378 = vunpack.c.0.s8 %v8377
        %v8379 = vlaneseq
        %v8380 = vshrl.u32 %v8379, 7
        %v8381 = vsub.s32 %v8378, %v8380
        %v8382 = vrot.slane %v8374, %v8381
        %v8384 = vunpack.c.l.s4 1966171168
        %v8385 = vunpack.c.0.s8 %v8384
        %v8386 = vlaneseq
        %v8387 = vshrl.u32 %v8386, 7
        %v8388 = vsub.s32 %v8385, %v8387
        %v8389 = vrot.slane %v8375, %v8388
        %v8390 = vcombine.low %v8382, %v8389
        %v8391 = vcombine.low %v5278, %v5292
        %v8392 = vcombine.low %v5300, %v5302
        %v8393 = vcombine.low %v5285, %v5299
        %v8394 = vcombine.low %v5301, %v5303
        %v8396 = vunpack.c.l.s4 1966171168
        %v8397 = vunpack.c.0.s8 %v8396
        %v8398 = vlaneseq
        %v8399 = vshrl.u32 %v8398, 7
        %v8400 = vsub.s32 %v8397, %v8399
        %v8401 = vrot.slane %v8391, %v8400
        %v8403 = vunpack.c.l.s4 1966171168
        %v8404 = vunpack.c.0.s8 %v8403
        %v8405 = vlaneseq
        %v8406 = vshrl.u32 %v8405, 7
        %v8407 = vsub.s32 %v8404, %v8406
        %v8408 = vrot.slane %v8392, %v8407
        %v8410 = vunpack.c.l.s4 1966171168
        %v8411 = vunpack.c.0.s8 %v8410
        %v8412 = vlaneseq
        %v8413 = vshrl.u32 %v8412, 7
        %v8414 = vsub.s32 %v8411, %v8413
        %v8415 = vrot.slane %v8393, %v8414
        %v8417 = vunpack.c.l.s4 1966171168
        %v8418 = vunpack.c.0.s8 %v8417
        %v8419 = vlaneseq
        %v8420 = vshrl.u32 %v8419, 7
        %v8421 = vsub.s32 %v8418, %v8420
        %v8422 = vrot.slane %v8394, %v8421
        %v8423 = vcombine.low %v8401, %v8408
        %v8424 = vcombine.low %v8415, %v8422
        %v8426 = vunpack.c.l.s4 1966171168
        %v8427 = vunpack.c.0.s8 %v8426
        %v8428 = vlaneseq
        %v8429 = vshrl.u32 %v8428, 7
        %v8430 = vsub.s32 %v8427, %v8429
        %v8431 = vrot.slane %v8423, %v8430
        %v8433 = vunpack.c.l.s4 1966171168
        %v8434 = vunpack.c.0.s8 %v8433
        %v8435 = vlaneseq
        %v8436 = vshrl.u32 %v8435, 7
        %v8437 = vsub.s32 %v8434, %v8436
        %v8438 = vrot.slane %v8424, %v8437
        %v8439 = vcombine.low %v8431, %v8438
        %v8440 = vcombine.low %v5327, %v5341
        %v8441 = vcombine.low %v5349, %v5351
        %v8442 = vcombine.low %v5334, %v5348
        %v8443 = vcombine.low %v5350, %v5352
        %v8445 = vunpack.c.l.s4 1966171168
        %v8446 = vunpack.c.0.s8 %v8445
        %v8447 = vlaneseq
        %v8448 = vshrl.u32 %v8447, 7
        %v8449 = vsub.s32 %v8446, %v8448
        %v8450 = vrot.slane %v8440, %v8449
        %v8452 = vunpack.c.l.s4 1966171168
        %v8453 = vunpack.c.0.s8 %v8452
        %v8454 = vlaneseq
        %v8455 = vshrl.u32 %v8454, 7
        %v8456 = vsub.s32 %v8453, %v8455
        %v8457 = vrot.slane %v8441, %v8456
        %v8459 = vunpack.c.l.s4 1966171168
        %v8460 = vunpack.c.0.s8 %v8459
        %v8461 = vlaneseq
        %v8462 = vshrl.u32 %v8461, 7
        %v8463 = vsub.s32 %v8460, %v8462
        %v8464 = vrot.slane %v8442, %v8463
        %v8466 = vunpack.c.l.s4 1966171168
        %v8467 = vunpack.c.0.s8 %v8466
        %v8468 = vlaneseq
        %v8469 = vshrl.u32 %v8468, 7
        %v8470 = vsub.s32 %v8467, %v8469
        %v8471 = vrot.slane %v8443, %v8470
        %v8472 = vcombine.low %v8450, %v8457
        %v8473 = vcombine.low %v8464, %v8471
        %v8475 = vunpack.c.l.s4 1966171168
        %v8476 = vunpack.c.0.s8 %v8475
        %v8477 = vlaneseq
        %v8478 = vshrl.u32 %v8477, 7
        %v8479 = vsub.s32 %v8476, %v8478
        %v8480 = vrot.slane %v8472, %v8479
        %v8482 = vunpack.c.l.s4 1966171168
        %v8483 = vunpack.c.0.s8 %v8482
        %v8484 = vlaneseq
        %v8485 = vshrl.u32 %v8484, 7
        %v8486 = vsub.s32 %v8483, %v8485
        %v8487 = vrot.slane %v8473, %v8486
        %v8488 = vcombine.low %v8480, %v8487
        %v8489 = vcombine.low %v5376, %v5390
        %v8490 = vcombine.low %v5398, %v5400
        %v8491 = vcombine.low %v5383, %v5397
        %v8492 = vcombine.low %v5399, %v5401
        %v8494 = vunpack.c.l.s4 1966171168
        %v8495 = vunpack.c.0.s8 %v8494
        %v8496 = vlaneseq
        %v8497 = vshrl.u32 %v8496, 7
        %v8498 = vsub.s32 %v8495, %v8497
        %v8499 = vrot.slane %v8489, %v8498
        %v8501 = vunpack.c.l.s4 1966171168
        %v8502 = vunpack.c.0.s8 %v8501
        %v8503 = vlaneseq
        %v8504 = vshrl.u32 %v8503, 7
        %v8505 = vsub.s32 %v8502, %v8504
        %v8506 = vrot.slane %v8490, %v8505
        %v8508 = vunpack.c.l.s4 1966171168
        %v8509 = vunpack.c.0.s8 %v8508
        %v8510 = vlaneseq
        %v8511 = vshrl.u32 %v8510, 7
        %v8512 = vsub.s32 %v8509, %v8511
        %v8513 = vrot.slane %v8491, %v8512
        %v8515 = vunpack.c.l.s4 1966171168
        %v8516 = vunpack.c.0.s8 %v8515
        %v8517 = vlaneseq
        %v8518 = vshrl.u32 %v8517, 7
        %v8519 = vsub.s32 %v8516, %v8518
        %v8520 = vrot.slane %v8492, %v8519
        %v8521 = vcombine.low %v8499, %v8506
        %v8522 = vcombine.low %v8513, %v8520
        %v8524 = vunpack.c.l.s4 1966171168
        %v8525 = vunpack.c.0.s8 %v8524
        %v8526 = vlaneseq
        %v8527 = vshrl.u32 %v8526, 7
        %v8528 = vsub.s32 %v8525, %v8527
        %v8529 = vrot.slane %v8521, %v8528
        %v8531 = vunpack.c.l.s4 1966171168
        %v8532 = vunpack.c.0.s8 %v8531
        %v8533 = vlaneseq
        %v8534 = vshrl.u32 %v8533, 7
        %v8535 = vsub.s32 %v8532, %v8534
        %v8536 = vrot.slane %v8522, %v8535
        %v8537 = vcombine.low %v8529, %v8536
        %v8538 = vcombine.low %v5425, %v5439
        %v8539 = vcombine.low %v5447, %v5449
        %v8540 = vcombine.low %v5432, %v5446
        %v8541 = vcombine.low %v5448, %v5450
        %v8543 = vunpack.c.l.s4 1966171168
        %v8544 = vunpack.c.0.s8 %v8543
        %v8545 = vlaneseq
        %v8546 = vshrl.u32 %v8545, 7
        %v8547 = vsub.s32 %v8544, %v8546
        %v8548 = vrot.slane %v8538, %v8547
        %v8550 = vunpack.c.l.s4 1966171168
        %v8551 = vunpack.c.0.s8 %v8550
        %v8552 = vlaneseq
        %v8553 = vshrl.u32 %v8552, 7
        %v8554 = vsub.s32 %v8551, %v8553
        %v8555 = vrot.slane %v8539, %v8554
        %v8557 = vunpack.c.l.s4 1966171168
        %v8558 = vunpack.c.0.s8 %v8557
        %v8559 = vlaneseq
        %v8560 = vshrl.u32 %v8559, 7
        %v8561 = vsub.s32 %v8558, %v8560
        %v8562 = vrot.slane %v8540, %v8561
        %v8564 = vunpack.c.l.s4 1966171168
        %v8565 = vunpack.c.0.s8 %v8564
        %v8566 = vlaneseq
        %v8567 = vshrl.u32 %v8566, 7
        %v8568 = vsub.s32 %v8565, %v8567
        %v8569 = vrot.slane %v8541, %v8568
        %v8570 = vcombine.low %v8548, %v8555
        %v8571 = vcombine.low %v8562, %v8569
        %v8573 = vunpack.c.l.s4 1966171168
        %v8574 = vunpack.c.0.s8 %v8573
        %v8575 = vlaneseq
        %v8576 = vshrl.u32 %v8575, 7
        %v8577 = vsub.s32 %v8574, %v8576
        %v8578 = vrot.slane %v8570, %v8577
        %v8580 = vunpack.c.l.s4 1966171168
        %v8581 = vunpack.c.0.s8 %v8580
        %v8582 = vlaneseq
        %v8583 = vshrl.u32 %v8582, 7
        %v8584 = vsub.s32 %v8581, %v8583
        %v8585 = vrot.slane %v8571, %v8584
        %v8586 = vcombine.low %v8578, %v8585
        %v8587 = vcombine.low %v5474, %v5488
        %v8588 = vcombine.low %v5496, %v5498
        %v8589 = vcombine.low %v5481, %v5495
        %v8590 = vcombine.low %v5497, %v5499
        %v8592 = vunpack.c.l.s4 1966171168
        %v8593 = vunpack.c.0.s8 %v8592
        %v8594 = vlaneseq
        %v8595 = vshrl.u32 %v8594, 7
        %v8596 = vsub.s32 %v8593, %v8595
        %v8597 = vrot.slane %v8587, %v8596
        %v8599 = vunpack.c.l.s4 1966171168
        %v8600 = vunpack.c.0.s8 %v8599
        %v8601 = vlaneseq
        %v8602 = vshrl.u32 %v8601, 7
        %v8603 = vsub.s32 %v8600, %v8602
        %v8604 = vrot.slane %v8588, %v8603
        %v8606 = vunpack.c.l.s4 1966171168
        %v8607 = vunpack.c.0.s8 %v8606
        %v8608 = vlaneseq
        %v8609 = vshrl.u32 %v8608, 7
        %v8610 = vsub.s32 %v8607, %v8609
        %v8611 = vrot.slane %v8589, %v8610
        %v8613 = vunpack.c.l.s4 1966171168
        %v8614 = vunpack.c.0.s8 %v8613
        %v8615 = vlaneseq
        %v8616 = vshrl.u32 %v8615, 7
        %v8617 = vsub.s32 %v8614, %v8616
        %v8618 = vrot.slane %v8590, %v8617
        %v8619 = vcombine.low %v8597, %v8604
        %v8620 = vcombine.low %v8611, %v8618
        %v8622 = vunpack.c.l.s4 1966171168
        %v8623 = vunpack.c.0.s8 %v8622
        %v8624 = vlaneseq
        %v8625 = vshrl.u32 %v8624, 7
        %v8626 = vsub.s32 %v8623, %v8625
        %v8627 = vrot.slane %v8619, %v8626
        %v8629 = vunpack.c.l.s4 1966171168
        %v8630 = vunpack.c.0.s8 %v8629
        %v8631 = vlaneseq
        %v8632 = vshrl.u32 %v8631, 7
        %v8633 = vsub.s32 %v8630, %v8632
        %v8634 = vrot.slane %v8620, %v8633
        %v8635 = vcombine.low %v8627, %v8634
        %v8636 = vcombine.low %v5523, %v5537
        %v8637 = vcombine.low %v5545, %v5547
        %v8638 = vcombine.low %v5530, %v5544
        %v8639 = vcombine.low %v5546, %v5548
        %v8641 = vunpack.c.l.s4 1966171168
        %v8642 = vunpack.c.0.s8 %v8641
        %v8643 = vlaneseq
        %v8644 = vshrl.u32 %v8643, 7
        %v8645 = vsub.s32 %v8642, %v8644
        %v8646 = vrot.slane %v8636, %v8645
        %v8648 = vunpack.c.l.s4 1966171168
        %v8649 = vunpack.c.0.s8 %v8648
        %v8650 = vlaneseq
        %v8651 = vshrl.u32 %v8650, 7
        %v8652 = vsub.s32 %v8649, %v8651
        %v8653 = vrot.slane %v8637, %v8652
        %v8655 = vunpack.c.l.s4 1966171168
        %v8656 = vunpack.c.0.s8 %v8655
        %v8657 = vlaneseq
        %v8658 = vshrl.u32 %v8657, 7
        %v8659 = vsub.s32 %v8656, %v8658
        %v8660 = vrot.slane %v8638, %v8659
        %v8662 = vunpack.c.l.s4 1966171168
        %v8663 = vunpack.c.0.s8 %v8662
        %v8664 = vlaneseq
        %v8665 = vshrl.u32 %v8664, 7
        %v8666 = vsub.s32 %v8663, %v8665
        %v8667 = vrot.slane %v8639, %v8666
        %v8668 = vcombine.low %v8646, %v8653
        %v8669 = vcombine.low %v8660, %v8667
        %v8671 = vunpack.c.l.s4 1966171168
        %v8672 = vunpack.c.0.s8 %v8671
        %v8673 = vlaneseq
        %v8674 = vshrl.u32 %v8673, 7
        %v8675 = vsub.s32 %v8672, %v8674
        %v8676 = vrot.slane %v8668, %v8675
        %v8678 = vunpack.c.l.s4 1966171168
        %v8679 = vunpack.c.0.s8 %v8678
        %v8680 = vlaneseq
        %v8681 = vshrl.u32 %v8680, 7
        %v8682 = vsub.s32 %v8679, %v8681
        %v8683 = vrot.slane %v8669, %v8682
        %v8684 = vcombine.low %v8676, %v8683
        %v8685 = vcombine.low %v5572, %v5586
        %v8686 = vcombine.low %v5594, %v5596
        %v8687 = vcombine.low %v5579, %v5593
        %v8688 = vcombine.low %v5595, %v5597
        %v8690 = vunpack.c.l.s4 1966171168
        %v8691 = vunpack.c.0.s8 %v8690
        %v8692 = vlaneseq
        %v8693 = vshrl.u32 %v8692, 7
        %v8694 = vsub.s32 %v8691, %v8693
        %v8695 = vrot.slane %v8685, %v8694
        %v8697 = vunpack.c.l.s4 1966171168
        %v8698 = vunpack.c.0.s8 %v8697
        %v8699 = vlaneseq
        %v8700 = vshrl.u32 %v8699, 7
        %v8701 = vsub.s32 %v8698, %v8700
        %v8702 = vrot.slane %v8686, %v8701
        %v8704 = vunpack.c.l.s4 1966171168
        %v8705 = vunpack.c.0.s8 %v8704
        %v8706 = vlaneseq
        %v8707 = vshrl.u32 %v8706, 7
        %v8708 = vsub.s32 %v8705, %v8707
        %v8709 = vrot.slane %v8687, %v8708
        %v8711 = vunpack.c.l.s4 1966171168
        %v8712 = vunpack.c.0.s8 %v8711
        %v8713 = vlaneseq
        %v8714 = vshrl.u32 %v8713, 7
        %v8715 = vsub.s32 %v8712, %v8714
        %v8716 = vrot.slane %v8688, %v8715
        %v8717 = vcombine.low %v8695, %v8702
        %v8718 = vcombine.low %v8709, %v8716
        %v8720 = vunpack.c.l.s4 1966171168
        %v8721 = vunpack.c.0.s8 %v8720
        %v8722 = vlaneseq
        %v8723 = vshrl.u32 %v8722, 7
        %v8724 = vsub.s32 %v8721, %v8723
        %v8725 = vrot.slane %v8717, %v8724
        %v8727 = vunpack.c.l.s4 1966171168
        %v8728 = vunpack.c.0.s8 %v8727
        %v8729 = vlaneseq
        %v8730 = vshrl.u32 %v8729, 7
        %v8731 = vsub.s32 %v8728, %v8730
        %v8732 = vrot.slane %v8718, %v8731
        %v8733 = vcombine.low %v8725, %v8732
        %v8734 = vcombine.low %v5621, %v5635
        %v8735 = vcombine.low %v5643, %v5645
        %v8736 = vcombine.low %v5628, %v5642
        %v8737 = vcombine.low %v5644, %v5646
        %v8739 = vunpack.c.l.s4 1966171168
        %v8740 = vunpack.c.0.s8 %v8739
        %v8741 = vlaneseq
        %v8742 = vshrl.u32 %v8741, 7
        %v8743 = vsub.s32 %v8740, %v8742
        %v8744 = vrot.slane %v8734, %v8743
        %v8746 = vunpack.c.l.s4 1966171168
        %v8747 = vunpack.c.0.s8 %v8746
        %v8748 = vlaneseq
        %v8749 = vshrl.u32 %v8748, 7
        %v8750 = vsub.s32 %v8747, %v8749
        %v8751 = vrot.slane %v8735, %v8750
        %v8753 = vunpack.c.l.s4 1966171168
        %v8754 = vunpack.c.0.s8 %v8753
        %v8755 = vlaneseq
        %v8756 = vshrl.u32 %v8755, 7
        %v8757 = vsub.s32 %v8754, %v8756
        %v8758 = vrot.slane %v8736, %v8757
        %v8760 = vunpack.c.l.s4 1966171168
        %v8761 = vunpack.c.0.s8 %v8760
        %v8762 = vlaneseq
        %v8763 = vshrl.u32 %v8762, 7
        %v8764 = vsub.s32 %v8761, %v8763
        %v8765 = vrot.slane %v8737, %v8764
        %v8766 = vcombine.low %v8744, %v8751
        %v8767 = vcombine.low %v8758, %v8765
        %v8769 = vunpack.c.l.s4 1966171168
        %v8770 = vunpack.c.0.s8 %v8769
        %v8771 = vlaneseq
        %v8772 = vshrl.u32 %v8771, 7
        %v8773 = vsub.s32 %v8770, %v8772
        %v8774 = vrot.slane %v8766, %v8773
        %v8776 = vunpack.c.l.s4 1966171168
        %v8777 = vunpack.c.0.s8 %v8776
        %v8778 = vlaneseq
        %v8779 = vshrl.u32 %v8778, 7
        %v8780 = vsub.s32 %v8777, %v8779
        %v8781 = vrot.slane %v8767, %v8780
        %v8782 = vcombine.low %v8774, %v8781
        %v8783 = vcombine.low %v5670, %v5684
        %v8784 = vcombine.low %v5692, %v5694
        %v8785 = vcombine.low %v5677, %v5691
        %v8786 = vcombine.low %v5693, %v5695
        %v8788 = vunpack.c.l.s4 1966171168
        %v8789 = vunpack.c.0.s8 %v8788
        %v8790 = vlaneseq
        %v8791 = vshrl.u32 %v8790, 7
        %v8792 = vsub.s32 %v8789, %v8791
        %v8793 = vrot.slane %v8783, %v8792
        %v8795 = vunpack.c.l.s4 1966171168
        %v8796 = vunpack.c.0.s8 %v8795
        %v8797 = vlaneseq
        %v8798 = vshrl.u32 %v8797, 7
        %v8799 = vsub.s32 %v8796, %v8798
        %v8800 = vrot.slane %v8784, %v8799
        %v8802 = vunpack.c.l.s4 1966171168
        %v8803 = vunpack.c.0.s8 %v8802
        %v8804 = vlaneseq
        %v8805 = vshrl.u32 %v8804, 7
        %v8806 = vsub.s32 %v8803, %v8805
        %v8807 = vrot.slane %v8785, %v8806
        %v8809 = vunpack.c.l.s4 1966171168
        %v8810 = vunpack.c.0.s8 %v8809
        %v8811 = vlaneseq
        %v8812 = vshrl.u32 %v8811, 7
        %v8813 = vsub.s32 %v8810, %v8812
        %v8814 = vrot.slane %v8786, %v8813
        %v8815 = vcombine.low %v8793, %v8800
        %v8816 = vcombine.low %v8807, %v8814
        %v8818 = vunpack.c.l.s4 1966171168
        %v8819 = vunpack.c.0.s8 %v8818
        %v8820 = vlaneseq
        %v8821 = vshrl.u32 %v8820, 7
        %v8822 = vsub.s32 %v8819, %v8821
        %v8823 = vrot.slane %v8815, %v8822
        %v8825 = vunpack.c.l.s4 1966171168
        %v8826 = vunpack.c.0.s8 %v8825
        %v8827 = vlaneseq
        %v8828 = vshrl.u32 %v8827, 7
        %v8829 = vsub.s32 %v8826, %v8828
        %v8830 = vrot.slane %v8816, %v8829
        %v8831 = vcombine.low %v8823, %v8830
        %v8832 = vcombine.low %v5719, %v5733
        %v8833 = vcombine.low %v5741, %v5743
        %v8834 = vcombine.low %v5726, %v5740
        %v8835 = vcombine.low %v5742, %v5744
        %v8837 = vunpack.c.l.s4 1966171168
        %v8838 = vunpack.c.0.s8 %v8837
        %v8839 = vlaneseq
        %v8840 = vshrl.u32 %v8839, 7
        %v8841 = vsub.s32 %v8838, %v8840
        %v8842 = vrot.slane %v8832, %v8841
        %v8844 = vunpack.c.l.s4 1966171168
        %v8845 = vunpack.c.0.s8 %v8844
        %v8846 = vlaneseq
        %v8847 = vshrl.u32 %v8846, 7
        %v8848 = vsub.s32 %v8845, %v8847
        %v8849 = vrot.slane %v8833, %v8848
        %v8851 = vunpack.c.l.s4 1966171168
        %v8852 = vunpack.c.0.s8 %v8851
        %v8853 = vlaneseq
        %v8854 = vshrl.u32 %v8853, 7
        %v8855 = vsub.s32 %v8852, %v8854
        %v8856 = vrot.slane %v8834, %v8855
        %v8858 = vunpack.c.l.s4 1966171168
        %v8859 = vunpack.c.0.s8 %v8858
        %v8860 = vlaneseq
        %v8861 = vshrl.u32 %v8860, 7
        %v8862 = vsub.s32 %v8859, %v8861
        %v8863 = vrot.slane %v8835, %v8862
        %v8864 = vcombine.low %v8842, %v8849
        %v8865 = vcombine.low %v8856, %v8863
        %v8867 = vunpack.c.l.s4 1966171168
        %v8868 = vunpack.c.0.s8 %v8867
        %v8869 = vlaneseq
        %v8870 = vshrl.u32 %v8869, 7
        %v8871 = vsub.s32 %v8868, %v8870
        %v8872 = vrot.slane %v8864, %v8871
        %v8874 = vunpack.c.l.s4 1966171168
        %v8875 = vunpack.c.0.s8 %v8874
        %v8876 = vlaneseq
        %v8877 = vshrl.u32 %v8876, 7
        %v8878 = vsub.s32 %v8875, %v8877
        %v8879 = vrot.slane %v8865, %v8878
        %v8880 = vcombine.low %v8872, %v8879
        %v8881 = vcombine.low %v5768, %v5782
        %v8882 = vcombine.low %v5790, %v5792
        %v8883 = vcombine.low %v5775, %v5789
        %v8884 = vcombine.low %v5791, %v5793
        %v8886 = vunpack.c.l.s4 1966171168
        %v8887 = vunpack.c.0.s8 %v8886
        %v8888 = vlaneseq
        %v8889 = vshrl.u32 %v8888, 7
        %v8890 = vsub.s32 %v8887, %v8889
        %v8891 = vrot.slane %v8881, %v8890
        %v8893 = vunpack.c.l.s4 1966171168
        %v8894 = vunpack.c.0.s8 %v8893
        %v8895 = vlaneseq
        %v8896 = vshrl.u32 %v8895, 7
        %v8897 = vsub.s32 %v8894, %v8896
        %v8898 = vrot.slane %v8882, %v8897
        %v8900 = vunpack.c.l.s4 1966171168
        %v8901 = vunpack.c.0.s8 %v8900
        %v8902 = vlaneseq
        %v8903 = vshrl.u32 %v8902, 7
        %v8904 = vsub.s32 %v8901, %v8903
        %v8905 = vrot.slane %v8883, %v8904
        %v8907 = vunpack.c.l.s4 1966171168
        %v8908 = vunpack.c.0.s8 %v8907
        %v8909 = vlaneseq
        %v8910 = vshrl.u32 %v8909, 7
        %v8911 = vsub.s32 %v8908, %v8910
        %v8912 = vrot.slane %v8884, %v8911
        %v8913 = vcombine.low %v8891, %v8898
        %v8914 = vcombine.low %v8905, %v8912
        %v8916 = vunpack.c.l.s4 1966171168
        %v8917 = vunpack.c.0.s8 %v8916
        %v8918 = vlaneseq
        %v8919 = vshrl.u32 %v8918, 7
        %v8920 = vsub.s32 %v8917, %v8919
        %v8921 = vrot.slane %v8913, %v8920
        %v8923 = vunpack.c.l.s4 1966171168
        %v8924 = vunpack.c.0.s8 %v8923
        %v8925 = vlaneseq
        %v8926 = vshrl.u32 %v8925, 7
        %v8927 = vsub.s32 %v8924, %v8926
        %v8928 = vrot.slane %v8914, %v8927
        %v8929 = vcombine.low %v8921, %v8928
        %v8930 = vcombine.low %v5817, %v5831
        %v8931 = vcombine.low %v5839, %v5841
        %v8932 = vcombine.low %v5824, %v5838
        %v8933 = vcombine.low %v5840, %v5842
        %v8935 = vunpack.c.l.s4 1966171168
        %v8936 = vunpack.c.0.s8 %v8935
        %v8937 = vlaneseq
        %v8938 = vshrl.u32 %v8937, 7
        %v8939 = vsub.s32 %v8936, %v8938
        %v8940 = vrot.slane %v8930, %v8939
        %v8942 = vunpack.c.l.s4 1966171168
        %v8943 = vunpack.c.0.s8 %v8942
        %v8944 = vlaneseq
        %v8945 = vshrl.u32 %v8944, 7
        %v8946 = vsub.s32 %v8943, %v8945
        %v8947 = vrot.slane %v8931, %v8946
        %v8949 = vunpack.c.l.s4 1966171168
        %v8950 = vunpack.c.0.s8 %v8949
        %v8951 = vlaneseq
        %v8952 = vshrl.u32 %v8951, 7
        %v8953 = vsub.s32 %v8950, %v8952
        %v8954 = vrot.slane %v8932, %v8953
        %v8956 = vunpack.c.l.s4 1966171168
        %v8957 = vunpack.c.0.s8 %v8956
        %v8958 = vlaneseq
        %v8959 = vshrl.u32 %v8958, 7
        %v8960 = vsub.s32 %v8957, %v8959
        %v8961 = vrot.slane %v8933, %v8960
        %v8962 = vcombine.low %v8940, %v8947
        %v8963 = vcombine.low %v8954, %v8961
        %v8965 = vunpack.c.l.s4 1966171168
        %v8966 = vunpack.c.0.s8 %v8965
        %v8967 = vlaneseq
        %v8968 = vshrl.u32 %v8967, 7
        %v8969 = vsub.s32 %v8966, %v8968
        %v8970 = vrot.slane %v8962, %v8969
        %v8972 = vunpack.c.l.s4 1966171168
        %v8973 = vunpack.c.0.s8 %v8972
        %v8974 = vlaneseq
        %v8975 = vshrl.u32 %v8974, 7
        %v8976 = vsub.s32 %v8973, %v8975
        %v8977 = vrot.slane %v8963, %v8976
        %v8978 = vcombine.low %v8970, %v8977
        %v8979 = vcombine.low %v5866, %v5880
        %v8980 = vcombine.low %v5888, %v5890
        %v8981 = vcombine.low %v5873, %v5887
        %v8982 = vcombine.low %v5889, %v5891
        %v8984 = vunpack.c.l.s4 1966171168
        %v8985 = vunpack.c.0.s8 %v8984
        %v8986 = vlaneseq
        %v8987 = vshrl.u32 %v8986, 7
        %v8988 = vsub.s32 %v8985, %v8987
        %v8989 = vrot.slane %v8979, %v8988
        %v8991 = vunpack.c.l.s4 1966171168
        %v8992 = vunpack.c.0.s8 %v8991
        %v8993 = vlaneseq
        %v8994 = vshrl.u32 %v8993, 7
        %v8995 = vsub.s32 %v8992, %v8994
        %v8996 = vrot.slane %v8980, %v8995
        %v8998 = vunpack.c.l.s4 1966171168
        %v8999 = vunpack.c.0.s8 %v8998
        %v9000 = vlaneseq
        %v9001 = vshrl.u32 %v9000, 7
        %v9002 = vsub.s32 %v8999, %v9001
        %v9003 = vrot.slane %v8981, %v9002
        %v9005 = vunpack.c.l.s4 1966171168
        %v9006 = vunpack.c.0.s8 %v9005
        %v9007 = vlaneseq
        %v9008 = vshrl.u32 %v9007, 7
        %v9009 = vsub.s32 %v9006, %v9008
        %v9010 = vrot.slane %v8982, %v9009
        %v9011 = vcombine.low %v8989, %v8996
        %v9012 = vcombine.low %v9003, %v9010
        %v9014 = vunpack.c.l.s4 1966171168
        %v9015 = vunpack.c.0.s8 %v9014
        %v9016 = vlaneseq
        %v9017 = vshrl.u32 %v9016, 7
        %v9018 = vsub.s32 %v9015, %v9017
        %v9019 = vrot.slane %v9011, %v9018
        %v9021 = vunpack.c.l.s4 1966171168
        %v9022 = vunpack.c.0.s8 %v9021
        %v9023 = vlaneseq
        %v9024 = vshrl.u32 %v9023, 7
        %v9025 = vsub.s32 %v9022, %v9024
        %v9026 = vrot.slane %v9012, %v9025
        %v9027 = vcombine.low %v9019, %v9026
        %v9028 = vcombine.low %v5915, %v5929
        %v9029 = vcombine.low %v5937, %v5939
        %v9030 = vcombine.low %v5922, %v5936
        %v9031 = vcombine.low %v5938, %v5940
        %v9033 = vunpack.c.l.s4 1966171168
        %v9034 = vunpack.c.0.s8 %v9033
        %v9035 = vlaneseq
        %v9036 = vshrl.u32 %v9035, 7
        %v9037 = vsub.s32 %v9034, %v9036
        %v9038 = vrot.slane %v9028, %v9037
        %v9040 = vunpack.c.l.s4 1966171168
        %v9041 = vunpack.c.0.s8 %v9040
        %v9042 = vlaneseq
        %v9043 = vshrl.u32 %v9042, 7
        %v9044 = vsub.s32 %v9041, %v9043
        %v9045 = vrot.slane %v9029, %v9044
        %v9047 = vunpack.c.l.s4 1966171168
        %v9048 = vunpack.c.0.s8 %v9047
        %v9049 = vlaneseq
        %v9050 = vshrl.u32 %v9049, 7
        %v9051 = vsub.s32 %v9048, %v9050
        %v9052 = vrot.slane %v9030, %v9051
        %v9054 = vunpack.c.l.s4 1966171168
        %v9055 = vunpack.c.0.s8 %v9054
        %v9056 = vlaneseq
        %v9057 = vshrl.u32 %v9056, 7
        %v9058 = vsub.s32 %v9055, %v9057
        %v9059 = vrot.slane %v9031, %v9058
        %v9060 = vcombine.low %v9038, %v9045
        %v9061 = vcombine.low %v9052, %v9059
        %v9063 = vunpack.c.l.s4 1966171168
        %v9064 = vunpack.c.0.s8 %v9063
        %v9065 = vlaneseq
        %v9066 = vshrl.u32 %v9065, 7
        %v9067 = vsub.s32 %v9064, %v9066
        %v9068 = vrot.slane %v9060, %v9067
        %v9070 = vunpack.c.l.s4 1966171168
        %v9071 = vunpack.c.0.s8 %v9070
        %v9072 = vlaneseq
        %v9073 = vshrl.u32 %v9072, 7
        %v9074 = vsub.s32 %v9071, %v9073
        %v9075 = vrot.slane %v9061, %v9074
        %v9076 = vcombine.low %v9068, %v9075
        %v9077 = vcombine.low %v5964, %v5978
        %v9078 = vcombine.low %v5986, %v5988
        %v9079 = vcombine.low %v5971, %v5985
        %v9080 = vcombine.low %v5987, %v5989
        %v9082 = vunpack.c.l.s4 1966171168
        %v9083 = vunpack.c.0.s8 %v9082
        %v9084 = vlaneseq
        %v9085 = vshrl.u32 %v9084, 7
        %v9086 = vsub.s32 %v9083, %v9085
        %v9087 = vrot.slane %v9077, %v9086
        %v9089 = vunpack.c.l.s4 1966171168
        %v9090 = vunpack.c.0.s8 %v9089
        %v9091 = vlaneseq
        %v9092 = vshrl.u32 %v9091, 7
        %v9093 = vsub.s32 %v9090, %v9092
        %v9094 = vrot.slane %v9078, %v9093
        %v9096 = vunpack.c.l.s4 1966171168
        %v9097 = vunpack.c.0.s8 %v9096
        %v9098 = vlaneseq
        %v9099 = vshrl.u32 %v9098, 7
        %v9100 = vsub.s32 %v9097, %v9099
        %v9101 = vrot.slane %v9079, %v9100
        %v9103 = vunpack.c.l.s4 1966171168
        %v9104 = vunpack.c.0.s8 %v9103
        %v9105 = vlaneseq
        %v9106 = vshrl.u32 %v9105, 7
        %v9107 = vsub.s32 %v9104, %v9106
        %v9108 = vrot.slane %v9080, %v9107
        %v9109 = vcombine.low %v9087, %v9094
        %v9110 = vcombine.low %v9101, %v9108
        %v9112 = vunpack.c.l.s4 1966171168
        %v9113 = vunpack.c.0.s8 %v9112
        %v9114 = vlaneseq
        %v9115 = vshrl.u32 %v9114, 7
        %v9116 = vsub.s32 %v9113, %v9115
        %v9117 = vrot.slane %v9109, %v9116
        %v9119 = vunpack.c.l.s4 1966171168
        %v9120 = vunpack.c.0.s8 %v9119
        %v9121 = vlaneseq
        %v9122 = vshrl.u32 %v9121, 7
        %v9123 = vsub.s32 %v9120, %v9122
        %v9124 = vrot.slane %v9110, %v9123
        %v9125 = vcombine.low %v9117, %v9124
        %v9126 = vcombine.low %v6013, %v6027
        %v9127 = vcombine.low %v6035, %v6037
        %v9128 = vcombine.low %v6020, %v6034
        %v9129 = vcombine.low %v6036, %v6038
        %v9131 = vunpack.c.l.s4 1966171168
        %v9132 = vunpack.c.0.s8 %v9131
        %v9133 = vlaneseq
        %v9134 = vshrl.u32 %v9133, 7
        %v9135 = vsub.s32 %v9132, %v9134
        %v9136 = vrot.slane %v9126, %v9135
        %v9138 = vunpack.c.l.s4 1966171168
        %v9139 = vunpack.c.0.s8 %v9138
        %v9140 = vlaneseq
        %v9141 = vshrl.u32 %v9140, 7
        %v9142 = vsub.s32 %v9139, %v9141
        %v9143 = vrot.slane %v9127, %v9142
        %v9145 = vunpack.c.l.s4 1966171168
        %v9146 = vunpack.c.0.s8 %v9145
        %v9147 = vlaneseq
        %v9148 = vshrl.u32 %v9147, 7
        %v9149 = vsub.s32 %v9146, %v9148
        %v9150 = vrot.slane %v9128, %v9149
        %v9152 = vunpack.c.l.s4 1966171168
        %v9153 = vunpack.c.0.s8 %v9152
        %v9154 = vlaneseq
        %v9155 = vshrl.u32 %v9154, 7
        %v9156 = vsub.s32 %v9153, %v9155
        %v9157 = vrot.slane %v9129, %v9156
        %v9158 = vcombine.low %v9136, %v9143
        %v9159 = vcombine.low %v9150, %v9157
        %v9161 = vunpack.c.l.s4 1966171168
        %v9162 = vunpack.c.0.s8 %v9161
        %v9163 = vlaneseq
        %v9164 = vshrl.u32 %v9163, 7
        %v9165 = vsub.s32 %v9162, %v9164
        %v9166 = vrot.slane %v9158, %v9165
        %v9168 = vunpack.c.l.s4 1966171168
        %v9169 = vunpack.c.0.s8 %v9168
        %v9170 = vlaneseq
        %v9171 = vshrl.u32 %v9170, 7
        %v9172 = vsub.s32 %v9169, %v9171
        %v9173 = vrot.slane %v9159, %v9172
        %v9174 = vcombine.low %v9166, %v9173
        %v9175 = vcombine.low %v6062, %v6076
        %v9176 = vcombine.low %v6084, %v6086
        %v9177 = vcombine.low %v6069, %v6083
        %v9178 = vcombine.low %v6085, %v6087
        %v9180 = vunpack.c.l.s4 1966171168
        %v9181 = vunpack.c.0.s8 %v9180
        %v9182 = vlaneseq
        %v9183 = vshrl.u32 %v9182, 7
        %v9184 = vsub.s32 %v9181, %v9183
        %v9185 = vrot.slane %v9175, %v9184
        %v9187 = vunpack.c.l.s4 1966171168
        %v9188 = vunpack.c.0.s8 %v9187
        %v9189 = vlaneseq
        %v9190 = vshrl.u32 %v9189, 7
        %v9191 = vsub.s32 %v9188, %v9190
        %v9192 = vrot.slane %v9176, %v9191
        %v9194 = vunpack.c.l.s4 1966171168
        %v9195 = vunpack.c.0.s8 %v9194
        %v9196 = vlaneseq
        %v9197 = vshrl.u32 %v9196, 7
        %v9198 = vsub.s32 %v9195, %v9197
        %v9199 = vrot.slane %v9177, %v9198
        %v9201 = vunpack.c.l.s4 1966171168
        %v9202 = vunpack.c.0.s8 %v9201
        %v9203 = vlaneseq
        %v9204 = vshrl.u32 %v9203, 7
        %v9205 = vsub.s32 %v9202, %v9204
        %v9206 = vrot.slane %v9178, %v9205
        %v9207 = vcombine.low %v9185, %v9192
        %v9208 = vcombine.low %v9199, %v9206
        %v9210 = vunpack.c.l.s4 1966171168
        %v9211 = vunpack.c.0.s8 %v9210
        %v9212 = vlaneseq
        %v9213 = vshrl.u32 %v9212, 7
        %v9214 = vsub.s32 %v9211, %v9213
        %v9215 = vrot.slane %v9207, %v9214
        %v9217 = vunpack.c.l.s4 1966171168
        %v9218 = vunpack.c.0.s8 %v9217
        %v9219 = vlaneseq
        %v9220 = vshrl.u32 %v9219, 7
        %v9221 = vsub.s32 %v9218, %v9220
        %v9222 = vrot.slane %v9208, %v9221
        %v9223 = vcombine.low %v9215, %v9222
        %v9224 = vcombine.low %v6111, %v6125
        %v9225 = vcombine.low %v6133, %v6135
        %v9226 = vcombine.low %v6118, %v6132
        %v9227 = vcombine.low %v6134, %v6136
        %v9229 = vunpack.c.l.s4 1966171168
        %v9230 = vunpack.c.0.s8 %v9229
        %v9231 = vlaneseq
        %v9232 = vshrl.u32 %v9231, 7
        %v9233 = vsub.s32 %v9230, %v9232
        %v9234 = vrot.slane %v9224, %v9233
        %v9236 = vunpack.c.l.s4 1966171168
        %v9237 = vunpack.c.0.s8 %v9236
        %v9238 = vlaneseq
        %v9239 = vshrl.u32 %v9238, 7
        %v9240 = vsub.s32 %v9237, %v9239
        %v9241 = vrot.slane %v9225, %v9240
        %v9243 = vunpack.c.l.s4 1966171168
        %v9244 = vunpack.c.0.s8 %v9243
        %v9245 = vlaneseq
        %v9246 = vshrl.u32 %v9245, 7
        %v9247 = vsub.s32 %v9244, %v9246
        %v9248 = vrot.slane %v9226, %v9247
        %v9250 = vunpack.c.l.s4 1966171168
        %v9251 = vunpack.c.0.s8 %v9250
        %v9252 = vlaneseq
        %v9253 = vshrl.u32 %v9252, 7
        %v9254 = vsub.s32 %v9251, %v9253
        %v9255 = vrot.slane %v9227, %v9254
        %v9256 = vcombine.low %v9234, %v9241
        %v9257 = vcombine.low %v9248, %v9255
        %v9259 = vunpack.c.l.s4 1966171168
        %v9260 = vunpack.c.0.s8 %v9259
        %v9261 = vlaneseq
        %v9262 = vshrl.u32 %v9261, 7
        %v9263 = vsub.s32 %v9260, %v9262
        %v9264 = vrot.slane %v9256, %v9263
        %v9266 = vunpack.c.l.s4 1966171168
        %v9267 = vunpack.c.0.s8 %v9266
        %v9268 = vlaneseq
        %v9269 = vshrl.u32 %v9268, 7
        %v9270 = vsub.s32 %v9267, %v9269
        %v9271 = vrot.slane %v9257, %v9270
        %v9272 = vcombine.low %v9264, %v9271
        %v9273 = vcombine.low %v6160, %v6174
        %v9274 = vcombine.low %v6182, %v6184
        %v9275 = vcombine.low %v6167, %v6181
        %v9276 = vcombine.low %v6183, %v6185
        %v9278 = vunpack.c.l.s4 1966171168
        %v9279 = vunpack.c.0.s8 %v9278
        %v9280 = vlaneseq
        %v9281 = vshrl.u32 %v9280, 7
        %v9282 = vsub.s32 %v9279, %v9281
        %v9283 = vrot.slane %v9273, %v9282
        %v9285 = vunpack.c.l.s4 1966171168
        %v9286 = vunpack.c.0.s8 %v9285
        %v9287 = vlaneseq
        %v9288 = vshrl.u32 %v9287, 7
        %v9289 = vsub.s32 %v9286, %v9288
        %v9290 = vrot.slane %v9274, %v9289
        %v9292 = vunpack.c.l.s4 1966171168
        %v9293 = vunpack.c.0.s8 %v9292
        %v9294 = vlaneseq
        %v9295 = vshrl.u32 %v9294, 7
        %v9296 = vsub.s32 %v9293, %v9295
        %v9297 = vrot.slane %v9275, %v9296
        %v9299 = vunpack.c.l.s4 1966171168
        %v9300 = vunpack.c.0.s8 %v9299
        %v9301 = vlaneseq
        %v9302 = vshrl.u32 %v9301, 7
        %v9303 = vsub.s32 %v9300, %v9302
        %v9304 = vrot.slane %v9276, %v9303
        %v9305 = vcombine.low %v9283, %v9290
        %v9306 = vcombine.low %v9297, %v9304
        %v9308 = vunpack.c.l.s4 1966171168
        %v9309 = vunpack.c.0.s8 %v9308
        %v9310 = vlaneseq
        %v9311 = vshrl.u32 %v9310, 7
        %v9312 = vsub.s32 %v9309, %v9311
        %v9313 = vrot.slane %v9305, %v9312
        %v9315 = vunpack.c.l.s4 1966171168
        %v9316 = vunpack.c.0.s8 %v9315
        %v9317 = vlaneseq
        %v9318 = vshrl.u32 %v9317, 7
        %v9319 = vsub.s32 %v9316, %v9318
        %v9320 = vrot.slane %v9306, %v9319
        %v9321 = vcombine.low %v9313, %v9320
        %v9322 = vcombine.low %v6209, %v6223
        %v9323 = vcombine.low %v6231, %v6233
        %v9324 = vcombine.low %v6216, %v6230
        %v9325 = vcombine.low %v6232, %v6234
        %v9327 = vunpack.c.l.s4 1966171168
        %v9328 = vunpack.c.0.s8 %v9327
        %v9329 = vlaneseq
        %v9330 = vshrl.u32 %v9329, 7
        %v9331 = vsub.s32 %v9328, %v9330
        %v9332 = vrot.slane %v9322, %v9331
        %v9334 = vunpack.c.l.s4 1966171168
        %v9335 = vunpack.c.0.s8 %v9334
        %v9336 = vlaneseq
        %v9337 = vshrl.u32 %v9336, 7
        %v9338 = vsub.s32 %v9335, %v9337
        %v9339 = vrot.slane %v9323, %v9338
        %v9341 = vunpack.c.l.s4 1966171168
        %v9342 = vunpack.c.0.s8 %v9341
        %v9343 = vlaneseq
        %v9344 = vshrl.u32 %v9343, 7
        %v9345 = vsub.s32 %v9342, %v9344
        %v9346 = vrot.slane %v9324, %v9345
        %v9348 = vunpack.c.l.s4 1966171168
        %v9349 = vunpack.c.0.s8 %v9348
        %v9350 = vlaneseq
        %v9351 = vshrl.u32 %v9350, 7
        %v9352 = vsub.s32 %v9349, %v9351
        %v9353 = vrot.slane %v9325, %v9352
        %v9354 = vcombine.low %v9332, %v9339
        %v9355 = vcombine.low %v9346, %v9353
        %v9357 = vunpack.c.l.s4 1966171168
        %v9358 = vunpack.c.0.s8 %v9357
        %v9359 = vlaneseq
        %v9360 = vshrl.u32 %v9359, 7
        %v9361 = vsub.s32 %v9358, %v9360
        %v9362 = vrot.slane %v9354, %v9361
        %v9364 = vunpack.c.l.s4 1966171168
        %v9365 = vunpack.c.0.s8 %v9364
        %v9366 = vlaneseq
        %v9367 = vshrl.u32 %v9366, 7
        %v9368 = vsub.s32 %v9365, %v9367
        %v9369 = vrot.slane %v9355, %v9368
        %v9370 = vcombine.low %v9362, %v9369
        %v9371 = vcombine.low %v6258, %v6272
        %v9372 = vcombine.low %v6280, %v6282
        %v9373 = vcombine.low %v6265, %v6279
        %v9374 = vcombine.low %v6281, %v6283
        %v9376 = vunpack.c.l.s4 1966171168
        %v9377 = vunpack.c.0.s8 %v9376
        %v9378 = vlaneseq
        %v9379 = vshrl.u32 %v9378, 7
        %v9380 = vsub.s32 %v9377, %v9379
        %v9381 = vrot.slane %v9371, %v9380
        %v9383 = vunpack.c.l.s4 1966171168
        %v9384 = vunpack.c.0.s8 %v9383
        %v9385 = vlaneseq
        %v9386 = vshrl.u32 %v9385, 7
        %v9387 = vsub.s32 %v9384, %v9386
        %v9388 = vrot.slane %v9372, %v9387
        %v9390 = vunpack.c.l.s4 1966171168
        %v9391 = vunpack.c.0.s8 %v9390
        %v9392 = vlaneseq
        %v9393 = vshrl.u32 %v9392, 7
        %v9394 = vsub.s32 %v9391, %v9393
        %v9395 = vrot.slane %v9373, %v9394
        %v9397 = vunpack.c.l.s4 1966171168
        %v9398 = vunpack.c.0.s8 %v9397
        %v9399 = vlaneseq
        %v9400 = vshrl.u32 %v9399, 7
        %v9401 = vsub.s32 %v9398, %v9400
        %v9402 = vrot.slane %v9374, %v9401
        %v9403 = vcombine.low %v9381, %v9388
        %v9404 = vcombine.low %v9395, %v9402
        %v9406 = vunpack.c.l.s4 1966171168
        %v9407 = vunpack.c.0.s8 %v9406
        %v9408 = vlaneseq
        %v9409 = vshrl.u32 %v9408, 7
        %v9410 = vsub.s32 %v9407, %v9409
        %v9411 = vrot.slane %v9403, %v9410
        %v9413 = vunpack.c.l.s4 1966171168
        %v9414 = vunpack.c.0.s8 %v9413
        %v9415 = vlaneseq
        %v9416 = vshrl.u32 %v9415, 7
        %v9417 = vsub.s32 %v9414, %v9416
        %v9418 = vrot.slane %v9404, %v9417
        %v9419 = vcombine.low %v9411, %v9418
        %v9420 = vcombine.low %v6307, %v6321
        %v9421 = vcombine.low %v6329, %v6331
        %v9422 = vcombine.low %v6314, %v6328
        %v9423 = vcombine.low %v6330, %v6332
        %v9425 = vunpack.c.l.s4 1966171168
        %v9426 = vunpack.c.0.s8 %v9425
        %v9427 = vlaneseq
        %v9428 = vshrl.u32 %v9427, 7
        %v9429 = vsub.s32 %v9426, %v9428
        %v9430 = vrot.slane %v9420, %v9429
        %v9432 = vunpack.c.l.s4 1966171168
        %v9433 = vunpack.c.0.s8 %v9432
        %v9434 = vlaneseq
        %v9435 = vshrl.u32 %v9434, 7
        %v9436 = vsub.s32 %v9433, %v9435
        %v9437 = vrot.slane %v9421, %v9436
        %v9439 = vunpack.c.l.s4 1966171168
        %v9440 = vunpack.c.0.s8 %v9439
        %v9441 = vlaneseq
        %v9442 = vshrl.u32 %v9441, 7
        %v9443 = vsub.s32 %v9440, %v9442
        %v9444 = vrot.slane %v9422, %v9443
        %v9446 = vunpack.c.l.s4 1966171168
        %v9447 = vunpack.c.0.s8 %v9446
        %v9448 = vlaneseq
        %v9449 = vshrl.u32 %v9448, 7
        %v9450 = vsub.s32 %v9447, %v9449
        %v9451 = vrot.slane %v9423, %v9450
        %v9452 = vcombine.low %v9430, %v9437
        %v9453 = vcombine.low %v9444, %v9451
        %v9455 = vunpack.c.l.s4 1966171168
        %v9456 = vunpack.c.0.s8 %v9455
        %v9457 = vlaneseq
        %v9458 = vshrl.u32 %v9457, 7
        %v9459 = vsub.s32 %v9456, %v9458
        %v9460 = vrot.slane %v9452, %v9459
        %v9462 = vunpack.c.l.s4 1966171168
        %v9463 = vunpack.c.0.s8 %v9462
        %v9464 = vlaneseq
        %v9465 = vshrl.u32 %v9464, 7
        %v9466 = vsub.s32 %v9463, %v9465
        %v9467 = vrot.slane %v9453, %v9466
        %v9468 = vcombine.low %v9460, %v9467
        %v9469 = vcombine.low %v6356, %v6370
        %v9470 = vcombine.low %v6378, %v6380
        %v9471 = vcombine.low %v6363, %v6377
        %v9472 = vcombine.low %v6379, %v6381
        %v9474 = vunpack.c.l.s4 1966171168
        %v9475 = vunpack.c.0.s8 %v9474
        %v9476 = vlaneseq
        %v9477 = vshrl.u32 %v9476, 7
        %v9478 = vsub.s32 %v9475, %v9477
        %v9479 = vrot.slane %v9469, %v9478
        %v9481 = vunpack.c.l.s4 1966171168
        %v9482 = vunpack.c.0.s8 %v9481
        %v9483 = vlaneseq
        %v9484 = vshrl.u32 %v9483, 7
        %v9485 = vsub.s32 %v9482, %v9484
        %v9486 = vrot.slane %v9470, %v9485
        %v9488 = vunpack.c.l.s4 1966171168
        %v9489 = vunpack.c.0.s8 %v9488
        %v9490 = vlaneseq
        %v9491 = vshrl.u32 %v9490, 7
        %v9492 = vsub.s32 %v9489, %v9491
        %v9493 = vrot.slane %v9471, %v9492
        %v9495 = vunpack.c.l.s4 1966171168
        %v9496 = vunpack.c.0.s8 %v9495
        %v9497 = vlaneseq
        %v9498 = vshrl.u32 %v9497, 7
        %v9499 = vsub.s32 %v9496, %v9498
        %v9500 = vrot.slane %v9472, %v9499
        %v9501 = vcombine.low %v9479, %v9486
        %v9502 = vcombine.low %v9493, %v9500
        %v9504 = vunpack.c.l.s4 1966171168
        %v9505 = vunpack.c.0.s8 %v9504
        %v9506 = vlaneseq
        %v9507 = vshrl.u32 %v9506, 7
        %v9508 = vsub.s32 %v9505, %v9507
        %v9509 = vrot.slane %v9501, %v9508
        %v9511 = vunpack.c.l.s4 1966171168
        %v9512 = vunpack.c.0.s8 %v9511
        %v9513 = vlaneseq
        %v9514 = vshrl.u32 %v9513, 7
        %v9515 = vsub.s32 %v9512, %v9514
        %v9516 = vrot.slane %v9502, %v9515
        %v9517 = vcombine.low %v9509, %v9516
        %v9518 = vcombine.low %v6405, %v6419
        %v9519 = vcombine.low %v6427, %v6429
        %v9520 = vcombine.low %v6412, %v6426
        %v9521 = vcombine.low %v6428, %v6430
        %v9523 = vunpack.c.l.s4 1966171168
        %v9524 = vunpack.c.0.s8 %v9523
        %v9525 = vlaneseq
        %v9526 = vshrl.u32 %v9525, 7
        %v9527 = vsub.s32 %v9524, %v9526
        %v9528 = vrot.slane %v9518, %v9527
        %v9530 = vunpack.c.l.s4 1966171168
        %v9531 = vunpack.c.0.s8 %v9530
        %v9532 = vlaneseq
        %v9533 = vshrl.u32 %v9532, 7
        %v9534 = vsub.s32 %v9531, %v9533
        %v9535 = vrot.slane %v9519, %v9534
        %v9537 = vunpack.c.l.s4 1966171168
        %v9538 = vunpack.c.0.s8 %v9537
        %v9539 = vlaneseq
        %v9540 = vshrl.u32 %v9539, 7
        %v9541 = vsub.s32 %v9538, %v9540
        %v9542 = vrot.slane %v9520, %v9541
        %v9544 = vunpack.c.l.s4 1966171168
        %v9545 = vunpack.c.0.s8 %v9544
        %v9546 = vlaneseq
        %v9547 = vshrl.u32 %v9546, 7
        %v9548 = vsub.s32 %v9545, %v9547
        %v9549 = vrot.slane %v9521, %v9548
        %v9550 = vcombine.low %v9528, %v9535
        %v9551 = vcombine.low %v9542, %v9549
        %v9553 = vunpack.c.l.s4 1966171168
        %v9554 = vunpack.c.0.s8 %v9553
        %v9555 = vlaneseq
        %v9556 = vshrl.u32 %v9555, 7
        %v9557 = vsub.s32 %v9554, %v9556
        %v9558 = vrot.slane %v9550, %v9557
        %v9560 = vunpack.c.l.s4 1966171168
        %v9561 = vunpack.c.0.s8 %v9560
        %v9562 = vlaneseq
        %v9563 = vshrl.u32 %v9562, 7
        %v9564 = vsub.s32 %v9561, %v9563
        %v9565 = vrot.slane %v9551, %v9564
        %v9566 = vcombine.low %v9558, %v9565
        %v9567 = vcombine.low %v6454, %v6468
        %v9568 = vcombine.low %v6476, %v6478
        %v9569 = vcombine.low %v6461, %v6475
        %v9570 = vcombine.low %v6477, %v6479
        %v9572 = vunpack.c.l.s4 1966171168
        %v9573 = vunpack.c.0.s8 %v9572
        %v9574 = vlaneseq
        %v9575 = vshrl.u32 %v9574, 7
        %v9576 = vsub.s32 %v9573, %v9575
        %v9577 = vrot.slane %v9567, %v9576
        %v9579 = vunpack.c.l.s4 1966171168
        %v9580 = vunpack.c.0.s8 %v9579
        %v9581 = vlaneseq
        %v9582 = vshrl.u32 %v9581, 7
        %v9583 = vsub.s32 %v9580, %v9582
        %v9584 = vrot.slane %v9568, %v9583
        %v9586 = vunpack.c.l.s4 1966171168
        %v9587 = vunpack.c.0.s8 %v9586
        %v9588 = vlaneseq
        %v9589 = vshrl.u32 %v9588, 7
        %v9590 = vsub.s32 %v9587, %v9589
        %v9591 = vrot.slane %v9569, %v9590
        %v9593 = vunpack.c.l.s4 1966171168
        %v9594 = vunpack.c.0.s8 %v9593
        %v9595 = vlaneseq
        %v9596 = vshrl.u32 %v9595, 7
        %v9597 = vsub.s32 %v9594, %v9596
        %v9598 = vrot.slane %v9570, %v9597
        %v9599 = vcombine.low %v9577, %v9584
        %v9600 = vcombine.low %v9591, %v9598
        %v9602 = vunpack.c.l.s4 1966171168
        %v9603 = vunpack.c.0.s8 %v9602
        %v9604 = vlaneseq
        %v9605 = vshrl.u32 %v9604, 7
        %v9606 = vsub.s32 %v9603, %v9605
        %v9607 = vrot.slane %v9599, %v9606
        %v9609 = vunpack.c.l.s4 1966171168
        %v9610 = vunpack.c.0.s8 %v9609
        %v9611 = vlaneseq
        %v9612 = vshrl.u32 %v9611, 7
        %v9613 = vsub.s32 %v9610, %v9612
        %v9614 = vrot.slane %v9600, %v9613
        %v9615 = vcombine.low %v9607, %v9614
        %v9616 = vcombine.low %v6503, %v6517
        %v9617 = vcombine.low %v6525, %v6527
        %v9618 = vcombine.low %v6510, %v6524
        %v9619 = vcombine.low %v6526, %v6528
        %v9621 = vunpack.c.l.s4 1966171168
        %v9622 = vunpack.c.0.s8 %v9621
        %v9623 = vlaneseq
        %v9624 = vshrl.u32 %v9623, 7
        %v9625 = vsub.s32 %v9622, %v9624
        %v9626 = vrot.slane %v9616, %v9625
        %v9628 = vunpack.c.l.s4 1966171168
        %v9629 = vunpack.c.0.s8 %v9628
        %v9630 = vlaneseq
        %v9631 = vshrl.u32 %v9630, 7
        %v9632 = vsub.s32 %v9629, %v9631
        %v9633 = vrot.slane %v9617, %v9632
        %v9635 = vunpack.c.l.s4 1966171168
        %v9636 = vunpack.c.0.s8 %v9635
        %v9637 = vlaneseq
        %v9638 = vshrl.u32 %v9637, 7
        %v9639 = vsub.s32 %v9636, %v9638
        %v9640 = vrot.slane %v9618, %v9639
        %v9642 = vunpack.c.l.s4 1966171168
        %v9643 = vunpack.c.0.s8 %v9642
        %v9644 = vlaneseq
        %v9645 = vshrl.u32 %v9644, 7
        %v9646 = vsub.s32 %v9643, %v9645
        %v9647 = vrot.slane %v9619, %v9646
        %v9648 = vcombine.low %v9626, %v9633
        %v9649 = vcombine.low %v9640, %v9647
        %v9651 = vunpack.c.l.s4 1966171168
        %v9652 = vunpack.c.0.s8 %v9651
        %v9653 = vlaneseq
        %v9654 = vshrl.u32 %v9653, 7
        %v9655 = vsub.s32 %v9652, %v9654
        %v9656 = vrot.slane %v9648, %v9655
        %v9658 = vunpack.c.l.s4 1966171168
        %v9659 = vunpack.c.0.s8 %v9658
        %v9660 = vlaneseq
        %v9661 = vshrl.u32 %v9660, 7
        %v9662 = vsub.s32 %v9659, %v9661
        %v9663 = vrot.slane %v9649, %v9662
        %v9664 = vcombine.low %v9656, %v9663
        %v9665 = vcombine.low %v6552, %v6566
        %v9666 = vcombine.low %v6574, %v6576
        %v9667 = vcombine.low %v6559, %v6573
        %v9668 = vcombine.low %v6575, %v6577
        %v9670 = vunpack.c.l.s4 1966171168
        %v9671 = vunpack.c.0.s8 %v9670
        %v9672 = vlaneseq
        %v9673 = vshrl.u32 %v9672, 7
        %v9674 = vsub.s32 %v9671, %v9673
        %v9675 = vrot.slane %v9665, %v9674
        %v9677 = vunpack.c.l.s4 1966171168
        %v9678 = vunpack.c.0.s8 %v9677
        %v9679 = vlaneseq
        %v9680 = vshrl.u32 %v9679, 7
        %v9681 = vsub.s32 %v9678, %v9680
        %v9682 = vrot.slane %v9666, %v9681
        %v9684 = vunpack.c.l.s4 1966171168
        %v9685 = vunpack.c.0.s8 %v9684
        %v9686 = vlaneseq
        %v9687 = vshrl.u32 %v9686, 7
        %v9688 = vsub.s32 %v9685, %v9687
        %v9689 = vrot.slane %v9667, %v9688
        %v9691 = vunpack.c.l.s4 1966171168
        %v9692 = vunpack.c.0.s8 %v9691
        %v9693 = vlaneseq
        %v9694 = vshrl.u32 %v9693, 7
        %v9695 = vsub.s32 %v9692, %v9694
        %v9696 = vrot.slane %v9668, %v9695
        %v9697 = vcombine.low %v9675, %v9682
        %v9698 = vcombine.low %v9689, %v9696
        %v9700 = vunpack.c.l.s4 1966171168
        %v9701 = vunpack.c.0.s8 %v9700
        %v9702 = vlaneseq
        %v9703 = vshrl.u32 %v9702, 7
        %v9704 = vsub.s32 %v9701, %v9703
        %v9705 = vrot.slane %v9697, %v9704
        %v9707 = vunpack.c.l.s4 1966171168
        %v9708 = vunpack.c.0.s8 %v9707
        %v9709 = vlaneseq
        %v9710 = vshrl.u32 %v9709, 7
        %v9711 = vsub.s32 %v9708, %v9710
        %v9712 = vrot.slane %v9698, %v9711
        %v9713 = vcombine.low %v9705, %v9712
        %v9714 = vcombine.low %v6601, %v6615
        %v9715 = vcombine.low %v6623, %v6625
        %v9716 = vcombine.low %v6608, %v6622
        %v9717 = vcombine.low %v6624, %v6626
        %v9719 = vunpack.c.l.s4 1966171168
        %v9720 = vunpack.c.0.s8 %v9719
        %v9721 = vlaneseq
        %v9722 = vshrl.u32 %v9721, 7
        %v9723 = vsub.s32 %v9720, %v9722
        %v9724 = vrot.slane %v9714, %v9723
        %v9726 = vunpack.c.l.s4 1966171168
        %v9727 = vunpack.c.0.s8 %v9726
        %v9728 = vlaneseq
        %v9729 = vshrl.u32 %v9728, 7
        %v9730 = vsub.s32 %v9727, %v9729
        %v9731 = vrot.slane %v9715, %v9730
        %v9733 = vunpack.c.l.s4 1966171168
        %v9734 = vunpack.c.0.s8 %v9733
        %v9735 = vlaneseq
        %v9736 = vshrl.u32 %v9735, 7
        %v9737 = vsub.s32 %v9734, %v9736
        %v9738 = vrot.slane %v9716, %v9737
        %v9740 = vunpack.c.l.s4 1966171168
        %v9741 = vunpack.c.0.s8 %v9740
        %v9742 = vlaneseq
        %v9743 = vshrl.u32 %v9742, 7
        %v9744 = vsub.s32 %v9741, %v9743
        %v9745 = vrot.slane %v9717, %v9744
        %v9746 = vcombine.low %v9724, %v9731
        %v9747 = vcombine.low %v9738, %v9745
        %v9749 = vunpack.c.l.s4 1966171168
        %v9750 = vunpack.c.0.s8 %v9749
        %v9751 = vlaneseq
        %v9752 = vshrl.u32 %v9751, 7
        %v9753 = vsub.s32 %v9750, %v9752
        %v9754 = vrot.slane %v9746, %v9753
        %v9756 = vunpack.c.l.s4 1966171168
        %v9757 = vunpack.c.0.s8 %v9756
        %v9758 = vlaneseq
        %v9759 = vshrl.u32 %v9758, 7
        %v9760 = vsub.s32 %v9757, %v9759
        %v9761 = vrot.slane %v9747, %v9760
        %v9762 = vcombine.low %v9754, %v9761
        %v9763 = vcombine.low %v6650, %v6664
        %v9764 = vcombine.low %v6672, %v6674
        %v9765 = vcombine.low %v6657, %v6671
        %v9766 = vcombine.low %v6673, %v6675
        %v9768 = vunpack.c.l.s4 1966171168
        %v9769 = vunpack.c.0.s8 %v9768
        %v9770 = vlaneseq
        %v9771 = vshrl.u32 %v9770, 7
        %v9772 = vsub.s32 %v9769, %v9771
        %v9773 = vrot.slane %v9763, %v9772
        %v9775 = vunpack.c.l.s4 1966171168
        %v9776 = vunpack.c.0.s8 %v9775
        %v9777 = vlaneseq
        %v9778 = vshrl.u32 %v9777, 7
        %v9779 = vsub.s32 %v9776, %v9778
        %v9780 = vrot.slane %v9764, %v9779
        %v9782 = vunpack.c.l.s4 1966171168
        %v9783 = vunpack.c.0.s8 %v9782
        %v9784 = vlaneseq
        %v9785 = vshrl.u32 %v9784, 7
        %v9786 = vsub.s32 %v9783, %v9785
        %v9787 = vrot.slane %v9765, %v9786
        %v9789 = vunpack.c.l.s4 1966171168
        %v9790 = vunpack.c.0.s8 %v9789
        %v9791 = vlaneseq
        %v9792 = vshrl.u32 %v9791, 7
        %v9793 = vsub.s32 %v9790, %v9792
        %v9794 = vrot.slane %v9766, %v9793
        %v9795 = vcombine.low %v9773, %v9780
        %v9796 = vcombine.low %v9787, %v9794
        %v9798 = vunpack.c.l.s4 1966171168
        %v9799 = vunpack.c.0.s8 %v9798
        %v9800 = vlaneseq
        %v9801 = vshrl.u32 %v9800, 7
        %v9802 = vsub.s32 %v9799, %v9801
        %v9803 = vrot.slane %v9795, %v9802
        %v9805 = vunpack.c.l.s4 1966171168
        %v9806 = vunpack.c.0.s8 %v9805
        %v9807 = vlaneseq
        %v9808 = vshrl.u32 %v9807, 7
        %v9809 = vsub.s32 %v9806, %v9808
        %v9810 = vrot.slane %v9796, %v9809
        %v9811 = vcombine.low %v9803, %v9810
        %v9812 = vcombine.low %v6699, %v6713
        %v9813 = vcombine.low %v6721, %v6723
        %v9814 = vcombine.low %v6706, %v6720
        %v9815 = vcombine.low %v6722, %v6724
        %v9817 = vunpack.c.l.s4 1966171168
        %v9818 = vunpack.c.0.s8 %v9817
        %v9819 = vlaneseq
        %v9820 = vshrl.u32 %v9819, 7
        %v9821 = vsub.s32 %v9818, %v9820
        %v9822 = vrot.slane %v9812, %v9821
        %v9824 = vunpack.c.l.s4 1966171168
        %v9825 = vunpack.c.0.s8 %v9824
        %v9826 = vlaneseq
        %v9827 = vshrl.u32 %v9826, 7
        %v9828 = vsub.s32 %v9825, %v9827
        %v9829 = vrot.slane %v9813, %v9828
        %v9831 = vunpack.c.l.s4 1966171168
        %v9832 = vunpack.c.0.s8 %v9831
        %v9833 = vlaneseq
        %v9834 = vshrl.u32 %v9833, 7
        %v9835 = vsub.s32 %v9832, %v9834
        %v9836 = vrot.slane %v9814, %v9835
        %v9838 = vunpack.c.l.s4 1966171168
        %v9839 = vunpack.c.0.s8 %v9838
        %v9840 = vlaneseq
        %v9841 = vshrl.u32 %v9840, 7
        %v9842 = vsub.s32 %v9839, %v9841
        %v9843 = vrot.slane %v9815, %v9842
        %v9844 = vcombine.low %v9822, %v9829
        %v9845 = vcombine.low %v9836, %v9843
        %v9847 = vunpack.c.l.s4 1966171168
        %v9848 = vunpack.c.0.s8 %v9847
        %v9849 = vlaneseq
        %v9850 = vshrl.u32 %v9849, 7
        %v9851 = vsub.s32 %v9848, %v9850
        %v9852 = vrot.slane %v9844, %v9851
        %v9854 = vunpack.c.l.s4 1966171168
        %v9855 = vunpack.c.0.s8 %v9854
        %v9856 = vlaneseq
        %v9857 = vshrl.u32 %v9856, 7
        %v9858 = vsub.s32 %v9855, %v9857
        %v9859 = vrot.slane %v9845, %v9858
        %v9860 = vcombine.low %v9852, %v9859
        %v9861 = vcombine.low %v6748, %v6762
        %v9862 = vcombine.low %v6770, %v6772
        %v9863 = vcombine.low %v6755, %v6769
        %v9864 = vcombine.low %v6771, %v6773
        %v9866 = vunpack.c.l.s4 1966171168
        %v9867 = vunpack.c.0.s8 %v9866
        %v9868 = vlaneseq
        %v9869 = vshrl.u32 %v9868, 7
        %v9870 = vsub.s32 %v9867, %v9869
        %v9871 = vrot.slane %v9861, %v9870
        %v9873 = vunpack.c.l.s4 1966171168
        %v9874 = vunpack.c.0.s8 %v9873
        %v9875 = vlaneseq
        %v9876 = vshrl.u32 %v9875, 7
        %v9877 = vsub.s32 %v9874, %v9876
        %v9878 = vrot.slane %v9862, %v9877
        %v9880 = vunpack.c.l.s4 1966171168
        %v9881 = vunpack.c.0.s8 %v9880
        %v9882 = vlaneseq
        %v9883 = vshrl.u32 %v9882, 7
        %v9884 = vsub.s32 %v9881, %v9883
        %v9885 = vrot.slane %v9863, %v9884
        %v9887 = vunpack.c.l.s4 1966171168
        %v9888 = vunpack.c.0.s8 %v9887
        %v9889 = vlaneseq
        %v9890 = vshrl.u32 %v9889, 7
        %v9891 = vsub.s32 %v9888, %v9890
        %v9892 = vrot.slane %v9864, %v9891
        %v9893 = vcombine.low %v9871, %v9878
        %v9894 = vcombine.low %v9885, %v9892
        %v9896 = vunpack.c.l.s4 1966171168
        %v9897 = vunpack.c.0.s8 %v9896
        %v9898 = vlaneseq
        %v9899 = vshrl.u32 %v9898, 7
        %v9900 = vsub.s32 %v9897, %v9899
        %v9901 = vrot.slane %v9893, %v9900
        %v9903 = vunpack.c.l.s4 1966171168
        %v9904 = vunpack.c.0.s8 %v9903
        %v9905 = vlaneseq
        %v9906 = vshrl.u32 %v9905, 7
        %v9907 = vsub.s32 %v9904, %v9906
        %v9908 = vrot.slane %v9894, %v9907
        %v9909 = vcombine.low %v9901, %v9908
        %v9910 = vcombine.low %v6797, %v6811
        %v9911 = vcombine.low %v6819, %v6821
        %v9912 = vcombine.low %v6804, %v6818
        %v9913 = vcombine.low %v6820, %v6822
        %v9915 = vunpack.c.l.s4 1966171168
        %v9916 = vunpack.c.0.s8 %v9915
        %v9917 = vlaneseq
        %v9918 = vshrl.u32 %v9917, 7
        %v9919 = vsub.s32 %v9916, %v9918
        %v9920 = vrot.slane %v9910, %v9919
        %v9922 = vunpack.c.l.s4 1966171168
        %v9923 = vunpack.c.0.s8 %v9922
        %v9924 = vlaneseq
        %v9925 = vshrl.u32 %v9924, 7
        %v9926 = vsub.s32 %v9923, %v9925
        %v9927 = vrot.slane %v9911, %v9926
        %v9929 = vunpack.c.l.s4 1966171168
        %v9930 = vunpack.c.0.s8 %v9929
        %v9931 = vlaneseq
        %v9932 = vshrl.u32 %v9931, 7
        %v9933 = vsub.s32 %v9930, %v9932
        %v9934 = vrot.slane %v9912, %v9933
        %v9936 = vunpack.c.l.s4 1966171168
        %v9937 = vunpack.c.0.s8 %v9936
        %v9938 = vlaneseq
        %v9939 = vshrl.u32 %v9938, 7
        %v9940 = vsub.s32 %v9937, %v9939
        %v9941 = vrot.slane %v9913, %v9940
        %v9942 = vcombine.low %v9920, %v9927
        %v9943 = vcombine.low %v9934, %v9941
        %v9945 = vunpack.c.l.s4 1966171168
        %v9946 = vunpack.c.0.s8 %v9945
        %v9947 = vlaneseq
        %v9948 = vshrl.u32 %v9947, 7
        %v9949 = vsub.s32 %v9946, %v9948
        %v9950 = vrot.slane %v9942, %v9949
        %v9952 = vunpack.c.l.s4 1966171168
        %v9953 = vunpack.c.0.s8 %v9952
        %v9954 = vlaneseq
        %v9955 = vshrl.u32 %v9954, 7
        %v9956 = vsub.s32 %v9953, %v9955
        %v9957 = vrot.slane %v9943, %v9956
        %v9958 = vcombine.low %v9950, %v9957
        %v9959 = vcombine.low %v6846, %v6860
        %v9960 = vcombine.low %v6868, %v6870
        %v9961 = vcombine.low %v6853, %v6867
        %v9962 = vcombine.low %v6869, %v6871
        %v9964 = vunpack.c.l.s4 1966171168
        %v9965 = vunpack.c.0.s8 %v9964
        %v9966 = vlaneseq
        %v9967 = vshrl.u32 %v9966, 7
        %v9968 = vsub.s32 %v9965, %v9967
        %v9969 = vrot.slane %v9959, %v9968
        %v9971 = vunpack.c.l.s4 1966171168
        %v9972 = vunpack.c.0.s8 %v9971
        %v9973 = vlaneseq
        %v9974 = vshrl.u32 %v9973, 7
        %v9975 = vsub.s32 %v9972, %v9974
        %v9976 = vrot.slane %v9960, %v9975
        %v9978 = vunpack.c.l.s4 1966171168
        %v9979 = vunpack.c.0.s8 %v9978
        %v9980 = vlaneseq
        %v9981 = vshrl.u32 %v9980, 7
        %v9982 = vsub.s32 %v9979, %v9981
        %v9983 = vrot.slane %v9961, %v9982
        %v9985 = vunpack.c.l.s4 1966171168
        %v9986 = vunpack.c.0.s8 %v9985
        %v9987 = vlaneseq
        %v9988 = vshrl.u32 %v9987, 7
        %v9989 = vsub.s32 %v9986, %v9988
        %v9990 = vrot.slane %v9962, %v9989
        %v9991 = vcombine.low %v9969, %v9976
        %v9992 = vcombine.low %v9983, %v9990
        %v9994 = vunpack.c.l.s4 1966171168
        %v9995 = vunpack.c.0.s8 %v9994
        %v9996 = vlaneseq
        %v9997 = vshrl.u32 %v9996, 7
        %v9998 = vsub.s32 %v9995, %v9997
        %v9999 = vrot.slane %v9991, %v9998
        %v10001 = vunpack.c.l.s4 1966171168
        %v10002 = vunpack.c.0.s8 %v10001
        %v10003 = vlaneseq
        %v10004 = vshrl.u32 %v10003, 7
        %v10005 = vsub.s32 %v10002, %v10004
        %v10006 = vrot.slane %v9992, %v10005
        %v10007 = vcombine.low %v9999, %v10006
        %v10008 = vcombine.low %v6895, %v6909
        %v10009 = vcombine.low %v6917, %v6919
        %v10010 = vcombine.low %v6902, %v6916
        %v10011 = vcombine.low %v6918, %v6920
        %v10013 = vunpack.c.l.s4 1966171168
        %v10014 = vunpack.c.0.s8 %v10013
        %v10015 = vlaneseq
        %v10016 = vshrl.u32 %v10015, 7
        %v10017 = vsub.s32 %v10014, %v10016
        %v10018 = vrot.slane %v10008, %v10017
        %v10020 = vunpack.c.l.s4 1966171168
        %v10021 = vunpack.c.0.s8 %v10020
        %v10022 = vlaneseq
        %v10023 = vshrl.u32 %v10022, 7
        %v10024 = vsub.s32 %v10021, %v10023
        %v10025 = vrot.slane %v10009, %v10024
        %v10027 = vunpack.c.l.s4 1966171168
        %v10028 = vunpack.c.0.s8 %v10027
        %v10029 = vlaneseq
        %v10030 = vshrl.u32 %v10029, 7
        %v10031 = vsub.s32 %v10028, %v10030
        %v10032 = vrot.slane %v10010, %v10031
        %v10034 = vunpack.c.l.s4 1966171168
        %v10035 = vunpack.c.0.s8 %v10034
        %v10036 = vlaneseq
        %v10037 = vshrl.u32 %v10036, 7
        %v10038 = vsub.s32 %v10035, %v10037
        %v10039 = vrot.slane %v10011, %v10038
        %v10040 = vcombine.low %v10018, %v10025
        %v10041 = vcombine.low %v10032, %v10039
        %v10043 = vunpack.c.l.s4 1966171168
        %v10044 = vunpack.c.0.s8 %v10043
        %v10045 = vlaneseq
        %v10046 = vshrl.u32 %v10045, 7
        %v10047 = vsub.s32 %v10044, %v10046
        %v10048 = vrot.slane %v10040, %v10047
        %v10050 = vunpack.c.l.s4 1966171168
        %v10051 = vunpack.c.0.s8 %v10050
        %v10052 = vlaneseq
        %v10053 = vshrl.u32 %v10052, 7
        %v10054 = vsub.s32 %v10051, %v10053
        %v10055 = vrot.slane %v10041, %v10054
        %v10056 = vcombine.low %v10048, %v10055
        %v10057 = vcombine.low %v6944, %v6958
        %v10058 = vcombine.low %v6966, %v6968
        %v10059 = vcombine.low %v6951, %v6965
        %v10060 = vcombine.low %v6967, %v6969
        %v10062 = vunpack.c.l.s4 1966171168
        %v10063 = vunpack.c.0.s8 %v10062
        %v10064 = vlaneseq
        %v10065 = vshrl.u32 %v10064, 7
        %v10066 = vsub.s32 %v10063, %v10065
        %v10067 = vrot.slane %v10057, %v10066
        %v10069 = vunpack.c.l.s4 1966171168
        %v10070 = vunpack.c.0.s8 %v10069
        %v10071 = vlaneseq
        %v10072 = vshrl.u32 %v10071, 7
        %v10073 = vsub.s32 %v10070, %v10072
        %v10074 = vrot.slane %v10058, %v10073
        %v10076 = vunpack.c.l.s4 1966171168
        %v10077 = vunpack.c.0.s8 %v10076
        %v10078 = vlaneseq
        %v10079 = vshrl.u32 %v10078, 7
        %v10080 = vsub.s32 %v10077, %v10079
        %v10081 = vrot.slane %v10059, %v10080
        %v10083 = vunpack.c.l.s4 1966171168
        %v10084 = vunpack.c.0.s8 %v10083
        %v10085 = vlaneseq
        %v10086 = vshrl.u32 %v10085, 7
        %v10087 = vsub.s32 %v10084, %v10086
        %v10088 = vrot.slane %v10060, %v10087
        %v10089 = vcombine.low %v10067, %v10074
        %v10090 = vcombine.low %v10081, %v10088
        %v10092 = vunpack.c.l.s4 1966171168
        %v10093 = vunpack.c.0.s8 %v10092
        %v10094 = vlaneseq
        %v10095 = vshrl.u32 %v10094, 7
        %v10096 = vsub.s32 %v10093, %v10095
        %v10097 = vrot.slane %v10089, %v10096
        %v10099 = vunpack.c.l.s4 1966171168
        %v10100 = vunpack.c.0.s8 %v10099
        %v10101 = vlaneseq
        %v10102 = vshrl.u32 %v10101, 7
        %v10103 = vsub.s32 %v10100, %v10102
        %v10104 = vrot.slane %v10090, %v10103
        %v10105 = vcombine.low %v10097, %v10104
        %v10106 = vcombine.low %v6993, %v7007
        %v10107 = vcombine.low %v7015, %v7017
        %v10108 = vcombine.low %v7000, %v7014
        %v10109 = vcombine.low %v7016, %v7018
        %v10111 = vunpack.c.l.s4 1966171168
        %v10112 = vunpack.c.0.s8 %v10111
        %v10113 = vlaneseq
        %v10114 = vshrl.u32 %v10113, 7
        %v10115 = vsub.s32 %v10112, %v10114
        %v10116 = vrot.slane %v10106, %v10115
        %v10118 = vunpack.c.l.s4 1966171168
        %v10119 = vunpack.c.0.s8 %v10118
        %v10120 = vlaneseq
        %v10121 = vshrl.u32 %v10120, 7
        %v10122 = vsub.s32 %v10119, %v10121
        %v10123 = vrot.slane %v10107, %v10122
        %v10125 = vunpack.c.l.s4 1966171168
        %v10126 = vunpack.c.0.s8 %v10125
        %v10127 = vlaneseq
        %v10128 = vshrl.u32 %v10127, 7
        %v10129 = vsub.s32 %v10126, %v10128
        %v10130 = vrot.slane %v10108, %v10129
        %v10132 = vunpack.c.l.s4 1966171168
        %v10133 = vunpack.c.0.s8 %v10132
        %v10134 = vlaneseq
        %v10135 = vshrl.u32 %v10134, 7
        %v10136 = vsub.s32 %v10133, %v10135
        %v10137 = vrot.slane %v10109, %v10136
        %v10138 = vcombine.low %v10116, %v10123
        %v10139 = vcombine.low %v10130, %v10137
        %v10141 = vunpack.c.l.s4 1966171168
        %v10142 = vunpack.c.0.s8 %v10141
        %v10143 = vlaneseq
        %v10144 = vshrl.u32 %v10143, 7
        %v10145 = vsub.s32 %v10142, %v10144
        %v10146 = vrot.slane %v10138, %v10145
        %v10148 = vunpack.c.l.s4 1966171168
        %v10149 = vunpack.c.0.s8 %v10148
        %v10150 = vlaneseq
        %v10151 = vshrl.u32 %v10150, 7
        %v10152 = vsub.s32 %v10149, %v10151
        %v10153 = vrot.slane %v10139, %v10152
        %v10154 = vcombine.low %v10146, %v10153
        %v10155 = vcombine.low %v7042, %v7056
        %v10156 = vcombine.low %v7064, %v7066
        %v10157 = vcombine.low %v7049, %v7063
        %v10158 = vcombine.low %v7065, %v7067
        %v10160 = vunpack.c.l.s4 1966171168
        %v10161 = vunpack.c.0.s8 %v10160
        %v10162 = vlaneseq
        %v10163 = vshrl.u32 %v10162, 7
        %v10164 = vsub.s32 %v10161, %v10163
        %v10165 = vrot.slane %v10155, %v10164
        %v10167 = vunpack.c.l.s4 1966171168
        %v10168 = vunpack.c.0.s8 %v10167
        %v10169 = vlaneseq
        %v10170 = vshrl.u32 %v10169, 7
        %v10171 = vsub.s32 %v10168, %v10170
        %v10172 = vrot.slane %v10156, %v10171
        %v10174 = vunpack.c.l.s4 1966171168
        %v10175 = vunpack.c.0.s8 %v10174
        %v10176 = vlaneseq
        %v10177 = vshrl.u32 %v10176, 7
        %v10178 = vsub.s32 %v10175, %v10177
        %v10179 = vrot.slane %v10157, %v10178
        %v10181 = vunpack.c.l.s4 1966171168
        %v10182 = vunpack.c.0.s8 %v10181
        %v10183 = vlaneseq
        %v10184 = vshrl.u32 %v10183, 7
        %v10185 = vsub.s32 %v10182, %v10184
        %v10186 = vrot.slane %v10158, %v10185
        %v10187 = vcombine.low %v10165, %v10172
        %v10188 = vcombine.low %v10179, %v10186
        %v10190 = vunpack.c.l.s4 1966171168
        %v10191 = vunpack.c.0.s8 %v10190
        %v10192 = vlaneseq
        %v10193 = vshrl.u32 %v10192, 7
        %v10194 = vsub.s32 %v10191, %v10193
        %v10195 = vrot.slane %v10187, %v10194
        %v10197 = vunpack.c.l.s4 1966171168
        %v10198 = vunpack.c.0.s8 %v10197
        %v10199 = vlaneseq
        %v10200 = vshrl.u32 %v10199, 7
        %v10201 = vsub.s32 %v10198, %v10200
        %v10202 = vrot.slane %v10188, %v10201
        %v10203 = vcombine.low %v10195, %v10202
        %v10204 = vcombine.low %v7091, %v7105
        %v10205 = vcombine.low %v7113, %v7115
        %v10206 = vcombine.low %v7098, %v7112
        %v10207 = vcombine.low %v7114, %v7116
        %v10209 = vunpack.c.l.s4 1966171168
        %v10210 = vunpack.c.0.s8 %v10209
        %v10211 = vlaneseq
        %v10212 = vshrl.u32 %v10211, 7
        %v10213 = vsub.s32 %v10210, %v10212
        %v10214 = vrot.slane %v10204, %v10213
        %v10216 = vunpack.c.l.s4 1966171168
        %v10217 = vunpack.c.0.s8 %v10216
        %v10218 = vlaneseq
        %v10219 = vshrl.u32 %v10218, 7
        %v10220 = vsub.s32 %v10217, %v10219
        %v10221 = vrot.slane %v10205, %v10220
        %v10223 = vunpack.c.l.s4 1966171168
        %v10224 = vunpack.c.0.s8 %v10223
        %v10225 = vlaneseq
        %v10226 = vshrl.u32 %v10225, 7
        %v10227 = vsub.s32 %v10224, %v10226
        %v10228 = vrot.slane %v10206, %v10227
        %v10230 = vunpack.c.l.s4 1966171168
        %v10231 = vunpack.c.0.s8 %v10230
        %v10232 = vlaneseq
        %v10233 = vshrl.u32 %v10232, 7
        %v10234 = vsub.s32 %v10231, %v10233
        %v10235 = vrot.slane %v10207, %v10234
        %v10236 = vcombine.low %v10214, %v10221
        %v10237 = vcombine.low %v10228, %v10235
        %v10239 = vunpack.c.l.s4 1966171168
        %v10240 = vunpack.c.0.s8 %v10239
        %v10241 = vlaneseq
        %v10242 = vshrl.u32 %v10241, 7
        %v10243 = vsub.s32 %v10240, %v10242
        %v10244 = vrot.slane %v10236, %v10243
        %v10246 = vunpack.c.l.s4 1966171168
        %v10247 = vunpack.c.0.s8 %v10246
        %v10248 = vlaneseq
        %v10249 = vshrl.u32 %v10248, 7
        %v10250 = vsub.s32 %v10247, %v10249
        %v10251 = vrot.slane %v10237, %v10250
        %v10252 = vcombine.low %v10244, %v10251
        %v10253 = vcombine.low %v7140, %v7154
        %v10254 = vcombine.low %v7162, %v7164
        %v10255 = vcombine.low %v7147, %v7161
        %v10256 = vcombine.low %v7163, %v7165
        %v10258 = vunpack.c.l.s4 1966171168
        %v10259 = vunpack.c.0.s8 %v10258
        %v10260 = vlaneseq
        %v10261 = vshrl.u32 %v10260, 7
        %v10262 = vsub.s32 %v10259, %v10261
        %v10263 = vrot.slane %v10253, %v10262
        %v10265 = vunpack.c.l.s4 1966171168
        %v10266 = vunpack.c.0.s8 %v10265
        %v10267 = vlaneseq
        %v10268 = vshrl.u32 %v10267, 7
        %v10269 = vsub.s32 %v10266, %v10268
        %v10270 = vrot.slane %v10254, %v10269
        %v10272 = vunpack.c.l.s4 1966171168
        %v10273 = vunpack.c.0.s8 %v10272
        %v10274 = vlaneseq
        %v10275 = vshrl.u32 %v10274, 7
        %v10276 = vsub.s32 %v10273, %v10275
        %v10277 = vrot.slane %v10255, %v10276
        %v10279 = vunpack.c.l.s4 1966171168
        %v10280 = vunpack.c.0.s8 %v10279
        %v10281 = vlaneseq
        %v10282 = vshrl.u32 %v10281, 7
        %v10283 = vsub.s32 %v10280, %v10282
        %v10284 = vrot.slane %v10256, %v10283
        %v10285 = vcombine.low %v10263, %v10270
        %v10286 = vcombine.low %v10277, %v10284
        %v10288 = vunpack.c.l.s4 1966171168
        %v10289 = vunpack.c.0.s8 %v10288
        %v10290 = vlaneseq
        %v10291 = vshrl.u32 %v10290, 7
        %v10292 = vsub.s32 %v10289, %v10291
        %v10293 = vrot.slane %v10285, %v10292
        %v10295 = vunpack.c.l.s4 1966171168
        %v10296 = vunpack.c.0.s8 %v10295
        %v10297 = vlaneseq
        %v10298 = vshrl.u32 %v10297, 7
        %v10299 = vsub.s32 %v10296, %v10298
        %v10300 = vrot.slane %v10286, %v10299
        %v10301 = vcombine.low %v10293, %v10300
        %v10302 = vcombine.low %v7189, %v7203
        %v10303 = vcombine.low %v7211, %v7213
        %v10304 = vcombine.low %v7196, %v7210
        %v10305 = vcombine.low %v7212, %v7214
        %v10307 = vunpack.c.l.s4 1966171168
        %v10308 = vunpack.c.0.s8 %v10307
        %v10309 = vlaneseq
        %v10310 = vshrl.u32 %v10309, 7
        %v10311 = vsub.s32 %v10308, %v10310
        %v10312 = vrot.slane %v10302, %v10311
        %v10314 = vunpack.c.l.s4 1966171168
        %v10315 = vunpack.c.0.s8 %v10314
        %v10316 = vlaneseq
        %v10317 = vshrl.u32 %v10316, 7
        %v10318 = vsub.s32 %v10315, %v10317
        %v10319 = vrot.slane %v10303, %v10318
        %v10321 = vunpack.c.l.s4 1966171168
        %v10322 = vunpack.c.0.s8 %v10321
        %v10323 = vlaneseq
        %v10324 = vshrl.u32 %v10323, 7
        %v10325 = vsub.s32 %v10322, %v10324
        %v10326 = vrot.slane %v10304, %v10325
        %v10328 = vunpack.c.l.s4 1966171168
        %v10329 = vunpack.c.0.s8 %v10328
        %v10330 = vlaneseq
        %v10331 = vshrl.u32 %v10330, 7
        %v10332 = vsub.s32 %v10329, %v10331
        %v10333 = vrot.slane %v10305, %v10332
        %v10334 = vcombine.low %v10312, %v10319
        %v10335 = vcombine.low %v10326, %v10333
        %v10337 = vunpack.c.l.s4 1966171168
        %v10338 = vunpack.c.0.s8 %v10337
        %v10339 = vlaneseq
        %v10340 = vshrl.u32 %v10339, 7
        %v10341 = vsub.s32 %v10338, %v10340
        %v10342 = vrot.slane %v10334, %v10341
        %v10344 = vunpack.c.l.s4 1966171168
        %v10345 = vunpack.c.0.s8 %v10344
        %v10346 = vlaneseq
        %v10347 = vshrl.u32 %v10346, 7
        %v10348 = vsub.s32 %v10345, %v10347
        %v10349 = vrot.slane %v10335, %v10348
        %v10350 = vcombine.low %v10342, %v10349
        %v10351 = vcombine.low %v7238, %v7252
        %v10352 = vcombine.low %v7260, %v7262
        %v10353 = vcombine.low %v7245, %v7259
        %v10354 = vcombine.low %v7261, %v7263
        %v10356 = vunpack.c.l.s4 1966171168
        %v10357 = vunpack.c.0.s8 %v10356
        %v10358 = vlaneseq
        %v10359 = vshrl.u32 %v10358, 7
        %v10360 = vsub.s32 %v10357, %v10359
        %v10361 = vrot.slane %v10351, %v10360
        %v10363 = vunpack.c.l.s4 1966171168
        %v10364 = vunpack.c.0.s8 %v10363
        %v10365 = vlaneseq
        %v10366 = vshrl.u32 %v10365, 7
        %v10367 = vsub.s32 %v10364, %v10366
        %v10368 = vrot.slane %v10352, %v10367
        %v10370 = vunpack.c.l.s4 1966171168
        %v10371 = vunpack.c.0.s8 %v10370
        %v10372 = vlaneseq
        %v10373 = vshrl.u32 %v10372, 7
        %v10374 = vsub.s32 %v10371, %v10373
        %v10375 = vrot.slane %v10353, %v10374
        %v10377 = vunpack.c.l.s4 1966171168
        %v10378 = vunpack.c.0.s8 %v10377
        %v10379 = vlaneseq
        %v10380 = vshrl.u32 %v10379, 7
        %v10381 = vsub.s32 %v10378, %v10380
        %v10382 = vrot.slane %v10354, %v10381
        %v10383 = vcombine.low %v10361, %v10368
        %v10384 = vcombine.low %v10375, %v10382
        %v10386 = vunpack.c.l.s4 1966171168
        %v10387 = vunpack.c.0.s8 %v10386
        %v10388 = vlaneseq
        %v10389 = vshrl.u32 %v10388, 7
        %v10390 = vsub.s32 %v10387, %v10389
        %v10391 = vrot.slane %v10383, %v10390
        %v10393 = vunpack.c.l.s4 1966171168
        %v10394 = vunpack.c.0.s8 %v10393
        %v10395 = vlaneseq
        %v10396 = vshrl.u32 %v10395, 7
        %v10397 = vsub.s32 %v10394, %v10396
        %v10398 = vrot.slane %v10384, %v10397
        %v10399 = vcombine.low %v10391, %v10398
        %v10400 = vcombine.low %v7287, %v7301
        %v10401 = vcombine.low %v7309, %v7311
        %v10402 = vcombine.low %v7294, %v7308
        %v10403 = vcombine.low %v7310, %v7312
        %v10405 = vunpack.c.l.s4 1966171168
        %v10406 = vunpack.c.0.s8 %v10405
        %v10407 = vlaneseq
        %v10408 = vshrl.u32 %v10407, 7
        %v10409 = vsub.s32 %v10406, %v10408
        %v10410 = vrot.slane %v10400, %v10409
        %v10412 = vunpack.c.l.s4 1966171168
        %v10413 = vunpack.c.0.s8 %v10412
        %v10414 = vlaneseq
        %v10415 = vshrl.u32 %v10414, 7
        %v10416 = vsub.s32 %v10413, %v10415
        %v10417 = vrot.slane %v10401, %v10416
        %v10419 = vunpack.c.l.s4 1966171168
        %v10420 = vunpack.c.0.s8 %v10419
        %v10421 = vlaneseq
        %v10422 = vshrl.u32 %v10421, 7
        %v10423 = vsub.s32 %v10420, %v10422
        %v10424 = vrot.slane %v10402, %v10423
        %v10426 = vunpack.c.l.s4 1966171168
        %v10427 = vunpack.c.0.s8 %v10426
        %v10428 = vlaneseq
        %v10429 = vshrl.u32 %v10428, 7
        %v10430 = vsub.s32 %v10427, %v10429
        %v10431 = vrot.slane %v10403, %v10430
        %v10432 = vcombine.low %v10410, %v10417
        %v10433 = vcombine.low %v10424, %v10431
        %v10435 = vunpack.c.l.s4 1966171168
        %v10436 = vunpack.c.0.s8 %v10435
        %v10437 = vlaneseq
        %v10438 = vshrl.u32 %v10437, 7
        %v10439 = vsub.s32 %v10436, %v10438
        %v10440 = vrot.slane %v10432, %v10439
        %v10442 = vunpack.c.l.s4 1966171168
        %v10443 = vunpack.c.0.s8 %v10442
        %v10444 = vlaneseq
        %v10445 = vshrl.u32 %v10444, 7
        %v10446 = vsub.s32 %v10443, %v10445
        %v10447 = vrot.slane %v10433, %v10446
        %v10448 = vcombine.low %v10440, %v10447
        %v10449 = vcombine.low %v7336, %v7350
        %v10450 = vcombine.low %v7358, %v7360
        %v10451 = vcombine.low %v7343, %v7357
        %v10452 = vcombine.low %v7359, %v7361
        %v10454 = vunpack.c.l.s4 1966171168
        %v10455 = vunpack.c.0.s8 %v10454
        %v10456 = vlaneseq
        %v10457 = vshrl.u32 %v10456, 7
        %v10458 = vsub.s32 %v10455, %v10457
        %v10459 = vrot.slane %v10449, %v10458
        %v10461 = vunpack.c.l.s4 1966171168
        %v10462 = vunpack.c.0.s8 %v10461
        %v10463 = vlaneseq
        %v10464 = vshrl.u32 %v10463, 7
        %v10465 = vsub.s32 %v10462, %v10464
        %v10466 = vrot.slane %v10450, %v10465
        %v10468 = vunpack.c.l.s4 1966171168
        %v10469 = vunpack.c.0.s8 %v10468
        %v10470 = vlaneseq
        %v10471 = vshrl.u32 %v10470, 7
        %v10472 = vsub.s32 %v10469, %v10471
        %v10473 = vrot.slane %v10451, %v10472
        %v10475 = vunpack.c.l.s4 1966171168
        %v10476 = vunpack.c.0.s8 %v10475
        %v10477 = vlaneseq
        %v10478 = vshrl.u32 %v10477, 7
        %v10479 = vsub.s32 %v10476, %v10478
        %v10480 = vrot.slane %v10452, %v10479
        %v10481 = vcombine.low %v10459, %v10466
        %v10482 = vcombine.low %v10473, %v10480
        %v10484 = vunpack.c.l.s4 1966171168
        %v10485 = vunpack.c.0.s8 %v10484
        %v10486 = vlaneseq
        %v10487 = vshrl.u32 %v10486, 7
        %v10488 = vsub.s32 %v10485, %v10487
        %v10489 = vrot.slane %v10481, %v10488
        %v10491 = vunpack.c.l.s4 1966171168
        %v10492 = vunpack.c.0.s8 %v10491
        %v10493 = vlaneseq
        %v10494 = vshrl.u32 %v10493, 7
        %v10495 = vsub.s32 %v10492, %v10494
        %v10496 = vrot.slane %v10482, %v10495
        %v10497 = vcombine.low %v10489, %v10496
        %v10498 = vcombine.low %v7385, %v7399
        %v10499 = vcombine.low %v7407, %v7409
        %v10500 = vcombine.low %v7392, %v7406
        %v10501 = vcombine.low %v7408, %v7410
        %v10503 = vunpack.c.l.s4 1966171168
        %v10504 = vunpack.c.0.s8 %v10503
        %v10505 = vlaneseq
        %v10506 = vshrl.u32 %v10505, 7
        %v10507 = vsub.s32 %v10504, %v10506
        %v10508 = vrot.slane %v10498, %v10507
        %v10510 = vunpack.c.l.s4 1966171168
        %v10511 = vunpack.c.0.s8 %v10510
        %v10512 = vlaneseq
        %v10513 = vshrl.u32 %v10512, 7
        %v10514 = vsub.s32 %v10511, %v10513
        %v10515 = vrot.slane %v10499, %v10514
        %v10517 = vunpack.c.l.s4 1966171168
        %v10518 = vunpack.c.0.s8 %v10517
        %v10519 = vlaneseq
        %v10520 = vshrl.u32 %v10519, 7
        %v10521 = vsub.s32 %v10518, %v10520
        %v10522 = vrot.slane %v10500, %v10521
        %v10524 = vunpack.c.l.s4 1966171168
        %v10525 = vunpack.c.0.s8 %v10524
        %v10526 = vlaneseq
        %v10527 = vshrl.u32 %v10526, 7
        %v10528 = vsub.s32 %v10525, %v10527
        %v10529 = vrot.slane %v10501, %v10528
        %v10530 = vcombine.low %v10508, %v10515
        %v10531 = vcombine.low %v10522, %v10529
        %v10533 = vunpack.c.l.s4 1966171168
        %v10534 = vunpack.c.0.s8 %v10533
        %v10535 = vlaneseq
        %v10536 = vshrl.u32 %v10535, 7
        %v10537 = vsub.s32 %v10534, %v10536
        %v10538 = vrot.slane %v10530, %v10537
        %v10540 = vunpack.c.l.s4 1966171168
        %v10541 = vunpack.c.0.s8 %v10540
        %v10542 = vlaneseq
        %v10543 = vshrl.u32 %v10542, 7
        %v10544 = vsub.s32 %v10541, %v10543
        %v10545 = vrot.slane %v10531, %v10544
        %v10546 = vcombine.low %v10538, %v10545
        %v10547 = vcombine.low %v7434, %v7448
        %v10548 = vcombine.low %v7456, %v7458
        %v10549 = vcombine.low %v7441, %v7455
        %v10550 = vcombine.low %v7457, %v7459
        %v10552 = vunpack.c.l.s4 1966171168
        %v10553 = vunpack.c.0.s8 %v10552
        %v10554 = vlaneseq
        %v10555 = vshrl.u32 %v10554, 7
        %v10556 = vsub.s32 %v10553, %v10555
        %v10557 = vrot.slane %v10547, %v10556
        %v10559 = vunpack.c.l.s4 1966171168
        %v10560 = vunpack.c.0.s8 %v10559
        %v10561 = vlaneseq
        %v10562 = vshrl.u32 %v10561, 7
        %v10563 = vsub.s32 %v10560, %v10562
        %v10564 = vrot.slane %v10548, %v10563
        %v10566 = vunpack.c.l.s4 1966171168
        %v10567 = vunpack.c.0.s8 %v10566
        %v10568 = vlaneseq
        %v10569 = vshrl.u32 %v10568, 7
        %v10570 = vsub.s32 %v10567, %v10569
        %v10571 = vrot.slane %v10549, %v10570
        %v10573 = vunpack.c.l.s4 1966171168
        %v10574 = vunpack.c.0.s8 %v10573
        %v10575 = vlaneseq
        %v10576 = vshrl.u32 %v10575, 7
        %v10577 = vsub.s32 %v10574, %v10576
        %v10578 = vrot.slane %v10550, %v10577
        %v10579 = vcombine.low %v10557, %v10564
        %v10580 = vcombine.low %v10571, %v10578
        %v10582 = vunpack.c.l.s4 1966171168
        %v10583 = vunpack.c.0.s8 %v10582
        %v10584 = vlaneseq
        %v10585 = vshrl.u32 %v10584, 7
        %v10586 = vsub.s32 %v10583, %v10585
        %v10587 = vrot.slane %v10579, %v10586
        %v10589 = vunpack.c.l.s4 1966171168
        %v10590 = vunpack.c.0.s8 %v10589
        %v10591 = vlaneseq
        %v10592 = vshrl.u32 %v10591, 7
        %v10593 = vsub.s32 %v10590, %v10592
        %v10594 = vrot.slane %v10580, %v10593
        %v10595 = vcombine.low %v10587, %v10594
        %v10596 = vcombine.low %v7483, %v7497
        %v10597 = vcombine.low %v7505, %v7507
        %v10598 = vcombine.low %v7490, %v7504
        %v10599 = vcombine.low %v7506, %v7508
        %v10601 = vunpack.c.l.s4 1966171168
        %v10602 = vunpack.c.0.s8 %v10601
        %v10603 = vlaneseq
        %v10604 = vshrl.u32 %v10603, 7
        %v10605 = vsub.s32 %v10602, %v10604
        %v10606 = vrot.slane %v10596, %v10605
        %v10608 = vunpack.c.l.s4 1966171168
        %v10609 = vunpack.c.0.s8 %v10608
        %v10610 = vlaneseq
        %v10611 = vshrl.u32 %v10610, 7
        %v10612 = vsub.s32 %v10609, %v10611
        %v10613 = vrot.slane %v10597, %v10612
        %v10615 = vunpack.c.l.s4 1966171168
        %v10616 = vunpack.c.0.s8 %v10615
        %v10617 = vlaneseq
        %v10618 = vshrl.u32 %v10617, 7
        %v10619 = vsub.s32 %v10616, %v10618
        %v10620 = vrot.slane %v10598, %v10619
        %v10622 = vunpack.c.l.s4 1966171168
        %v10623 = vunpack.c.0.s8 %v10622
        %v10624 = vlaneseq
        %v10625 = vshrl.u32 %v10624, 7
        %v10626 = vsub.s32 %v10623, %v10625
        %v10627 = vrot.slane %v10599, %v10626
        %v10628 = vcombine.low %v10606, %v10613
        %v10629 = vcombine.low %v10620, %v10627
        %v10631 = vunpack.c.l.s4 1966171168
        %v10632 = vunpack.c.0.s8 %v10631
        %v10633 = vlaneseq
        %v10634 = vshrl.u32 %v10633, 7
        %v10635 = vsub.s32 %v10632, %v10634
        %v10636 = vrot.slane %v10628, %v10635
        %v10638 = vunpack.c.l.s4 1966171168
        %v10639 = vunpack.c.0.s8 %v10638
        %v10640 = vlaneseq
        %v10641 = vshrl.u32 %v10640, 7
        %v10642 = vsub.s32 %v10639, %v10641
        %v10643 = vrot.slane %v10629, %v10642
        %v10644 = vcombine.low %v10636, %v10643
        %v10645 = vcombine.low %v7532, %v7546
        %v10646 = vcombine.low %v7554, %v7556
        %v10647 = vcombine.low %v7539, %v7553
        %v10648 = vcombine.low %v7555, %v7557
        %v10650 = vunpack.c.l.s4 1966171168
        %v10651 = vunpack.c.0.s8 %v10650
        %v10652 = vlaneseq
        %v10653 = vshrl.u32 %v10652, 7
        %v10654 = vsub.s32 %v10651, %v10653
        %v10655 = vrot.slane %v10645, %v10654
        %v10657 = vunpack.c.l.s4 1966171168
        %v10658 = vunpack.c.0.s8 %v10657
        %v10659 = vlaneseq
        %v10660 = vshrl.u32 %v10659, 7
        %v10661 = vsub.s32 %v10658, %v10660
        %v10662 = vrot.slane %v10646, %v10661
        %v10664 = vunpack.c.l.s4 1966171168
        %v10665 = vunpack.c.0.s8 %v10664
        %v10666 = vlaneseq
        %v10667 = vshrl.u32 %v10666, 7
        %v10668 = vsub.s32 %v10665, %v10667
        %v10669 = vrot.slane %v10647, %v10668
        %v10671 = vunpack.c.l.s4 1966171168
        %v10672 = vunpack.c.0.s8 %v10671
        %v10673 = vlaneseq
        %v10674 = vshrl.u32 %v10673, 7
        %v10675 = vsub.s32 %v10672, %v10674
        %v10676 = vrot.slane %v10648, %v10675
        %v10677 = vcombine.low %v10655, %v10662
        %v10678 = vcombine.low %v10669, %v10676
        %v10680 = vunpack.c.l.s4 1966171168
        %v10681 = vunpack.c.0.s8 %v10680
        %v10682 = vlaneseq
        %v10683 = vshrl.u32 %v10682, 7
        %v10684 = vsub.s32 %v10681, %v10683
        %v10685 = vrot.slane %v10677, %v10684
        %v10687 = vunpack.c.l.s4 1966171168
        %v10688 = vunpack.c.0.s8 %v10687
        %v10689 = vlaneseq
        %v10690 = vshrl.u32 %v10689, 7
        %v10691 = vsub.s32 %v10688, %v10690
        %v10692 = vrot.slane %v10678, %v10691
        %v10693 = vcombine.low %v10685, %v10692
        %v10694 = vcombine.low %v7581, %v7595
        %v10695 = vcombine.low %v7603, %v7605
        %v10696 = vcombine.low %v7588, %v7602
        %v10697 = vcombine.low %v7604, %v7606
        %v10699 = vunpack.c.l.s4 1966171168
        %v10700 = vunpack.c.0.s8 %v10699
        %v10701 = vlaneseq
        %v10702 = vshrl.u32 %v10701, 7
        %v10703 = vsub.s32 %v10700, %v10702
        %v10704 = vrot.slane %v10694, %v10703
        %v10706 = vunpack.c.l.s4 1966171168
        %v10707 = vunpack.c.0.s8 %v10706
        %v10708 = vlaneseq
        %v10709 = vshrl.u32 %v10708, 7
        %v10710 = vsub.s32 %v10707, %v10709
        %v10711 = vrot.slane %v10695, %v10710
        %v10713 = vunpack.c.l.s4 1966171168
        %v10714 = vunpack.c.0.s8 %v10713
        %v10715 = vlaneseq
        %v10716 = vshrl.u32 %v10715, 7
        %v10717 = vsub.s32 %v10714, %v10716
        %v10718 = vrot.slane %v10696, %v10717
        %v10720 = vunpack.c.l.s4 1966171168
        %v10721 = vunpack.c.0.s8 %v10720
        %v10722 = vlaneseq
        %v10723 = vshrl.u32 %v10722, 7
        %v10724 = vsub.s32 %v10721, %v10723
        %v10725 = vrot.slane %v10697, %v10724
        %v10726 = vcombine.low %v10704, %v10711
        %v10727 = vcombine.low %v10718, %v10725
        %v10729 = vunpack.c.l.s4 1966171168
        %v10730 = vunpack.c.0.s8 %v10729
        %v10731 = vlaneseq
        %v10732 = vshrl.u32 %v10731, 7
        %v10733 = vsub.s32 %v10730, %v10732
        %v10734 = vrot.slane %v10726, %v10733
        %v10736 = vunpack.c.l.s4 1966171168
        %v10737 = vunpack.c.0.s8 %v10736
        %v10738 = vlaneseq
        %v10739 = vshrl.u32 %v10738, 7
        %v10740 = vsub.s32 %v10737, %v10739
        %v10741 = vrot.slane %v10727, %v10740
        %v10742 = vcombine.low %v10734, %v10741
        %v10743 = vcombine.low %v7630, %v7644
        %v10744 = vcombine.low %v7652, %v7654
        %v10745 = vcombine.low %v7637, %v7651
        %v10746 = vcombine.low %v7653, %v7655
        %v10748 = vunpack.c.l.s4 1966171168
        %v10749 = vunpack.c.0.s8 %v10748
        %v10750 = vlaneseq
        %v10751 = vshrl.u32 %v10750, 7
        %v10752 = vsub.s32 %v10749, %v10751
        %v10753 = vrot.slane %v10743, %v10752
        %v10755 = vunpack.c.l.s4 1966171168
        %v10756 = vunpack.c.0.s8 %v10755
        %v10757 = vlaneseq
        %v10758 = vshrl.u32 %v10757, 7
        %v10759 = vsub.s32 %v10756, %v10758
        %v10760 = vrot.slane %v10744, %v10759
        %v10762 = vunpack.c.l.s4 1966171168
        %v10763 = vunpack.c.0.s8 %v10762
        %v10764 = vlaneseq
        %v10765 = vshrl.u32 %v10764, 7
        %v10766 = vsub.s32 %v10763, %v10765
        %v10767 = vrot.slane %v10745, %v10766
        %v10769 = vunpack.c.l.s4 1966171168
        %v10770 = vunpack.c.0.s8 %v10769
        %v10771 = vlaneseq
        %v10772 = vshrl.u32 %v10771, 7
        %v10773 = vsub.s32 %v10770, %v10772
        %v10774 = vrot.slane %v10746, %v10773
        %v10775 = vcombine.low %v10753, %v10760
        %v10776 = vcombine.low %v10767, %v10774
        %v10778 = vunpack.c.l.s4 1966171168
        %v10779 = vunpack.c.0.s8 %v10778
        %v10780 = vlaneseq
        %v10781 = vshrl.u32 %v10780, 7
        %v10782 = vsub.s32 %v10779, %v10781
        %v10783 = vrot.slane %v10775, %v10782
        %v10785 = vunpack.c.l.s4 1966171168
        %v10786 = vunpack.c.0.s8 %v10785
        %v10787 = vlaneseq
        %v10788 = vshrl.u32 %v10787, 7
        %v10789 = vsub.s32 %v10786, %v10788
        %v10790 = vrot.slane %v10776, %v10789
        %v10791 = vcombine.low %v10783, %v10790
        %v10792 = vcombine.low %v7679, %v7693
        %v10793 = vcombine.low %v7701, %v7703
        %v10794 = vcombine.low %v7686, %v7700
        %v10795 = vcombine.low %v7702, %v7704
        %v10797 = vunpack.c.l.s4 1966171168
        %v10798 = vunpack.c.0.s8 %v10797
        %v10799 = vlaneseq
        %v10800 = vshrl.u32 %v10799, 7
        %v10801 = vsub.s32 %v10798, %v10800
        %v10802 = vrot.slane %v10792, %v10801
        %v10804 = vunpack.c.l.s4 1966171168
        %v10805 = vunpack.c.0.s8 %v10804
        %v10806 = vlaneseq
        %v10807 = vshrl.u32 %v10806, 7
        %v10808 = vsub.s32 %v10805, %v10807
        %v10809 = vrot.slane %v10793, %v10808
        %v10811 = vunpack.c.l.s4 1966171168
        %v10812 = vunpack.c.0.s8 %v10811
        %v10813 = vlaneseq
        %v10814 = vshrl.u32 %v10813, 7
        %v10815 = vsub.s32 %v10812, %v10814
        %v10816 = vrot.slane %v10794, %v10815
        %v10818 = vunpack.c.l.s4 1966171168
        %v10819 = vunpack.c.0.s8 %v10818
        %v10820 = vlaneseq
        %v10821 = vshrl.u32 %v10820, 7
        %v10822 = vsub.s32 %v10819, %v10821
        %v10823 = vrot.slane %v10795, %v10822
        %v10824 = vcombine.low %v10802, %v10809
        %v10825 = vcombine.low %v10816, %v10823
        %v10827 = vunpack.c.l.s4 1966171168
        %v10828 = vunpack.c.0.s8 %v10827
        %v10829 = vlaneseq
        %v10830 = vshrl.u32 %v10829, 7
        %v10831 = vsub.s32 %v10828, %v10830
        %v10832 = vrot.slane %v10824, %v10831
        %v10834 = vunpack.c.l.s4 1966171168
        %v10835 = vunpack.c.0.s8 %v10834
        %v10836 = vlaneseq
        %v10837 = vshrl.u32 %v10836, 7
        %v10838 = vsub.s32 %v10835, %v10837
        %v10839 = vrot.slane %v10825, %v10838
        %v10840 = vcombine.low %v10832, %v10839
        %v10841 = vcombine.low %v7728, %v7742
        %v10842 = vcombine.low %v7750, %v7752
        %v10843 = vcombine.low %v7735, %v7749
        %v10844 = vcombine.low %v7751, %v7753
        %v10846 = vunpack.c.l.s4 1966171168
        %v10847 = vunpack.c.0.s8 %v10846
        %v10848 = vlaneseq
        %v10849 = vshrl.u32 %v10848, 7
        %v10850 = vsub.s32 %v10847, %v10849
        %v10851 = vrot.slane %v10841, %v10850
        %v10853 = vunpack.c.l.s4 1966171168
        %v10854 = vunpack.c.0.s8 %v10853
        %v10855 = vlaneseq
        %v10856 = vshrl.u32 %v10855, 7
        %v10857 = vsub.s32 %v10854, %v10856
        %v10858 = vrot.slane %v10842, %v10857
        %v10860 = vunpack.c.l.s4 1966171168
        %v10861 = vunpack.c.0.s8 %v10860
        %v10862 = vlaneseq
        %v10863 = vshrl.u32 %v10862, 7
        %v10864 = vsub.s32 %v10861, %v10863
        %v10865 = vrot.slane %v10843, %v10864
        %v10867 = vunpack.c.l.s4 1966171168
        %v10868 = vunpack.c.0.s8 %v10867
        %v10869 = vlaneseq
        %v10870 = vshrl.u32 %v10869, 7
        %v10871 = vsub.s32 %v10868, %v10870
        %v10872 = vrot.slane %v10844, %v10871
        %v10873 = vcombine.low %v10851, %v10858
        %v10874 = vcombine.low %v10865, %v10872
        %v10876 = vunpack.c.l.s4 1966171168
        %v10877 = vunpack.c.0.s8 %v10876
        %v10878 = vlaneseq
        %v10879 = vshrl.u32 %v10878, 7
        %v10880 = vsub.s32 %v10877, %v10879
        %v10881 = vrot.slane %v10873, %v10880
        %v10883 = vunpack.c.l.s4 1966171168
        %v10884 = vunpack.c.0.s8 %v10883
        %v10885 = vlaneseq
        %v10886 = vshrl.u32 %v10885, 7
        %v10887 = vsub.s32 %v10884, %v10886
        %v10888 = vrot.slane %v10874, %v10887
        %v10889 = vcombine.low %v10881, %v10888
        %v10890 = vcombine.low %v7777, %v7791
        %v10891 = vcombine.low %v7799, %v7801
        %v10892 = vcombine.low %v7784, %v7798
        %v10893 = vcombine.low %v7800, %v7802
        %v10895 = vunpack.c.l.s4 1966171168
        %v10896 = vunpack.c.0.s8 %v10895
        %v10897 = vlaneseq
        %v10898 = vshrl.u32 %v10897, 7
        %v10899 = vsub.s32 %v10896, %v10898
        %v10900 = vrot.slane %v10890, %v10899
        %v10902 = vunpack.c.l.s4 1966171168
        %v10903 = vunpack.c.0.s8 %v10902
        %v10904 = vlaneseq
        %v10905 = vshrl.u32 %v10904, 7
        %v10906 = vsub.s32 %v10903, %v10905
        %v10907 = vrot.slane %v10891, %v10906
        %v10909 = vunpack.c.l.s4 1966171168
        %v10910 = vunpack.c.0.s8 %v10909
        %v10911 = vlaneseq
        %v10912 = vshrl.u32 %v10911, 7
        %v10913 = vsub.s32 %v10910, %v10912
        %v10914 = vrot.slane %v10892, %v10913
        %v10916 = vunpack.c.l.s4 1966171168
        %v10917 = vunpack.c.0.s8 %v10916
        %v10918 = vlaneseq
        %v10919 = vshrl.u32 %v10918, 7
        %v10920 = vsub.s32 %v10917, %v10919
        %v10921 = vrot.slane %v10893, %v10920
        %v10922 = vcombine.low %v10900, %v10907
        %v10923 = vcombine.low %v10914, %v10921
        %v10925 = vunpack.c.l.s4 1966171168
        %v10926 = vunpack.c.0.s8 %v10925
        %v10927 = vlaneseq
        %v10928 = vshrl.u32 %v10927, 7
        %v10929 = vsub.s32 %v10926, %v10928
        %v10930 = vrot.slane %v10922, %v10929
        %v10932 = vunpack.c.l.s4 1966171168
        %v10933 = vunpack.c.0.s8 %v10932
        %v10934 = vlaneseq
        %v10935 = vshrl.u32 %v10934, 7
        %v10936 = vsub.s32 %v10933, %v10935
        %v10937 = vrot.slane %v10923, %v10936
        %v10938 = vcombine.low %v10930, %v10937
        %v10939 = vcombine.low %v7826, %v7840
        %v10940 = vcombine.low %v7848, %v7850
        %v10941 = vcombine.low %v7833, %v7847
        %v10942 = vcombine.low %v7849, %v7851
        %v10944 = vunpack.c.l.s4 1966171168
        %v10945 = vunpack.c.0.s8 %v10944
        %v10946 = vlaneseq
        %v10947 = vshrl.u32 %v10946, 7
        %v10948 = vsub.s32 %v10945, %v10947
        %v10949 = vrot.slane %v10939, %v10948
        %v10951 = vunpack.c.l.s4 1966171168
        %v10952 = vunpack.c.0.s8 %v10951
        %v10953 = vlaneseq
        %v10954 = vshrl.u32 %v10953, 7
        %v10955 = vsub.s32 %v10952, %v10954
        %v10956 = vrot.slane %v10940, %v10955
        %v10958 = vunpack.c.l.s4 1966171168
        %v10959 = vunpack.c.0.s8 %v10958
        %v10960 = vlaneseq
        %v10961 = vshrl.u32 %v10960, 7
        %v10962 = vsub.s32 %v10959, %v10961
        %v10963 = vrot.slane %v10941, %v10962
        %v10965 = vunpack.c.l.s4 1966171168
        %v10966 = vunpack.c.0.s8 %v10965
        %v10967 = vlaneseq
        %v10968 = vshrl.u32 %v10967, 7
        %v10969 = vsub.s32 %v10966, %v10968
        %v10970 = vrot.slane %v10942, %v10969
        %v10971 = vcombine.low %v10949, %v10956
        %v10972 = vcombine.low %v10963, %v10970
        %v10974 = vunpack.c.l.s4 1966171168
        %v10975 = vunpack.c.0.s8 %v10974
        %v10976 = vlaneseq
        %v10977 = vshrl.u32 %v10976, 7
        %v10978 = vsub.s32 %v10975, %v10977
        %v10979 = vrot.slane %v10971, %v10978
        %v10981 = vunpack.c.l.s4 1966171168
        %v10982 = vunpack.c.0.s8 %v10981
        %v10983 = vlaneseq
        %v10984 = vshrl.u32 %v10983, 7
        %v10985 = vsub.s32 %v10982, %v10984
        %v10986 = vrot.slane %v10972, %v10985
        %v10987 = vcombine.low %v10979, %v10986
        %10988 = vset.pattern.permute.xlu0 64
        %10989 = vperm.xlu0 %10988, %v7900
        %v10990 = vpop.permute.xlu0 %10989
        %10991 = vset.pattern.permute.xlu0 64
        %10992 = vperm.xlu0 %10991, %v7949
        %v10993 = vpop.permute.xlu0 %10992
        %10994 = vset.pattern.permute.xlu0 64
        %10995 = vperm.xlu0 %10994, %v7998
        %v10996 = vpop.permute.xlu0 %10995
        %10997 = vset.pattern.permute.xlu0 64
        %10998 = vperm.xlu0 %10997, %v8047
        %v10999 = vpop.permute.xlu0 %10998
        %11000 = vset.pattern.permute.xlu0 64
        %11001 = vperm.xlu0 %11000, %v8096
        %v11002 = vpop.permute.xlu0 %11001
        %11003 = vset.pattern.permute.xlu0 64
        %11004 = vperm.xlu0 %11003, %v8145
        %v11005 = vpop.permute.xlu0 %11004
        %11006 = vset.pattern.permute.xlu0 64
        %11007 = vperm.xlu0 %11006, %v8194
        %v11008 = vpop.permute.xlu0 %11007
        %11009 = vset.pattern.permute.xlu0 64
        %11010 = vperm.xlu0 %11009, %v8243
        %v11011 = vpop.permute.xlu0 %11010
        %11012 = vset.pattern.permute.xlu0 64
        %11013 = vperm.xlu0 %11012, %v8292
        %v11014 = vpop.permute.xlu0 %11013
        %11015 = vset.pattern.permute.xlu0 64
        %11016 = vperm.xlu0 %11015, %v8341
        %v11017 = vpop.permute.xlu0 %11016
        %11018 = vset.pattern.permute.xlu0 64
        %11019 = vperm.xlu0 %11018, %v8390
        %v11020 = vpop.permute.xlu0 %11019
        %11021 = vset.pattern.permute.xlu0 64
        %11022 = vperm.xlu0 %11021, %v8439
        %v11023 = vpop.permute.xlu0 %11022
        %11024 = vset.pattern.permute.xlu0 64
        %11025 = vperm.xlu0 %11024, %v8488
        %v11026 = vpop.permute.xlu0 %11025
        %11027 = vset.pattern.permute.xlu0 64
        %11028 = vperm.xlu0 %11027, %v8537
        %v11029 = vpop.permute.xlu0 %11028
        %11030 = vset.pattern.permute.xlu0 64
        %11031 = vperm.xlu0 %11030, %v8586
        %v11032 = vpop.permute.xlu0 %11031
        %11033 = vset.pattern.permute.xlu0 64
        %11034 = vperm.xlu0 %11033, %v8635
        %v11035 = vpop.permute.xlu0 %11034
        %11036 = vset.pattern.permute.xlu0 64
        %11037 = vperm.xlu0 %11036, %v8684
        %v11038 = vpop.permute.xlu0 %11037
        %11039 = vset.pattern.permute.xlu0 64
        %11040 = vperm.xlu0 %11039, %v8733
        %v11041 = vpop.permute.xlu0 %11040
        %11042 = vset.pattern.permute.xlu0 64
        %11043 = vperm.xlu0 %11042, %v8782
        %v11044 = vpop.permute.xlu0 %11043
        %11045 = vset.pattern.permute.xlu0 64
        %11046 = vperm.xlu0 %11045, %v8831
        %v11047 = vpop.permute.xlu0 %11046
        %11048 = vset.pattern.permute.xlu0 64
        %11049 = vperm.xlu0 %11048, %v8880
        %v11050 = vpop.permute.xlu0 %11049
        %11051 = vset.pattern.permute.xlu0 64
        %11052 = vperm.xlu0 %11051, %v8929
        %v11053 = vpop.permute.xlu0 %11052
        %11054 = vset.pattern.permute.xlu0 64
        %11055 = vperm.xlu0 %11054, %v8978
        %v11056 = vpop.permute.xlu0 %11055
        %11057 = vset.pattern.permute.xlu0 64
        %11058 = vperm.xlu0 %11057, %v9027
        %v11059 = vpop.permute.xlu0 %11058
        %11060 = vset.pattern.permute.xlu0 64
        %11061 = vperm.xlu0 %11060, %v9076
        %v11062 = vpop.permute.xlu0 %11061
        %11063 = vset.pattern.permute.xlu0 64
        %11064 = vperm.xlu0 %11063, %v9125
        %v11065 = vpop.permute.xlu0 %11064
        %11066 = vset.pattern.permute.xlu0 64
        %11067 = vperm.xlu0 %11066, %v9174
        %v11068 = vpop.permute.xlu0 %11067
        %11069 = vset.pattern.permute.xlu0 64
        %11070 = vperm.xlu0 %11069, %v9223
        %v11071 = vpop.permute.xlu0 %11070
        %11072 = vset.pattern.permute.xlu0 64
        %11073 = vperm.xlu0 %11072, %v9272
        %v11074 = vpop.permute.xlu0 %11073
        %11075 = vset.pattern.permute.xlu0 64
        %11076 = vperm.xlu0 %11075, %v9321
        %v11077 = vpop.permute.xlu0 %11076
        %11078 = vset.pattern.permute.xlu0 64
        %11079 = vperm.xlu0 %11078, %v9370
        %v11080 = vpop.permute.xlu0 %11079
        %11081 = vset.pattern.permute.xlu0 64
        %11082 = vperm.xlu0 %11081, %v9419
        %v11083 = vpop.permute.xlu0 %11082
        %11084 = vset.pattern.permute.xlu0 64
        %11085 = vperm.xlu0 %11084, %v9468
        %v11086 = vpop.permute.xlu0 %11085
        %11087 = vset.pattern.permute.xlu0 64
        %11088 = vperm.xlu0 %11087, %v9517
        %v11089 = vpop.permute.xlu0 %11088
        %11090 = vset.pattern.permute.xlu0 64
        %11091 = vperm.xlu0 %11090, %v9566
        %v11092 = vpop.permute.xlu0 %11091
        %11093 = vset.pattern.permute.xlu0 64
        %11094 = vperm.xlu0 %11093, %v9615
        %v11095 = vpop.permute.xlu0 %11094
        %11096 = vset.pattern.permute.xlu0 64
        %11097 = vperm.xlu0 %11096, %v9664
        %v11098 = vpop.permute.xlu0 %11097
        %11099 = vset.pattern.permute.xlu0 64
        %11100 = vperm.xlu0 %11099, %v9713
        %v11101 = vpop.permute.xlu0 %11100
        %11102 = vset.pattern.permute.xlu0 64
        %11103 = vperm.xlu0 %11102, %v9762
        %v11104 = vpop.permute.xlu0 %11103
        %11105 = vset.pattern.permute.xlu0 64
        %11106 = vperm.xlu0 %11105, %v9811
        %v11107 = vpop.permute.xlu0 %11106
        %11108 = vset.pattern.permute.xlu0 64
        %11109 = vperm.xlu0 %11108, %v9860
        %v11110 = vpop.permute.xlu0 %11109
        %11111 = vset.pattern.permute.xlu0 64
        %11112 = vperm.xlu0 %11111, %v9909
        %v11113 = vpop.permute.xlu0 %11112
        %11114 = vset.pattern.permute.xlu0 64
        %11115 = vperm.xlu0 %11114, %v9958
        %v11116 = vpop.permute.xlu0 %11115
        %11117 = vset.pattern.permute.xlu0 64
        %11118 = vperm.xlu0 %11117, %v10007
        %v11119 = vpop.permute.xlu0 %11118
        %11120 = vset.pattern.permute.xlu0 64
        %11121 = vperm.xlu0 %11120, %v10056
        %v11122 = vpop.permute.xlu0 %11121
        %11123 = vset.pattern.permute.xlu0 64
        %11124 = vperm.xlu0 %11123, %v10105
        %v11125 = vpop.permute.xlu0 %11124
        %11126 = vset.pattern.permute.xlu0 64
        %11127 = vperm.xlu0 %11126, %v10154
        %v11128 = vpop.permute.xlu0 %11127
        %11129 = vset.pattern.permute.xlu0 64
        %11130 = vperm.xlu0 %11129, %v10203
        %v11131 = vpop.permute.xlu0 %11130
        %11132 = vset.pattern.permute.xlu0 64
        %11133 = vperm.xlu0 %11132, %v10252
        %v11134 = vpop.permute.xlu0 %11133
        %11135 = vset.pattern.permute.xlu0 64
        %11136 = vperm.xlu0 %11135, %v10301
        %v11137 = vpop.permute.xlu0 %11136
        %11138 = vset.pattern.permute.xlu0 64
        %11139 = vperm.xlu0 %11138, %v10350
        %v11140 = vpop.permute.xlu0 %11139
        %11141 = vset.pattern.permute.xlu0 64
        %11142 = vperm.xlu0 %11141, %v10399
        %v11143 = vpop.permute.xlu0 %11142
        %11144 = vset.pattern.permute.xlu0 64
        %11145 = vperm.xlu0 %11144, %v10448
        %v11146 = vpop.permute.xlu0 %11145
        %11147 = vset.pattern.permute.xlu0 64
        %11148 = vperm.xlu0 %11147, %v10497
        %v11149 = vpop.permute.xlu0 %11148
        %11150 = vset.pattern.permute.xlu0 64
        %11151 = vperm.xlu0 %11150, %v10546
        %v11152 = vpop.permute.xlu0 %11151
        %11153 = vset.pattern.permute.xlu0 64
        %11154 = vperm.xlu0 %11153, %v10595
        %v11155 = vpop.permute.xlu0 %11154
        %11156 = vset.pattern.permute.xlu0 64
        %11157 = vperm.xlu0 %11156, %v10644
        %v11158 = vpop.permute.xlu0 %11157
        %11159 = vset.pattern.permute.xlu0 64
        %11160 = vperm.xlu0 %11159, %v10693
        %v11161 = vpop.permute.xlu0 %11160
        %11162 = vset.pattern.permute.xlu0 64
        %11163 = vperm.xlu0 %11162, %v10742
        %v11164 = vpop.permute.xlu0 %11163
        %11165 = vset.pattern.permute.xlu0 64
        %11166 = vperm.xlu0 %11165, %v10791
        %v11167 = vpop.permute.xlu0 %11166
        %11168 = vset.pattern.permute.xlu0 64
        %11169 = vperm.xlu0 %11168, %v10840
        %v11170 = vpop.permute.xlu0 %11169
        %11171 = vset.pattern.permute.xlu0 64
        %11172 = vperm.xlu0 %11171, %v10889
        %v11173 = vpop.permute.xlu0 %11172
        %11174 = vset.pattern.permute.xlu0 64
        %11175 = vperm.xlu0 %11174, %v10938
        %v11176 = vpop.permute.xlu0 %11175
        %11177 = vset.pattern.permute.xlu0 64
        %11178 = vperm.xlu0 %11177, %v10987
        %v11179 = vpop.permute.xlu0 %11178
        %v11180 = vlaneseq
        %v11181 = vshrl.u32 %v11180, 7
        %v11182 = vsub.s32 %v286, %v11181
        %v11183 = vrot.slane %v10990, %v11182
        %v11184 = vadd.s32 %v286, 4294967288
        %v11185 = vlaneseq
        %v11186 = vshrl.u32 %v11185, 7
        %v11187 = vsub.s32 %v11184, %v11186
        %v11188 = vrot.slane %v10993, %v11187
        %vm11189 = vcmask 130112
        %v11190 = vsel %vm11189, %v11188, %v11183
        %v11191 = vadd.s32 %v286, 4294967280
        %v11192 = vlaneseq
        %v11193 = vshrl.u32 %v11192, 7
        %v11194 = vsub.s32 %v11191, %v11193
        %v11195 = vrot.slane %v10996, %v11194
        %vm11196 = vcmask 195712
        %v11197 = vsel %vm11196, %v11195, %v11190
        %v11198 = vadd.s32 %v286, 4294967272
        %v11199 = vlaneseq
        %v11200 = vshrl.u32 %v11199, 7
        %v11201 = vsub.s32 %v11198, %v11200
        %v11202 = vrot.slane %v10999, %v11201
        %vm11203 = vcmask 261312
        %v11204 = vsel %vm11203, %v11202, %v11197
        %v11205 = vadd.s32 %v286, 4294967264
        %v11206 = vlaneseq
        %v11207 = vshrl.u32 %v11206, 7
        %v11208 = vsub.s32 %v11205, %v11207
        %v11209 = vrot.slane %v11002, %v11208
        %vm11210 = vcmask 326912
        %v11211 = vsel %vm11210, %v11209, %v11204
        %v11212 = vadd.s32 %v286, 4294967256
        %v11213 = vlaneseq
        %v11214 = vshrl.u32 %v11213, 7
        %v11215 = vsub.s32 %v11212, %v11214
        %v11216 = vrot.slane %v11005, %v11215
        %vm11217 = vcmask 392512
        %v11218 = vsel %vm11217, %v11216, %v11211
        %v11219 = vadd.s32 %v286, 4294967248
        %v11220 = vlaneseq
        %v11221 = vshrl.u32 %v11220, 7
        %v11222 = vsub.s32 %v11219, %v11221
        %v11223 = vrot.slane %v11008, %v11222
        %vm11224 = vcmask 458112
        %v11225 = vsel %vm11224, %v11223, %v11218
        %v11226 = vadd.s32 %v286, 4294967240
        %v11227 = vlaneseq
        %v11228 = vshrl.u32 %v11227, 7
        %v11229 = vsub.s32 %v11226, %v11228
        %v11230 = vrot.slane %v11011, %v11229
        %vm11231 = vcmask 523712
        %v11232 = vsel %vm11231, %v11230, %v11225
        %v11233 = vadd.s32 %v286, 4294967232
        %v11234 = vlaneseq
        %v11235 = vshrl.u32 %v11234, 7
        %v11236 = vsub.s32 %v11233, %v11235
        %v11237 = vrot.slane %v11014, %v11236
        %vm11238 = vcmask 589312
        %v11239 = vsel %vm11238, %v11237, %v11232
        %v11240 = vadd.s32 %v286, 4294967224
        %v11241 = vlaneseq
        %v11242 = vshrl.u32 %v11241, 7
        %v11243 = vsub.s32 %v11240, %v11242
        %v11244 = vrot.slane %v11017, %v11243
        %vm11245 = vcmask 654912
        %v11246 = vsel %vm11245, %v11244, %v11239
        %v11247 = vadd.s32 %v286, 4294967216
        %v11248 = vlaneseq
        %v11249 = vshrl.u32 %v11248, 7
        %v11250 = vsub.s32 %v11247, %v11249
        %v11251 = vrot.slane %v11020, %v11250
        %vm11252 = vcmask 720512
        %v11253 = vsel %vm11252, %v11251, %v11246
        %v11254 = vadd.s32 %v286, 4294967208
        %v11255 = vlaneseq
        %v11256 = vshrl.u32 %v11255, 7
        %v11257 = vsub.s32 %v11254, %v11256
        %v11258 = vrot.slane %v11023, %v11257
        %vm11259 = vcmask 786112
        %v11260 = vsel %vm11259, %v11258, %v11253
        %v11261 = vadd.s32 %v286, 4294967200
        %v11262 = vlaneseq
        %v11263 = vshrl.u32 %v11262, 7
        %v11264 = vsub.s32 %v11261, %v11263
        %v11265 = vrot.slane %v11026, %v11264
        %vm11266 = vcmask 851712
        %v11267 = vsel %vm11266, %v11265, %v11260
        %v11268 = vadd.s32 %v286, 4294967192
        %v11269 = vlaneseq
        %v11270 = vshrl.u32 %v11269, 7
        %v11271 = vsub.s32 %v11268, %v11270
        %v11272 = vrot.slane %v11029, %v11271
        %vm11273 = vcmask 917312
        %v11274 = vsel %vm11273, %v11272, %v11267
        %v11275 = vadd.s32 %v286, 4294967184
        %v11276 = vlaneseq
        %v11277 = vshrl.u32 %v11276, 7
        %v11278 = vsub.s32 %v11275, %v11277
        %v11279 = vrot.slane %v11032, %v11278
        %vm11280 = vcmask 982912
        %v11281 = vsel %vm11280, %v11279, %v11274
        %v11282 = vadd.s32 %v286, 4294967176
        %v11283 = vlaneseq
        %v11284 = vshrl.u32 %v11283, 7
        %v11285 = vsub.s32 %v11282, %v11284
        %v11286 = vrot.slane %v11035, %v11285
        %vm11287 = vcmask 1048512
        %v11288 = vsel %vm11287, %v11286, %v11281
        %v11289 = vlaneseq
        %v11290 = vshrl.u32 %v11289, 7
        %v11291 = vsub.s32 %v286, %v11290
        %v11292 = vrot.slane %v11038, %v11291
        %v11293 = vlaneseq
        %v11294 = vshrl.u32 %v11293, 7
        %v11295 = vsub.s32 %v11184, %v11294
        %v11296 = vrot.slane %v11041, %v11295
        %v11297 = vsel %vm11189, %v11296, %v11292
        %v11298 = vlaneseq
        %v11299 = vshrl.u32 %v11298, 7
        %v11300 = vsub.s32 %v11191, %v11299
        %v11301 = vrot.slane %v11044, %v11300
        %v11302 = vsel %vm11196, %v11301, %v11297
        %v11303 = vlaneseq
        %v11304 = vshrl.u32 %v11303, 7
        %v11305 = vsub.s32 %v11198, %v11304
        %v11306 = vrot.slane %v11047, %v11305
        %v11307 = vsel %vm11203, %v11306, %v11302
        %v11308 = vlaneseq
        %v11309 = vshrl.u32 %v11308, 7
        %v11310 = vsub.s32 %v11205, %v11309
        %v11311 = vrot.slane %v11050, %v11310
        %v11312 = vsel %vm11210, %v11311, %v11307
        %v11313 = vlaneseq
        %v11314 = vshrl.u32 %v11313, 7
        %v11315 = vsub.s32 %v11212, %v11314
        %v11316 = vrot.slane %v11053, %v11315
        %v11317 = vsel %vm11217, %v11316, %v11312
        %v11318 = vlaneseq
        %v11319 = vshrl.u32 %v11318, 7
        %v11320 = vsub.s32 %v11219, %v11319
        %v11321 = vrot.slane %v11056, %v11320
        %v11322 = vsel %vm11224, %v11321, %v11317
        %v11323 = vlaneseq
        %v11324 = vshrl.u32 %v11323, 7
        %v11325 = vsub.s32 %v11226, %v11324
        %v11326 = vrot.slane %v11059, %v11325
        %v11327 = vsel %vm11231, %v11326, %v11322
        %v11328 = vlaneseq
        %v11329 = vshrl.u32 %v11328, 7
        %v11330 = vsub.s32 %v11233, %v11329
        %v11331 = vrot.slane %v11062, %v11330
        %v11332 = vsel %vm11238, %v11331, %v11327
        %v11333 = vlaneseq
        %v11334 = vshrl.u32 %v11333, 7
        %v11335 = vsub.s32 %v11240, %v11334
        %v11336 = vrot.slane %v11065, %v11335
        %v11337 = vsel %vm11245, %v11336, %v11332
        %v11338 = vlaneseq
        %v11339 = vshrl.u32 %v11338, 7
        %v11340 = vsub.s32 %v11247, %v11339
        %v11341 = vrot.slane %v11068, %v11340
        %v11342 = vsel %vm11252, %v11341, %v11337
        %v11343 = vlaneseq
        %v11344 = vshrl.u32 %v11343, 7
        %v11345 = vsub.s32 %v11254, %v11344
        %v11346 = vrot.slane %v11071, %v11345
        %v11347 = vsel %vm11259, %v11346, %v11342
        %v11348 = vlaneseq
        %v11349 = vshrl.u32 %v11348, 7
        %v11350 = vsub.s32 %v11261, %v11349
        %v11351 = vrot.slane %v11074, %v11350
        %v11352 = vsel %vm11266, %v11351, %v11347
        %v11353 = vlaneseq
        %v11354 = vshrl.u32 %v11353, 7
        %v11355 = vsub.s32 %v11268, %v11354
        %v11356 = vrot.slane %v11077, %v11355
        %v11357 = vsel %vm11273, %v11356, %v11352
        %v11358 = vlaneseq
        %v11359 = vshrl.u32 %v11358, 7
        %v11360 = vsub.s32 %v11275, %v11359
        %v11361 = vrot.slane %v11080, %v11360
        %v11362 = vsel %vm11280, %v11361, %v11357
        %v11363 = vlaneseq
        %v11364 = vshrl.u32 %v11363, 7
        %v11365 = vsub.s32 %v11282, %v11364
        %v11366 = vrot.slane %v11083, %v11365
        %v11367 = vsel %vm11287, %v11366, %v11362
        %v11368 = vlaneseq
        %v11369 = vshrl.u32 %v11368, 7
        %v11370 = vsub.s32 %v286, %v11369
        %v11371 = vrot.slane %v11086, %v11370
        %v11372 = vlaneseq
        %v11373 = vshrl.u32 %v11372, 7
        %v11374 = vsub.s32 %v11184, %v11373
        %v11375 = vrot.slane %v11089, %v11374
        %v11376 = vsel %vm11189, %v11375, %v11371
        %v11377 = vlaneseq
        %v11378 = vshrl.u32 %v11377, 7
        %v11379 = vsub.s32 %v11191, %v11378
        %v11380 = vrot.slane %v11092, %v11379
        %v11381 = vsel %vm11196, %v11380, %v11376
        %v11382 = vlaneseq
        %v11383 = vshrl.u32 %v11382, 7
        %v11384 = vsub.s32 %v11198, %v11383
        %v11385 = vrot.slane %v11095, %v11384
        %v11386 = vsel %vm11203, %v11385, %v11381
        %v11387 = vlaneseq
        %v11388 = vshrl.u32 %v11387, 7
        %v11389 = vsub.s32 %v11205, %v11388
        %v11390 = vrot.slane %v11098, %v11389
        %v11391 = vsel %vm11210, %v11390, %v11386
        %v11392 = vlaneseq
        %v11393 = vshrl.u32 %v11392, 7
        %v11394 = vsub.s32 %v11212, %v11393
        %v11395 = vrot.slane %v11101, %v11394
        %v11396 = vsel %vm11217, %v11395, %v11391
        %v11397 = vlaneseq
        %v11398 = vshrl.u32 %v11397, 7
        %v11399 = vsub.s32 %v11219, %v11398
        %v11400 = vrot.slane %v11104, %v11399
        %v11401 = vsel %vm11224, %v11400, %v11396
        %v11402 = vlaneseq
        %v11403 = vshrl.u32 %v11402, 7
        %v11404 = vsub.s32 %v11226, %v11403
        %v11405 = vrot.slane %v11107, %v11404
        %v11406 = vsel %vm11231, %v11405, %v11401
        %v11407 = vlaneseq
        %v11408 = vshrl.u32 %v11407, 7
        %v11409 = vsub.s32 %v11233, %v11408
        %v11410 = vrot.slane %v11110, %v11409
        %v11411 = vsel %vm11238, %v11410, %v11406
        %v11412 = vlaneseq
        %v11413 = vshrl.u32 %v11412, 7
        %v11414 = vsub.s32 %v11240, %v11413
        %v11415 = vrot.slane %v11113, %v11414
        %v11416 = vsel %vm11245, %v11415, %v11411
        %v11417 = vlaneseq
        %v11418 = vshrl.u32 %v11417, 7
        %v11419 = vsub.s32 %v11247, %v11418
        %v11420 = vrot.slane %v11116, %v11419
        %v11421 = vsel %vm11252, %v11420, %v11416
        %v11422 = vlaneseq
        %v11423 = vshrl.u32 %v11422, 7
        %v11424 = vsub.s32 %v11254, %v11423
        %v11425 = vrot.slane %v11119, %v11424
        %v11426 = vsel %vm11259, %v11425, %v11421
        %v11427 = vlaneseq
        %v11428 = vshrl.u32 %v11427, 7
        %v11429 = vsub.s32 %v11261, %v11428
        %v11430 = vrot.slane %v11122, %v11429
        %v11431 = vsel %vm11266, %v11430, %v11426
        %v11432 = vlaneseq
        %v11433 = vshrl.u32 %v11432, 7
        %v11434 = vsub.s32 %v11268, %v11433
        %v11435 = vrot.slane %v11125, %v11434
        %v11436 = vsel %vm11273, %v11435, %v11431
        %v11437 = vlaneseq
        %v11438 = vshrl.u32 %v11437, 7
        %v11439 = vsub.s32 %v11275, %v11438
        %v11440 = vrot.slane %v11128, %v11439
        %v11441 = vsel %vm11280, %v11440, %v11436
        %v11442 = vlaneseq
        %v11443 = vshrl.u32 %v11442, 7
        %v11444 = vsub.s32 %v11282, %v11443
        %v11445 = vrot.slane %v11131, %v11444
        %v11446 = vsel %vm11287, %v11445, %v11441
        %v11447 = vlaneseq
        %v11448 = vshrl.u32 %v11447, 7
        %v11449 = vsub.s32 %v286, %v11448
        %v11450 = vrot.slane %v11134, %v11449
        %v11451 = vlaneseq
        %v11452 = vshrl.u32 %v11451, 7
        %v11453 = vsub.s32 %v11184, %v11452
        %v11454 = vrot.slane %v11137, %v11453
        %v11455 = vsel %vm11189, %v11454, %v11450
        %v11456 = vlaneseq
        %v11457 = vshrl.u32 %v11456, 7
        %v11458 = vsub.s32 %v11191, %v11457
        %v11459 = vrot.slane %v11140, %v11458
        %v11460 = vsel %vm11196, %v11459, %v11455
        %v11461 = vlaneseq
        %v11462 = vshrl.u32 %v11461, 7
        %v11463 = vsub.s32 %v11198, %v11462
        %v11464 = vrot.slane %v11143, %v11463
        %v11465 = vsel %vm11203, %v11464, %v11460
        %v11466 = vlaneseq
        %v11467 = vshrl.u32 %v11466, 7
        %v11468 = vsub.s32 %v11205, %v11467
        %v11469 = vrot.slane %v11146, %v11468
        %v11470 = vsel %vm11210, %v11469, %v11465
        %v11471 = vlaneseq
        %v11472 = vshrl.u32 %v11471, 7
        %v11473 = vsub.s32 %v11212, %v11472
        %v11474 = vrot.slane %v11149, %v11473
        %v11475 = vsel %vm11217, %v11474, %v11470
        %v11476 = vlaneseq
        %v11477 = vshrl.u32 %v11476, 7
        %v11478 = vsub.s32 %v11219, %v11477
        %v11479 = vrot.slane %v11152, %v11478
        %v11480 = vsel %vm11224, %v11479, %v11475
        %v11481 = vlaneseq
        %v11482 = vshrl.u32 %v11481, 7
        %v11483 = vsub.s32 %v11226, %v11482
        %v11484 = vrot.slane %v11155, %v11483
        %v11485 = vsel %vm11231, %v11484, %v11480
        %v11486 = vlaneseq
        %v11487 = vshrl.u32 %v11486, 7
        %v11488 = vsub.s32 %v11233, %v11487
        %v11489 = vrot.slane %v11158, %v11488
        %v11490 = vsel %vm11238, %v11489, %v11485
        %v11491 = vlaneseq
        %v11492 = vshrl.u32 %v11491, 7
        %v11493 = vsub.s32 %v11240, %v11492
        %v11494 = vrot.slane %v11161, %v11493
        %v11495 = vsel %vm11245, %v11494, %v11490
        %v11496 = vlaneseq
        %v11497 = vshrl.u32 %v11496, 7
        %v11498 = vsub.s32 %v11247, %v11497
        %v11499 = vrot.slane %v11164, %v11498
        %v11500 = vsel %vm11252, %v11499, %v11495
        %v11501 = vlaneseq
        %v11502 = vshrl.u32 %v11501, 7
        %v11503 = vsub.s32 %v11254, %v11502
        %v11504 = vrot.slane %v11167, %v11503
        %v11505 = vsel %vm11259, %v11504, %v11500
        %v11506 = vlaneseq
        %v11507 = vshrl.u32 %v11506, 7
        %v11508 = vsub.s32 %v11261, %v11507
        %v11509 = vrot.slane %v11170, %v11508
        %v11510 = vsel %vm11266, %v11509, %v11505
        %v11511 = vlaneseq
        %v11512 = vshrl.u32 %v11511, 7
        %v11513 = vsub.s32 %v11268, %v11512
        %v11514 = vrot.slane %v11173, %v11513
        %v11515 = vsel %vm11273, %v11514, %v11510
        %v11516 = vlaneseq
        %v11517 = vshrl.u32 %v11516, 7
        %v11518 = vsub.s32 %v11275, %v11517
        %v11519 = vrot.slane %v11176, %v11518
        %v11520 = vsel %vm11280, %v11519, %v11515
        %v11521 = vlaneseq
        %v11522 = vshrl.u32 %v11521, 7
        %v11523 = vsub.s32 %v11282, %v11522
        %v11524 = vrot.slane %v11179, %v11523
        %v11525 = vsel %vm11287, %v11524, %v11520
        %v11526 = vcombine.low %v11288, %v11367
        %v11527 = vcombine.low %v11446, %v11525
        %v11529 = vunpack.c.l.s4 1966171168
        %v11530 = vunpack.c.0.s8 %v11529
        %v11531 = vlaneseq
        %v11532 = vshrl.u32 %v11531, 7
        %v11533 = vsub.s32 %v11530, %v11532
        %v11534 = vrot.slane %v11526, %v11533
        %v11536 = vunpack.c.l.s4 1966171168
        %v11537 = vunpack.c.0.s8 %v11536
        %v11538 = vlaneseq
        %v11539 = vshrl.u32 %v11538, 7
        %v11540 = vsub.s32 %v11537, %v11539
        %v11541 = vrot.slane %v11527, %v11540
        %v11542 = vcombine.low %v11534, %v11541
        %v11544 = vunpack.c.l.s4 1966171168
        %v11545 = vunpack.c.0.s8 %v11544
        %v11546 = vlaneseq
        %v11547 = vshrl.u32 %v11546, 7
        %v11548 = vsub.s32 %v11545, %v11547
        %v11549 = vrot.slane %v11542, %v11548
        %v11551 = vlaneseq
        %vm11552 = vcmp.ge.s32.totalorder %v11551, 0
        %vm11553 = vcmp.lt.s32.totalorder %v11551, 512
        %vm11554 = vmand %vm11552, %vm11553
        %11555 = vst.msk [vmem:[%s207] sm:$0xf] %vm11554, %v11549
        %s11556 = sand.u32 %s120, 1
        %s11557 = scalar_lea.sflag [#allocation3], %s11556
        %s11558 = sand.u32 %s120, 1
        %s11559 = smul.addr %s11558, 4
        %s11560 = scalar_lea.vmem [#allocation2], %s11559
        // Predicated region
        $region37: #{tpu_custom_call.1} parent=35 // pred_check
          %p11561 = pneg %p130
        $region38: #{tpu_custom_call.1} parent=35 // pred_check_branch
          %11563 = sbr.rel (%p11561) target = $region40
        $region39: #{tpu_custom_call.1} parent=35 // pred_region
          %s11564 = smul.u32 4, %s18
          %s11566 = ssub.s32 64, 64
          %11567 = vsyncadd %s11557, %s11566
          %s11568 = smul.addr %s11564, 16
          %s11569 = scalar_lea.hbm %s4, %s11568
          %s11571 = sshll.u32 %s11560, 4
          %s11572 = int_to_ptr.vmem [resolvable:$true] %s11571
          %11574 = dma.vmem_to_hbm [thread:$0]  %s11572, 64, %s11569, %s11557
        $region40: #{tpu_custom_call.1} parent=35 // pred_fallthru
          _
      $region36: #{tpu_custom_call.1} parent=5 // pred_fallthru
        _
      %p11575 = scmp.le.s32.totalorder 2, %s13
      // Predicated region
      $region41: #{tpu_custom_call.1} parent=5 // pred_check
        %p11576 = pneg %p11575
      $region42: #{tpu_custom_call.1} parent=5 // pred_check_branch
        %11578 = sbr.rel (%p11576) target = $region44
      $region43: #{tpu_custom_call.1} parent=5 // pred_region
        %s11579 = ssub.s32 %s13, 2
        // Predicated region
        $region45: #{tpu_custom_call.1} parent=43 // pred_check
          %p11580 = pneg %p136
        $region46: #{tpu_custom_call.1} parent=43 // pred_check_branch
          %11582 = sbr.rel (%p11580) target = $region48
        $region47: #{tpu_custom_call.1} parent=43 // pred_region
          %s11583 = sand.u32 %s121, 1
          %s11584 = scalar_lea.sflag [#allocation3], %s11583
          %s11585 = sand.u32 %s121, 1
          %s11586 = smul.addr %s11585, 4
          %s11587 = scalar_lea.vmem [#allocation2], %s11586
          %11588 = dma.done %s11584, 64
        $region48: #{tpu_custom_call.1} parent=43 // pred_fallthru
          _
      $region44: #{tpu_custom_call.1} parent=5 // pred_fallthru
        _
    $region6: #{tpu_custom_call.1} parent=1 // loop_footer
      %s17 = sadd.s32 1, %s13
    $region7: #{tpu_custom_call.1} parent=1 // loop_footer_branch
      %12 = sbr.rel target = $region3
    $region8: #{tpu_custom_call.1} parent=1 // loop_exit
      _
    %11589 = vsyncpa [#allocation3], 1
    %s11590 = scalar_lea.sflag [#allocation3], 1
    %11591 = vsyncpa %s11590, 1

</llo_original>
